<compile_context>
chip_gen: v7x
topology: tpu7x:2x2x1
jax: 0.10.0
libtpu: 0.0.40
codegen_flags: <defaults>
</compile_context>

<pallas_src>
import jax
import jax.numpy as jnp
from jax.experimental import pallas as pl
from jax.experimental.pallas import tpu as pltpu


# Batch-tile size: multiple of 8 (BlockSpec second-minor rule) and equal to the
# bf16 sublane tile (16) so every in-kernel (H,W,TB,C) <-> (H*W*TB, C) reshape
# is a pure re-view of the same VMEM tiles (no relayout).
_TB = 16


# -----------------------------------------------------------------------------
# In-kernel helpers
# -----------------------------------------------------------------------------
def _take_strided(x, off, stride, count, axis):
    """Select indices off + stride*i (i < count) along a *leading* axis of x.

    axis must be < x.ndim - 2, so everything here is leading-dim work only
    (contiguous slices, leading-dim reshape split, static integer index),
    all of which are layout-trivial on TPU.  Requires kernel_size >= stride
    (true for all layers of this net) so the slice window always fits.
    """
    if stride == 1:
        idx = [slice(None)] * x.ndim
        idx[axis] = slice(off, off + count)
        return x[tuple(idx)]
    span = stride * count
    start = min(off, x.shape[axis] - span)   # shift window left if needed
    phase = off - start                      # 0 <= phase < stride
    idx = [slice(None)] * x.ndim
    idx[axis] = slice(start, start + span)
    x = x[tuple(idx)]
    x = x.reshape(x.shape[:axis] + (count, stride) + x.shape[axis + 1:])
    idx = [slice(None)] * x.ndim
    idx[axis + 1] = phase
    return x[tuple(idx)]


def _conv_relu(x, w_ref, b_ref, stride):
    """Valid conv + bias + ReLU on an (H, W, TB, Cin) bf16 activation.

    Implemented as kH*kW shifted (strided) bf16 MXU matmuls accumulated in
    f32; the spatial/batch dims are leading so every slice is layout-trivial
    and the 2D matmul views are tile-preserving reshapes (TB = 16).
    """
    kh, kw, cin, cout = w_ref.shape
    hin, win, tb, _ = x.shape
    ho = (hin - kh) // stride + 1
    wo = (win - kw) // stride + 1
    m = ho * wo * tb
    acc = jnp.zeros((m, cout), jnp.float32)
    for di in range(kh):
        for dj in range(kw):
            p = _take_strided(x, di, stride, ho, axis=0)
            p = _take_strided(p, dj, stride, wo, axis=1)
            acc = acc + jnp.dot(p.reshape(m, cin), w_ref[di, dj],
                                preferred_element_type=jnp.float32)
    y = jnp.maximum(acc + b_ref[...], 0.0)                    # f32 bias + ReLU
    return y.astype(jnp.bfloat16).reshape(ho, wo, tb, cout)


def _net_kernel(xs_ref, w1_ref, b1_ref, w2_ref, b2_ref, w3_ref, b3_ref,
                wf1_ref, bf1_ref, wf2_ref, bf2_ref, o_ref):
    """Whole forward pass for one 16-image batch tile; all intermediates stay
    in VMEM/vregs (no HBM traffic between layers)."""
    # uint8 -> f32 -> bf16 (exact for 0..255); the /256 is folded into w1.
    # TODO(synk): a direct u8->bf16 cast would halve the VPU cast work, kept as
    # the proven widened path for Mosaic unsigned-convert robustness.
    x = xs_ref[...].astype(jnp.float32).astype(jnp.bfloat16)

    # conv1 8x8/s4 -> after space-to-depth-by-4 it is a 2x2/s1 conv on 16*C ch.
    h = _conv_relu(x, w1_ref, b1_ref, stride=1)
    # conv2 4x4/s2, conv3 3x3/s1.
    h = _conv_relu(h, w2_ref, b2_ref, stride=2)
    h = _conv_relu(h, w3_ref, b3_ref, stride=1)

    # FC head: Linear(conv_out -> 512) + ReLU + Linear(512 -> n_actions).
    # The NCHW flatten is folded into wf1's layout; contraction over the
    # spatial positions is an accumulation of per-(h, w) MXU matmuls so no
    # transpose of the conv output is needed.
    # TODO(synk): at large spatial sizes a single matmul on a transposed
    # (TB, conv_out) view would use the MXU better than this per-(h,w) loop.
    ho3, wo3, tb, _ = h.shape
    hid = wf1_ref.shape[2]
    acc = jnp.zeros((tb, hid), jnp.float32)
    for p in range(ho3 * wo3):
        acc = acc + jnp.dot(h[p // wo3, p % wo3], wf1_ref[p],
                            preferred_element_type=jnp.float32)
    hfc = jnp.maximum(acc + bf1_ref[...], 0.0).astype(jnp.bfloat16)
    out = jnp.dot(hfc, wf2_ref[...], preferred_element_type=jnp.float32)
    o_ref[...] = out + bf2_ref[...]


# -----------------------------------------------------------------------------
# Net: Conv(C->32,8,s4) ReLU, Conv(32->64,4,s2) ReLU, Conv(64->64,3,s1) ReLU,
#      flatten (NCHW order), Linear(conv_out->512) ReLU, Linear(512->n_actions)
# -----------------------------------------------------------------------------
def _conv_out_hw(h, w):
    h, w = (h - 8) // 4 + 1, (w - 8) // 4 + 1
    h, w = (h - 4) // 2 + 1, (w - 4) // 2 + 1
    return h - 2, w - 2


class NetPallas:
    def __init__(self, input_shape, n_actions, key):
        C, H, W = input_shape
        assert (H - 8) % 4 == 0 and (W - 8) % 4 == 0, "conv stack needs H,W ≡ 0 (mod 4)"
        self.C, self.H, self.W = C, H, W
        self.n_actions = n_actions
        ho3, wo3 = _conv_out_hw(H, W)
        assert ho3 >= 1 and wo3 >= 1, "input too small for the conv stack"
        self.ho3, self.wo3 = ho3, wo3
        conv_out = 64 * ho3 * wo3

        ks = jax.random.split(key, 10)

        def init(k, shape, fan_in):  # PyTorch default U(-1/sqrt(fan_in), 1/sqrt(fan_in))
            bound = 1.0 / (fan_in ** 0.5)
            return jax.random.uniform(k, shape, jnp.float32, -bound, bound)

        w1 = init(ks[0], (32, C, 8, 8), C * 8 * 8)
        b1 = init(ks[1], (32,), C * 8 * 8)
        w2 = init(ks[2], (64, 32, 4, 4), 32 * 4 * 4)
        b2 = init(ks[3], (64,), 32 * 4 * 4)
        w3 = init(ks[4], (64, 64, 3, 3), 64 * 3 * 3)
        b3 = init(ks[5], (64,), 64 * 3 * 3)
        wf1 = init(ks[6], (512, conv_out), conv_out)
        bf1 = init(ks[7], (512,), conv_out)
        wf2 = init(ks[8], (n_actions, 512), 512)
        bf2 = init(ks[9], (n_actions,), 512)

        # conv1: fold the x/256 scaling AND the space-to-depth-by-4 feature
        # order (di, dj, c) into a (2, 2, 16*C, 32) bf16 tensor: tap (a, b) of
        # the 2x2 stride-1 conv on the s2d input == taps (4a+di, 4b+dj) of the
        # original 8x8 stride-4 conv.
        m = w1.reshape(32, C, 2, 4, 2, 4)                 # (o, c, a, di, b, dj)
        m = jnp.transpose(m, (2, 4, 3, 5, 1, 0))          # (a, b, di, dj, c, o)
        self.w1k = (m.reshape(2, 2, 16 * C, 32) / 256.0).astype(jnp.bfloat16)
        self.b1k = b1.reshape(1, 32).astype(jnp.float32)

        # conv2 / conv3: (o, c, kh, kw) -> (kh, kw, c, o), bf16.
        self.w2k = jnp.transpose(w2, (2, 3, 1, 0)).astype(jnp.bfloat16)
        self.b2k = b2.reshape(1, 64).astype(jnp.float32)
        self.w3k = jnp.transpose(w3, (2, 3, 1, 0)).astype(jnp.bfloat16)
        self.b3k = b3.reshape(1, 64).astype(jnp.float32)

        # fc1: PyTorch flattens the NCHW conv output (index = c*H*W + h*W + w);
        # our conv output is consumed per spatial position (h, w) with layout
        # (h, w, n, c), so reorganize wf1 to (Ho3*Wo3, 64, 512).
        m = wf1.reshape(512, 64, ho3, wo3)                # (j, c, h, w)
        m = jnp.transpose(m, (2, 3, 1, 0))                # (h, w, c, j)
        self.wf1k = m.reshape(ho3 * wo3, 64, 512).astype(jnp.bfloat16)
        self.bf1k = bf1.reshape(1, 512).astype(jnp.float32)
        self.wf2k = jnp.transpose(wf2).astype(jnp.bfloat16)      # (512, A)
        self.bf2k = bf2.reshape(1, n_actions).astype(jnp.float32)

    def __call__(self, x_nchw):
        B, C, H, W = x_nchw.shape
        assert (C, H, W) == (self.C, self.H, self.W)
        A = self.n_actions

        # Pad the batch to a multiple of the batch tile so every VMEM block /
        # in-kernel reshape stays tile-aligned; padded rows are sliced off.
        Bp = ((B + _TB - 1) // _TB) * _TB
        if Bp != B:
            x_nchw = jnp.concatenate(
                [x_nchw, jnp.zeros((Bp - B, C, H, W), x_nchw.dtype)], axis=0)

        # Space-to-depth by the conv1 stride (4).  This single uint8 permute is
        # the only XLA glue left: it is non-duplicating (each input byte
        # appears once) and replaces both the old NCHW->NHWC transpose and the
        # conv1 im2col gather.  Layout: (H/4, W/4, B, 16*C), feature order
        # (di, dj, c) matching w1k.
        # TODO(synk): this permute could also be folded into the kernel with an
        # in-kernel relayout of the raw NCHW tile.
        xs = x_nchw.reshape(Bp, C, H // 4, 4, W // 4, 4)
        xs = jnp.transpose(xs, (2, 4, 0, 3, 5, 1))        # (hb, wb, n, di, dj, c)
        xs = xs.reshape(H // 4, W // 4, Bp, 16 * C)

        H4, W4, F = H // 4, W // 4, 16 * C
        grid = (Bp // _TB,)

        out = pl.pallas_call(
            _net_kernel,
            out_shape=jax.ShapeDtypeStruct((Bp, A), jnp.float32),
            grid=grid,
            in_specs=[
                # batch-tiled s2d input; weights/biases are whole-block and
                # stay VMEM-resident across the (parallel) batch grid.
                pl.BlockSpec((H4, W4, _TB, F), lambda i: (0, 0, i, 0)),
                pl.BlockSpec(self.w1k.shape, lambda i: (0, 0, 0, 0)),
                pl.BlockSpec(self.b1k.shape, lambda i: (0, 0)),
                pl.BlockSpec(self.w2k.shape, lambda i: (0, 0, 0, 0)),
                pl.BlockSpec(self.b2k.shape, lambda i: (0, 0)),
                pl.BlockSpec(self.w3k.shape, lambda i: (0, 0, 0, 0)),
                pl.BlockSpec(self.b3k.shape, lambda i: (0, 0)),
                pl.BlockSpec(self.wf1k.shape, lambda i: (0, 0, 0)),
                pl.BlockSpec(self.bf1k.shape, lambda i: (0, 0)),
                pl.BlockSpec(self.wf2k.shape, lambda i: (0, 0)),
                pl.BlockSpec(self.bf2k.shape, lambda i: (0, 0)),
            ],
            out_specs=pl.BlockSpec((_TB, A), lambda i: (i, 0)),
            compiler_params=pltpu.CompilerParams(
                dimension_semantics=("parallel",),
                vmem_limit_bytes=48 * 1024 * 1024,
            ),
        )(xs, self.w1k, self.b1k, self.w2k, self.b2k, self.w3k, self.b3k,
          self.wf1k, self.bf1k, self.wf2k, self.bf2k)
        return out[:B]


if __name__ == "__main__":
    key = jax.random.PRNGKey(0)
    kp, kx = jax.random.split(key)

    # Smallest spatial size the conv stack accepts: 36x36 -> 8x8 -> 3x3 -> 1x1.
    input_shape = (4, 36, 36)
    n_actions = 6
    batch = 2

    net = NetPallas(input_shape, n_actions, kp)
    x = jax.random.randint(kx, (batch,) + input_shape, 0, 256,
                           dtype=jnp.int32).astype(jnp.uint8)

    fwd = jax.jit(net.__call__)
    out = fwd(x)
    jax.block_until_ready(out)
    assert out.shape == (batch, n_actions), out.shape
    assert out.dtype == jnp.float32
    assert bool(jnp.all(jnp.isfinite(out)))
    print("KERNEL_OK")
</pallas_src>

<mosaic_0001>
module attributes {stable_mosaic.version = 11 : i64} {
  func.func @_net_kernel(%arg0: i32, %arg1: memref<9x9x16x64xi8, #tpu.memory_space<vmem>>, %arg2: memref<2x2x64x32xbf16, #tpu.memory_space<vmem>>, %arg3: memref<1x32xf32, #tpu.memory_space<vmem>>, %arg4: memref<4x4x32x64xbf16, #tpu.memory_space<vmem>>, %arg5: memref<1x64xf32, #tpu.memory_space<vmem>>, %arg6: memref<3x3x64x64xbf16, #tpu.memory_space<vmem>>, %arg7: memref<1x64xf32, #tpu.memory_space<vmem>>, %arg8: memref<1x64x512xbf16, #tpu.memory_space<vmem>>, %arg9: memref<1x512xf32, #tpu.memory_space<vmem>>, %arg10: memref<512x6xbf16, #tpu.memory_space<vmem>>, %arg11: memref<1x6xf32, #tpu.memory_space<vmem>>, %arg12: memref<16x6xf32, #tpu.memory_space<vmem>>) attributes {dimension_semantics = [#tpu.dimension_semantics<parallel>], iteration_bounds = array<i64: 1>, scalar_prefetch = 0 : i64, scratch_operands = 0 : i64, tpu.core_type = #tpu.core_type<tc>, window_params = [{transform_indices = @transform_0, window_bounds = array<i64: 9, 9, 16, 64>}, {pipeline_mode = #tpu.pipeline_mode<synchronous>, transform_indices = @transform_1, window_bounds = array<i64: 2, 2, 64, 32>}, {pipeline_mode = #tpu.pipeline_mode<synchronous>, transform_indices = @transform_2, window_bounds = array<i64: 1, 32>}, {pipeline_mode = #tpu.pipeline_mode<synchronous>, transform_indices = @transform_3, window_bounds = array<i64: 4, 4, 32, 64>}, {pipeline_mode = #tpu.pipeline_mode<synchronous>, transform_indices = @transform_4, window_bounds = array<i64: 1, 64>}, {pipeline_mode = #tpu.pipeline_mode<synchronous>, transform_indices = @transform_5, window_bounds = array<i64: 3, 3, 64, 64>}, {pipeline_mode = #tpu.pipeline_mode<synchronous>, transform_indices = @transform_6, window_bounds = array<i64: 1, 64>}, {pipeline_mode = #tpu.pipeline_mode<synchronous>, transform_indices = @transform_7, window_bounds = array<i64: 1, 64, 512>}, {pipeline_mode = #tpu.pipeline_mode<synchronous>, transform_indices = @transform_8, window_bounds = array<i64: 1, 512>}, {pipeline_mode = #tpu.pipeline_mode<synchronous>, transform_indices = @transform_9, window_bounds = array<i64: 512, 6>}, {pipeline_mode = #tpu.pipeline_mode<synchronous>, transform_indices = @transform_10, window_bounds = array<i64: 1, 6>}, {transform_indices = @transform_11, window_bounds = array<i64: 16, 6>}]} {
    %c0 = arith.constant 0 : index
    %c0_0 = arith.constant 0 : index
    %c0_1 = arith.constant 0 : index
    %c0_2 = arith.constant 0 : index
    %0 = vector.load %arg1[%c0, %c0_0, %c0_1, %c0_2] : memref<9x9x16x64xi8, #tpu.memory_space<vmem>>, vector<9x9x16x64xi8>
    %1 = arith.uitofp %0 : vector<9x9x16x64xi8> to vector<9x9x16x64xf32>
    %2 = arith.truncf %1 : vector<9x9x16x64xf32> to vector<9x9x16x64xbf16>
    %cst = arith.constant 0.000000e+00 : f32
    %3 = vector.broadcast %cst : f32 to vector<1024x32xf32>
    %4 = vector.extract_strided_slice %2 {offsets = [0, 0, 0, 0], sizes = [8, 9, 16, 64], strides = [1, 1, 1, 1]} : vector<9x9x16x64xbf16> to vector<8x9x16x64xbf16>
    %5 = vector.extract_strided_slice %4 {offsets = [0, 0, 0, 0], sizes = [8, 8, 16, 64], strides = [1, 1, 1, 1]} : vector<8x9x16x64xbf16> to vector<8x8x16x64xbf16>
    %6 = vector.shape_cast %5 : vector<8x8x16x64xbf16> to vector<1024x64xbf16>
    %c0_3 = arith.constant 0 : index
    %c0_4 = arith.constant 0 : index
    %c0_5 = arith.constant 0 : index
    %c0_6 = arith.constant 0 : index
    %7 = vector.load %arg2[%c0_3, %c0_4, %c0_5, %c0_6] : memref<2x2x64x32xbf16, #tpu.memory_space<vmem>>, vector<1x1x64x32xbf16>
    %8 = vector.shape_cast %7 : vector<1x1x64x32xbf16> to vector<64x32xbf16>
    %cst_7 = arith.constant dense<0.000000e+00> : vector<1024x32xf32>
    %9 = tpu.matmul %6, %8, %cst_7 {dimension_numbers = #tpu.dot_dimension_numbers<[1], [0], [0], [1], [0, 0, 1, 1], [], []>} : vector<1024x64xbf16>, vector<64x32xbf16>, vector<1024x32xf32> -> vector<1024x32xf32>
    %10 = arith.addf %3, %9 : vector<1024x32xf32>
    %11 = vector.extract_strided_slice %2 {offsets = [0, 0, 0, 0], sizes = [8, 9, 16, 64], strides = [1, 1, 1, 1]} : vector<9x9x16x64xbf16> to vector<8x9x16x64xbf16>
    %12 = vector.extract_strided_slice %11 {offsets = [0, 1, 0, 0], sizes = [8, 8, 16, 64], strides = [1, 1, 1, 1]} : vector<8x9x16x64xbf16> to vector<8x8x16x64xbf16>
    %13 = vector.shape_cast %12 : vector<8x8x16x64xbf16> to vector<1024x64xbf16>
    %c0_8 = arith.constant 0 : index
    %c1 = arith.constant 1 : index
    %c0_9 = arith.constant 0 : index
    %c0_10 = arith.constant 0 : index
    %14 = vector.load %arg2[%c0_8, %c1, %c0_9, %c0_10] : memref<2x2x64x32xbf16, #tpu.memory_space<vmem>>, vector<1x1x64x32xbf16>
    %15 = vector.shape_cast %14 : vector<1x1x64x32xbf16> to vector<64x32xbf16>
    %cst_11 = arith.constant dense<0.000000e+00> : vector<1024x32xf32>
    %16 = tpu.matmul %13, %15, %cst_11 {dimension_numbers = #tpu.dot_dimension_numbers<[1], [0], [0], [1], [0, 0, 1, 1], [], []>} : vector<1024x64xbf16>, vector<64x32xbf16>, vector<1024x32xf32> -> vector<1024x32xf32>
    %17 = arith.addf %10, %16 : vector<1024x32xf32>
    %18 = vector.extract_strided_slice %2 {offsets = [1, 0, 0, 0], sizes = [8, 9, 16, 64], strides = [1, 1, 1, 1]} : vector<9x9x16x64xbf16> to vector<8x9x16x64xbf16>
    %19 = vector.extract_strided_slice %18 {offsets = [0, 0, 0, 0], sizes = [8, 8, 16, 64], strides = [1, 1, 1, 1]} : vector<8x9x16x64xbf16> to vector<8x8x16x64xbf16>
    %20 = vector.shape_cast %19 : vector<8x8x16x64xbf16> to vector<1024x64xbf16>
    %c1_12 = arith.constant 1 : index
    %c0_13 = arith.constant 0 : index
    %c0_14 = arith.constant 0 : index
    %c0_15 = arith.constant 0 : index
    %21 = vector.load %arg2[%c1_12, %c0_13, %c0_14, %c0_15] : memref<2x2x64x32xbf16, #tpu.memory_space<vmem>>, vector<1x1x64x32xbf16>
    %22 = vector.shape_cast %21 : vector<1x1x64x32xbf16> to vector<64x32xbf16>
    %cst_16 = arith.constant dense<0.000000e+00> : vector<1024x32xf32>
    %23 = tpu.matmul %20, %22, %cst_16 {dimension_numbers = #tpu.dot_dimension_numbers<[1], [0], [0], [1], [0, 0, 1, 1], [], []>} : vector<1024x64xbf16>, vector<64x32xbf16>, vector<1024x32xf32> -> vector<1024x32xf32>
    %24 = arith.addf %17, %23 : vector<1024x32xf32>
    %25 = vector.extract_strided_slice %2 {offsets = [1, 0, 0, 0], sizes = [8, 9, 16, 64], strides = [1, 1, 1, 1]} : vector<9x9x16x64xbf16> to vector<8x9x16x64xbf16>
    %26 = vector.extract_strided_slice %25 {offsets = [0, 1, 0, 0], sizes = [8, 8, 16, 64], strides = [1, 1, 1, 1]} : vector<8x9x16x64xbf16> to vector<8x8x16x64xbf16>
    %27 = vector.shape_cast %26 : vector<8x8x16x64xbf16> to vector<1024x64xbf16>
    %c1_17 = arith.constant 1 : index
    %c1_18 = arith.constant 1 : index
    %c0_19 = arith.constant 0 : index
    %c0_20 = arith.constant 0 : index
    %28 = vector.load %arg2[%c1_17, %c1_18, %c0_19, %c0_20] : memref<2x2x64x32xbf16, #tpu.memory_space<vmem>>, vector<1x1x64x32xbf16>
    %29 = vector.shape_cast %28 : vector<1x1x64x32xbf16> to vector<64x32xbf16>
    %cst_21 = arith.constant dense<0.000000e+00> : vector<1024x32xf32>
    %30 = tpu.matmul %27, %29, %cst_21 {dimension_numbers = #tpu.dot_dimension_numbers<[1], [0], [0], [1], [0, 0, 1, 1], [], []>} : vector<1024x64xbf16>, vector<64x32xbf16>, vector<1024x32xf32> -> vector<1024x32xf32>
    %31 = arith.addf %24, %30 : vector<1024x32xf32>
    %c0_22 = arith.constant 0 : index
    %c0_23 = arith.constant 0 : index
    %32 = vector.load %arg3[%c0_22, %c0_23] : memref<1x32xf32, #tpu.memory_space<vmem>>, vector<1x32xf32>
    %33 = vector.broadcast %32 : vector<1x32xf32> to vector<1024x32xf32>
    %34 = arith.addf %31, %33 : vector<1024x32xf32>
    %cst_24 = arith.constant 0.000000e+00 : f32
    %35 = vector.broadcast %cst_24 : f32 to vector<1024x32xf32>
    %36 = arith.maximumf %34, %35 : vector<1024x32xf32>
    %37 = arith.truncf %36 : vector<1024x32xf32> to vector<1024x32xbf16>
    %38 = vector.shape_cast %37 : vector<1024x32xbf16> to vector<8x8x16x32xbf16>
    %cst_25 = arith.constant 0.000000e+00 : f32
    %39 = vector.broadcast %cst_25 : f32 to vector<144x64xf32>
    %40 = vector.extract_strided_slice %38 {offsets = [0, 0, 0, 0], sizes = [6, 8, 16, 32], strides = [1, 1, 1, 1]} : vector<8x8x16x32xbf16> to vector<6x8x16x32xbf16>
    %41 = vector.shape_cast %40 : vector<6x8x16x32xbf16> to vector<3x2x8x16x32xbf16>
    %42 = vector.extract_strided_slice %41 {offsets = [0, 0, 0, 0, 0], sizes = [3, 1, 8, 16, 32], strides = [1, 1, 1, 1, 1]} : vector<3x2x8x16x32xbf16> to vector<3x1x8x16x32xbf16>
    %43 = vector.shape_cast %42 : vector<3x1x8x16x32xbf16> to vector<3x8x16x32xbf16>
    %44 = vector.extract_strided_slice %43 {offsets = [0, 0, 0, 0], sizes = [3, 6, 16, 32], strides = [1, 1, 1, 1]} : vector<3x8x16x32xbf16> to vector<3x6x16x32xbf16>
    %45 = vector.shape_cast %44 : vector<3x6x16x32xbf16> to vector<3x3x2x16x32xbf16>
    %46 = vector.extract_strided_slice %45 {offsets = [0, 0, 0, 0, 0], sizes = [3, 3, 1, 16, 32], strides = [1, 1, 1, 1, 1]} : vector<3x3x2x16x32xbf16> to vector<3x3x1x16x32xbf16>
    %47 = vector.shape_cast %46 : vector<3x3x1x16x32xbf16> to vector<3x3x16x32xbf16>
    %48 = vector.shape_cast %47 : vector<3x3x16x32xbf16> to vector<144x32xbf16>
    %c0_26 = arith.constant 0 : index
    %c0_27 = arith.constant 0 : index
    %c0_28 = arith.constant 0 : index
    %c0_29 = arith.constant 0 : index
    %49 = vector.load %arg4[%c0_26, %c0_27, %c0_28, %c0_29] : memref<4x4x32x64xbf16, #tpu.memory_space<vmem>>, vector<1x1x32x64xbf16>
    %50 = vector.shape_cast %49 : vector<1x1x32x64xbf16> to vector<32x64xbf16>
    %cst_30 = arith.constant dense<0.000000e+00> : vector<144x64xf32>
    %51 = tpu.matmul %48, %50, %cst_30 {dimension_numbers = #tpu.dot_dimension_numbers<[1], [0], [0], [1], [0, 0, 1, 1], [], []>} : vector<144x32xbf16>, vector<32x64xbf16>, vector<144x64xf32> -> vector<144x64xf32>
    %52 = arith.addf %39, %51 : vector<144x64xf32>
    %53 = vector.extract_strided_slice %38 {offsets = [0, 0, 0, 0], sizes = [6, 8, 16, 32], strides = [1, 1, 1, 1]} : vector<8x8x16x32xbf16> to vector<6x8x16x32xbf16>
    %54 = vector.shape_cast %53 : vector<6x8x16x32xbf16> to vector<3x2x8x16x32xbf16>
    %55 = vector.extract_strided_slice %54 {offsets = [0, 0, 0, 0, 0], sizes = [3, 1, 8, 16, 32], strides = [1, 1, 1, 1, 1]} : vector<3x2x8x16x32xbf16> to vector<3x1x8x16x32xbf16>
    %56 = vector.shape_cast %55 : vector<3x1x8x16x32xbf16> to vector<3x8x16x32xbf16>
    %57 = vector.extract_strided_slice %56 {offsets = [0, 1, 0, 0], sizes = [3, 6, 16, 32], strides = [1, 1, 1, 1]} : vector<3x8x16x32xbf16> to vector<3x6x16x32xbf16>
    %58 = vector.shape_cast %57 : vector<3x6x16x32xbf16> to vector<3x3x2x16x32xbf16>
    %59 = vector.extract_strided_slice %58 {offsets = [0, 0, 0, 0, 0], sizes = [3, 3, 1, 16, 32], strides = [1, 1, 1, 1, 1]} : vector<3x3x2x16x32xbf16> to vector<3x3x1x16x32xbf16>
    %60 = vector.shape_cast %59 : vector<3x3x1x16x32xbf16> to vector<3x3x16x32xbf16>
    %61 = vector.shape_cast %60 : vector<3x3x16x32xbf16> to vector<144x32xbf16>
    %c0_31 = arith.constant 0 : index
    %c1_32 = arith.constant 1 : index
    %c0_33 = arith.constant 0 : index
    %c0_34 = arith.constant 0 : index
    %62 = vector.load %arg4[%c0_31, %c1_32, %c0_33, %c0_34] : memref<4x4x32x64xbf16, #tpu.memory_space<vmem>>, vector<1x1x32x64xbf16>
    %63 = vector.shape_cast %62 : vector<1x1x32x64xbf16> to vector<32x64xbf16>
    %cst_35 = arith.constant dense<0.000000e+00> : vector<144x64xf32>
    %64 = tpu.matmul %61, %63, %cst_35 {dimension_numbers = #tpu.dot_dimension_numbers<[1], [0], [0], [1], [0, 0, 1, 1], [], []>} : vector<144x32xbf16>, vector<32x64xbf16>, vector<144x64xf32> -> vector<144x64xf32>
    %65 = arith.addf %52, %64 : vector<144x64xf32>
    %66 = vector.extract_strided_slice %38 {offsets = [0, 0, 0, 0], sizes = [6, 8, 16, 32], strides = [1, 1, 1, 1]} : vector<8x8x16x32xbf16> to vector<6x8x16x32xbf16>
    %67 = vector.shape_cast %66 : vector<6x8x16x32xbf16> to vector<3x2x8x16x32xbf16>
    %68 = vector.extract_strided_slice %67 {offsets = [0, 0, 0, 0, 0], sizes = [3, 1, 8, 16, 32], strides = [1, 1, 1, 1, 1]} : vector<3x2x8x16x32xbf16> to vector<3x1x8x16x32xbf16>
    %69 = vector.shape_cast %68 : vector<3x1x8x16x32xbf16> to vector<3x8x16x32xbf16>
    %70 = vector.extract_strided_slice %69 {offsets = [0, 2, 0, 0], sizes = [3, 6, 16, 32], strides = [1, 1, 1, 1]} : vector<3x8x16x32xbf16> to vector<3x6x16x32xbf16>
    %71 = vector.shape_cast %70 : vector<3x6x16x32xbf16> to vector<3x3x2x16x32xbf16>
    %72 = vector.extract_strided_slice %71 {offsets = [0, 0, 0, 0, 0], sizes = [3, 3, 1, 16, 32], strides = [1, 1, 1, 1, 1]} : vector<3x3x2x16x32xbf16> to vector<3x3x1x16x32xbf16>
    %73 = vector.shape_cast %72 : vector<3x3x1x16x32xbf16> to vector<3x3x16x32xbf16>
    %74 = vector.shape_cast %73 : vector<3x3x16x32xbf16> to vector<144x32xbf16>
    %c0_36 = arith.constant 0 : index
    %c2 = arith.constant 2 : index
    %c0_37 = arith.constant 0 : index
    %c0_38 = arith.constant 0 : index
    %75 = vector.load %arg4[%c0_36, %c2, %c0_37, %c0_38] : memref<4x4x32x64xbf16, #tpu.memory_space<vmem>>, vector<1x1x32x64xbf16>
    %76 = vector.shape_cast %75 : vector<1x1x32x64xbf16> to vector<32x64xbf16>
    %cst_39 = arith.constant dense<0.000000e+00> : vector<144x64xf32>
    %77 = tpu.matmul %74, %76, %cst_39 {dimension_numbers = #tpu.dot_dimension_numbers<[1], [0], [0], [1], [0, 0, 1, 1], [], []>} : vector<144x32xbf16>, vector<32x64xbf16>, vector<144x64xf32> -> vector<144x64xf32>
    %78 = arith.addf %65, %77 : vector<144x64xf32>
    %79 = vector.extract_strided_slice %38 {offsets = [0, 0, 0, 0], sizes = [6, 8, 16, 32], strides = [1, 1, 1, 1]} : vector<8x8x16x32xbf16> to vector<6x8x16x32xbf16>
    %80 = vector.shape_cast %79 : vector<6x8x16x32xbf16> to vector<3x2x8x16x32xbf16>
    %81 = vector.extract_strided_slice %80 {offsets = [0, 0, 0, 0, 0], sizes = [3, 1, 8, 16, 32], strides = [1, 1, 1, 1, 1]} : vector<3x2x8x16x32xbf16> to vector<3x1x8x16x32xbf16>
    %82 = vector.shape_cast %81 : vector<3x1x8x16x32xbf16> to vector<3x8x16x32xbf16>
    %83 = vector.extract_strided_slice %82 {offsets = [0, 2, 0, 0], sizes = [3, 6, 16, 32], strides = [1, 1, 1, 1]} : vector<3x8x16x32xbf16> to vector<3x6x16x32xbf16>
    %84 = vector.shape_cast %83 : vector<3x6x16x32xbf16> to vector<3x3x2x16x32xbf16>
    %85 = vector.extract_strided_slice %84 {offsets = [0, 0, 1, 0, 0], sizes = [3, 3, 1, 16, 32], strides = [1, 1, 1, 1, 1]} : vector<3x3x2x16x32xbf16> to vector<3x3x1x16x32xbf16>
    %86 = vector.shape_cast %85 : vector<3x3x1x16x32xbf16> to vector<3x3x16x32xbf16>
    %87 = vector.shape_cast %86 : vector<3x3x16x32xbf16> to vector<144x32xbf16>
    %c0_40 = arith.constant 0 : index
    %c3 = arith.constant 3 : index
    %c0_41 = arith.constant 0 : index
    %c0_42 = arith.constant 0 : index
    %88 = vector.load %arg4[%c0_40, %c3, %c0_41, %c0_42] : memref<4x4x32x64xbf16, #tpu.memory_space<vmem>>, vector<1x1x32x64xbf16>
    %89 = vector.shape_cast %88 : vector<1x1x32x64xbf16> to vector<32x64xbf16>
    %cst_43 = arith.constant dense<0.000000e+00> : vector<144x64xf32>
    %90 = tpu.matmul %87, %89, %cst_43 {dimension_numbers = #tpu.dot_dimension_numbers<[1], [0], [0], [1], [0, 0, 1, 1], [], []>} : vector<144x32xbf16>, vector<32x64xbf16>, vector<144x64xf32> -> vector<144x64xf32>
    %91 = arith.addf %78, %90 : vector<144x64xf32>
    %92 = vector.extract_strided_slice %38 {offsets = [1, 0, 0, 0], sizes = [6, 8, 16, 32], strides = [1, 1, 1, 1]} : vector<8x8x16x32xbf16> to vector<6x8x16x32xbf16>
    %93 = vector.shape_cast %92 : vector<6x8x16x32xbf16> to vector<3x2x8x16x32xbf16>
    %94 = vector.extract_strided_slice %93 {offsets = [0, 0, 0, 0, 0], sizes = [3, 1, 8, 16, 32], strides = [1, 1, 1, 1, 1]} : vector<3x2x8x16x32xbf16> to vector<3x1x8x16x32xbf16>
    %95 = vector.shape_cast %94 : vector<3x1x8x16x32xbf16> to vector<3x8x16x32xbf16>
    %96 = vector.extract_strided_slice %95 {offsets = [0, 0, 0, 0], sizes = [3, 6, 16, 32], strides = [1, 1, 1, 1]} : vector<3x8x16x32xbf16> to vector<3x6x16x32xbf16>
    %97 = vector.shape_cast %96 : vector<3x6x16x32xbf16> to vector<3x3x2x16x32xbf16>
    %98 = vector.extract_strided_slice %97 {offsets = [0, 0, 0, 0, 0], sizes = [3, 3, 1, 16, 32], strides = [1, 1, 1, 1, 1]} : vector<3x3x2x16x32xbf16> to vector<3x3x1x16x32xbf16>
    %99 = vector.shape_cast %98 : vector<3x3x1x16x32xbf16> to vector<3x3x16x32xbf16>
    %100 = vector.shape_cast %99 : vector<3x3x16x32xbf16> to vector<144x32xbf16>
    %c1_44 = arith.constant 1 : index
    %c0_45 = arith.constant 0 : index
    %c0_46 = arith.constant 0 : index
    %c0_47 = arith.constant 0 : index
    %101 = vector.load %arg4[%c1_44, %c0_45, %c0_46, %c0_47] : memref<4x4x32x64xbf16, #tpu.memory_space<vmem>>, vector<1x1x32x64xbf16>
    %102 = vector.shape_cast %101 : vector<1x1x32x64xbf16> to vector<32x64xbf16>
    %cst_48 = arith.constant dense<0.000000e+00> : vector<144x64xf32>
    %103 = tpu.matmul %100, %102, %cst_48 {dimension_numbers = #tpu.dot_dimension_numbers<[1], [0], [0], [1], [0, 0, 1, 1], [], []>} : vector<144x32xbf16>, vector<32x64xbf16>, vector<144x64xf32> -> vector<144x64xf32>
    %104 = arith.addf %91, %103 : vector<144x64xf32>
    %105 = vector.extract_strided_slice %38 {offsets = [1, 0, 0, 0], sizes = [6, 8, 16, 32], strides = [1, 1, 1, 1]} : vector<8x8x16x32xbf16> to vector<6x8x16x32xbf16>
    %106 = vector.shape_cast %105 : vector<6x8x16x32xbf16> to vector<3x2x8x16x32xbf16>
    %107 = vector.extract_strided_slice %106 {offsets = [0, 0, 0, 0, 0], sizes = [3, 1, 8, 16, 32], strides = [1, 1, 1, 1, 1]} : vector<3x2x8x16x32xbf16> to vector<3x1x8x16x32xbf16>
    %108 = vector.shape_cast %107 : vector<3x1x8x16x32xbf16> to vector<3x8x16x32xbf16>
    %109 = vector.extract_strided_slice %108 {offsets = [0, 1, 0, 0], sizes = [3, 6, 16, 32], strides = [1, 1, 1, 1]} : vector<3x8x16x32xbf16> to vector<3x6x16x32xbf16>
    %110 = vector.shape_cast %109 : vector<3x6x16x32xbf16> to vector<3x3x2x16x32xbf16>
    %111 = vector.extract_strided_slice %110 {offsets = [0, 0, 0, 0, 0], sizes = [3, 3, 1, 16, 32], strides = [1, 1, 1, 1, 1]} : vector<3x3x2x16x32xbf16> to vector<3x3x1x16x32xbf16>
    %112 = vector.shape_cast %111 : vector<3x3x1x16x32xbf16> to vector<3x3x16x32xbf16>
    %113 = vector.shape_cast %112 : vector<3x3x16x32xbf16> to vector<144x32xbf16>
    %c1_49 = arith.constant 1 : index
    %c1_50 = arith.constant 1 : index
    %c0_51 = arith.constant 0 : index
    %c0_52 = arith.constant 0 : index
    %114 = vector.load %arg4[%c1_49, %c1_50, %c0_51, %c0_52] : memref<4x4x32x64xbf16, #tpu.memory_space<vmem>>, vector<1x1x32x64xbf16>
    %115 = vector.shape_cast %114 : vector<1x1x32x64xbf16> to vector<32x64xbf16>
    %cst_53 = arith.constant dense<0.000000e+00> : vector<144x64xf32>
    %116 = tpu.matmul %113, %115, %cst_53 {dimension_numbers = #tpu.dot_dimension_numbers<[1], [0], [0], [1], [0, 0, 1, 1], [], []>} : vector<144x32xbf16>, vector<32x64xbf16>, vector<144x64xf32> -> vector<144x64xf32>
    %117 = arith.addf %104, %116 : vector<144x64xf32>
    %118 = vector.extract_strided_slice %38 {offsets = [1, 0, 0, 0], sizes = [6, 8, 16, 32], strides = [1, 1, 1, 1]} : vector<8x8x16x32xbf16> to vector<6x8x16x32xbf16>
    %119 = vector.shape_cast %118 : vector<6x8x16x32xbf16> to vector<3x2x8x16x32xbf16>
    %120 = vector.extract_strided_slice %119 {offsets = [0, 0, 0, 0, 0], sizes = [3, 1, 8, 16, 32], strides = [1, 1, 1, 1, 1]} : vector<3x2x8x16x32xbf16> to vector<3x1x8x16x32xbf16>
    %121 = vector.shape_cast %120 : vector<3x1x8x16x32xbf16> to vector<3x8x16x32xbf16>
    %122 = vector.extract_strided_slice %121 {offsets = [0, 2, 0, 0], sizes = [3, 6, 16, 32], strides = [1, 1, 1, 1]} : vector<3x8x16x32xbf16> to vector<3x6x16x32xbf16>
    %123 = vector.shape_cast %122 : vector<3x6x16x32xbf16> to vector<3x3x2x16x32xbf16>
    %124 = vector.extract_strided_slice %123 {offsets = [0, 0, 0, 0, 0], sizes = [3, 3, 1, 16, 32], strides = [1, 1, 1, 1, 1]} : vector<3x3x2x16x32xbf16> to vector<3x3x1x16x32xbf16>
    %125 = vector.shape_cast %124 : vector<3x3x1x16x32xbf16> to vector<3x3x16x32xbf16>
    %126 = vector.shape_cast %125 : vector<3x3x16x32xbf16> to vector<144x32xbf16>
    %c1_54 = arith.constant 1 : index
    %c2_55 = arith.constant 2 : index
    %c0_56 = arith.constant 0 : index
    %c0_57 = arith.constant 0 : index
    %127 = vector.load %arg4[%c1_54, %c2_55, %c0_56, %c0_57] : memref<4x4x32x64xbf16, #tpu.memory_space<vmem>>, vector<1x1x32x64xbf16>
    %128 = vector.shape_cast %127 : vector<1x1x32x64xbf16> to vector<32x64xbf16>
    %cst_58 = arith.constant dense<0.000000e+00> : vector<144x64xf32>
    %129 = tpu.matmul %126, %128, %cst_58 {dimension_numbers = #tpu.dot_dimension_numbers<[1], [0], [0], [1], [0, 0, 1, 1], [], []>} : vector<144x32xbf16>, vector<32x64xbf16>, vector<144x64xf32> -> vector<144x64xf32>
    %130 = arith.addf %117, %129 : vector<144x64xf32>
    %131 = vector.extract_strided_slice %38 {offsets = [1, 0, 0, 0], sizes = [6, 8, 16, 32], strides = [1, 1, 1, 1]} : vector<8x8x16x32xbf16> to vector<6x8x16x32xbf16>
    %132 = vector.shape_cast %131 : vector<6x8x16x32xbf16> to vector<3x2x8x16x32xbf16>
    %133 = vector.extract_strided_slice %132 {offsets = [0, 0, 0, 0, 0], sizes = [3, 1, 8, 16, 32], strides = [1, 1, 1, 1, 1]} : vector<3x2x8x16x32xbf16> to vector<3x1x8x16x32xbf16>
    %134 = vector.shape_cast %133 : vector<3x1x8x16x32xbf16> to vector<3x8x16x32xbf16>
    %135 = vector.extract_strided_slice %134 {offsets = [0, 2, 0, 0], sizes = [3, 6, 16, 32], strides = [1, 1, 1, 1]} : vector<3x8x16x32xbf16> to vector<3x6x16x32xbf16>
    %136 = vector.shape_cast %135 : vector<3x6x16x32xbf16> to vector<3x3x2x16x32xbf16>
    %137 = vector.extract_strided_slice %136 {offsets = [0, 0, 1, 0, 0], sizes = [3, 3, 1, 16, 32], strides = [1, 1, 1, 1, 1]} : vector<3x3x2x16x32xbf16> to vector<3x3x1x16x32xbf16>
    %138 = vector.shape_cast %137 : vector<3x3x1x16x32xbf16> to vector<3x3x16x32xbf16>
    %139 = vector.shape_cast %138 : vector<3x3x16x32xbf16> to vector<144x32xbf16>
    %c1_59 = arith.constant 1 : index
    %c3_60 = arith.constant 3 : index
    %c0_61 = arith.constant 0 : index
    %c0_62 = arith.constant 0 : index
    %140 = vector.load %arg4[%c1_59, %c3_60, %c0_61, %c0_62] : memref<4x4x32x64xbf16, #tpu.memory_space<vmem>>, vector<1x1x32x64xbf16>
    %141 = vector.shape_cast %140 : vector<1x1x32x64xbf16> to vector<32x64xbf16>
    %cst_63 = arith.constant dense<0.000000e+00> : vector<144x64xf32>
    %142 = tpu.matmul %139, %141, %cst_63 {dimension_numbers = #tpu.dot_dimension_numbers<[1], [0], [0], [1], [0, 0, 1, 1], [], []>} : vector<144x32xbf16>, vector<32x64xbf16>, vector<144x64xf32> -> vector<144x64xf32>
    %143 = arith.addf %130, %142 : vector<144x64xf32>
    %144 = vector.extract_strided_slice %38 {offsets = [2, 0, 0, 0], sizes = [6, 8, 16, 32], strides = [1, 1, 1, 1]} : vector<8x8x16x32xbf16> to vector<6x8x16x32xbf16>
    %145 = vector.shape_cast %144 : vector<6x8x16x32xbf16> to vector<3x2x8x16x32xbf16>
    %146 = vector.extract_strided_slice %145 {offsets = [0, 0, 0, 0, 0], sizes = [3, 1, 8, 16, 32], strides = [1, 1, 1, 1, 1]} : vector<3x2x8x16x32xbf16> to vector<3x1x8x16x32xbf16>
    %147 = vector.shape_cast %146 : vector<3x1x8x16x32xbf16> to vector<3x8x16x32xbf16>
    %148 = vector.extract_strided_slice %147 {offsets = [0, 0, 0, 0], sizes = [3, 6, 16, 32], strides = [1, 1, 1, 1]} : vector<3x8x16x32xbf16> to vector<3x6x16x32xbf16>
    %149 = vector.shape_cast %148 : vector<3x6x16x32xbf16> to vector<3x3x2x16x32xbf16>
    %150 = vector.extract_strided_slice %149 {offsets = [0, 0, 0, 0, 0], sizes = [3, 3, 1, 16, 32], strides = [1, 1, 1, 1, 1]} : vector<3x3x2x16x32xbf16> to vector<3x3x1x16x32xbf16>
    %151 = vector.shape_cast %150 : vector<3x3x1x16x32xbf16> to vector<3x3x16x32xbf16>
    %152 = vector.shape_cast %151 : vector<3x3x16x32xbf16> to vector<144x32xbf16>
    %c2_64 = arith.constant 2 : index
    %c0_65 = arith.constant 0 : index
    %c0_66 = arith.constant 0 : index
    %c0_67 = arith.constant 0 : index
    %153 = vector.load %arg4[%c2_64, %c0_65, %c0_66, %c0_67] : memref<4x4x32x64xbf16, #tpu.memory_space<vmem>>, vector<1x1x32x64xbf16>
    %154 = vector.shape_cast %153 : vector<1x1x32x64xbf16> to vector<32x64xbf16>
    %cst_68 = arith.constant dense<0.000000e+00> : vector<144x64xf32>
    %155 = tpu.matmul %152, %154, %cst_68 {dimension_numbers = #tpu.dot_dimension_numbers<[1], [0], [0], [1], [0, 0, 1, 1], [], []>} : vector<144x32xbf16>, vector<32x64xbf16>, vector<144x64xf32> -> vector<144x64xf32>
    %156 = arith.addf %143, %155 : vector<144x64xf32>
    %157 = vector.extract_strided_slice %38 {offsets = [2, 0, 0, 0], sizes = [6, 8, 16, 32], strides = [1, 1, 1, 1]} : vector<8x8x16x32xbf16> to vector<6x8x16x32xbf16>
    %158 = vector.shape_cast %157 : vector<6x8x16x32xbf16> to vector<3x2x8x16x32xbf16>
    %159 = vector.extract_strided_slice %158 {offsets = [0, 0, 0, 0, 0], sizes = [3, 1, 8, 16, 32], strides = [1, 1, 1, 1, 1]} : vector<3x2x8x16x32xbf16> to vector<3x1x8x16x32xbf16>
    %160 = vector.shape_cast %159 : vector<3x1x8x16x32xbf16> to vector<3x8x16x32xbf16>
    %161 = vector.extract_strided_slice %160 {offsets = [0, 1, 0, 0], sizes = [3, 6, 16, 32], strides = [1, 1, 1, 1]} : vector<3x8x16x32xbf16> to vector<3x6x16x32xbf16>
    %162 = vector.shape_cast %161 : vector<3x6x16x32xbf16> to vector<3x3x2x16x32xbf16>
    %163 = vector.extract_strided_slice %162 {offsets = [0, 0, 0, 0, 0], sizes = [3, 3, 1, 16, 32], strides = [1, 1, 1, 1, 1]} : vector<3x3x2x16x32xbf16> to vector<3x3x1x16x32xbf16>
    %164 = vector.shape_cast %163 : vector<3x3x1x16x32xbf16> to vector<3x3x16x32xbf16>
    %165 = vector.shape_cast %164 : vector<3x3x16x32xbf16> to vector<144x32xbf16>
    %c2_69 = arith.constant 2 : index
    %c1_70 = arith.constant 1 : index
    %c0_71 = arith.constant 0 : index
    %c0_72 = arith.constant 0 : index
    %166 = vector.load %arg4[%c2_69, %c1_70, %c0_71, %c0_72] : memref<4x4x32x64xbf16, #tpu.memory_space<vmem>>, vector<1x1x32x64xbf16>
    %167 = vector.shape_cast %166 : vector<1x1x32x64xbf16> to vector<32x64xbf16>
    %cst_73 = arith.constant dense<0.000000e+00> : vector<144x64xf32>
    %168 = tpu.matmul %165, %167, %cst_73 {dimension_numbers = #tpu.dot_dimension_numbers<[1], [0], [0], [1], [0, 0, 1, 1], [], []>} : vector<144x32xbf16>, vector<32x64xbf16>, vector<144x64xf32> -> vector<144x64xf32>
    %169 = arith.addf %156, %168 : vector<144x64xf32>
    %170 = vector.extract_strided_slice %38 {offsets = [2, 0, 0, 0], sizes = [6, 8, 16, 32], strides = [1, 1, 1, 1]} : vector<8x8x16x32xbf16> to vector<6x8x16x32xbf16>
    %171 = vector.shape_cast %170 : vector<6x8x16x32xbf16> to vector<3x2x8x16x32xbf16>
    %172 = vector.extract_strided_slice %171 {offsets = [0, 0, 0, 0, 0], sizes = [3, 1, 8, 16, 32], strides = [1, 1, 1, 1, 1]} : vector<3x2x8x16x32xbf16> to vector<3x1x8x16x32xbf16>
    %173 = vector.shape_cast %172 : vector<3x1x8x16x32xbf16> to vector<3x8x16x32xbf16>
    %174 = vector.extract_strided_slice %173 {offsets = [0, 2, 0, 0], sizes = [3, 6, 16, 32], strides = [1, 1, 1, 1]} : vector<3x8x16x32xbf16> to vector<3x6x16x32xbf16>
    %175 = vector.shape_cast %174 : vector<3x6x16x32xbf16> to vector<3x3x2x16x32xbf16>
    %176 = vector.extract_strided_slice %175 {offsets = [0, 0, 0, 0, 0], sizes = [3, 3, 1, 16, 32], strides = [1, 1, 1, 1, 1]} : vector<3x3x2x16x32xbf16> to vector<3x3x1x16x32xbf16>
    %177 = vector.shape_cast %176 : vector<3x3x1x16x32xbf16> to vector<3x3x16x32xbf16>
    %178 = vector.shape_cast %177 : vector<3x3x16x32xbf16> to vector<144x32xbf16>
    %c2_74 = arith.constant 2 : index
    %c2_75 = arith.constant 2 : index
    %c0_76 = arith.constant 0 : index
    %c0_77 = arith.constant 0 : index
    %179 = vector.load %arg4[%c2_74, %c2_75, %c0_76, %c0_77] : memref<4x4x32x64xbf16, #tpu.memory_space<vmem>>, vector<1x1x32x64xbf16>
    %180 = vector.shape_cast %179 : vector<1x1x32x64xbf16> to vector<32x64xbf16>
    %cst_78 = arith.constant dense<0.000000e+00> : vector<144x64xf32>
    %181 = tpu.matmul %178, %180, %cst_78 {dimension_numbers = #tpu.dot_dimension_numbers<[1], [0], [0], [1], [0, 0, 1, 1], [], []>} : vector<144x32xbf16>, vector<32x64xbf16>, vector<144x64xf32> -> vector<144x64xf32>
    %182 = arith.addf %169, %181 : vector<144x64xf32>
    %183 = vector.extract_strided_slice %38 {offsets = [2, 0, 0, 0], sizes = [6, 8, 16, 32], strides = [1, 1, 1, 1]} : vector<8x8x16x32xbf16> to vector<6x8x16x32xbf16>
    %184 = vector.shape_cast %183 : vector<6x8x16x32xbf16> to vector<3x2x8x16x32xbf16>
    %185 = vector.extract_strided_slice %184 {offsets = [0, 0, 0, 0, 0], sizes = [3, 1, 8, 16, 32], strides = [1, 1, 1, 1, 1]} : vector<3x2x8x16x32xbf16> to vector<3x1x8x16x32xbf16>
    %186 = vector.shape_cast %185 : vector<3x1x8x16x32xbf16> to vector<3x8x16x32xbf16>
    %187 = vector.extract_strided_slice %186 {offsets = [0, 2, 0, 0], sizes = [3, 6, 16, 32], strides = [1, 1, 1, 1]} : vector<3x8x16x32xbf16> to vector<3x6x16x32xbf16>
    %188 = vector.shape_cast %187 : vector<3x6x16x32xbf16> to vector<3x3x2x16x32xbf16>
    %189 = vector.extract_strided_slice %188 {offsets = [0, 0, 1, 0, 0], sizes = [3, 3, 1, 16, 32], strides = [1, 1, 1, 1, 1]} : vector<3x3x2x16x32xbf16> to vector<3x3x1x16x32xbf16>
    %190 = vector.shape_cast %189 : vector<3x3x1x16x32xbf16> to vector<3x3x16x32xbf16>
    %191 = vector.shape_cast %190 : vector<3x3x16x32xbf16> to vector<144x32xbf16>
    %c2_79 = arith.constant 2 : index
    %c3_80 = arith.constant 3 : index
    %c0_81 = arith.constant 0 : index
    %c0_82 = arith.constant 0 : index
    %192 = vector.load %arg4[%c2_79, %c3_80, %c0_81, %c0_82] : memref<4x4x32x64xbf16, #tpu.memory_space<vmem>>, vector<1x1x32x64xbf16>
    %193 = vector.shape_cast %192 : vector<1x1x32x64xbf16> to vector<32x64xbf16>
    %cst_83 = arith.constant dense<0.000000e+00> : vector<144x64xf32>
    %194 = tpu.matmul %191, %193, %cst_83 {dimension_numbers = #tpu.dot_dimension_numbers<[1], [0], [0], [1], [0, 0, 1, 1], [], []>} : vector<144x32xbf16>, vector<32x64xbf16>, vector<144x64xf32> -> vector<144x64xf32>
    %195 = arith.addf %182, %194 : vector<144x64xf32>
    %196 = vector.extract_strided_slice %38 {offsets = [2, 0, 0, 0], sizes = [6, 8, 16, 32], strides = [1, 1, 1, 1]} : vector<8x8x16x32xbf16> to vector<6x8x16x32xbf16>
    %197 = vector.shape_cast %196 : vector<6x8x16x32xbf16> to vector<3x2x8x16x32xbf16>
    %198 = vector.extract_strided_slice %197 {offsets = [0, 1, 0, 0, 0], sizes = [3, 1, 8, 16, 32], strides = [1, 1, 1, 1, 1]} : vector<3x2x8x16x32xbf16> to vector<3x1x8x16x32xbf16>
    %199 = vector.shape_cast %198 : vector<3x1x8x16x32xbf16> to vector<3x8x16x32xbf16>
    %200 = vector.extract_strided_slice %199 {offsets = [0, 0, 0, 0], sizes = [3, 6, 16, 32], strides = [1, 1, 1, 1]} : vector<3x8x16x32xbf16> to vector<3x6x16x32xbf16>
    %201 = vector.shape_cast %200 : vector<3x6x16x32xbf16> to vector<3x3x2x16x32xbf16>
    %202 = vector.extract_strided_slice %201 {offsets = [0, 0, 0, 0, 0], sizes = [3, 3, 1, 16, 32], strides = [1, 1, 1, 1, 1]} : vector<3x3x2x16x32xbf16> to vector<3x3x1x16x32xbf16>
    %203 = vector.shape_cast %202 : vector<3x3x1x16x32xbf16> to vector<3x3x16x32xbf16>
    %204 = vector.shape_cast %203 : vector<3x3x16x32xbf16> to vector<144x32xbf16>
    %c3_84 = arith.constant 3 : index
    %c0_85 = arith.constant 0 : index
    %c0_86 = arith.constant 0 : index
    %c0_87 = arith.constant 0 : index
    %205 = vector.load %arg4[%c3_84, %c0_85, %c0_86, %c0_87] : memref<4x4x32x64xbf16, #tpu.memory_space<vmem>>, vector<1x1x32x64xbf16>
    %206 = vector.shape_cast %205 : vector<1x1x32x64xbf16> to vector<32x64xbf16>
    %cst_88 = arith.constant dense<0.000000e+00> : vector<144x64xf32>
    %207 = tpu.matmul %204, %206, %cst_88 {dimension_numbers = #tpu.dot_dimension_numbers<[1], [0], [0], [1], [0, 0, 1, 1], [], []>} : vector<144x32xbf16>, vector<32x64xbf16>, vector<144x64xf32> -> vector<144x64xf32>
    %208 = arith.addf %195, %207 : vector<144x64xf32>
    %209 = vector.extract_strided_slice %38 {offsets = [2, 0, 0, 0], sizes = [6, 8, 16, 32], strides = [1, 1, 1, 1]} : vector<8x8x16x32xbf16> to vector<6x8x16x32xbf16>
    %210 = vector.shape_cast %209 : vector<6x8x16x32xbf16> to vector<3x2x8x16x32xbf16>
    %211 = vector.extract_strided_slice %210 {offsets = [0, 1, 0, 0, 0], sizes = [3, 1, 8, 16, 32], strides = [1, 1, 1, 1, 1]} : vector<3x2x8x16x32xbf16> to vector<3x1x8x16x32xbf16>
    %212 = vector.shape_cast %211 : vector<3x1x8x16x32xbf16> to vector<3x8x16x32xbf16>
    %213 = vector.extract_strided_slice %212 {offsets = [0, 1, 0, 0], sizes = [3, 6, 16, 32], strides = [1, 1, 1, 1]} : vector<3x8x16x32xbf16> to vector<3x6x16x32xbf16>
    %214 = vector.shape_cast %213 : vector<3x6x16x32xbf16> to vector<3x3x2x16x32xbf16>
    %215 = vector.extract_strided_slice %214 {offsets = [0, 0, 0, 0, 0], sizes = [3, 3, 1, 16, 32], strides = [1, 1, 1, 1, 1]} : vector<3x3x2x16x32xbf16> to vector<3x3x1x16x32xbf16>
    %216 = vector.shape_cast %215 : vector<3x3x1x16x32xbf16> to vector<3x3x16x32xbf16>
    %217 = vector.shape_cast %216 : vector<3x3x16x32xbf16> to vector<144x32xbf16>
    %c3_89 = arith.constant 3 : index
    %c1_90 = arith.constant 1 : index
    %c0_91 = arith.constant 0 : index
    %c0_92 = arith.constant 0 : index
    %218 = vector.load %arg4[%c3_89, %c1_90, %c0_91, %c0_92] : memref<4x4x32x64xbf16, #tpu.memory_space<vmem>>, vector<1x1x32x64xbf16>
    %219 = vector.shape_cast %218 : vector<1x1x32x64xbf16> to vector<32x64xbf16>
    %cst_93 = arith.constant dense<0.000000e+00> : vector<144x64xf32>
    %220 = tpu.matmul %217, %219, %cst_93 {dimension_numbers = #tpu.dot_dimension_numbers<[1], [0], [0], [1], [0, 0, 1, 1], [], []>} : vector<144x32xbf16>, vector<32x64xbf16>, vector<144x64xf32> -> vector<144x64xf32>
    %221 = arith.addf %208, %220 : vector<144x64xf32>
    %222 = vector.extract_strided_slice %38 {offsets = [2, 0, 0, 0], sizes = [6, 8, 16, 32], strides = [1, 1, 1, 1]} : vector<8x8x16x32xbf16> to vector<6x8x16x32xbf16>
    %223 = vector.shape_cast %222 : vector<6x8x16x32xbf16> to vector<3x2x8x16x32xbf16>
    %224 = vector.extract_strided_slice %223 {offsets = [0, 1, 0, 0, 0], sizes = [3, 1, 8, 16, 32], strides = [1, 1, 1, 1, 1]} : vector<3x2x8x16x32xbf16> to vector<3x1x8x16x32xbf16>
    %225 = vector.shape_cast %224 : vector<3x1x8x16x32xbf16> to vector<3x8x16x32xbf16>
    %226 = vector.extract_strided_slice %225 {offsets = [0, 2, 0, 0], sizes = [3, 6, 16, 32], strides = [1, 1, 1, 1]} : vector<3x8x16x32xbf16> to vector<3x6x16x32xbf16>
    %227 = vector.shape_cast %226 : vector<3x6x16x32xbf16> to vector<3x3x2x16x32xbf16>
    %228 = vector.extract_strided_slice %227 {offsets = [0, 0, 0, 0, 0], sizes = [3, 3, 1, 16, 32], strides = [1, 1, 1, 1, 1]} : vector<3x3x2x16x32xbf16> to vector<3x3x1x16x32xbf16>
    %229 = vector.shape_cast %228 : vector<3x3x1x16x32xbf16> to vector<3x3x16x32xbf16>
    %230 = vector.shape_cast %229 : vector<3x3x16x32xbf16> to vector<144x32xbf16>
    %c3_94 = arith.constant 3 : index
    %c2_95 = arith.constant 2 : index
    %c0_96 = arith.constant 0 : index
    %c0_97 = arith.constant 0 : index
    %231 = vector.load %arg4[%c3_94, %c2_95, %c0_96, %c0_97] : memref<4x4x32x64xbf16, #tpu.memory_space<vmem>>, vector<1x1x32x64xbf16>
    %232 = vector.shape_cast %231 : vector<1x1x32x64xbf16> to vector<32x64xbf16>
    %cst_98 = arith.constant dense<0.000000e+00> : vector<144x64xf32>
    %233 = tpu.matmul %230, %232, %cst_98 {dimension_numbers = #tpu.dot_dimension_numbers<[1], [0], [0], [1], [0, 0, 1, 1], [], []>} : vector<144x32xbf16>, vector<32x64xbf16>, vector<144x64xf32> -> vector<144x64xf32>
    %234 = arith.addf %221, %233 : vector<144x64xf32>
    %235 = vector.extract_strided_slice %38 {offsets = [2, 0, 0, 0], sizes = [6, 8, 16, 32], strides = [1, 1, 1, 1]} : vector<8x8x16x32xbf16> to vector<6x8x16x32xbf16>
    %236 = vector.shape_cast %235 : vector<6x8x16x32xbf16> to vector<3x2x8x16x32xbf16>
    %237 = vector.extract_strided_slice %236 {offsets = [0, 1, 0, 0, 0], sizes = [3, 1, 8, 16, 32], strides = [1, 1, 1, 1, 1]} : vector<3x2x8x16x32xbf16> to vector<3x1x8x16x32xbf16>
    %238 = vector.shape_cast %237 : vector<3x1x8x16x32xbf16> to vector<3x8x16x32xbf16>
    %239 = vector.extract_strided_slice %238 {offsets = [0, 2, 0, 0], sizes = [3, 6, 16, 32], strides = [1, 1, 1, 1]} : vector<3x8x16x32xbf16> to vector<3x6x16x32xbf16>
    %240 = vector.shape_cast %239 : vector<3x6x16x32xbf16> to vector<3x3x2x16x32xbf16>
    %241 = vector.extract_strided_slice %240 {offsets = [0, 0, 1, 0, 0], sizes = [3, 3, 1, 16, 32], strides = [1, 1, 1, 1, 1]} : vector<3x3x2x16x32xbf16> to vector<3x3x1x16x32xbf16>
    %242 = vector.shape_cast %241 : vector<3x3x1x16x32xbf16> to vector<3x3x16x32xbf16>
    %243 = vector.shape_cast %242 : vector<3x3x16x32xbf16> to vector<144x32xbf16>
    %c3_99 = arith.constant 3 : index
    %c3_100 = arith.constant 3 : index
    %c0_101 = arith.constant 0 : index
    %c0_102 = arith.constant 0 : index
    %244 = vector.load %arg4[%c3_99, %c3_100, %c0_101, %c0_102] : memref<4x4x32x64xbf16, #tpu.memory_space<vmem>>, vector<1x1x32x64xbf16>
    %245 = vector.shape_cast %244 : vector<1x1x32x64xbf16> to vector<32x64xbf16>
    %cst_103 = arith.constant dense<0.000000e+00> : vector<144x64xf32>
    %246 = tpu.matmul %243, %245, %cst_103 {dimension_numbers = #tpu.dot_dimension_numbers<[1], [0], [0], [1], [0, 0, 1, 1], [], []>} : vector<144x32xbf16>, vector<32x64xbf16>, vector<144x64xf32> -> vector<144x64xf32>
    %247 = arith.addf %234, %246 : vector<144x64xf32>
    %c0_104 = arith.constant 0 : index
    %c0_105 = arith.constant 0 : index
    %248 = vector.load %arg5[%c0_104, %c0_105] : memref<1x64xf32, #tpu.memory_space<vmem>>, vector<1x64xf32>
    %249 = vector.broadcast %248 : vector<1x64xf32> to vector<144x64xf32>
    %250 = arith.addf %247, %249 : vector<144x64xf32>
    %cst_106 = arith.constant 0.000000e+00 : f32
    %251 = vector.broadcast %cst_106 : f32 to vector<144x64xf32>
    %252 = arith.maximumf %250, %251 : vector<144x64xf32>
    %253 = arith.truncf %252 : vector<144x64xf32> to vector<144x64xbf16>
    %254 = vector.shape_cast %253 : vector<144x64xbf16> to vector<3x3x16x64xbf16>
    %cst_107 = arith.constant 0.000000e+00 : f32
    %255 = vector.broadcast %cst_107 : f32 to vector<16x64xf32>
    %256 = vector.extract_strided_slice %254 {offsets = [0, 0, 0, 0], sizes = [1, 3, 16, 64], strides = [1, 1, 1, 1]} : vector<3x3x16x64xbf16> to vector<1x3x16x64xbf16>
    %257 = vector.extract_strided_slice %256 {offsets = [0, 0, 0, 0], sizes = [1, 1, 16, 64], strides = [1, 1, 1, 1]} : vector<1x3x16x64xbf16> to vector<1x1x16x64xbf16>
    %258 = vector.shape_cast %257 : vector<1x1x16x64xbf16> to vector<16x64xbf16>
    %c0_108 = arith.constant 0 : index
    %c0_109 = arith.constant 0 : index
    %c0_110 = arith.constant 0 : index
    %c0_111 = arith.constant 0 : index
    %259 = vector.load %arg6[%c0_108, %c0_109, %c0_110, %c0_111] : memref<3x3x64x64xbf16, #tpu.memory_space<vmem>>, vector<1x1x64x64xbf16>
    %260 = vector.shape_cast %259 : vector<1x1x64x64xbf16> to vector<64x64xbf16>
    %cst_112 = arith.constant dense<0.000000e+00> : vector<16x64xf32>
    %261 = tpu.matmul %258, %260, %cst_112 {dimension_numbers = #tpu.dot_dimension_numbers<[1], [0], [0], [1], [0, 0, 1, 1], [], []>} : vector<16x64xbf16>, vector<64x64xbf16>, vector<16x64xf32> -> vector<16x64xf32>
    %262 = arith.addf %255, %261 : vector<16x64xf32>
    %263 = vector.extract_strided_slice %254 {offsets = [0, 0, 0, 0], sizes = [1, 3, 16, 64], strides = [1, 1, 1, 1]} : vector<3x3x16x64xbf16> to vector<1x3x16x64xbf16>
    %264 = vector.extract_strided_slice %263 {offsets = [0, 1, 0, 0], sizes = [1, 1, 16, 64], strides = [1, 1, 1, 1]} : vector<1x3x16x64xbf16> to vector<1x1x16x64xbf16>
    %265 = vector.shape_cast %264 : vector<1x1x16x64xbf16> to vector<16x64xbf16>
    %c0_113 = arith.constant 0 : index
    %c1_114 = arith.constant 1 : index
    %c0_115 = arith.constant 0 : index
    %c0_116 = arith.constant 0 : index
    %266 = vector.load %arg6[%c0_113, %c1_114, %c0_115, %c0_116] : memref<3x3x64x64xbf16, #tpu.memory_space<vmem>>, vector<1x1x64x64xbf16>
    %267 = vector.shape_cast %266 : vector<1x1x64x64xbf16> to vector<64x64xbf16>
    %cst_117 = arith.constant dense<0.000000e+00> : vector<16x64xf32>
    %268 = tpu.matmul %265, %267, %cst_117 {dimension_numbers = #tpu.dot_dimension_numbers<[1], [0], [0], [1], [0, 0, 1, 1], [], []>} : vector<16x64xbf16>, vector<64x64xbf16>, vector<16x64xf32> -> vector<16x64xf32>
    %269 = arith.addf %262, %268 : vector<16x64xf32>
    %270 = vector.extract_strided_slice %254 {offsets = [0, 0, 0, 0], sizes = [1, 3, 16, 64], strides = [1, 1, 1, 1]} : vector<3x3x16x64xbf16> to vector<1x3x16x64xbf16>
    %271 = vector.extract_strided_slice %270 {offsets = [0, 2, 0, 0], sizes = [1, 1, 16, 64], strides = [1, 1, 1, 1]} : vector<1x3x16x64xbf16> to vector<1x1x16x64xbf16>
    %272 = vector.shape_cast %271 : vector<1x1x16x64xbf16> to vector<16x64xbf16>
    %c0_118 = arith.constant 0 : index
    %c2_119 = arith.constant 2 : index
    %c0_120 = arith.constant 0 : index
    %c0_121 = arith.constant 0 : index
    %273 = vector.load %arg6[%c0_118, %c2_119, %c0_120, %c0_121] : memref<3x3x64x64xbf16, #tpu.memory_space<vmem>>, vector<1x1x64x64xbf16>
    %274 = vector.shape_cast %273 : vector<1x1x64x64xbf16> to vector<64x64xbf16>
    %cst_122 = arith.constant dense<0.000000e+00> : vector<16x64xf32>
    %275 = tpu.matmul %272, %274, %cst_122 {dimension_numbers = #tpu.dot_dimension_numbers<[1], [0], [0], [1], [0, 0, 1, 1], [], []>} : vector<16x64xbf16>, vector<64x64xbf16>, vector<16x64xf32> -> vector<16x64xf32>
    %276 = arith.addf %269, %275 : vector<16x64xf32>
    %277 = vector.extract_strided_slice %254 {offsets = [1, 0, 0, 0], sizes = [1, 3, 16, 64], strides = [1, 1, 1, 1]} : vector<3x3x16x64xbf16> to vector<1x3x16x64xbf16>
    %278 = vector.extract_strided_slice %277 {offsets = [0, 0, 0, 0], sizes = [1, 1, 16, 64], strides = [1, 1, 1, 1]} : vector<1x3x16x64xbf16> to vector<1x1x16x64xbf16>
    %279 = vector.shape_cast %278 : vector<1x1x16x64xbf16> to vector<16x64xbf16>
    %c1_123 = arith.constant 1 : index
    %c0_124 = arith.constant 0 : index
    %c0_125 = arith.constant 0 : index
    %c0_126 = arith.constant 0 : index
    %280 = vector.load %arg6[%c1_123, %c0_124, %c0_125, %c0_126] : memref<3x3x64x64xbf16, #tpu.memory_space<vmem>>, vector<1x1x64x64xbf16>
    %281 = vector.shape_cast %280 : vector<1x1x64x64xbf16> to vector<64x64xbf16>
    %cst_127 = arith.constant dense<0.000000e+00> : vector<16x64xf32>
    %282 = tpu.matmul %279, %281, %cst_127 {dimension_numbers = #tpu.dot_dimension_numbers<[1], [0], [0], [1], [0, 0, 1, 1], [], []>} : vector<16x64xbf16>, vector<64x64xbf16>, vector<16x64xf32> -> vector<16x64xf32>
    %283 = arith.addf %276, %282 : vector<16x64xf32>
    %284 = vector.extract_strided_slice %254 {offsets = [1, 0, 0, 0], sizes = [1, 3, 16, 64], strides = [1, 1, 1, 1]} : vector<3x3x16x64xbf16> to vector<1x3x16x64xbf16>
    %285 = vector.extract_strided_slice %284 {offsets = [0, 1, 0, 0], sizes = [1, 1, 16, 64], strides = [1, 1, 1, 1]} : vector<1x3x16x64xbf16> to vector<1x1x16x64xbf16>
    %286 = vector.shape_cast %285 : vector<1x1x16x64xbf16> to vector<16x64xbf16>
    %c1_128 = arith.constant 1 : index
    %c1_129 = arith.constant 1 : index
    %c0_130 = arith.constant 0 : index
    %c0_131 = arith.constant 0 : index
    %287 = vector.load %arg6[%c1_128, %c1_129, %c0_130, %c0_131] : memref<3x3x64x64xbf16, #tpu.memory_space<vmem>>, vector<1x1x64x64xbf16>
    %288 = vector.shape_cast %287 : vector<1x1x64x64xbf16> to vector<64x64xbf16>
    %cst_132 = arith.constant dense<0.000000e+00> : vector<16x64xf32>
    %289 = tpu.matmul %286, %288, %cst_132 {dimension_numbers = #tpu.dot_dimension_numbers<[1], [0], [0], [1], [0, 0, 1, 1], [], []>} : vector<16x64xbf16>, vector<64x64xbf16>, vector<16x64xf32> -> vector<16x64xf32>
    %290 = arith.addf %283, %289 : vector<16x64xf32>
    %291 = vector.extract_strided_slice %254 {offsets = [1, 0, 0, 0], sizes = [1, 3, 16, 64], strides = [1, 1, 1, 1]} : vector<3x3x16x64xbf16> to vector<1x3x16x64xbf16>
    %292 = vector.extract_strided_slice %291 {offsets = [0, 2, 0, 0], sizes = [1, 1, 16, 64], strides = [1, 1, 1, 1]} : vector<1x3x16x64xbf16> to vector<1x1x16x64xbf16>
    %293 = vector.shape_cast %292 : vector<1x1x16x64xbf16> to vector<16x64xbf16>
    %c1_133 = arith.constant 1 : index
    %c2_134 = arith.constant 2 : index
    %c0_135 = arith.constant 0 : index
    %c0_136 = arith.constant 0 : index
    %294 = vector.load %arg6[%c1_133, %c2_134, %c0_135, %c0_136] : memref<3x3x64x64xbf16, #tpu.memory_space<vmem>>, vector<1x1x64x64xbf16>
    %295 = vector.shape_cast %294 : vector<1x1x64x64xbf16> to vector<64x64xbf16>
    %cst_137 = arith.constant dense<0.000000e+00> : vector<16x64xf32>
    %296 = tpu.matmul %293, %295, %cst_137 {dimension_numbers = #tpu.dot_dimension_numbers<[1], [0], [0], [1], [0, 0, 1, 1], [], []>} : vector<16x64xbf16>, vector<64x64xbf16>, vector<16x64xf32> -> vector<16x64xf32>
    %297 = arith.addf %290, %296 : vector<16x64xf32>
    %298 = vector.extract_strided_slice %254 {offsets = [2, 0, 0, 0], sizes = [1, 3, 16, 64], strides = [1, 1, 1, 1]} : vector<3x3x16x64xbf16> to vector<1x3x16x64xbf16>
    %299 = vector.extract_strided_slice %298 {offsets = [0, 0, 0, 0], sizes = [1, 1, 16, 64], strides = [1, 1, 1, 1]} : vector<1x3x16x64xbf16> to vector<1x1x16x64xbf16>
    %300 = vector.shape_cast %299 : vector<1x1x16x64xbf16> to vector<16x64xbf16>
    %c2_138 = arith.constant 2 : index
    %c0_139 = arith.constant 0 : index
    %c0_140 = arith.constant 0 : index
    %c0_141 = arith.constant 0 : index
    %301 = vector.load %arg6[%c2_138, %c0_139, %c0_140, %c0_141] : memref<3x3x64x64xbf16, #tpu.memory_space<vmem>>, vector<1x1x64x64xbf16>
    %302 = vector.shape_cast %301 : vector<1x1x64x64xbf16> to vector<64x64xbf16>
    %cst_142 = arith.constant dense<0.000000e+00> : vector<16x64xf32>
    %303 = tpu.matmul %300, %302, %cst_142 {dimension_numbers = #tpu.dot_dimension_numbers<[1], [0], [0], [1], [0, 0, 1, 1], [], []>} : vector<16x64xbf16>, vector<64x64xbf16>, vector<16x64xf32> -> vector<16x64xf32>
    %304 = arith.addf %297, %303 : vector<16x64xf32>
    %305 = vector.extract_strided_slice %254 {offsets = [2, 0, 0, 0], sizes = [1, 3, 16, 64], strides = [1, 1, 1, 1]} : vector<3x3x16x64xbf16> to vector<1x3x16x64xbf16>
    %306 = vector.extract_strided_slice %305 {offsets = [0, 1, 0, 0], sizes = [1, 1, 16, 64], strides = [1, 1, 1, 1]} : vector<1x3x16x64xbf16> to vector<1x1x16x64xbf16>
    %307 = vector.shape_cast %306 : vector<1x1x16x64xbf16> to vector<16x64xbf16>
    %c2_143 = arith.constant 2 : index
    %c1_144 = arith.constant 1 : index
    %c0_145 = arith.constant 0 : index
    %c0_146 = arith.constant 0 : index
    %308 = vector.load %arg6[%c2_143, %c1_144, %c0_145, %c0_146] : memref<3x3x64x64xbf16, #tpu.memory_space<vmem>>, vector<1x1x64x64xbf16>
    %309 = vector.shape_cast %308 : vector<1x1x64x64xbf16> to vector<64x64xbf16>
    %cst_147 = arith.constant dense<0.000000e+00> : vector<16x64xf32>
    %310 = tpu.matmul %307, %309, %cst_147 {dimension_numbers = #tpu.dot_dimension_numbers<[1], [0], [0], [1], [0, 0, 1, 1], [], []>} : vector<16x64xbf16>, vector<64x64xbf16>, vector<16x64xf32> -> vector<16x64xf32>
    %311 = arith.addf %304, %310 : vector<16x64xf32>
    %312 = vector.extract_strided_slice %254 {offsets = [2, 0, 0, 0], sizes = [1, 3, 16, 64], strides = [1, 1, 1, 1]} : vector<3x3x16x64xbf16> to vector<1x3x16x64xbf16>
    %313 = vector.extract_strided_slice %312 {offsets = [0, 2, 0, 0], sizes = [1, 1, 16, 64], strides = [1, 1, 1, 1]} : vector<1x3x16x64xbf16> to vector<1x1x16x64xbf16>
    %314 = vector.shape_cast %313 : vector<1x1x16x64xbf16> to vector<16x64xbf16>
    %c2_148 = arith.constant 2 : index
    %c2_149 = arith.constant 2 : index
    %c0_150 = arith.constant 0 : index
    %c0_151 = arith.constant 0 : index
    %315 = vector.load %arg6[%c2_148, %c2_149, %c0_150, %c0_151] : memref<3x3x64x64xbf16, #tpu.memory_space<vmem>>, vector<1x1x64x64xbf16>
    %316 = vector.shape_cast %315 : vector<1x1x64x64xbf16> to vector<64x64xbf16>
    %cst_152 = arith.constant dense<0.000000e+00> : vector<16x64xf32>
    %317 = tpu.matmul %314, %316, %cst_152 {dimension_numbers = #tpu.dot_dimension_numbers<[1], [0], [0], [1], [0, 0, 1, 1], [], []>} : vector<16x64xbf16>, vector<64x64xbf16>, vector<16x64xf32> -> vector<16x64xf32>
    %318 = arith.addf %311, %317 : vector<16x64xf32>
    %c0_153 = arith.constant 0 : index
    %c0_154 = arith.constant 0 : index
    %319 = vector.load %arg7[%c0_153, %c0_154] : memref<1x64xf32, #tpu.memory_space<vmem>>, vector<1x64xf32>
    %320 = vector.broadcast %319 : vector<1x64xf32> to vector<16x64xf32>
    %321 = arith.addf %318, %320 : vector<16x64xf32>
    %cst_155 = arith.constant 0.000000e+00 : f32
    %322 = vector.broadcast %cst_155 : f32 to vector<16x64xf32>
    %323 = arith.maximumf %321, %322 : vector<16x64xf32>
    %324 = arith.truncf %323 : vector<16x64xf32> to vector<16x64xbf16>
    %325 = vector.shape_cast %324 : vector<16x64xbf16> to vector<1x1x16x64xbf16>
    %cst_156 = arith.constant 0.000000e+00 : f32
    %326 = vector.broadcast %cst_156 : f32 to vector<16x512xf32>
    %327 = vector.shape_cast %325 : vector<1x1x16x64xbf16> to vector<16x64xbf16>
    %c0_157 = arith.constant 0 : index
    %c0_158 = arith.constant 0 : index
    %c0_159 = arith.constant 0 : index
    %328 = vector.load %arg8[%c0_157, %c0_158, %c0_159] : memref<1x64x512xbf16, #tpu.memory_space<vmem>>, vector<1x64x512xbf16>
    %329 = vector.shape_cast %328 : vector<1x64x512xbf16> to vector<64x512xbf16>
    %cst_160 = arith.constant dense<0.000000e+00> : vector<16x512xf32>
    %330 = tpu.matmul %327, %329, %cst_160 {dimension_numbers = #tpu.dot_dimension_numbers<[1], [0], [0], [1], [0, 0, 1, 1], [], []>} : vector<16x64xbf16>, vector<64x512xbf16>, vector<16x512xf32> -> vector<16x512xf32>
    %331 = arith.addf %326, %330 : vector<16x512xf32>
    %c0_161 = arith.constant 0 : index
    %c0_162 = arith.constant 0 : index
    %332 = vector.load %arg9[%c0_161, %c0_162] : memref<1x512xf32, #tpu.memory_space<vmem>>, vector<1x512xf32>
    %333 = vector.broadcast %332 : vector<1x512xf32> to vector<16x512xf32>
    %334 = arith.addf %331, %333 : vector<16x512xf32>
    %cst_163 = arith.constant 0.000000e+00 : f32
    %335 = vector.broadcast %cst_163 : f32 to vector<16x512xf32>
    %336 = arith.maximumf %334, %335 : vector<16x512xf32>
    %337 = arith.truncf %336 : vector<16x512xf32> to vector<16x512xbf16>
    %c0_164 = arith.constant 0 : index
    %c0_165 = arith.constant 0 : index
    %338 = vector.load %arg10[%c0_164, %c0_165] : memref<512x6xbf16, #tpu.memory_space<vmem>>, vector<512x6xbf16>
    %cst_166 = arith.constant dense<0.000000e+00> : vector<16x6xf32>
    %339 = tpu.matmul %337, %338, %cst_166 {dimension_numbers = #tpu.dot_dimension_numbers<[1], [0], [0], [1], [0, 0, 1, 1], [], []>} : vector<16x512xbf16>, vector<512x6xbf16>, vector<16x6xf32> -> vector<16x6xf32>
    %c0_167 = arith.constant 0 : index
    %c0_168 = arith.constant 0 : index
    %340 = vector.load %arg11[%c0_167, %c0_168] : memref<1x6xf32, #tpu.memory_space<vmem>>, vector<1x6xf32>
    %341 = vector.broadcast %340 : vector<1x6xf32> to vector<16x6xf32>
    %342 = arith.addf %339, %341 : vector<16x6xf32>
    %c0_169 = arith.constant 0 : index
    %c0_170 = arith.constant 0 : index
    %343 = vector.load %arg12[%c0_169, %c0_170] : memref<16x6xf32, #tpu.memory_space<vmem>>, vector<16x6xf32>
    tpu.vector_store %arg12[%c0_169, %c0_170], %342 {strides = array<i32>} : memref<16x6xf32, #tpu.memory_space<vmem>>, vector<16x6xf32>,
    return
  }
  func.func @transform_0(%arg0: i32) -> (i32, i32, i32, i32) {
    %c0_i32 = arith.constant 0 : i32
    %c0_i32_0 = arith.constant 0 : i32
    %c0_i32_1 = arith.constant 0 : i32
    %c0_i32_2 = arith.constant 0 : i32
    return %c0_i32, %c0_i32_0, %arg0, %c0_i32_1 : i32, i32, i32, i32
  }
  func.func @transform_1(%arg0: i32) -> (i32, i32, i32, i32) {
    %c0_i32 = arith.constant 0 : i32
    %c0_i32_0 = arith.constant 0 : i32
    %c0_i32_1 = arith.constant 0 : i32
    %c0_i32_2 = arith.constant 0 : i32
    %c0_i32_3 = arith.constant 0 : i32
    return %c0_i32, %c0_i32_0, %c0_i32_1, %c0_i32_2 : i32, i32, i32, i32
  }
  func.func @transform_2(%arg0: i32) -> (i32, i32) {
    %c0_i32 = arith.constant 0 : i32
    %c0_i32_0 = arith.constant 0 : i32
    %c0_i32_1 = arith.constant 0 : i32
    return %c0_i32, %c0_i32_0 : i32, i32
  }
  func.func @transform_3(%arg0: i32) -> (i32, i32, i32, i32) {
    %c0_i32 = arith.constant 0 : i32
    %c0_i32_0 = arith.constant 0 : i32
    %c0_i32_1 = arith.constant 0 : i32
    %c0_i32_2 = arith.constant 0 : i32
    %c0_i32_3 = arith.constant 0 : i32
    return %c0_i32, %c0_i32_0, %c0_i32_1, %c0_i32_2 : i32, i32, i32, i32
  }
  func.func @transform_4(%arg0: i32) -> (i32, i32) {
    %c0_i32 = arith.constant 0 : i32
    %c0_i32_0 = arith.constant 0 : i32
    %c0_i32_1 = arith.constant 0 : i32
    return %c0_i32, %c0_i32_0 : i32, i32
  }
  func.func @transform_5(%arg0: i32) -> (i32, i32, i32, i32) {
    %c0_i32 = arith.constant 0 : i32
    %c0_i32_0 = arith.constant 0 : i32
    %c0_i32_1 = arith.constant 0 : i32
    %c0_i32_2 = arith.constant 0 : i32
    %c0_i32_3 = arith.constant 0 : i32
    return %c0_i32, %c0_i32_0, %c0_i32_1, %c0_i32_2 : i32, i32, i32, i32
  }
  func.func @transform_6(%arg0: i32) -> (i32, i32) {
    %c0_i32 = arith.constant 0 : i32
    %c0_i32_0 = arith.constant 0 : i32
    %c0_i32_1 = arith.constant 0 : i32
    return %c0_i32, %c0_i32_0 : i32, i32
  }
  func.func @transform_7(%arg0: i32) -> (i32, i32, i32) {
    %c0_i32 = arith.constant 0 : i32
    %c0_i32_0 = arith.constant 0 : i32
    %c0_i32_1 = arith.constant 0 : i32
    %c0_i32_2 = arith.constant 0 : i32
    return %c0_i32, %c0_i32_0, %c0_i32_1 : i32, i32, i32
  }
  func.func @transform_8(%arg0: i32) -> (i32, i32) {
    %c0_i32 = arith.constant 0 : i32
    %c0_i32_0 = arith.constant 0 : i32
    %c0_i32_1 = arith.constant 0 : i32
    return %c0_i32, %c0_i32_0 : i32, i32
  }
  func.func @transform_9(%arg0: i32) -> (i32, i32) {
    %c0_i32 = arith.constant 0 : i32
    %c0_i32_0 = arith.constant 0 : i32
    %c0_i32_1 = arith.constant 0 : i32
    return %c0_i32, %c0_i32_0 : i32, i32
  }
  func.func @transform_10(%arg0: i32) -> (i32, i32) {
    %c0_i32 = arith.constant 0 : i32
    %c0_i32_0 = arith.constant 0 : i32
    %c0_i32_1 = arith.constant 0 : i32
    return %c0_i32, %c0_i32_0 : i32, i32
  }
  func.func @transform_11(%arg0: i32) -> (i32, i32) {
    %c0_i32 = arith.constant 0 : i32
    %c0_i32_0 = arith.constant 0 : i32
    return %arg0, %c0_i32 : i32, i32
  }
}

</mosaic_0001>

<llo_original>
// kernel: a_call__.1
$region0: #{a_call__.1}
  #allocation0 [shape = 'u32[]', space=smem, size = 0x4, offset = 0x4, fixed_abs, tag = 'smem constant byte address 0x4 - core index']
  #allocation1 [shape = 'u32[144,128]{1,0:T(1,128)}', space=vmem, size = 0x12000, scoped, tag = 'internal scratch']
  %s0 = inlined_call_operand.vmem [shape: u8[9,9,16,64], index: 0, kind: input, shape index: {}]
  %s1 = inlined_call_operand.vmem [shape: bf16[2,2,64,32], index: 1, kind: input, shape index: {}]
  %s2 = inlined_call_operand.vmem [shape: f32[1,32], index: 2, kind: input, shape index: {}]
  %s3 = inlined_call_operand.vmem [shape: bf16[4,4,32,64], index: 3, kind: input, shape index: {}]
  %s4 = inlined_call_operand.vmem [shape: f32[1,64], index: 4, kind: input, shape index: {}]
  %s5 = inlined_call_operand.vmem [shape: bf16[3,3,64,64], index: 5, kind: input, shape index: {}]
  %s6 = inlined_call_operand.vmem [shape: f32[1,64], index: 6, kind: input, shape index: {}]
  %s7 = inlined_call_operand.vmem [shape: bf16[1,64,512], index: 7, kind: input, shape index: {}]
  %s8 = inlined_call_operand.vmem [shape: f32[1,512], index: 8, kind: input, shape index: {}]
  %s9 = inlined_call_operand.vmem [shape: bf16[512,6], index: 9, kind: input, shape index: {}]
  %s10 = inlined_call_operand.vmem [shape: f32[1,6], index: 10, kind: input, shape index: {}]
  %s11 = inlined_call_operand.vmem [shape: f32[16,6], index: 11, kind: output, shape index: {}]
  %s12 = sld [smem:[#allocation0]]
  $region54: #{a_call__.1} parent=0
    _
  %s14 = ssub.s32 1, %s12
  %s15 = scalar_select 0, %s14, %s12
  // Predicated region
  $region2: #{a_call__.1} parent=0 // pred_check
    _
  $region3: #{a_call__.1} parent=0 // pred_check_branch
    %17 = sbr.rel (0) target = $region5
  $region4: #{a_call__.1} parent=0 // pred_region
    _
  $region5: #{a_call__.1} parent=0 // pred_fallthru
    _
  // Predicated region
  $region6: #{a_call__.1} parent=0 // pred_check
    _
  $region7: #{a_call__.1} parent=0 // pred_check_branch
    %19 = sbr.rel (0) target = $region9
  $region8: #{a_call__.1} parent=0 // pred_region
    _
  $region9: #{a_call__.1} parent=0 // pred_fallthru
    _
  // Predicated region
  $region10: #{a_call__.1} parent=0 // pred_check
    _
  $region11: #{a_call__.1} parent=0 // pred_check_branch
    %21 = sbr.rel (0) target = $region13
  $region12: #{a_call__.1} parent=0 // pred_region
    _
  $region13: #{a_call__.1} parent=0 // pred_fallthru
    _
  // Predicated region
  $region14: #{a_call__.1} parent=0 // pred_check
    _
  $region15: #{a_call__.1} parent=0 // pred_check_branch
    %23 = sbr.rel (0) target = $region17
  $region16: #{a_call__.1} parent=0 // pred_region
    _
  $region17: #{a_call__.1} parent=0 // pred_fallthru
    _
  // Predicated region
  $region18: #{a_call__.1} parent=0 // pred_check
    _
  $region19: #{a_call__.1} parent=0 // pred_check_branch
    %25 = sbr.rel (0) target = $region21
  $region20: #{a_call__.1} parent=0 // pred_region
    _
  $region21: #{a_call__.1} parent=0 // pred_fallthru
    _
  // Predicated region
  $region22: #{a_call__.1} parent=0 // pred_check
    _
  $region23: #{a_call__.1} parent=0 // pred_check_branch
    %27 = sbr.rel (0) target = $region25
  $region24: #{a_call__.1} parent=0 // pred_region
    _
  $region25: #{a_call__.1} parent=0 // pred_fallthru
    _
  // Predicated region
  $region26: #{a_call__.1} parent=0 // pred_check
    _
  $region27: #{a_call__.1} parent=0 // pred_check_branch
    %29 = sbr.rel (0) target = $region29
  $region28: #{a_call__.1} parent=0 // pred_region
    _
  $region29: #{a_call__.1} parent=0 // pred_fallthru
    _
  // Predicated region
  $region30: #{a_call__.1} parent=0 // pred_check
    _
  $region31: #{a_call__.1} parent=0 // pred_check_branch
    %31 = sbr.rel (0) target = $region33
  $region32: #{a_call__.1} parent=0 // pred_region
    _
  $region33: #{a_call__.1} parent=0 // pred_fallthru
    _
  // Predicated region
  $region34: #{a_call__.1} parent=0 // pred_check
    _
  $region35: #{a_call__.1} parent=0 // pred_check_branch
    %33 = sbr.rel (0) target = $region37
  $region36: #{a_call__.1} parent=0 // pred_region
    _
  $region37: #{a_call__.1} parent=0 // pred_fallthru
    _
  // Predicated region
  $region38: #{a_call__.1} parent=0 // pred_check
    _
  $region39: #{a_call__.1} parent=0 // pred_check_branch
    %35 = sbr.rel (0) target = $region41
  $region40: #{a_call__.1} parent=0 // pred_region
    _
  $region41: #{a_call__.1} parent=0 // pred_fallthru
    _
  // Predicated region
  $region42: #{a_call__.1} parent=0 // pred_check
    _
  $region43: #{a_call__.1} parent=0 // pred_check_branch
    %37 = sbr.rel (0) target = $region45
  $region44: #{a_call__.1} parent=0 // pred_region
    _
  $region45: #{a_call__.1} parent=0 // pred_fallthru
    _
  %v39 = vld [vmem:[%s0] sm:$0x3]
  %v40 = vld [vmem:[%s0 + $0x2] sm:$0x3]
  %v41 = vld [vmem:[%s0 + $0x4] sm:$0x3]
  %v42 = vld [vmem:[%s0 + $0x6] sm:$0x3]
  %v43 = vld [vmem:[%s0 + $0x8] sm:$0x3]
  %v44 = vld [vmem:[%s0 + $0xa] sm:$0x3]
  %v45 = vld [vmem:[%s0 + $0xc] sm:$0x3]
  %v46 = vld [vmem:[%s0 + $0xe] sm:$0x3]
  %v47 = vld [vmem:[%s0 + $0x10] sm:$0x3]
  %v48 = vld [vmem:[%s0 + $0x12] sm:$0x3]
  %v49 = vld [vmem:[%s0 + $0x14] sm:$0x3]
  %v50 = vld [vmem:[%s0 + $0x16] sm:$0x3]
  %v51 = vld [vmem:[%s0 + $0x18] sm:$0x3]
  %v52 = vld [vmem:[%s0 + $0x1a] sm:$0x3]
  %v53 = vld [vmem:[%s0 + $0x1c] sm:$0x3]
  %v54 = vld [vmem:[%s0 + $0x1e] sm:$0x3]
  %v55 = vld [vmem:[%s0 + $0x20] sm:$0x3]
  %v56 = vld [vmem:[%s0 + $0x22] sm:$0x3]
  %v57 = vld [vmem:[%s0 + $0x24] sm:$0x3]
  %v58 = vld [vmem:[%s0 + $0x26] sm:$0x3]
  %v59 = vld [vmem:[%s0 + $0x28] sm:$0x3]
  %v60 = vld [vmem:[%s0 + $0x2a] sm:$0x3]
  %v61 = vld [vmem:[%s0 + $0x2c] sm:$0x3]
  %v62 = vld [vmem:[%s0 + $0x2e] sm:$0x3]
  %v63 = vld [vmem:[%s0 + $0x30] sm:$0x3]
  %v64 = vld [vmem:[%s0 + $0x32] sm:$0x3]
  %v65 = vld [vmem:[%s0 + $0x34] sm:$0x3]
  %v66 = vld [vmem:[%s0 + $0x36] sm:$0x3]
  %v67 = vld [vmem:[%s0 + $0x38] sm:$0x3]
  %v68 = vld [vmem:[%s0 + $0x3a] sm:$0x3]
  %v69 = vld [vmem:[%s0 + $0x3c] sm:$0x3]
  %v70 = vld [vmem:[%s0 + $0x3e] sm:$0x3]
  %v71 = vld [vmem:[%s0 + $0x40] sm:$0x3]
  %v72 = vld [vmem:[%s0 + $0x42] sm:$0x3]
  %v73 = vld [vmem:[%s0 + $0x44] sm:$0x3]
  %v74 = vld [vmem:[%s0 + $0x46] sm:$0x3]
  %v75 = vld [vmem:[%s0 + $0x48] sm:$0x3]
  %v76 = vld [vmem:[%s0 + $0x4a] sm:$0x3]
  %v77 = vld [vmem:[%s0 + $0x4c] sm:$0x3]
  %v78 = vld [vmem:[%s0 + $0x4e] sm:$0x3]
  %v79 = vld [vmem:[%s0 + $0x50] sm:$0x3]
  %v80 = vld [vmem:[%s0 + $0x52] sm:$0x3]
  %v81 = vld [vmem:[%s0 + $0x54] sm:$0x3]
  %v82 = vld [vmem:[%s0 + $0x56] sm:$0x3]
  %v83 = vld [vmem:[%s0 + $0x58] sm:$0x3]
  %v84 = vld [vmem:[%s0 + $0x5a] sm:$0x3]
  %v85 = vld [vmem:[%s0 + $0x5c] sm:$0x3]
  %v86 = vld [vmem:[%s0 + $0x5e] sm:$0x3]
  %v87 = vld [vmem:[%s0 + $0x60] sm:$0x3]
  %v88 = vld [vmem:[%s0 + $0x62] sm:$0x3]
  %v89 = vld [vmem:[%s0 + $0x64] sm:$0x3]
  %v90 = vld [vmem:[%s0 + $0x66] sm:$0x3]
  %v91 = vld [vmem:[%s0 + $0x68] sm:$0x3]
  %v92 = vld [vmem:[%s0 + $0x6a] sm:$0x3]
  %v93 = vld [vmem:[%s0 + $0x6c] sm:$0x3]
  %v94 = vld [vmem:[%s0 + $0x6e] sm:$0x3]
  %v95 = vld [vmem:[%s0 + $0x70] sm:$0x3]
  %v96 = vld [vmem:[%s0 + $0x72] sm:$0x3]
  %v97 = vld [vmem:[%s0 + $0x74] sm:$0x3]
  %v98 = vld [vmem:[%s0 + $0x76] sm:$0x3]
  %v99 = vld [vmem:[%s0 + $0x78] sm:$0x3]
  %v100 = vld [vmem:[%s0 + $0x7a] sm:$0x3]
  %v101 = vld [vmem:[%s0 + $0x7c] sm:$0x3]
  %v102 = vld [vmem:[%s0 + $0x7e] sm:$0x3]
  %v103 = vld [vmem:[%s0 + $0x80] sm:$0x3]
  %v104 = vld [vmem:[%s0 + $0x82] sm:$0x3]
  %v105 = vld [vmem:[%s0 + $0x84] sm:$0x3]
  %v106 = vld [vmem:[%s0 + $0x86] sm:$0x3]
  %v107 = vld [vmem:[%s0 + $0x88] sm:$0x3]
  %v108 = vld [vmem:[%s0 + $0x8a] sm:$0x3]
  %v109 = vld [vmem:[%s0 + $0x8c] sm:$0x3]
  %v110 = vld [vmem:[%s0 + $0x8e] sm:$0x3]
  %v111 = vld [vmem:[%s0 + $0x90] sm:$0x3]
  %v112 = vld [vmem:[%s0 + $0x92] sm:$0x3]
  %v113 = vld [vmem:[%s0 + $0x94] sm:$0x3]
  %v114 = vld [vmem:[%s0 + $0x96] sm:$0x3]
  %v115 = vld [vmem:[%s0 + $0x98] sm:$0x3]
  %v116 = vld [vmem:[%s0 + $0x9a] sm:$0x3]
  %v117 = vld [vmem:[%s0 + $0x9c] sm:$0x3]
  %v118 = vld [vmem:[%s0 + $0x9e] sm:$0x3]
  %v119 = vld [vmem:[%s0 + $0xa0] sm:$0x3]
  %v120 = vld [vmem:[%s0 + $0xa2] sm:$0x3]
  %v121 = vld [vmem:[%s0 + $0xa4] sm:$0x3]
  %v122 = vld [vmem:[%s0 + $0xa6] sm:$0x3]
  %v123 = vld [vmem:[%s0 + $0xa8] sm:$0x3]
  %v124 = vld [vmem:[%s0 + $0xaa] sm:$0x3]
  %v125 = vld [vmem:[%s0 + $0xac] sm:$0x3]
  %v126 = vld [vmem:[%s0 + $0xae] sm:$0x3]
  %v127 = vld [vmem:[%s0 + $0xb0] sm:$0x3]
  %v128 = vld [vmem:[%s0 + $0xb2] sm:$0x3]
  %v129 = vld [vmem:[%s0 + $0xb4] sm:$0x3]
  %v130 = vld [vmem:[%s0 + $0xb6] sm:$0x3]
  %v131 = vld [vmem:[%s0 + $0xb8] sm:$0x3]
  %v132 = vld [vmem:[%s0 + $0xba] sm:$0x3]
  %v133 = vld [vmem:[%s0 + $0xbc] sm:$0x3]
  %v134 = vld [vmem:[%s0 + $0xbe] sm:$0x3]
  %v135 = vld [vmem:[%s0 + $0xc0] sm:$0x3]
  %v136 = vld [vmem:[%s0 + $0xc2] sm:$0x3]
  %v137 = vld [vmem:[%s0 + $0xc4] sm:$0x3]
  %v138 = vld [vmem:[%s0 + $0xc6] sm:$0x3]
  %v139 = vld [vmem:[%s0 + $0xc8] sm:$0x3]
  %v140 = vld [vmem:[%s0 + $0xca] sm:$0x3]
  %v141 = vld [vmem:[%s0 + $0xcc] sm:$0x3]
  %v142 = vld [vmem:[%s0 + $0xce] sm:$0x3]
  %v143 = vld [vmem:[%s0 + $0xd0] sm:$0x3]
  %v144 = vld [vmem:[%s0 + $0xd2] sm:$0x3]
  %v145 = vld [vmem:[%s0 + $0xd4] sm:$0x3]
  %v146 = vld [vmem:[%s0 + $0xd6] sm:$0x3]
  %v147 = vld [vmem:[%s0 + $0xd8] sm:$0x3]
  %v148 = vld [vmem:[%s0 + $0xda] sm:$0x3]
  %v149 = vld [vmem:[%s0 + $0xdc] sm:$0x3]
  %v150 = vld [vmem:[%s0 + $0xde] sm:$0x3]
  %v151 = vld [vmem:[%s0 + $0xe0] sm:$0x3]
  %v152 = vld [vmem:[%s0 + $0xe2] sm:$0x3]
  %v153 = vld [vmem:[%s0 + $0xe4] sm:$0x3]
  %v154 = vld [vmem:[%s0 + $0xe6] sm:$0x3]
  %v155 = vld [vmem:[%s0 + $0xe8] sm:$0x3]
  %v156 = vld [vmem:[%s0 + $0xea] sm:$0x3]
  %v157 = vld [vmem:[%s0 + $0xec] sm:$0x3]
  %v158 = vld [vmem:[%s0 + $0xee] sm:$0x3]
  %v159 = vld [vmem:[%s0 + $0xf0] sm:$0x3]
  %v160 = vld [vmem:[%s0 + $0xf2] sm:$0x3]
  %v161 = vld [vmem:[%s0 + $0xf4] sm:$0x3]
  %v162 = vld [vmem:[%s0 + $0xf6] sm:$0x3]
  %v163 = vld [vmem:[%s0 + $0xf8] sm:$0x3]
  %v164 = vld [vmem:[%s0 + $0xfa] sm:$0x3]
  %v165 = vld [vmem:[%s0 + $0xfc] sm:$0x3]
  %v166 = vld [vmem:[%s0 + $0xfe] sm:$0x3]
  %v167 = vld [vmem:[%s0 + $0x100] sm:$0x3]
  %v168 = vld [vmem:[%s0 + $0x102] sm:$0x3]
  %v169 = vld [vmem:[%s0 + $0x104] sm:$0x3]
  %v170 = vld [vmem:[%s0 + $0x106] sm:$0x3]
  %v171 = vld [vmem:[%s0 + $0x108] sm:$0x3]
  %v172 = vld [vmem:[%s0 + $0x10a] sm:$0x3]
  %v173 = vld [vmem:[%s0 + $0x10c] sm:$0x3]
  %v174 = vld [vmem:[%s0 + $0x10e] sm:$0x3]
  %v175 = vld [vmem:[%s0 + $0x110] sm:$0x3]
  %v176 = vld [vmem:[%s0 + $0x112] sm:$0x3]
  %v177 = vld [vmem:[%s0 + $0x114] sm:$0x3]
  %v178 = vld [vmem:[%s0 + $0x116] sm:$0x3]
  %v179 = vld [vmem:[%s0 + $0x118] sm:$0x3]
  %v180 = vld [vmem:[%s0 + $0x11a] sm:$0x3]
  %v181 = vld [vmem:[%s0 + $0x11c] sm:$0x3]
  %v182 = vld [vmem:[%s0 + $0x11e] sm:$0x3]
  %v183 = vld [vmem:[%s0 + $0x120] sm:$0x3]
  %v184 = vld [vmem:[%s0 + $0x122] sm:$0x3]
  %v185 = vld [vmem:[%s0 + $0x124] sm:$0x3]
  %v186 = vld [vmem:[%s0 + $0x126] sm:$0x3]
  %v187 = vld [vmem:[%s0 + $0x128] sm:$0x3]
  %v188 = vld [vmem:[%s0 + $0x12a] sm:$0x3]
  %v189 = vld [vmem:[%s0 + $0x12c] sm:$0x3]
  %v190 = vld [vmem:[%s0 + $0x12e] sm:$0x3]
  %v191 = vld [vmem:[%s0 + $0x130] sm:$0x3]
  %v192 = vld [vmem:[%s0 + $0x132] sm:$0x3]
  %v193 = vld [vmem:[%s0 + $0x134] sm:$0x3]
  %v194 = vld [vmem:[%s0 + $0x136] sm:$0x3]
  %v195 = vld [vmem:[%s0 + $0x138] sm:$0x3]
  %v196 = vld [vmem:[%s0 + $0x13a] sm:$0x3]
  %v197 = vld [vmem:[%s0 + $0x13c] sm:$0x3]
  %v198 = vld [vmem:[%s0 + $0x13e] sm:$0x3]
  %v199 = vld [vmem:[%s0 + $0x140] sm:$0x3]
  %v200 = vld [vmem:[%s0 + $0x142] sm:$0x3]
  %v201 = vunpack.c.l.u8.bf16 %v39
  %v202 = vunpack.c.l.u8.bf16 %v40
  %v203 = vunpack.c.l.u8.bf16 %v41
  %v204 = vunpack.c.l.u8.bf16 %v42
  %v205 = vunpack.c.l.u8.bf16 %v43
  %v206 = vunpack.c.l.u8.bf16 %v44
  %v207 = vunpack.c.l.u8.bf16 %v45
  %v208 = vunpack.c.l.u8.bf16 %v46
  %v209 = vunpack.c.l.u8.bf16 %v47
  %v210 = vunpack.c.l.u8.bf16 %v48
  %v211 = vunpack.c.l.u8.bf16 %v49
  %v212 = vunpack.c.l.u8.bf16 %v50
  %v213 = vunpack.c.l.u8.bf16 %v51
  %v214 = vunpack.c.l.u8.bf16 %v52
  %v215 = vunpack.c.l.u8.bf16 %v53
  %v216 = vunpack.c.l.u8.bf16 %v54
  %v217 = vunpack.c.l.u8.bf16 %v55
  %v218 = vunpack.c.l.u8.bf16 %v56
  %v219 = vunpack.c.l.u8.bf16 %v57
  %v220 = vunpack.c.l.u8.bf16 %v58
  %v221 = vunpack.c.l.u8.bf16 %v59
  %v222 = vunpack.c.l.u8.bf16 %v60
  %v223 = vunpack.c.l.u8.bf16 %v61
  %v224 = vunpack.c.l.u8.bf16 %v62
  %v225 = vunpack.c.l.u8.bf16 %v63
  %v226 = vunpack.c.l.u8.bf16 %v64
  %v227 = vunpack.c.l.u8.bf16 %v65
  %v228 = vunpack.c.l.u8.bf16 %v66
  %v229 = vunpack.c.l.u8.bf16 %v67
  %v230 = vunpack.c.l.u8.bf16 %v68
  %v231 = vunpack.c.l.u8.bf16 %v69
  %v232 = vunpack.c.l.u8.bf16 %v70
  %v233 = vunpack.c.l.u8.bf16 %v71
  %v234 = vunpack.c.l.u8.bf16 %v72
  %v235 = vunpack.c.l.u8.bf16 %v73
  %v236 = vunpack.c.l.u8.bf16 %v74
  %v237 = vunpack.c.l.u8.bf16 %v75
  %v238 = vunpack.c.l.u8.bf16 %v76
  %v239 = vunpack.c.l.u8.bf16 %v77
  %v240 = vunpack.c.l.u8.bf16 %v78
  %v241 = vunpack.c.l.u8.bf16 %v79
  %v242 = vunpack.c.l.u8.bf16 %v80
  %v243 = vunpack.c.l.u8.bf16 %v81
  %v244 = vunpack.c.l.u8.bf16 %v82
  %v245 = vunpack.c.l.u8.bf16 %v83
  %v246 = vunpack.c.l.u8.bf16 %v84
  %v247 = vunpack.c.l.u8.bf16 %v85
  %v248 = vunpack.c.l.u8.bf16 %v86
  %v249 = vunpack.c.l.u8.bf16 %v87
  %v250 = vunpack.c.l.u8.bf16 %v88
  %v251 = vunpack.c.l.u8.bf16 %v89
  %v252 = vunpack.c.l.u8.bf16 %v90
  %v253 = vunpack.c.l.u8.bf16 %v91
  %v254 = vunpack.c.l.u8.bf16 %v92
  %v255 = vunpack.c.l.u8.bf16 %v93
  %v256 = vunpack.c.l.u8.bf16 %v94
  %v257 = vunpack.c.l.u8.bf16 %v95
  %v258 = vunpack.c.l.u8.bf16 %v96
  %v259 = vunpack.c.l.u8.bf16 %v97
  %v260 = vunpack.c.l.u8.bf16 %v98
  %v261 = vunpack.c.l.u8.bf16 %v99
  %v262 = vunpack.c.l.u8.bf16 %v100
  %v263 = vunpack.c.l.u8.bf16 %v101
  %v264 = vunpack.c.l.u8.bf16 %v102
  %v265 = vunpack.c.l.u8.bf16 %v103
  %v266 = vunpack.c.l.u8.bf16 %v104
  %v267 = vunpack.c.l.u8.bf16 %v105
  %v268 = vunpack.c.l.u8.bf16 %v106
  %v269 = vunpack.c.l.u8.bf16 %v107
  %v270 = vunpack.c.l.u8.bf16 %v108
  %v271 = vunpack.c.l.u8.bf16 %v109
  %v272 = vunpack.c.l.u8.bf16 %v110
  %v273 = vunpack.c.l.u8.bf16 %v111
  %v274 = vunpack.c.l.u8.bf16 %v112
  %v275 = vunpack.c.l.u8.bf16 %v113
  %v276 = vunpack.c.l.u8.bf16 %v114
  %v277 = vunpack.c.l.u8.bf16 %v115
  %v278 = vunpack.c.l.u8.bf16 %v116
  %v279 = vunpack.c.l.u8.bf16 %v117
  %v280 = vunpack.c.l.u8.bf16 %v118
  %v281 = vunpack.c.l.u8.bf16 %v119
  %v282 = vunpack.c.l.u8.bf16 %v120
  %v283 = vunpack.c.l.u8.bf16 %v121
  %v284 = vunpack.c.l.u8.bf16 %v122
  %v285 = vunpack.c.l.u8.bf16 %v123
  %v286 = vunpack.c.l.u8.bf16 %v124
  %v287 = vunpack.c.l.u8.bf16 %v125
  %v288 = vunpack.c.l.u8.bf16 %v126
  %v289 = vunpack.c.l.u8.bf16 %v127
  %v290 = vunpack.c.l.u8.bf16 %v128
  %v291 = vunpack.c.l.u8.bf16 %v129
  %v292 = vunpack.c.l.u8.bf16 %v130
  %v293 = vunpack.c.l.u8.bf16 %v131
  %v294 = vunpack.c.l.u8.bf16 %v132
  %v295 = vunpack.c.l.u8.bf16 %v133
  %v296 = vunpack.c.l.u8.bf16 %v134
  %v297 = vunpack.c.l.u8.bf16 %v135
  %v298 = vunpack.c.l.u8.bf16 %v136
  %v299 = vunpack.c.l.u8.bf16 %v137
  %v300 = vunpack.c.l.u8.bf16 %v138
  %v301 = vunpack.c.l.u8.bf16 %v139
  %v302 = vunpack.c.l.u8.bf16 %v140
  %v303 = vunpack.c.l.u8.bf16 %v141
  %v304 = vunpack.c.l.u8.bf16 %v142
  %v305 = vunpack.c.l.u8.bf16 %v143
  %v306 = vunpack.c.l.u8.bf16 %v144
  %v307 = vunpack.c.l.u8.bf16 %v145
  %v308 = vunpack.c.l.u8.bf16 %v146
  %v309 = vunpack.c.l.u8.bf16 %v147
  %v310 = vunpack.c.l.u8.bf16 %v148
  %v311 = vunpack.c.l.u8.bf16 %v149
  %v312 = vunpack.c.l.u8.bf16 %v150
  %v313 = vunpack.c.l.u8.bf16 %v151
  %v314 = vunpack.c.l.u8.bf16 %v152
  %v315 = vunpack.c.l.u8.bf16 %v153
  %v316 = vunpack.c.l.u8.bf16 %v154
  %v317 = vunpack.c.l.u8.bf16 %v155
  %v318 = vunpack.c.l.u8.bf16 %v156
  %v319 = vunpack.c.l.u8.bf16 %v157
  %v320 = vunpack.c.l.u8.bf16 %v158
  %v321 = vunpack.c.l.u8.bf16 %v159
  %v322 = vunpack.c.l.u8.bf16 %v160
  %v323 = vunpack.c.l.u8.bf16 %v161
  %v324 = vunpack.c.l.u8.bf16 %v162
  %v325 = vunpack.c.l.u8.bf16 %v163
  %v326 = vunpack.c.l.u8.bf16 %v164
  %v327 = vunpack.c.l.u8.bf16 %v165
  %v328 = vunpack.c.l.u8.bf16 %v166
  %v329 = vunpack.c.l.u8.bf16 %v167
  %v330 = vunpack.c.l.u8.bf16 %v168
  %v331 = vunpack.c.l.u8.bf16 %v169
  %v332 = vunpack.c.l.u8.bf16 %v170
  %v333 = vunpack.c.l.u8.bf16 %v171
  %v334 = vunpack.c.l.u8.bf16 %v172
  %v335 = vunpack.c.l.u8.bf16 %v173
  %v336 = vunpack.c.l.u8.bf16 %v174
  %v337 = vunpack.c.l.u8.bf16 %v175
  %v338 = vunpack.c.l.u8.bf16 %v176
  %v339 = vunpack.c.l.u8.bf16 %v177
  %v340 = vunpack.c.l.u8.bf16 %v178
  %v341 = vunpack.c.l.u8.bf16 %v179
  %v342 = vunpack.c.l.u8.bf16 %v180
  %v343 = vunpack.c.l.u8.bf16 %v181
  %v344 = vunpack.c.l.u8.bf16 %v182
  %v345 = vunpack.c.l.u8.bf16 %v183
  %v346 = vunpack.c.l.u8.bf16 %v184
  %v347 = vunpack.c.l.u8.bf16 %v185
  %v348 = vunpack.c.l.u8.bf16 %v186
  %v349 = vunpack.c.l.u8.bf16 %v187
  %v350 = vunpack.c.l.u8.bf16 %v188
  %v351 = vunpack.c.l.u8.bf16 %v189
  %v352 = vunpack.c.l.u8.bf16 %v190
  %v353 = vunpack.c.l.u8.bf16 %v191
  %v354 = vunpack.c.l.u8.bf16 %v192
  %v355 = vunpack.c.l.u8.bf16 %v193
  %v356 = vunpack.c.l.u8.bf16 %v194
  %v357 = vunpack.c.l.u8.bf16 %v195
  %v358 = vunpack.c.l.u8.bf16 %v196
  %v359 = vunpack.c.l.u8.bf16 %v197
  %v360 = vunpack.c.l.u8.bf16 %v198
  %v361 = vunpack.c.l.u8.bf16 %v199
  %v362 = vunpack.c.l.u8.bf16 %v200
  %v363 = vld [vmem:[%s1] sm:$0xf]
  %v364 = vld [vmem:[%s1 + $0x4] sm:$0xf]
  %v365 = vld [vmem:[%s1 + $0x8] sm:$0xf]
  %v366 = vld [vmem:[%s1 + $0xc] sm:$0xf]
  %v367 = vld [vmem:[%s1 + $0x10] sm:$0xf]
  %v368 = vld [vmem:[%s1 + $0x14] sm:$0xf]
  %v369 = vld [vmem:[%s1 + $0x18] sm:$0xf]
  %v370 = vld [vmem:[%s1 + $0x1c] sm:$0xf]
  %s371 = scalar_lea.vmem %s1, 32
  %v372 = vld [vmem:[%s371] sm:$0xf]
  %v373 = vld [vmem:[%s371 + $0x4] sm:$0xf]
  %v374 = vld [vmem:[%s371 + $0x8] sm:$0xf]
  %v375 = vld [vmem:[%s371 + $0xc] sm:$0xf]
  %v376 = vld [vmem:[%s371 + $0x10] sm:$0xf]
  %v377 = vld [vmem:[%s371 + $0x14] sm:$0xf]
  %v378 = vld [vmem:[%s371 + $0x18] sm:$0xf]
  %v379 = vld [vmem:[%s371 + $0x1c] sm:$0xf]
  %v508 = vunpack.c.l.b16 %v203
  %v509 = vunpack.c.l.b16 %v204
  %v510 = vunpack.c.l.b16 %v205
  %v511 = vunpack.c.l.b16 %v206
  %v512 = vunpack.c.l.b16 %v207
  %v513 = vunpack.c.l.b16 %v208
  %v514 = vunpack.c.l.b16 %v209
  %v515 = vunpack.c.l.b16 %v210
  %v516 = vunpack.c.l.b16 %v211
  %v517 = vunpack.c.l.b16 %v212
  %v518 = vunpack.c.l.b16 %v213
  %v519 = vunpack.c.l.b16 %v214
  %v520 = vunpack.c.l.b16 %v215
  %v521 = vunpack.c.l.b16 %v216
  %v522 = vunpack.c.l.b16 %v217
  %v523 = vunpack.c.l.b16 %v218
  %v524 = vunpack.c.l.b16 %v221
  %v525 = vunpack.c.l.b16 %v222
  %v526 = vunpack.c.l.b16 %v223
  %v527 = vunpack.c.l.b16 %v224
  %v528 = vunpack.c.l.b16 %v225
  %v529 = vunpack.c.l.b16 %v226
  %v530 = vunpack.c.l.b16 %v227
  %v531 = vunpack.c.l.b16 %v228
  %v532 = vunpack.c.l.b16 %v229
  %v533 = vunpack.c.l.b16 %v230
  %v534 = vunpack.c.l.b16 %v231
  %v535 = vunpack.c.l.b16 %v232
  %v536 = vunpack.c.l.b16 %v233
  %v537 = vunpack.c.l.b16 %v234
  %v538 = vunpack.c.l.b16 %v235
  %v539 = vunpack.c.l.b16 %v236
  %v540 = vunpack.c.l.b16 %v239
  %v541 = vunpack.c.l.b16 %v240
  %v542 = vunpack.c.l.b16 %v241
  %v543 = vunpack.c.l.b16 %v242
  %v544 = vunpack.c.l.b16 %v243
  %v545 = vunpack.c.l.b16 %v244
  %v546 = vunpack.c.l.b16 %v245
  %v547 = vunpack.c.l.b16 %v246
  %v548 = vunpack.c.l.b16 %v247
  %v549 = vunpack.c.l.b16 %v248
  %v550 = vunpack.c.l.b16 %v249
  %v551 = vunpack.c.l.b16 %v250
  %v552 = vunpack.c.l.b16 %v251
  %v553 = vunpack.c.l.b16 %v252
  %v554 = vunpack.c.l.b16 %v253
  %v555 = vunpack.c.l.b16 %v254
  %v556 = vunpack.c.l.b16 %v257
  %v557 = vunpack.c.l.b16 %v258
  %v558 = vunpack.c.l.b16 %v259
  %v559 = vunpack.c.l.b16 %v260
  %v560 = vunpack.c.l.b16 %v261
  %v561 = vunpack.c.l.b16 %v262
  %v562 = vunpack.c.l.b16 %v263
  %v563 = vunpack.c.l.b16 %v264
  %v564 = vunpack.c.l.b16 %v265
  %v565 = vunpack.c.l.b16 %v266
  %v566 = vunpack.c.l.b16 %v267
  %v567 = vunpack.c.l.b16 %v268
  %v568 = vunpack.c.l.b16 %v269
  %v569 = vunpack.c.l.b16 %v270
  %v570 = vunpack.c.l.b16 %v271
  %v571 = vunpack.c.l.b16 %v272
  %v572 = vunpack.c.l.b16 %v275
  %v573 = vunpack.c.l.b16 %v276
  %v574 = vunpack.c.l.b16 %v277
  %v575 = vunpack.c.l.b16 %v278
  %v576 = vunpack.c.l.b16 %v279
  %v577 = vunpack.c.l.b16 %v280
  %v578 = vunpack.c.l.b16 %v281
  %v579 = vunpack.c.l.b16 %v282
  %v580 = vunpack.c.l.b16 %v283
  %v581 = vunpack.c.l.b16 %v284
  %v582 = vunpack.c.l.b16 %v285
  %v583 = vunpack.c.l.b16 %v286
  %v584 = vunpack.c.l.b16 %v287
  %v585 = vunpack.c.l.b16 %v288
  %v586 = vunpack.c.l.b16 %v289
  %v587 = vunpack.c.l.b16 %v290
  %v588 = vunpack.c.l.b16 %v293
  %v589 = vunpack.c.l.b16 %v294
  %v590 = vunpack.c.l.b16 %v295
  %v591 = vunpack.c.l.b16 %v296
  %v592 = vunpack.c.l.b16 %v297
  %v593 = vunpack.c.l.b16 %v298
  %v594 = vunpack.c.l.b16 %v299
  %v595 = vunpack.c.l.b16 %v300
  %v596 = vunpack.c.l.b16 %v301
  %v597 = vunpack.c.l.b16 %v302
  %v598 = vunpack.c.l.b16 %v303
  %v599 = vunpack.c.l.b16 %v304
  %v600 = vunpack.c.l.b16 %v305
  %v601 = vunpack.c.l.b16 %v306
  %v602 = vunpack.c.l.b16 %v307
  %v603 = vunpack.c.l.b16 %v308
  %v604 = vunpack.c.l.b16 %v311
  %v605 = vunpack.c.l.b16 %v312
  %v606 = vunpack.c.l.b16 %v313
  %v607 = vunpack.c.l.b16 %v314
  %v608 = vunpack.c.l.b16 %v315
  %v609 = vunpack.c.l.b16 %v316
  %v610 = vunpack.c.l.b16 %v317
  %v611 = vunpack.c.l.b16 %v318
  %v612 = vunpack.c.l.b16 %v319
  %v613 = vunpack.c.l.b16 %v320
  %v614 = vunpack.c.l.b16 %v321
  %v615 = vunpack.c.l.b16 %v322
  %v616 = vunpack.c.l.b16 %v323
  %v617 = vunpack.c.l.b16 %v324
  %v618 = vunpack.c.l.b16 %v325
  %v619 = vunpack.c.l.b16 %v326
  %v620 = vunpack.c.l.b16 %v329
  %v621 = vunpack.c.l.b16 %v330
  %v622 = vunpack.c.l.b16 %v331
  %v623 = vunpack.c.l.b16 %v332
  %v624 = vunpack.c.l.b16 %v333
  %v625 = vunpack.c.l.b16 %v334
  %v626 = vunpack.c.l.b16 %v335
  %v627 = vunpack.c.l.b16 %v336
  %v628 = vunpack.c.l.b16 %v337
  %v629 = vunpack.c.l.b16 %v338
  %v630 = vunpack.c.l.b16 %v339
  %v631 = vunpack.c.l.b16 %v340
  %v632 = vunpack.c.l.b16 %v341
  %v633 = vunpack.c.l.b16 %v342
  %v634 = vunpack.c.l.b16 %v343
  %v635 = vunpack.c.l.b16 %v344
  %v636 = vpack.c.b16 %v509, %v508
  %v637 = vpack.c.b16 %v511, %v510
  %v638 = vpack.c.b16 %v513, %v512
  %v639 = vpack.c.b16 %v515, %v514
  %v640 = vpack.c.b16 %v517, %v516
  %v641 = vpack.c.b16 %v519, %v518
  %v642 = vpack.c.b16 %v521, %v520
  %v643 = vpack.c.b16 %v523, %v522
  %v644 = vpack.c.b16 %v525, %v524
  %v645 = vpack.c.b16 %v527, %v526
  %v646 = vpack.c.b16 %v529, %v528
  %v647 = vpack.c.b16 %v531, %v530
  %v648 = vpack.c.b16 %v533, %v532
  %v649 = vpack.c.b16 %v535, %v534
  %v650 = vpack.c.b16 %v537, %v536
  %v651 = vpack.c.b16 %v539, %v538
  %v652 = vpack.c.b16 %v541, %v540
  %v653 = vpack.c.b16 %v543, %v542
  %v654 = vpack.c.b16 %v545, %v544
  %v655 = vpack.c.b16 %v547, %v546
  %v656 = vpack.c.b16 %v549, %v548
  %v657 = vpack.c.b16 %v551, %v550
  %v658 = vpack.c.b16 %v553, %v552
  %v659 = vpack.c.b16 %v555, %v554
  %v660 = vpack.c.b16 %v557, %v556
  %v661 = vpack.c.b16 %v559, %v558
  %v662 = vpack.c.b16 %v561, %v560
  %v663 = vpack.c.b16 %v563, %v562
  %v664 = vpack.c.b16 %v565, %v564
  %v665 = vpack.c.b16 %v567, %v566
  %v666 = vpack.c.b16 %v569, %v568
  %v667 = vpack.c.b16 %v571, %v570
  %v668 = vpack.c.b16 %v573, %v572
  %v669 = vpack.c.b16 %v575, %v574
  %v670 = vpack.c.b16 %v577, %v576
  %v671 = vpack.c.b16 %v579, %v578
  %v672 = vpack.c.b16 %v581, %v580
  %v673 = vpack.c.b16 %v583, %v582
  %v674 = vpack.c.b16 %v585, %v584
  %v675 = vpack.c.b16 %v587, %v586
  %v676 = vpack.c.b16 %v589, %v588
  %v677 = vpack.c.b16 %v591, %v590
  %v678 = vpack.c.b16 %v593, %v592
  %v679 = vpack.c.b16 %v595, %v594
  %v680 = vpack.c.b16 %v597, %v596
  %v681 = vpack.c.b16 %v599, %v598
  %v682 = vpack.c.b16 %v601, %v600
  %v683 = vpack.c.b16 %v603, %v602
  %v684 = vpack.c.b16 %v605, %v604
  %v685 = vpack.c.b16 %v607, %v606
  %v686 = vpack.c.b16 %v609, %v608
  %v687 = vpack.c.b16 %v611, %v610
  %v688 = vpack.c.b16 %v613, %v612
  %v689 = vpack.c.b16 %v615, %v614
  %v690 = vpack.c.b16 %v617, %v616
  %v691 = vpack.c.b16 %v619, %v618
  %v692 = vpack.c.b16 %v621, %v620
  %v693 = vpack.c.b16 %v623, %v622
  %v694 = vpack.c.b16 %v625, %v624
  %v695 = vpack.c.b16 %v627, %v626
  %v696 = vpack.c.b16 %v629, %v628
  %v697 = vpack.c.b16 %v631, %v630
  %v698 = vpack.c.b16 %v633, %v632
  %v699 = vpack.c.b16 %v635, %v634
  %v708 = vunpack.c.l.b16 %v372
  %v709 = vunpack.c.l.b16 %v373
  %v710 = vunpack.c.l.b16 %v374
  %v711 = vunpack.c.l.b16 %v375
  %v712 = vunpack.c.l.b16 %v376
  %v713 = vunpack.c.l.b16 %v377
  %v714 = vunpack.c.l.b16 %v378
  %v715 = vunpack.c.l.b16 %v379
  %v716 = vpack.c.b16 %v709, %v708
  %v717 = vpack.c.b16 %v711, %v710
  %v718 = vpack.c.b16 %v713, %v712
  %v719 = vpack.c.b16 %v715, %v714
  %vm724 = vcmask 523264
  %v726 = vsel %vm724, %v636, 0
  %v729 = vsel %vm724, %v637, 0
  %v732 = vsel %vm724, %v638, 0
  %v735 = vsel %vm724, %v639, 0
  %v738 = vsel %vm724, %v640, 0
  %v741 = vsel %vm724, %v641, 0
  %v744 = vsel %vm724, %v642, 0
  %v747 = vsel %vm724, %v643, 0
  %v750 = vsel %vm724, %v644, 0
  %v753 = vsel %vm724, %v645, 0
  %v756 = vsel %vm724, %v646, 0
  %v759 = vsel %vm724, %v647, 0
  %v762 = vsel %vm724, %v648, 0
  %v765 = vsel %vm724, %v649, 0
  %v768 = vsel %vm724, %v650, 0
  %v771 = vsel %vm724, %v651, 0
  %v774 = vsel %vm724, %v652, 0
  %v777 = vsel %vm724, %v653, 0
  %v780 = vsel %vm724, %v654, 0
  %v783 = vsel %vm724, %v655, 0
  %v786 = vsel %vm724, %v656, 0
  %v789 = vsel %vm724, %v657, 0
  %v792 = vsel %vm724, %v658, 0
  %v795 = vsel %vm724, %v659, 0
  %v798 = vsel %vm724, %v660, 0
  %v801 = vsel %vm724, %v661, 0
  %v804 = vsel %vm724, %v662, 0
  %v807 = vsel %vm724, %v663, 0
  %v810 = vsel %vm724, %v664, 0
  %v813 = vsel %vm724, %v665, 0
  %v816 = vsel %vm724, %v666, 0
  %v819 = vsel %vm724, %v667, 0
  %v822 = vsel %vm724, %v668, 0
  %v825 = vsel %vm724, %v669, 0
  %v828 = vsel %vm724, %v670, 0
  %v831 = vsel %vm724, %v671, 0
  %v834 = vsel %vm724, %v672, 0
  %v837 = vsel %vm724, %v673, 0
  %v840 = vsel %vm724, %v674, 0
  %v843 = vsel %vm724, %v675, 0
  %v846 = vsel %vm724, %v676, 0
  %v849 = vsel %vm724, %v677, 0
  %v852 = vsel %vm724, %v678, 0
  %v855 = vsel %vm724, %v679, 0
  %v858 = vsel %vm724, %v680, 0
  %v861 = vsel %vm724, %v681, 0
  %v864 = vsel %vm724, %v682, 0
  %v867 = vsel %vm724, %v683, 0
  %v870 = vsel %vm724, %v684, 0
  %v873 = vsel %vm724, %v685, 0
  %v876 = vsel %vm724, %v686, 0
  %v879 = vsel %vm724, %v687, 0
  %v882 = vsel %vm724, %v688, 0
  %v885 = vsel %vm724, %v689, 0
  %v888 = vsel %vm724, %v690, 0
  %v891 = vsel %vm724, %v691, 0
  %v894 = vsel %vm724, %v692, 0
  %v897 = vsel %vm724, %v693, 0
  %v900 = vsel %vm724, %v694, 0
  %v903 = vsel %vm724, %v695, 0
  %v906 = vsel %vm724, %v696, 0
  %v909 = vsel %vm724, %v697, 0
  %v912 = vsel %vm724, %v698, 0
  %v915 = vsel %vm724, %v699, 0
  %917 = vmatprep.subr.bf16.mxu0 0
  %918 = vmatpush1.bf16.msra.mxu0 %v716
  %919 = vmatprep.subr.bf16.mxu0 0
  %920 = vmatpush1.bf16.msra.mxu0 %v717
  %921 = vmatprep.subr.bf16.mxu0 0
  %922 = vmatpush1.bf16.msra.mxu0 %v718
  %923 = vmatprep.subr.bf16.mxu0 0
  %924 = vmatpush1.bf16.msra.mxu0 %v719
  %925 = vmatprep.subr.bf16.mxu0 0
  %926 = vmatpush1.bf16.msra.mxu0 0
  %927 = vmatprep.subr.bf16.mxu0 0
  %928 = vmatpush1.bf16.msra.mxu0 0
  %929 = vmatprep.subr.bf16.mxu0 0
  %930 = vmatpush1.bf16.msra.mxu0 0
  %931 = vmatprep.subr.bf16.mxu0 0
  %932 = vmatpush1.bf16.msra.mxu0 0
  %933 = vmatprep.subr.bf16.mxu0 0
  %934 = vmatpush1.bf16.msra.mxu0 0
  %935 = vmatprep.subr.bf16.mxu0 0
  %936 = vmatpush1.bf16.msra.mxu0 0
  %937 = vmatprep.subr.bf16.mxu0 0
  %938 = vmatpush1.bf16.msra.mxu0 0
  %939 = vmatprep.subr.bf16.mxu0 0
  %940 = vmatpush1.bf16.msra.mxu0 0
  %941 = vmatprep.subr.bf16.mxu0 0
  %942 = vmatpush1.bf16.msra.mxu0 0
  %943 = vmatprep.subr.bf16.mxu0 0
  %944 = vmatpush1.bf16.msra.mxu0 0
  %945 = vmatprep.subr.bf16.mxu0 0
  %946 = vmatpush1.bf16.msra.mxu0 0
  %947 = vmatprep.subr.bf16.mxu0 0
  %948 = vmatpush1.bf16.msra.mxu0 0
  %949 = vmatprep.mubr.bf16.mxu0 0
  %950 = vmatmul.mubr.bf16.gmra.mrb[0].mxu0 %v726
  %v951 = vpop.f32.mrb[0].mxu0
  %v952 = vadd.f32 0.0, %v951
  %v953 = vpop.f32.mrb[0].mxu0
  %v954 = vpop.f32.mrb[0].mxu0
  %v955 = vadd.f32 0.0, %v954
  %v956 = vpop.f32.mrb[0].mxu0
  %957 = vmatprep.mubr.bf16.mxu0 0
  %958 = vmatmul.mubr.bf16.gmra.mrb[0].mxu0 %v729
  %v959 = vpop.f32.mrb[0].mxu0
  %v960 = vadd.f32 0.0, %v959
  %v961 = vpop.f32.mrb[0].mxu0
  %v962 = vpop.f32.mrb[0].mxu0
  %v963 = vadd.f32 0.0, %v962
  %v964 = vpop.f32.mrb[0].mxu0
  %965 = vmatprep.mubr.bf16.mxu0 0
  %966 = vmatmul.mubr.bf16.gmra.mrb[0].mxu0 %v732
  %v967 = vpop.f32.mrb[0].mxu0
  %v968 = vadd.f32 0.0, %v967
  %v969 = vpop.f32.mrb[0].mxu0
  %v970 = vpop.f32.mrb[0].mxu0
  %v971 = vadd.f32 0.0, %v970
  %v972 = vpop.f32.mrb[0].mxu0
  %973 = vmatprep.mubr.bf16.mxu0 0
  %974 = vmatmul.mubr.bf16.gmra.mrb[0].mxu0 %v735
  %v975 = vpop.f32.mrb[0].mxu0
  %v976 = vadd.f32 0.0, %v975
  %v977 = vpop.f32.mrb[0].mxu0
  %v978 = vpop.f32.mrb[0].mxu0
  %v979 = vadd.f32 0.0, %v978
  %v980 = vpop.f32.mrb[0].mxu0
  %981 = vmatprep.mubr.bf16.mxu0 0
  %982 = vmatmul.mubr.bf16.gmra.mrb[0].mxu0 %v738
  %v983 = vpop.f32.mrb[0].mxu0
  %v984 = vadd.f32 0.0, %v983
  %v985 = vpop.f32.mrb[0].mxu0
  %v986 = vpop.f32.mrb[0].mxu0
  %v987 = vadd.f32 0.0, %v986
  %v988 = vpop.f32.mrb[0].mxu0
  %989 = vmatprep.mubr.bf16.mxu0 0
  %990 = vmatmul.mubr.bf16.gmra.mrb[0].mxu0 %v741
  %v991 = vpop.f32.mrb[0].mxu0
  %v992 = vadd.f32 0.0, %v991
  %v993 = vpop.f32.mrb[0].mxu0
  %v994 = vpop.f32.mrb[0].mxu0
  %v995 = vadd.f32 0.0, %v994
  %v996 = vpop.f32.mrb[0].mxu0
  %997 = vmatprep.mubr.bf16.mxu0 0
  %998 = vmatmul.mubr.bf16.gmra.mrb[0].mxu0 %v744
  %v999 = vpop.f32.mrb[0].mxu0
  %v1000 = vadd.f32 0.0, %v999
  %v1001 = vpop.f32.mrb[0].mxu0
  %v1002 = vpop.f32.mrb[0].mxu0
  %v1003 = vadd.f32 0.0, %v1002
  %v1004 = vpop.f32.mrb[0].mxu0
  %1005 = vmatprep.mubr.bf16.mxu0 0
  %1006 = vmatmul.mubr.bf16.gmra.mrb[0].mxu0 %v747
  %v1007 = vpop.f32.mrb[0].mxu0
  %v1008 = vadd.f32 0.0, %v1007
  %v1009 = vpop.f32.mrb[0].mxu0
  %v1010 = vpop.f32.mrb[0].mxu0
  %v1011 = vadd.f32 0.0, %v1010
  %v1012 = vpop.f32.mrb[0].mxu0
  %1013 = vmatprep.mubr.bf16.mxu0 0
  %1014 = vmatmul.mubr.bf16.gmra.mrb[0].mxu0 %v750
  %v1015 = vpop.f32.mrb[0].mxu0
  %v1016 = vadd.f32 0.0, %v1015
  %v1017 = vpop.f32.mrb[0].mxu0
  %v1018 = vpop.f32.mrb[0].mxu0
  %v1019 = vadd.f32 0.0, %v1018
  %v1020 = vpop.f32.mrb[0].mxu0
  %1021 = vmatprep.mubr.bf16.mxu0 0
  %1022 = vmatmul.mubr.bf16.gmra.mrb[0].mxu0 %v753
  %v1023 = vpop.f32.mrb[0].mxu0
  %v1024 = vadd.f32 0.0, %v1023
  %v1025 = vpop.f32.mrb[0].mxu0
  %v1026 = vpop.f32.mrb[0].mxu0
  %v1027 = vadd.f32 0.0, %v1026
  %v1028 = vpop.f32.mrb[0].mxu0
  %1029 = vmatprep.mubr.bf16.mxu0 0
  %1030 = vmatmul.mubr.bf16.gmra.mrb[0].mxu0 %v756
  %v1031 = vpop.f32.mrb[0].mxu0
  %v1032 = vadd.f32 0.0, %v1031
  %v1033 = vpop.f32.mrb[0].mxu0
  %v1034 = vpop.f32.mrb[0].mxu0
  %v1035 = vadd.f32 0.0, %v1034
  %v1036 = vpop.f32.mrb[0].mxu0
  %1037 = vmatprep.mubr.bf16.mxu0 0
  %1038 = vmatmul.mubr.bf16.gmra.mrb[0].mxu0 %v759
  %v1039 = vpop.f32.mrb[0].mxu0
  %v1040 = vadd.f32 0.0, %v1039
  %v1041 = vpop.f32.mrb[0].mxu0
  %v1042 = vpop.f32.mrb[0].mxu0
  %v1043 = vadd.f32 0.0, %v1042
  %v1044 = vpop.f32.mrb[0].mxu0
  %1045 = vmatprep.mubr.bf16.mxu0 0
  %1046 = vmatmul.mubr.bf16.gmra.mrb[0].mxu0 %v762
  %v1047 = vpop.f32.mrb[0].mxu0
  %v1048 = vadd.f32 0.0, %v1047
  %v1049 = vpop.f32.mrb[0].mxu0
  %v1050 = vpop.f32.mrb[0].mxu0
  %v1051 = vadd.f32 0.0, %v1050
  %v1052 = vpop.f32.mrb[0].mxu0
  %1053 = vmatprep.mubr.bf16.mxu0 0
  %1054 = vmatmul.mubr.bf16.gmra.mrb[0].mxu0 %v765
  %v1055 = vpop.f32.mrb[0].mxu0
  %v1056 = vadd.f32 0.0, %v1055
  %v1057 = vpop.f32.mrb[0].mxu0
  %v1058 = vpop.f32.mrb[0].mxu0
  %v1059 = vadd.f32 0.0, %v1058
  %v1060 = vpop.f32.mrb[0].mxu0
  %1061 = vmatprep.mubr.bf16.mxu0 0
  %1062 = vmatmul.mubr.bf16.gmra.mrb[0].mxu0 %v768
  %v1063 = vpop.f32.mrb[0].mxu0
  %v1064 = vadd.f32 0.0, %v1063
  %v1065 = vpop.f32.mrb[0].mxu0
  %v1066 = vpop.f32.mrb[0].mxu0
  %v1067 = vadd.f32 0.0, %v1066
  %v1068 = vpop.f32.mrb[0].mxu0
  %1069 = vmatprep.mubr.bf16.mxu0 0
  %1070 = vmatmul.mubr.bf16.gmra.mrb[0].mxu0 %v771
  %v1071 = vpop.f32.mrb[0].mxu0
  %v1072 = vadd.f32 0.0, %v1071
  %v1073 = vpop.f32.mrb[0].mxu0
  %v1074 = vpop.f32.mrb[0].mxu0
  %v1075 = vadd.f32 0.0, %v1074
  %v1076 = vpop.f32.mrb[0].mxu0
  %1077 = vmatprep.mubr.bf16.mxu0 0
  %1078 = vmatmul.mubr.bf16.gmra.mrb[0].mxu0 %v774
  %v1079 = vpop.f32.mrb[0].mxu0
  %v1080 = vadd.f32 0.0, %v1079
  %v1081 = vpop.f32.mrb[0].mxu0
  %v1082 = vpop.f32.mrb[0].mxu0
  %v1083 = vadd.f32 0.0, %v1082
  %v1084 = vpop.f32.mrb[0].mxu0
  %1085 = vmatprep.mubr.bf16.mxu0 0
  %1086 = vmatmul.mubr.bf16.gmra.mrb[0].mxu0 %v777
  %v1087 = vpop.f32.mrb[0].mxu0
  %v1088 = vadd.f32 0.0, %v1087
  %v1089 = vpop.f32.mrb[0].mxu0
  %v1090 = vpop.f32.mrb[0].mxu0
  %v1091 = vadd.f32 0.0, %v1090
  %v1092 = vpop.f32.mrb[0].mxu0
  %1093 = vmatprep.mubr.bf16.mxu0 0
  %1094 = vmatmul.mubr.bf16.gmra.mrb[0].mxu0 %v780
  %v1095 = vpop.f32.mrb[0].mxu0
  %v1096 = vadd.f32 0.0, %v1095
  %v1097 = vpop.f32.mrb[0].mxu0
  %v1098 = vpop.f32.mrb[0].mxu0
  %v1099 = vadd.f32 0.0, %v1098
  %v1100 = vpop.f32.mrb[0].mxu0
  %1101 = vmatprep.mubr.bf16.mxu0 0
  %1102 = vmatmul.mubr.bf16.gmra.mrb[0].mxu0 %v783
  %v1103 = vpop.f32.mrb[0].mxu0
  %v1104 = vadd.f32 0.0, %v1103
  %v1105 = vpop.f32.mrb[0].mxu0
  %v1106 = vpop.f32.mrb[0].mxu0
  %v1107 = vadd.f32 0.0, %v1106
  %v1108 = vpop.f32.mrb[0].mxu0
  %1109 = vmatprep.mubr.bf16.mxu0 0
  %1110 = vmatmul.mubr.bf16.gmra.mrb[0].mxu0 %v786
  %v1111 = vpop.f32.mrb[0].mxu0
  %v1112 = vadd.f32 0.0, %v1111
  %v1113 = vpop.f32.mrb[0].mxu0
  %v1114 = vpop.f32.mrb[0].mxu0
  %v1115 = vadd.f32 0.0, %v1114
  %v1116 = vpop.f32.mrb[0].mxu0
  %1117 = vmatprep.mubr.bf16.mxu0 0
  %1118 = vmatmul.mubr.bf16.gmra.mrb[0].mxu0 %v789
  %v1119 = vpop.f32.mrb[0].mxu0
  %v1120 = vadd.f32 0.0, %v1119
  %v1121 = vpop.f32.mrb[0].mxu0
  %v1122 = vpop.f32.mrb[0].mxu0
  %v1123 = vadd.f32 0.0, %v1122
  %v1124 = vpop.f32.mrb[0].mxu0
  %1125 = vmatprep.mubr.bf16.mxu0 0
  %1126 = vmatmul.mubr.bf16.gmra.mrb[0].mxu0 %v792
  %v1127 = vpop.f32.mrb[0].mxu0
  %v1128 = vadd.f32 0.0, %v1127
  %v1129 = vpop.f32.mrb[0].mxu0
  %v1130 = vpop.f32.mrb[0].mxu0
  %v1131 = vadd.f32 0.0, %v1130
  %v1132 = vpop.f32.mrb[0].mxu0
  %1133 = vmatprep.mubr.bf16.mxu0 0
  %1134 = vmatmul.mubr.bf16.gmra.mrb[0].mxu0 %v795
  %v1135 = vpop.f32.mrb[0].mxu0
  %v1136 = vadd.f32 0.0, %v1135
  %v1137 = vpop.f32.mrb[0].mxu0
  %v1138 = vpop.f32.mrb[0].mxu0
  %v1139 = vadd.f32 0.0, %v1138
  %v1140 = vpop.f32.mrb[0].mxu0
  %1141 = vmatprep.mubr.bf16.mxu0 0
  %1142 = vmatmul.mubr.bf16.gmra.mrb[0].mxu0 %v798
  %v1143 = vpop.f32.mrb[0].mxu0
  %v1144 = vadd.f32 0.0, %v1143
  %v1145 = vpop.f32.mrb[0].mxu0
  %v1146 = vpop.f32.mrb[0].mxu0
  %v1147 = vadd.f32 0.0, %v1146
  %v1148 = vpop.f32.mrb[0].mxu0
  %1149 = vmatprep.mubr.bf16.mxu0 0
  %1150 = vmatmul.mubr.bf16.gmra.mrb[0].mxu0 %v801
  %v1151 = vpop.f32.mrb[0].mxu0
  %v1152 = vadd.f32 0.0, %v1151
  %v1153 = vpop.f32.mrb[0].mxu0
  %v1154 = vpop.f32.mrb[0].mxu0
  %v1155 = vadd.f32 0.0, %v1154
  %v1156 = vpop.f32.mrb[0].mxu0
  %1157 = vmatprep.mubr.bf16.mxu0 0
  %1158 = vmatmul.mubr.bf16.gmra.mrb[0].mxu0 %v804
  %v1159 = vpop.f32.mrb[0].mxu0
  %v1160 = vadd.f32 0.0, %v1159
  %v1161 = vpop.f32.mrb[0].mxu0
  %v1162 = vpop.f32.mrb[0].mxu0
  %v1163 = vadd.f32 0.0, %v1162
  %v1164 = vpop.f32.mrb[0].mxu0
  %1165 = vmatprep.mubr.bf16.mxu0 0
  %1166 = vmatmul.mubr.bf16.gmra.mrb[0].mxu0 %v807
  %v1167 = vpop.f32.mrb[0].mxu0
  %v1168 = vadd.f32 0.0, %v1167
  %v1169 = vpop.f32.mrb[0].mxu0
  %v1170 = vpop.f32.mrb[0].mxu0
  %v1171 = vadd.f32 0.0, %v1170
  %v1172 = vpop.f32.mrb[0].mxu0
  %1173 = vmatprep.mubr.bf16.mxu0 0
  %1174 = vmatmul.mubr.bf16.gmra.mrb[0].mxu0 %v810
  %v1175 = vpop.f32.mrb[0].mxu0
  %v1176 = vadd.f32 0.0, %v1175
  %v1177 = vpop.f32.mrb[0].mxu0
  %v1178 = vpop.f32.mrb[0].mxu0
  %v1179 = vadd.f32 0.0, %v1178
  %v1180 = vpop.f32.mrb[0].mxu0
  %1181 = vmatprep.mubr.bf16.mxu0 0
  %1182 = vmatmul.mubr.bf16.gmra.mrb[0].mxu0 %v813
  %v1183 = vpop.f32.mrb[0].mxu0
  %v1184 = vadd.f32 0.0, %v1183
  %v1185 = vpop.f32.mrb[0].mxu0
  %v1186 = vpop.f32.mrb[0].mxu0
  %v1187 = vadd.f32 0.0, %v1186
  %v1188 = vpop.f32.mrb[0].mxu0
  %1189 = vmatprep.mubr.bf16.mxu0 0
  %1190 = vmatmul.mubr.bf16.gmra.mrb[0].mxu0 %v816
  %v1191 = vpop.f32.mrb[0].mxu0
  %v1192 = vadd.f32 0.0, %v1191
  %v1193 = vpop.f32.mrb[0].mxu0
  %v1194 = vpop.f32.mrb[0].mxu0
  %v1195 = vadd.f32 0.0, %v1194
  %v1196 = vpop.f32.mrb[0].mxu0
  %1197 = vmatprep.mubr.bf16.mxu0 0
  %1198 = vmatmul.mubr.bf16.gmra.mrb[0].mxu0 %v819
  %v1199 = vpop.f32.mrb[0].mxu0
  %v1200 = vadd.f32 0.0, %v1199
  %v1201 = vpop.f32.mrb[0].mxu0
  %v1202 = vpop.f32.mrb[0].mxu0
  %v1203 = vadd.f32 0.0, %v1202
  %v1204 = vpop.f32.mrb[0].mxu0
  %1205 = vmatprep.mubr.bf16.mxu0 0
  %1206 = vmatmul.mubr.bf16.gmra.mrb[0].mxu0 %v822
  %v1207 = vpop.f32.mrb[0].mxu0
  %v1208 = vadd.f32 0.0, %v1207
  %v1209 = vpop.f32.mrb[0].mxu0
  %v1210 = vpop.f32.mrb[0].mxu0
  %v1211 = vadd.f32 0.0, %v1210
  %v1212 = vpop.f32.mrb[0].mxu0
  %1213 = vmatprep.mubr.bf16.mxu0 0
  %1214 = vmatmul.mubr.bf16.gmra.mrb[0].mxu0 %v825
  %v1215 = vpop.f32.mrb[0].mxu0
  %v1216 = vadd.f32 0.0, %v1215
  %v1217 = vpop.f32.mrb[0].mxu0
  %v1218 = vpop.f32.mrb[0].mxu0
  %v1219 = vadd.f32 0.0, %v1218
  %v1220 = vpop.f32.mrb[0].mxu0
  %1221 = vmatprep.mubr.bf16.mxu0 0
  %1222 = vmatmul.mubr.bf16.gmra.mrb[0].mxu0 %v828
  %v1223 = vpop.f32.mrb[0].mxu0
  %v1224 = vadd.f32 0.0, %v1223
  %v1225 = vpop.f32.mrb[0].mxu0
  %v1226 = vpop.f32.mrb[0].mxu0
  %v1227 = vadd.f32 0.0, %v1226
  %v1228 = vpop.f32.mrb[0].mxu0
  %1229 = vmatprep.mubr.bf16.mxu0 0
  %1230 = vmatmul.mubr.bf16.gmra.mrb[0].mxu0 %v831
  %v1231 = vpop.f32.mrb[0].mxu0
  %v1232 = vadd.f32 0.0, %v1231
  %v1233 = vpop.f32.mrb[0].mxu0
  %v1234 = vpop.f32.mrb[0].mxu0
  %v1235 = vadd.f32 0.0, %v1234
  %v1236 = vpop.f32.mrb[0].mxu0
  %1237 = vmatprep.mubr.bf16.mxu0 0
  %1238 = vmatmul.mubr.bf16.gmra.mrb[0].mxu0 %v834
  %v1239 = vpop.f32.mrb[0].mxu0
  %v1240 = vadd.f32 0.0, %v1239
  %v1241 = vpop.f32.mrb[0].mxu0
  %v1242 = vpop.f32.mrb[0].mxu0
  %v1243 = vadd.f32 0.0, %v1242
  %v1244 = vpop.f32.mrb[0].mxu0
  %1245 = vmatprep.mubr.bf16.mxu0 0
  %1246 = vmatmul.mubr.bf16.gmra.mrb[0].mxu0 %v837
  %v1247 = vpop.f32.mrb[0].mxu0
  %v1248 = vadd.f32 0.0, %v1247
  %v1249 = vpop.f32.mrb[0].mxu0
  %v1250 = vpop.f32.mrb[0].mxu0
  %v1251 = vadd.f32 0.0, %v1250
  %v1252 = vpop.f32.mrb[0].mxu0
  %1253 = vmatprep.mubr.bf16.mxu0 0
  %1254 = vmatmul.mubr.bf16.gmra.mrb[0].mxu0 %v840
  %v1255 = vpop.f32.mrb[0].mxu0
  %v1256 = vadd.f32 0.0, %v1255
  %v1257 = vpop.f32.mrb[0].mxu0
  %v1258 = vpop.f32.mrb[0].mxu0
  %v1259 = vadd.f32 0.0, %v1258
  %v1260 = vpop.f32.mrb[0].mxu0
  %1261 = vmatprep.mubr.bf16.mxu0 0
  %1262 = vmatmul.mubr.bf16.gmra.mrb[0].mxu0 %v843
  %v1263 = vpop.f32.mrb[0].mxu0
  %v1264 = vadd.f32 0.0, %v1263
  %v1265 = vpop.f32.mrb[0].mxu0
  %v1266 = vpop.f32.mrb[0].mxu0
  %v1267 = vadd.f32 0.0, %v1266
  %v1268 = vpop.f32.mrb[0].mxu0
  %1269 = vmatprep.mubr.bf16.mxu0 0
  %1270 = vmatmul.mubr.bf16.gmra.mrb[0].mxu0 %v846
  %v1271 = vpop.f32.mrb[0].mxu0
  %v1272 = vadd.f32 0.0, %v1271
  %v1273 = vpop.f32.mrb[0].mxu0
  %v1274 = vpop.f32.mrb[0].mxu0
  %v1275 = vadd.f32 0.0, %v1274
  %v1276 = vpop.f32.mrb[0].mxu0
  %1277 = vmatprep.mubr.bf16.mxu0 0
  %1278 = vmatmul.mubr.bf16.gmra.mrb[0].mxu0 %v849
  %v1279 = vpop.f32.mrb[0].mxu0
  %v1280 = vadd.f32 0.0, %v1279
  %v1281 = vpop.f32.mrb[0].mxu0
  %v1282 = vpop.f32.mrb[0].mxu0
  %v1283 = vadd.f32 0.0, %v1282
  %v1284 = vpop.f32.mrb[0].mxu0
  %1285 = vmatprep.mubr.bf16.mxu0 0
  %1286 = vmatmul.mubr.bf16.gmra.mrb[0].mxu0 %v852
  %v1287 = vpop.f32.mrb[0].mxu0
  %v1288 = vadd.f32 0.0, %v1287
  %v1289 = vpop.f32.mrb[0].mxu0
  %v1290 = vpop.f32.mrb[0].mxu0
  %v1291 = vadd.f32 0.0, %v1290
  %v1292 = vpop.f32.mrb[0].mxu0
  %1293 = vmatprep.mubr.bf16.mxu0 0
  %1294 = vmatmul.mubr.bf16.gmra.mrb[0].mxu0 %v855
  %v1295 = vpop.f32.mrb[0].mxu0
  %v1296 = vadd.f32 0.0, %v1295
  %v1297 = vpop.f32.mrb[0].mxu0
  %v1298 = vpop.f32.mrb[0].mxu0
  %v1299 = vadd.f32 0.0, %v1298
  %v1300 = vpop.f32.mrb[0].mxu0
  %1301 = vmatprep.mubr.bf16.mxu0 0
  %1302 = vmatmul.mubr.bf16.gmra.mrb[0].mxu0 %v858
  %v1303 = vpop.f32.mrb[0].mxu0
  %v1304 = vadd.f32 0.0, %v1303
  %v1305 = vpop.f32.mrb[0].mxu0
  %v1306 = vpop.f32.mrb[0].mxu0
  %v1307 = vadd.f32 0.0, %v1306
  %v1308 = vpop.f32.mrb[0].mxu0
  %1309 = vmatprep.mubr.bf16.mxu0 0
  %1310 = vmatmul.mubr.bf16.gmra.mrb[0].mxu0 %v861
  %v1311 = vpop.f32.mrb[0].mxu0
  %v1312 = vadd.f32 0.0, %v1311
  %v1313 = vpop.f32.mrb[0].mxu0
  %v1314 = vpop.f32.mrb[0].mxu0
  %v1315 = vadd.f32 0.0, %v1314
  %v1316 = vpop.f32.mrb[0].mxu0
  %1317 = vmatprep.mubr.bf16.mxu0 0
  %1318 = vmatmul.mubr.bf16.gmra.mrb[0].mxu0 %v864
  %v1319 = vpop.f32.mrb[0].mxu0
  %v1320 = vadd.f32 0.0, %v1319
  %v1321 = vpop.f32.mrb[0].mxu0
  %v1322 = vpop.f32.mrb[0].mxu0
  %v1323 = vadd.f32 0.0, %v1322
  %v1324 = vpop.f32.mrb[0].mxu0
  %1325 = vmatprep.mubr.bf16.mxu0 0
  %1326 = vmatmul.mubr.bf16.gmra.mrb[0].mxu0 %v867
  %v1327 = vpop.f32.mrb[0].mxu0
  %v1328 = vadd.f32 0.0, %v1327
  %v1329 = vpop.f32.mrb[0].mxu0
  %v1330 = vpop.f32.mrb[0].mxu0
  %v1331 = vadd.f32 0.0, %v1330
  %v1332 = vpop.f32.mrb[0].mxu0
  %1333 = vmatprep.mubr.bf16.mxu0 0
  %1334 = vmatmul.mubr.bf16.gmra.mrb[0].mxu0 %v870
  %v1335 = vpop.f32.mrb[0].mxu0
  %v1336 = vadd.f32 0.0, %v1335
  %v1337 = vpop.f32.mrb[0].mxu0
  %v1338 = vpop.f32.mrb[0].mxu0
  %v1339 = vadd.f32 0.0, %v1338
  %v1340 = vpop.f32.mrb[0].mxu0
  %1341 = vmatprep.mubr.bf16.mxu0 0
  %1342 = vmatmul.mubr.bf16.gmra.mrb[0].mxu0 %v873
  %v1343 = vpop.f32.mrb[0].mxu0
  %v1344 = vadd.f32 0.0, %v1343
  %v1345 = vpop.f32.mrb[0].mxu0
  %v1346 = vpop.f32.mrb[0].mxu0
  %v1347 = vadd.f32 0.0, %v1346
  %v1348 = vpop.f32.mrb[0].mxu0
  %1349 = vmatprep.mubr.bf16.mxu0 0
  %1350 = vmatmul.mubr.bf16.gmra.mrb[0].mxu0 %v876
  %v1351 = vpop.f32.mrb[0].mxu0
  %v1352 = vadd.f32 0.0, %v1351
  %v1353 = vpop.f32.mrb[0].mxu0
  %v1354 = vpop.f32.mrb[0].mxu0
  %v1355 = vadd.f32 0.0, %v1354
  %v1356 = vpop.f32.mrb[0].mxu0
  %1357 = vmatprep.mubr.bf16.mxu0 0
  %1358 = vmatmul.mubr.bf16.gmra.mrb[0].mxu0 %v879
  %v1359 = vpop.f32.mrb[0].mxu0
  %v1360 = vadd.f32 0.0, %v1359
  %v1361 = vpop.f32.mrb[0].mxu0
  %v1362 = vpop.f32.mrb[0].mxu0
  %v1363 = vadd.f32 0.0, %v1362
  %v1364 = vpop.f32.mrb[0].mxu0
  %1365 = vmatprep.mubr.bf16.mxu0 0
  %1366 = vmatmul.mubr.bf16.gmra.mrb[0].mxu0 %v882
  %v1367 = vpop.f32.mrb[0].mxu0
  %v1368 = vadd.f32 0.0, %v1367
  %v1369 = vpop.f32.mrb[0].mxu0
  %v1370 = vpop.f32.mrb[0].mxu0
  %v1371 = vadd.f32 0.0, %v1370
  %v1372 = vpop.f32.mrb[0].mxu0
  %1373 = vmatprep.mubr.bf16.mxu0 0
  %1374 = vmatmul.mubr.bf16.gmra.mrb[0].mxu0 %v885
  %v1375 = vpop.f32.mrb[0].mxu0
  %v1376 = vadd.f32 0.0, %v1375
  %v1377 = vpop.f32.mrb[0].mxu0
  %v1378 = vpop.f32.mrb[0].mxu0
  %v1379 = vadd.f32 0.0, %v1378
  %v1380 = vpop.f32.mrb[0].mxu0
  %1381 = vmatprep.mubr.bf16.mxu0 0
  %1382 = vmatmul.mubr.bf16.gmra.mrb[0].mxu0 %v888
  %v1383 = vpop.f32.mrb[0].mxu0
  %v1384 = vadd.f32 0.0, %v1383
  %v1385 = vpop.f32.mrb[0].mxu0
  %v1386 = vpop.f32.mrb[0].mxu0
  %v1387 = vadd.f32 0.0, %v1386
  %v1388 = vpop.f32.mrb[0].mxu0
  %1389 = vmatprep.mubr.bf16.mxu0 0
  %1390 = vmatmul.mubr.bf16.gmra.mrb[0].mxu0 %v891
  %v1391 = vpop.f32.mrb[0].mxu0
  %v1392 = vadd.f32 0.0, %v1391
  %v1393 = vpop.f32.mrb[0].mxu0
  %v1394 = vpop.f32.mrb[0].mxu0
  %v1395 = vadd.f32 0.0, %v1394
  %v1396 = vpop.f32.mrb[0].mxu0
  %1397 = vmatprep.mubr.bf16.mxu0 0
  %1398 = vmatmul.mubr.bf16.gmra.mrb[0].mxu0 %v894
  %v1399 = vpop.f32.mrb[0].mxu0
  %v1400 = vadd.f32 0.0, %v1399
  %v1401 = vpop.f32.mrb[0].mxu0
  %v1402 = vpop.f32.mrb[0].mxu0
  %v1403 = vadd.f32 0.0, %v1402
  %v1404 = vpop.f32.mrb[0].mxu0
  %1405 = vmatprep.mubr.bf16.mxu0 0
  %1406 = vmatmul.mubr.bf16.gmra.mrb[0].mxu0 %v897
  %v1407 = vpop.f32.mrb[0].mxu0
  %v1408 = vadd.f32 0.0, %v1407
  %v1409 = vpop.f32.mrb[0].mxu0
  %v1410 = vpop.f32.mrb[0].mxu0
  %v1411 = vadd.f32 0.0, %v1410
  %v1412 = vpop.f32.mrb[0].mxu0
  %1413 = vmatprep.mubr.bf16.mxu0 0
  %1414 = vmatmul.mubr.bf16.gmra.mrb[0].mxu0 %v900
  %v1415 = vpop.f32.mrb[0].mxu0
  %v1416 = vadd.f32 0.0, %v1415
  %v1417 = vpop.f32.mrb[0].mxu0
  %v1418 = vpop.f32.mrb[0].mxu0
  %v1419 = vadd.f32 0.0, %v1418
  %v1420 = vpop.f32.mrb[0].mxu0
  %1421 = vmatprep.mubr.bf16.mxu0 0
  %1422 = vmatmul.mubr.bf16.gmra.mrb[0].mxu0 %v903
  %v1423 = vpop.f32.mrb[0].mxu0
  %v1424 = vadd.f32 0.0, %v1423
  %v1425 = vpop.f32.mrb[0].mxu0
  %v1426 = vpop.f32.mrb[0].mxu0
  %v1427 = vadd.f32 0.0, %v1426
  %v1428 = vpop.f32.mrb[0].mxu0
  %1429 = vmatprep.mubr.bf16.mxu0 0
  %1430 = vmatmul.mubr.bf16.gmra.mrb[0].mxu0 %v906
  %v1431 = vpop.f32.mrb[0].mxu0
  %v1432 = vadd.f32 0.0, %v1431
  %v1433 = vpop.f32.mrb[0].mxu0
  %v1434 = vpop.f32.mrb[0].mxu0
  %v1435 = vadd.f32 0.0, %v1434
  %v1436 = vpop.f32.mrb[0].mxu0
  %1437 = vmatprep.mubr.bf16.mxu0 0
  %1438 = vmatmul.mubr.bf16.gmra.mrb[0].mxu0 %v909
  %v1439 = vpop.f32.mrb[0].mxu0
  %v1440 = vadd.f32 0.0, %v1439
  %v1441 = vpop.f32.mrb[0].mxu0
  %v1442 = vpop.f32.mrb[0].mxu0
  %v1443 = vadd.f32 0.0, %v1442
  %v1444 = vpop.f32.mrb[0].mxu0
  %1445 = vmatprep.mubr.bf16.mxu0 0
  %1446 = vmatmul.mubr.bf16.gmra.mrb[0].mxu0 %v912
  %v1447 = vpop.f32.mrb[0].mxu0
  %v1448 = vadd.f32 0.0, %v1447
  %v1449 = vpop.f32.mrb[0].mxu0
  %v1450 = vpop.f32.mrb[0].mxu0
  %v1451 = vadd.f32 0.0, %v1450
  %v1452 = vpop.f32.mrb[0].mxu0
  %1453 = vmatprep.mubr.bf16.mxu0 0
  %1454 = vmatmul.mubr.bf16.gmra.mrb[0].mxu0 %v915
  %v1455 = vpop.f32.mrb[0].mxu0
  %v1456 = vadd.f32 0.0, %v1455
  %v1457 = vpop.f32.mrb[0].mxu0
  %v1458 = vpop.f32.mrb[0].mxu0
  %v1459 = vadd.f32 0.0, %v1458
  %v1460 = vpop.f32.mrb[0].mxu0
  %1461 = vdwg.mxu0
  %v1478 = vunpack.c.l.b16 %v201
  %v1479 = vunpack.c.l.b16 %v202
  %v1480 = vunpack.c.l.b16 %v219
  %v1481 = vunpack.c.l.b16 %v220
  %v1482 = vunpack.c.l.b16 %v237
  %v1483 = vunpack.c.l.b16 %v238
  %v1484 = vunpack.c.l.b16 %v255
  %v1485 = vunpack.c.l.b16 %v256
  %v1486 = vunpack.c.l.b16 %v273
  %v1487 = vunpack.c.l.b16 %v274
  %v1488 = vunpack.c.l.b16 %v291
  %v1489 = vunpack.c.l.b16 %v292
  %v1490 = vunpack.c.l.b16 %v309
  %v1491 = vunpack.c.l.b16 %v310
  %v1492 = vunpack.c.l.b16 %v327
  %v1493 = vunpack.c.l.b16 %v328
  %v1494 = vpack.c.b16 %v1479, %v1478
  %v1495 = vpack.c.b16 %v1481, %v1480
  %v1496 = vpack.c.b16 %v1483, %v1482
  %v1497 = vpack.c.b16 %v1485, %v1484
  %v1498 = vpack.c.b16 %v1487, %v1486
  %v1499 = vpack.c.b16 %v1489, %v1488
  %v1500 = vpack.c.b16 %v1491, %v1490
  %v1501 = vpack.c.b16 %v1493, %v1492
  %v1510 = vunpack.c.l.b16 %v363
  %v1511 = vunpack.c.l.b16 %v364
  %v1512 = vunpack.c.l.b16 %v365
  %v1513 = vunpack.c.l.b16 %v366
  %v1514 = vunpack.c.l.b16 %v367
  %v1515 = vunpack.c.l.b16 %v368
  %v1516 = vunpack.c.l.b16 %v369
  %v1517 = vunpack.c.l.b16 %v370
  %v1518 = vpack.c.b16 %v1511, %v1510
  %v1519 = vpack.c.b16 %v1513, %v1512
  %v1520 = vpack.c.b16 %v1515, %v1514
  %v1521 = vpack.c.b16 %v1517, %v1516
  %v1527 = vsel %vm724, %v1494, 0
  %v1530 = vsel %vm724, %v1495, 0
  %v1533 = vsel %vm724, %v1496, 0
  %v1536 = vsel %vm724, %v1497, 0
  %v1539 = vsel %vm724, %v1498, 0
  %v1542 = vsel %vm724, %v1499, 0
  %v1545 = vsel %vm724, %v1500, 0
  %v1548 = vsel %vm724, %v1501, 0
  %1550 = vmatprep.subr.bf16.mxu0 0
  %1551 = vmatpush1.bf16.msra.mxu0 %v1518
  %1552 = vmatprep.subr.bf16.mxu0 0
  %1553 = vmatpush1.bf16.msra.mxu0 %v1519
  %1554 = vmatprep.subr.bf16.mxu0 0
  %1555 = vmatpush1.bf16.msra.mxu0 %v1520
  %1556 = vmatprep.subr.bf16.mxu0 0
  %1557 = vmatpush1.bf16.msra.mxu0 %v1521
  %1558 = vmatprep.subr.bf16.mxu0 0
  %1559 = vmatpush1.bf16.msra.mxu0 0
  %1560 = vmatprep.subr.bf16.mxu0 0
  %1561 = vmatpush1.bf16.msra.mxu0 0
  %1562 = vmatprep.subr.bf16.mxu0 0
  %1563 = vmatpush1.bf16.msra.mxu0 0
  %1564 = vmatprep.subr.bf16.mxu0 0
  %1565 = vmatpush1.bf16.msra.mxu0 0
  %1566 = vmatprep.subr.bf16.mxu0 0
  %1567 = vmatpush1.bf16.msra.mxu0 0
  %1568 = vmatprep.subr.bf16.mxu0 0
  %1569 = vmatpush1.bf16.msra.mxu0 0
  %1570 = vmatprep.subr.bf16.mxu0 0
  %1571 = vmatpush1.bf16.msra.mxu0 0
  %1572 = vmatprep.subr.bf16.mxu0 0
  %1573 = vmatpush1.bf16.msra.mxu0 0
  %1574 = vmatprep.subr.bf16.mxu0 0
  %1575 = vmatpush1.bf16.msra.mxu0 0
  %1576 = vmatprep.subr.bf16.mxu0 0
  %1577 = vmatpush1.bf16.msra.mxu0 0
  %1578 = vmatprep.subr.bf16.mxu0 0
  %1579 = vmatpush1.bf16.msra.mxu0 0
  %1580 = vmatprep.subr.bf16.mxu0 0
  %1581 = vmatpush1.bf16.msra.mxu0 0
  %1582 = vmatprep.mubr.bf16.mxu0 0
  %1583 = vmatmul.mubr.bf16.gmra.mrb[0].mxu0 %v1527
  %v1584 = vpop.f32.mrb[0].mxu0
  %v1585 = vadd.f32 %v952, %v1584
  %v1586 = vpop.f32.mrb[0].mxu0
  %v1587 = vpop.f32.mrb[0].mxu0
  %v1588 = vadd.f32 %v955, %v1587
  %v1589 = vpop.f32.mrb[0].mxu0
  %1590 = vmatprep.mubr.bf16.mxu0 0
  %1591 = vmatmul.mubr.bf16.gmra.mrb[0].mxu0 %v726
  %v1592 = vpop.f32.mrb[0].mxu0
  %v1593 = vadd.f32 %v960, %v1592
  %v1594 = vpop.f32.mrb[0].mxu0
  %v1595 = vpop.f32.mrb[0].mxu0
  %v1596 = vadd.f32 %v963, %v1595
  %v1597 = vpop.f32.mrb[0].mxu0
  %1598 = vmatprep.mubr.bf16.mxu0 0
  %1599 = vmatmul.mubr.bf16.gmra.mrb[0].mxu0 %v729
  %v1600 = vpop.f32.mrb[0].mxu0
  %v1601 = vadd.f32 %v968, %v1600
  %v1602 = vpop.f32.mrb[0].mxu0
  %v1603 = vpop.f32.mrb[0].mxu0
  %v1604 = vadd.f32 %v971, %v1603
  %v1605 = vpop.f32.mrb[0].mxu0
  %1606 = vmatprep.mubr.bf16.mxu0 0
  %1607 = vmatmul.mubr.bf16.gmra.mrb[0].mxu0 %v732
  %v1608 = vpop.f32.mrb[0].mxu0
  %v1609 = vadd.f32 %v976, %v1608
  %v1610 = vpop.f32.mrb[0].mxu0
  %v1611 = vpop.f32.mrb[0].mxu0
  %v1612 = vadd.f32 %v979, %v1611
  %v1613 = vpop.f32.mrb[0].mxu0
  %1614 = vmatprep.mubr.bf16.mxu0 0
  %1615 = vmatmul.mubr.bf16.gmra.mrb[0].mxu0 %v735
  %v1616 = vpop.f32.mrb[0].mxu0
  %v1617 = vadd.f32 %v984, %v1616
  %v1618 = vpop.f32.mrb[0].mxu0
  %v1619 = vpop.f32.mrb[0].mxu0
  %v1620 = vadd.f32 %v987, %v1619
  %v1621 = vpop.f32.mrb[0].mxu0
  %1622 = vmatprep.mubr.bf16.mxu0 0
  %1623 = vmatmul.mubr.bf16.gmra.mrb[0].mxu0 %v738
  %v1624 = vpop.f32.mrb[0].mxu0
  %v1625 = vadd.f32 %v992, %v1624
  %v1626 = vpop.f32.mrb[0].mxu0
  %v1627 = vpop.f32.mrb[0].mxu0
  %v1628 = vadd.f32 %v995, %v1627
  %v1629 = vpop.f32.mrb[0].mxu0
  %1630 = vmatprep.mubr.bf16.mxu0 0
  %1631 = vmatmul.mubr.bf16.gmra.mrb[0].mxu0 %v741
  %v1632 = vpop.f32.mrb[0].mxu0
  %v1633 = vadd.f32 %v1000, %v1632
  %v1634 = vpop.f32.mrb[0].mxu0
  %v1635 = vpop.f32.mrb[0].mxu0
  %v1636 = vadd.f32 %v1003, %v1635
  %v1637 = vpop.f32.mrb[0].mxu0
  %1638 = vmatprep.mubr.bf16.mxu0 0
  %1639 = vmatmul.mubr.bf16.gmra.mrb[0].mxu0 %v744
  %v1640 = vpop.f32.mrb[0].mxu0
  %v1641 = vadd.f32 %v1008, %v1640
  %v1642 = vpop.f32.mrb[0].mxu0
  %v1643 = vpop.f32.mrb[0].mxu0
  %v1644 = vadd.f32 %v1011, %v1643
  %v1645 = vpop.f32.mrb[0].mxu0
  %1646 = vmatprep.mubr.bf16.mxu0 0
  %1647 = vmatmul.mubr.bf16.gmra.mrb[0].mxu0 %v1530
  %v1648 = vpop.f32.mrb[0].mxu0
  %v1649 = vadd.f32 %v1016, %v1648
  %v1650 = vpop.f32.mrb[0].mxu0
  %v1651 = vpop.f32.mrb[0].mxu0
  %v1652 = vadd.f32 %v1019, %v1651
  %v1653 = vpop.f32.mrb[0].mxu0
  %1654 = vmatprep.mubr.bf16.mxu0 0
  %1655 = vmatmul.mubr.bf16.gmra.mrb[0].mxu0 %v750
  %v1656 = vpop.f32.mrb[0].mxu0
  %v1657 = vadd.f32 %v1024, %v1656
  %v1658 = vpop.f32.mrb[0].mxu0
  %v1659 = vpop.f32.mrb[0].mxu0
  %v1660 = vadd.f32 %v1027, %v1659
  %v1661 = vpop.f32.mrb[0].mxu0
  %1662 = vmatprep.mubr.bf16.mxu0 0
  %1663 = vmatmul.mubr.bf16.gmra.mrb[0].mxu0 %v753
  %v1664 = vpop.f32.mrb[0].mxu0
  %v1665 = vadd.f32 %v1032, %v1664
  %v1666 = vpop.f32.mrb[0].mxu0
  %v1667 = vpop.f32.mrb[0].mxu0
  %v1668 = vadd.f32 %v1035, %v1667
  %v1669 = vpop.f32.mrb[0].mxu0
  %1670 = vmatprep.mubr.bf16.mxu0 0
  %1671 = vmatmul.mubr.bf16.gmra.mrb[0].mxu0 %v756
  %v1672 = vpop.f32.mrb[0].mxu0
  %v1673 = vadd.f32 %v1040, %v1672
  %v1674 = vpop.f32.mrb[0].mxu0
  %v1675 = vpop.f32.mrb[0].mxu0
  %v1676 = vadd.f32 %v1043, %v1675
  %v1677 = vpop.f32.mrb[0].mxu0
  %1678 = vmatprep.mubr.bf16.mxu0 0
  %1679 = vmatmul.mubr.bf16.gmra.mrb[0].mxu0 %v759
  %v1680 = vpop.f32.mrb[0].mxu0
  %v1681 = vadd.f32 %v1048, %v1680
  %v1682 = vpop.f32.mrb[0].mxu0
  %v1683 = vpop.f32.mrb[0].mxu0
  %v1684 = vadd.f32 %v1051, %v1683
  %v1685 = vpop.f32.mrb[0].mxu0
  %1686 = vmatprep.mubr.bf16.mxu0 0
  %1687 = vmatmul.mubr.bf16.gmra.mrb[0].mxu0 %v762
  %v1688 = vpop.f32.mrb[0].mxu0
  %v1689 = vadd.f32 %v1056, %v1688
  %v1690 = vpop.f32.mrb[0].mxu0
  %v1691 = vpop.f32.mrb[0].mxu0
  %v1692 = vadd.f32 %v1059, %v1691
  %v1693 = vpop.f32.mrb[0].mxu0
  %1694 = vmatprep.mubr.bf16.mxu0 0
  %1695 = vmatmul.mubr.bf16.gmra.mrb[0].mxu0 %v765
  %v1696 = vpop.f32.mrb[0].mxu0
  %v1697 = vadd.f32 %v1064, %v1696
  %v1698 = vpop.f32.mrb[0].mxu0
  %v1699 = vpop.f32.mrb[0].mxu0
  %v1700 = vadd.f32 %v1067, %v1699
  %v1701 = vpop.f32.mrb[0].mxu0
  %1702 = vmatprep.mubr.bf16.mxu0 0
  %1703 = vmatmul.mubr.bf16.gmra.mrb[0].mxu0 %v768
  %v1704 = vpop.f32.mrb[0].mxu0
  %v1705 = vadd.f32 %v1072, %v1704
  %v1706 = vpop.f32.mrb[0].mxu0
  %v1707 = vpop.f32.mrb[0].mxu0
  %v1708 = vadd.f32 %v1075, %v1707
  %v1709 = vpop.f32.mrb[0].mxu0
  %1710 = vmatprep.mubr.bf16.mxu0 0
  %1711 = vmatmul.mubr.bf16.gmra.mrb[0].mxu0 %v1533
  %v1712 = vpop.f32.mrb[0].mxu0
  %v1713 = vadd.f32 %v1080, %v1712
  %v1714 = vpop.f32.mrb[0].mxu0
  %v1715 = vpop.f32.mrb[0].mxu0
  %v1716 = vadd.f32 %v1083, %v1715
  %v1717 = vpop.f32.mrb[0].mxu0
  %1718 = vmatprep.mubr.bf16.mxu0 0
  %1719 = vmatmul.mubr.bf16.gmra.mrb[0].mxu0 %v774
  %v1720 = vpop.f32.mrb[0].mxu0
  %v1721 = vadd.f32 %v1088, %v1720
  %v1722 = vpop.f32.mrb[0].mxu0
  %v1723 = vpop.f32.mrb[0].mxu0
  %v1724 = vadd.f32 %v1091, %v1723
  %v1725 = vpop.f32.mrb[0].mxu0
  %1726 = vmatprep.mubr.bf16.mxu0 0
  %1727 = vmatmul.mubr.bf16.gmra.mrb[0].mxu0 %v777
  %v1728 = vpop.f32.mrb[0].mxu0
  %v1729 = vadd.f32 %v1096, %v1728
  %v1730 = vpop.f32.mrb[0].mxu0
  %v1731 = vpop.f32.mrb[0].mxu0
  %v1732 = vadd.f32 %v1099, %v1731
  %v1733 = vpop.f32.mrb[0].mxu0
  %1734 = vmatprep.mubr.bf16.mxu0 0
  %1735 = vmatmul.mubr.bf16.gmra.mrb[0].mxu0 %v780
  %v1736 = vpop.f32.mrb[0].mxu0
  %v1737 = vadd.f32 %v1104, %v1736
  %v1738 = vpop.f32.mrb[0].mxu0
  %v1739 = vpop.f32.mrb[0].mxu0
  %v1740 = vadd.f32 %v1107, %v1739
  %v1741 = vpop.f32.mrb[0].mxu0
  %1742 = vmatprep.mubr.bf16.mxu0 0
  %1743 = vmatmul.mubr.bf16.gmra.mrb[0].mxu0 %v783
  %v1744 = vpop.f32.mrb[0].mxu0
  %v1745 = vadd.f32 %v1112, %v1744
  %v1746 = vpop.f32.mrb[0].mxu0
  %v1747 = vpop.f32.mrb[0].mxu0
  %v1748 = vadd.f32 %v1115, %v1747
  %v1749 = vpop.f32.mrb[0].mxu0
  %1750 = vmatprep.mubr.bf16.mxu0 0
  %1751 = vmatmul.mubr.bf16.gmra.mrb[0].mxu0 %v786
  %v1752 = vpop.f32.mrb[0].mxu0
  %v1753 = vadd.f32 %v1120, %v1752
  %v1754 = vpop.f32.mrb[0].mxu0
  %v1755 = vpop.f32.mrb[0].mxu0
  %v1756 = vadd.f32 %v1123, %v1755
  %v1757 = vpop.f32.mrb[0].mxu0
  %1758 = vmatprep.mubr.bf16.mxu0 0
  %1759 = vmatmul.mubr.bf16.gmra.mrb[0].mxu0 %v789
  %v1760 = vpop.f32.mrb[0].mxu0
  %v1761 = vadd.f32 %v1128, %v1760
  %v1762 = vpop.f32.mrb[0].mxu0
  %v1763 = vpop.f32.mrb[0].mxu0
  %v1764 = vadd.f32 %v1131, %v1763
  %v1765 = vpop.f32.mrb[0].mxu0
  %1766 = vmatprep.mubr.bf16.mxu0 0
  %1767 = vmatmul.mubr.bf16.gmra.mrb[0].mxu0 %v792
  %v1768 = vpop.f32.mrb[0].mxu0
  %v1769 = vadd.f32 %v1136, %v1768
  %v1770 = vpop.f32.mrb[0].mxu0
  %v1771 = vpop.f32.mrb[0].mxu0
  %v1772 = vadd.f32 %v1139, %v1771
  %v1773 = vpop.f32.mrb[0].mxu0
  %1774 = vmatprep.mubr.bf16.mxu0 0
  %1775 = vmatmul.mubr.bf16.gmra.mrb[0].mxu0 %v1536
  %v1776 = vpop.f32.mrb[0].mxu0
  %v1777 = vadd.f32 %v1144, %v1776
  %v1778 = vpop.f32.mrb[0].mxu0
  %v1779 = vpop.f32.mrb[0].mxu0
  %v1780 = vadd.f32 %v1147, %v1779
  %v1781 = vpop.f32.mrb[0].mxu0
  %1782 = vmatprep.mubr.bf16.mxu0 0
  %1783 = vmatmul.mubr.bf16.gmra.mrb[0].mxu0 %v798
  %v1784 = vpop.f32.mrb[0].mxu0
  %v1785 = vadd.f32 %v1152, %v1784
  %v1786 = vpop.f32.mrb[0].mxu0
  %v1787 = vpop.f32.mrb[0].mxu0
  %v1788 = vadd.f32 %v1155, %v1787
  %v1789 = vpop.f32.mrb[0].mxu0
  %1790 = vmatprep.mubr.bf16.mxu0 0
  %1791 = vmatmul.mubr.bf16.gmra.mrb[0].mxu0 %v801
  %v1792 = vpop.f32.mrb[0].mxu0
  %v1793 = vadd.f32 %v1160, %v1792
  %v1794 = vpop.f32.mrb[0].mxu0
  %v1795 = vpop.f32.mrb[0].mxu0
  %v1796 = vadd.f32 %v1163, %v1795
  %v1797 = vpop.f32.mrb[0].mxu0
  %1798 = vmatprep.mubr.bf16.mxu0 0
  %1799 = vmatmul.mubr.bf16.gmra.mrb[0].mxu0 %v804
  %v1800 = vpop.f32.mrb[0].mxu0
  %v1801 = vadd.f32 %v1168, %v1800
  %v1802 = vpop.f32.mrb[0].mxu0
  %v1803 = vpop.f32.mrb[0].mxu0
  %v1804 = vadd.f32 %v1171, %v1803
  %v1805 = vpop.f32.mrb[0].mxu0
  %1806 = vmatprep.mubr.bf16.mxu0 0
  %1807 = vmatmul.mubr.bf16.gmra.mrb[0].mxu0 %v807
  %v1808 = vpop.f32.mrb[0].mxu0
  %v1809 = vadd.f32 %v1176, %v1808
  %v1810 = vpop.f32.mrb[0].mxu0
  %v1811 = vpop.f32.mrb[0].mxu0
  %v1812 = vadd.f32 %v1179, %v1811
  %v1813 = vpop.f32.mrb[0].mxu0
  %1814 = vmatprep.mubr.bf16.mxu0 0
  %1815 = vmatmul.mubr.bf16.gmra.mrb[0].mxu0 %v810
  %v1816 = vpop.f32.mrb[0].mxu0
  %v1817 = vadd.f32 %v1184, %v1816
  %v1818 = vpop.f32.mrb[0].mxu0
  %v1819 = vpop.f32.mrb[0].mxu0
  %v1820 = vadd.f32 %v1187, %v1819
  %v1821 = vpop.f32.mrb[0].mxu0
  %1822 = vmatprep.mubr.bf16.mxu0 0
  %1823 = vmatmul.mubr.bf16.gmra.mrb[0].mxu0 %v813
  %v1824 = vpop.f32.mrb[0].mxu0
  %v1825 = vadd.f32 %v1192, %v1824
  %v1826 = vpop.f32.mrb[0].mxu0
  %v1827 = vpop.f32.mrb[0].mxu0
  %v1828 = vadd.f32 %v1195, %v1827
  %v1829 = vpop.f32.mrb[0].mxu0
  %1830 = vmatprep.mubr.bf16.mxu0 0
  %1831 = vmatmul.mubr.bf16.gmra.mrb[0].mxu0 %v816
  %v1832 = vpop.f32.mrb[0].mxu0
  %v1833 = vadd.f32 %v1200, %v1832
  %v1834 = vpop.f32.mrb[0].mxu0
  %v1835 = vpop.f32.mrb[0].mxu0
  %v1836 = vadd.f32 %v1203, %v1835
  %v1837 = vpop.f32.mrb[0].mxu0
  %1838 = vmatprep.mubr.bf16.mxu0 0
  %1839 = vmatmul.mubr.bf16.gmra.mrb[0].mxu0 %v1539
  %v1840 = vpop.f32.mrb[0].mxu0
  %v1841 = vadd.f32 %v1208, %v1840
  %v1842 = vpop.f32.mrb[0].mxu0
  %v1843 = vpop.f32.mrb[0].mxu0
  %v1844 = vadd.f32 %v1211, %v1843
  %v1845 = vpop.f32.mrb[0].mxu0
  %1846 = vmatprep.mubr.bf16.mxu0 0
  %1847 = vmatmul.mubr.bf16.gmra.mrb[0].mxu0 %v822
  %v1848 = vpop.f32.mrb[0].mxu0
  %v1849 = vadd.f32 %v1216, %v1848
  %v1850 = vpop.f32.mrb[0].mxu0
  %v1851 = vpop.f32.mrb[0].mxu0
  %v1852 = vadd.f32 %v1219, %v1851
  %v1853 = vpop.f32.mrb[0].mxu0
  %1854 = vmatprep.mubr.bf16.mxu0 0
  %1855 = vmatmul.mubr.bf16.gmra.mrb[0].mxu0 %v825
  %v1856 = vpop.f32.mrb[0].mxu0
  %v1857 = vadd.f32 %v1224, %v1856
  %v1858 = vpop.f32.mrb[0].mxu0
  %v1859 = vpop.f32.mrb[0].mxu0
  %v1860 = vadd.f32 %v1227, %v1859
  %v1861 = vpop.f32.mrb[0].mxu0
  %1862 = vmatprep.mubr.bf16.mxu0 0
  %1863 = vmatmul.mubr.bf16.gmra.mrb[0].mxu0 %v828
  %v1864 = vpop.f32.mrb[0].mxu0
  %v1865 = vadd.f32 %v1232, %v1864
  %v1866 = vpop.f32.mrb[0].mxu0
  %v1867 = vpop.f32.mrb[0].mxu0
  %v1868 = vadd.f32 %v1235, %v1867
  %v1869 = vpop.f32.mrb[0].mxu0
  %1870 = vmatprep.mubr.bf16.mxu0 0
  %1871 = vmatmul.mubr.bf16.gmra.mrb[0].mxu0 %v831
  %v1872 = vpop.f32.mrb[0].mxu0
  %v1873 = vadd.f32 %v1240, %v1872
  %v1874 = vpop.f32.mrb[0].mxu0
  %v1875 = vpop.f32.mrb[0].mxu0
  %v1876 = vadd.f32 %v1243, %v1875
  %v1877 = vpop.f32.mrb[0].mxu0
  %1878 = vmatprep.mubr.bf16.mxu0 0
  %1879 = vmatmul.mubr.bf16.gmra.mrb[0].mxu0 %v834
  %v1880 = vpop.f32.mrb[0].mxu0
  %v1881 = vadd.f32 %v1248, %v1880
  %v1882 = vpop.f32.mrb[0].mxu0
  %v1883 = vpop.f32.mrb[0].mxu0
  %v1884 = vadd.f32 %v1251, %v1883
  %v1885 = vpop.f32.mrb[0].mxu0
  %1886 = vmatprep.mubr.bf16.mxu0 0
  %1887 = vmatmul.mubr.bf16.gmra.mrb[0].mxu0 %v837
  %v1888 = vpop.f32.mrb[0].mxu0
  %v1889 = vadd.f32 %v1256, %v1888
  %v1890 = vpop.f32.mrb[0].mxu0
  %v1891 = vpop.f32.mrb[0].mxu0
  %v1892 = vadd.f32 %v1259, %v1891
  %v1893 = vpop.f32.mrb[0].mxu0
  %1894 = vmatprep.mubr.bf16.mxu0 0
  %1895 = vmatmul.mubr.bf16.gmra.mrb[0].mxu0 %v840
  %v1896 = vpop.f32.mrb[0].mxu0
  %v1897 = vadd.f32 %v1264, %v1896
  %v1898 = vpop.f32.mrb[0].mxu0
  %v1899 = vpop.f32.mrb[0].mxu0
  %v1900 = vadd.f32 %v1267, %v1899
  %v1901 = vpop.f32.mrb[0].mxu0
  %1902 = vmatprep.mubr.bf16.mxu0 0
  %1903 = vmatmul.mubr.bf16.gmra.mrb[0].mxu0 %v1542
  %v1904 = vpop.f32.mrb[0].mxu0
  %v1905 = vadd.f32 %v1272, %v1904
  %v1906 = vpop.f32.mrb[0].mxu0
  %v1907 = vpop.f32.mrb[0].mxu0
  %v1908 = vadd.f32 %v1275, %v1907
  %v1909 = vpop.f32.mrb[0].mxu0
  %1910 = vmatprep.mubr.bf16.mxu0 0
  %1911 = vmatmul.mubr.bf16.gmra.mrb[0].mxu0 %v846
  %v1912 = vpop.f32.mrb[0].mxu0
  %v1913 = vadd.f32 %v1280, %v1912
  %v1914 = vpop.f32.mrb[0].mxu0
  %v1915 = vpop.f32.mrb[0].mxu0
  %v1916 = vadd.f32 %v1283, %v1915
  %v1917 = vpop.f32.mrb[0].mxu0
  %1918 = vmatprep.mubr.bf16.mxu0 0
  %1919 = vmatmul.mubr.bf16.gmra.mrb[0].mxu0 %v849
  %v1920 = vpop.f32.mrb[0].mxu0
  %v1921 = vadd.f32 %v1288, %v1920
  %v1922 = vpop.f32.mrb[0].mxu0
  %v1923 = vpop.f32.mrb[0].mxu0
  %v1924 = vadd.f32 %v1291, %v1923
  %v1925 = vpop.f32.mrb[0].mxu0
  %1926 = vmatprep.mubr.bf16.mxu0 0
  %1927 = vmatmul.mubr.bf16.gmra.mrb[0].mxu0 %v852
  %v1928 = vpop.f32.mrb[0].mxu0
  %v1929 = vadd.f32 %v1296, %v1928
  %v1930 = vpop.f32.mrb[0].mxu0
  %v1931 = vpop.f32.mrb[0].mxu0
  %v1932 = vadd.f32 %v1299, %v1931
  %v1933 = vpop.f32.mrb[0].mxu0
  %1934 = vmatprep.mubr.bf16.mxu0 0
  %1935 = vmatmul.mubr.bf16.gmra.mrb[0].mxu0 %v855
  %v1936 = vpop.f32.mrb[0].mxu0
  %v1937 = vadd.f32 %v1304, %v1936
  %v1938 = vpop.f32.mrb[0].mxu0
  %v1939 = vpop.f32.mrb[0].mxu0
  %v1940 = vadd.f32 %v1307, %v1939
  %v1941 = vpop.f32.mrb[0].mxu0
  %1942 = vmatprep.mubr.bf16.mxu0 0
  %1943 = vmatmul.mubr.bf16.gmra.mrb[0].mxu0 %v858
  %v1944 = vpop.f32.mrb[0].mxu0
  %v1945 = vadd.f32 %v1312, %v1944
  %v1946 = vpop.f32.mrb[0].mxu0
  %v1947 = vpop.f32.mrb[0].mxu0
  %v1948 = vadd.f32 %v1315, %v1947
  %v1949 = vpop.f32.mrb[0].mxu0
  %1950 = vmatprep.mubr.bf16.mxu0 0
  %1951 = vmatmul.mubr.bf16.gmra.mrb[0].mxu0 %v861
  %v1952 = vpop.f32.mrb[0].mxu0
  %v1953 = vadd.f32 %v1320, %v1952
  %v1954 = vpop.f32.mrb[0].mxu0
  %v1955 = vpop.f32.mrb[0].mxu0
  %v1956 = vadd.f32 %v1323, %v1955
  %v1957 = vpop.f32.mrb[0].mxu0
  %1958 = vmatprep.mubr.bf16.mxu0 0
  %1959 = vmatmul.mubr.bf16.gmra.mrb[0].mxu0 %v864
  %v1960 = vpop.f32.mrb[0].mxu0
  %v1961 = vadd.f32 %v1328, %v1960
  %v1962 = vpop.f32.mrb[0].mxu0
  %v1963 = vpop.f32.mrb[0].mxu0
  %v1964 = vadd.f32 %v1331, %v1963
  %v1965 = vpop.f32.mrb[0].mxu0
  %1966 = vmatprep.mubr.bf16.mxu0 0
  %1967 = vmatmul.mubr.bf16.gmra.mrb[0].mxu0 %v1545
  %v1968 = vpop.f32.mrb[0].mxu0
  %v1969 = vadd.f32 %v1336, %v1968
  %v1970 = vpop.f32.mrb[0].mxu0
  %v1971 = vpop.f32.mrb[0].mxu0
  %v1972 = vadd.f32 %v1339, %v1971
  %v1973 = vpop.f32.mrb[0].mxu0
  %1974 = vmatprep.mubr.bf16.mxu0 0
  %1975 = vmatmul.mubr.bf16.gmra.mrb[0].mxu0 %v870
  %v1976 = vpop.f32.mrb[0].mxu0
  %v1977 = vadd.f32 %v1344, %v1976
  %v1978 = vpop.f32.mrb[0].mxu0
  %v1979 = vpop.f32.mrb[0].mxu0
  %v1980 = vadd.f32 %v1347, %v1979
  %v1981 = vpop.f32.mrb[0].mxu0
  %1982 = vmatprep.mubr.bf16.mxu0 0
  %1983 = vmatmul.mubr.bf16.gmra.mrb[0].mxu0 %v873
  %v1984 = vpop.f32.mrb[0].mxu0
  %v1985 = vadd.f32 %v1352, %v1984
  %v1986 = vpop.f32.mrb[0].mxu0
  %v1987 = vpop.f32.mrb[0].mxu0
  %v1988 = vadd.f32 %v1355, %v1987
  %v1989 = vpop.f32.mrb[0].mxu0
  %1990 = vmatprep.mubr.bf16.mxu0 0
  %1991 = vmatmul.mubr.bf16.gmra.mrb[0].mxu0 %v876
  %v1992 = vpop.f32.mrb[0].mxu0
  %v1993 = vadd.f32 %v1360, %v1992
  %v1994 = vpop.f32.mrb[0].mxu0
  %v1995 = vpop.f32.mrb[0].mxu0
  %v1996 = vadd.f32 %v1363, %v1995
  %v1997 = vpop.f32.mrb[0].mxu0
  %1998 = vmatprep.mubr.bf16.mxu0 0
  %1999 = vmatmul.mubr.bf16.gmra.mrb[0].mxu0 %v879
  %v2000 = vpop.f32.mrb[0].mxu0
  %v2001 = vadd.f32 %v1368, %v2000
  %v2002 = vpop.f32.mrb[0].mxu0
  %v2003 = vpop.f32.mrb[0].mxu0
  %v2004 = vadd.f32 %v1371, %v2003
  %v2005 = vpop.f32.mrb[0].mxu0
  %2006 = vmatprep.mubr.bf16.mxu0 0
  %2007 = vmatmul.mubr.bf16.gmra.mrb[0].mxu0 %v882
  %v2008 = vpop.f32.mrb[0].mxu0
  %v2009 = vadd.f32 %v1376, %v2008
  %v2010 = vpop.f32.mrb[0].mxu0
  %v2011 = vpop.f32.mrb[0].mxu0
  %v2012 = vadd.f32 %v1379, %v2011
  %v2013 = vpop.f32.mrb[0].mxu0
  %2014 = vmatprep.mubr.bf16.mxu0 0
  %2015 = vmatmul.mubr.bf16.gmra.mrb[0].mxu0 %v885
  %v2016 = vpop.f32.mrb[0].mxu0
  %v2017 = vadd.f32 %v1384, %v2016
  %v2018 = vpop.f32.mrb[0].mxu0
  %v2019 = vpop.f32.mrb[0].mxu0
  %v2020 = vadd.f32 %v1387, %v2019
  %v2021 = vpop.f32.mrb[0].mxu0
  %2022 = vmatprep.mubr.bf16.mxu0 0
  %2023 = vmatmul.mubr.bf16.gmra.mrb[0].mxu0 %v888
  %v2024 = vpop.f32.mrb[0].mxu0
  %v2025 = vadd.f32 %v1392, %v2024
  %v2026 = vpop.f32.mrb[0].mxu0
  %v2027 = vpop.f32.mrb[0].mxu0
  %v2028 = vadd.f32 %v1395, %v2027
  %v2029 = vpop.f32.mrb[0].mxu0
  %2030 = vmatprep.mubr.bf16.mxu0 0
  %2031 = vmatmul.mubr.bf16.gmra.mrb[0].mxu0 %v1548
  %v2032 = vpop.f32.mrb[0].mxu0
  %v2033 = vadd.f32 %v1400, %v2032
  %v2034 = vpop.f32.mrb[0].mxu0
  %v2035 = vpop.f32.mrb[0].mxu0
  %v2036 = vadd.f32 %v1403, %v2035
  %v2037 = vpop.f32.mrb[0].mxu0
  %2038 = vmatprep.mubr.bf16.mxu0 0
  %2039 = vmatmul.mubr.bf16.gmra.mrb[0].mxu0 %v894
  %v2040 = vpop.f32.mrb[0].mxu0
  %v2041 = vadd.f32 %v1408, %v2040
  %v2042 = vpop.f32.mrb[0].mxu0
  %v2043 = vpop.f32.mrb[0].mxu0
  %v2044 = vadd.f32 %v1411, %v2043
  %v2045 = vpop.f32.mrb[0].mxu0
  %2046 = vmatprep.mubr.bf16.mxu0 0
  %2047 = vmatmul.mubr.bf16.gmra.mrb[0].mxu0 %v897
  %v2048 = vpop.f32.mrb[0].mxu0
  %v2049 = vadd.f32 %v1416, %v2048
  %v2050 = vpop.f32.mrb[0].mxu0
  %v2051 = vpop.f32.mrb[0].mxu0
  %v2052 = vadd.f32 %v1419, %v2051
  %v2053 = vpop.f32.mrb[0].mxu0
  %2054 = vmatprep.mubr.bf16.mxu0 0
  %2055 = vmatmul.mubr.bf16.gmra.mrb[0].mxu0 %v900
  %v2056 = vpop.f32.mrb[0].mxu0
  %v2057 = vadd.f32 %v1424, %v2056
  %v2058 = vpop.f32.mrb[0].mxu0
  %v2059 = vpop.f32.mrb[0].mxu0
  %v2060 = vadd.f32 %v1427, %v2059
  %v2061 = vpop.f32.mrb[0].mxu0
  %2062 = vmatprep.mubr.bf16.mxu0 0
  %2063 = vmatmul.mubr.bf16.gmra.mrb[0].mxu0 %v903
  %v2064 = vpop.f32.mrb[0].mxu0
  %v2065 = vadd.f32 %v1432, %v2064
  %v2066 = vpop.f32.mrb[0].mxu0
  %v2067 = vpop.f32.mrb[0].mxu0
  %v2068 = vadd.f32 %v1435, %v2067
  %v2069 = vpop.f32.mrb[0].mxu0
  %2070 = vmatprep.mubr.bf16.mxu0 0
  %2071 = vmatmul.mubr.bf16.gmra.mrb[0].mxu0 %v906
  %v2072 = vpop.f32.mrb[0].mxu0
  %v2073 = vadd.f32 %v1440, %v2072
  %v2074 = vpop.f32.mrb[0].mxu0
  %v2075 = vpop.f32.mrb[0].mxu0
  %v2076 = vadd.f32 %v1443, %v2075
  %v2077 = vpop.f32.mrb[0].mxu0
  %2078 = vmatprep.mubr.bf16.mxu0 0
  %2079 = vmatmul.mubr.bf16.gmra.mrb[0].mxu0 %v909
  %v2080 = vpop.f32.mrb[0].mxu0
  %v2081 = vadd.f32 %v1448, %v2080
  %v2082 = vpop.f32.mrb[0].mxu0
  %v2083 = vpop.f32.mrb[0].mxu0
  %v2084 = vadd.f32 %v1451, %v2083
  %v2085 = vpop.f32.mrb[0].mxu0
  %2086 = vmatprep.mubr.bf16.mxu0 0
  %2087 = vmatmul.mubr.bf16.gmra.mrb[0].mxu0 %v912
  %v2088 = vpop.f32.mrb[0].mxu0
  %v2089 = vadd.f32 %v1456, %v2088
  %v2090 = vpop.f32.mrb[0].mxu0
  %v2091 = vpop.f32.mrb[0].mxu0
  %v2092 = vadd.f32 %v1459, %v2091
  %v2093 = vpop.f32.mrb[0].mxu0
  %2094 = vdwg.mxu0
  %s2095 = scalar_lea.vmem %s1, 64
  %v2096 = vld [vmem:[%s2095] sm:$0xf]
  %v2097 = vld [vmem:[%s2095 + $0x4] sm:$0xf]
  %v2098 = vld [vmem:[%s2095 + $0x8] sm:$0xf]
  %v2099 = vld [vmem:[%s2095 + $0xc] sm:$0xf]
  %v2100 = vld [vmem:[%s2095 + $0x10] sm:$0xf]
  %v2101 = vld [vmem:[%s2095 + $0x14] sm:$0xf]
  %v2102 = vld [vmem:[%s2095 + $0x18] sm:$0xf]
  %v2103 = vld [vmem:[%s2095 + $0x1c] sm:$0xf]
  %v2120 = vunpack.c.l.b16 %v345
  %v2121 = vunpack.c.l.b16 %v346
  %v2122 = vunpack.c.l.b16 %v347
  %v2123 = vunpack.c.l.b16 %v348
  %v2124 = vunpack.c.l.b16 %v349
  %v2125 = vunpack.c.l.b16 %v350
  %v2126 = vunpack.c.l.b16 %v351
  %v2127 = vunpack.c.l.b16 %v352
  %v2128 = vunpack.c.l.b16 %v353
  %v2129 = vunpack.c.l.b16 %v354
  %v2130 = vunpack.c.l.b16 %v355
  %v2131 = vunpack.c.l.b16 %v356
  %v2132 = vunpack.c.l.b16 %v357
  %v2133 = vunpack.c.l.b16 %v358
  %v2134 = vunpack.c.l.b16 %v359
  %v2135 = vunpack.c.l.b16 %v360
  %v2136 = vpack.c.b16 %v2121, %v2120
  %v2137 = vpack.c.b16 %v2123, %v2122
  %v2138 = vpack.c.b16 %v2125, %v2124
  %v2139 = vpack.c.b16 %v2127, %v2126
  %v2140 = vpack.c.b16 %v2129, %v2128
  %v2141 = vpack.c.b16 %v2131, %v2130
  %v2142 = vpack.c.b16 %v2133, %v2132
  %v2143 = vpack.c.b16 %v2135, %v2134
  %v2152 = vunpack.c.l.b16 %v2096
  %v2153 = vunpack.c.l.b16 %v2097
  %v2154 = vunpack.c.l.b16 %v2098
  %v2155 = vunpack.c.l.b16 %v2099
  %v2156 = vunpack.c.l.b16 %v2100
  %v2157 = vunpack.c.l.b16 %v2101
  %v2158 = vunpack.c.l.b16 %v2102
  %v2159 = vunpack.c.l.b16 %v2103
  %v2160 = vpack.c.b16 %v2153, %v2152
  %v2161 = vpack.c.b16 %v2155, %v2154
  %v2162 = vpack.c.b16 %v2157, %v2156
  %v2163 = vpack.c.b16 %v2159, %v2158
  %v2169 = vsel %vm724, %v2136, 0
  %v2172 = vsel %vm724, %v2137, 0
  %v2175 = vsel %vm724, %v2138, 0
  %v2178 = vsel %vm724, %v2139, 0
  %v2181 = vsel %vm724, %v2140, 0
  %v2184 = vsel %vm724, %v2141, 0
  %v2187 = vsel %vm724, %v2142, 0
  %v2190 = vsel %vm724, %v2143, 0
  %2192 = vmatprep.subr.bf16.mxu0 0
  %2193 = vmatpush1.bf16.msra.mxu0 %v2160
  %2194 = vmatprep.subr.bf16.mxu0 0
  %2195 = vmatpush1.bf16.msra.mxu0 %v2161
  %2196 = vmatprep.subr.bf16.mxu0 0
  %2197 = vmatpush1.bf16.msra.mxu0 %v2162
  %2198 = vmatprep.subr.bf16.mxu0 0
  %2199 = vmatpush1.bf16.msra.mxu0 %v2163
  %2200 = vmatprep.subr.bf16.mxu0 0
  %2201 = vmatpush1.bf16.msra.mxu0 0
  %2202 = vmatprep.subr.bf16.mxu0 0
  %2203 = vmatpush1.bf16.msra.mxu0 0
  %2204 = vmatprep.subr.bf16.mxu0 0
  %2205 = vmatpush1.bf16.msra.mxu0 0
  %2206 = vmatprep.subr.bf16.mxu0 0
  %2207 = vmatpush1.bf16.msra.mxu0 0
  %2208 = vmatprep.subr.bf16.mxu0 0
  %2209 = vmatpush1.bf16.msra.mxu0 0
  %2210 = vmatprep.subr.bf16.mxu0 0
  %2211 = vmatpush1.bf16.msra.mxu0 0
  %2212 = vmatprep.subr.bf16.mxu0 0
  %2213 = vmatpush1.bf16.msra.mxu0 0
  %2214 = vmatprep.subr.bf16.mxu0 0
  %2215 = vmatpush1.bf16.msra.mxu0 0
  %2216 = vmatprep.subr.bf16.mxu0 0
  %2217 = vmatpush1.bf16.msra.mxu0 0
  %2218 = vmatprep.subr.bf16.mxu0 0
  %2219 = vmatpush1.bf16.msra.mxu0 0
  %2220 = vmatprep.subr.bf16.mxu0 0
  %2221 = vmatpush1.bf16.msra.mxu0 0
  %2222 = vmatprep.subr.bf16.mxu0 0
  %2223 = vmatpush1.bf16.msra.mxu0 0
  %2224 = vmatprep.mubr.bf16.mxu0 0
  %2225 = vmatmul.mubr.bf16.gmra.mrb[0].mxu0 %v1530
  %v2226 = vpop.f32.mrb[0].mxu0
  %v2227 = vadd.f32 0.0, %v2226
  %v2228 = vpop.f32.mrb[0].mxu0
  %v2229 = vpop.f32.mrb[0].mxu0
  %v2230 = vadd.f32 0.0, %v2229
  %v2231 = vpop.f32.mrb[0].mxu0
  %2232 = vmatprep.mubr.bf16.mxu0 0
  %2233 = vmatmul.mubr.bf16.gmra.mrb[0].mxu0 %v750
  %v2234 = vpop.f32.mrb[0].mxu0
  %v2235 = vadd.f32 0.0, %v2234
  %v2236 = vpop.f32.mrb[0].mxu0
  %v2237 = vpop.f32.mrb[0].mxu0
  %v2238 = vadd.f32 0.0, %v2237
  %v2239 = vpop.f32.mrb[0].mxu0
  %2240 = vmatprep.mubr.bf16.mxu0 0
  %2241 = vmatmul.mubr.bf16.gmra.mrb[0].mxu0 %v753
  %v2242 = vpop.f32.mrb[0].mxu0
  %v2243 = vadd.f32 0.0, %v2242
  %v2244 = vpop.f32.mrb[0].mxu0
  %v2245 = vpop.f32.mrb[0].mxu0
  %v2246 = vadd.f32 0.0, %v2245
  %v2247 = vpop.f32.mrb[0].mxu0
  %2248 = vmatprep.mubr.bf16.mxu0 0
  %2249 = vmatmul.mubr.bf16.gmra.mrb[0].mxu0 %v756
  %v2250 = vpop.f32.mrb[0].mxu0
  %v2251 = vadd.f32 0.0, %v2250
  %v2252 = vpop.f32.mrb[0].mxu0
  %v2253 = vpop.f32.mrb[0].mxu0
  %v2254 = vadd.f32 0.0, %v2253
  %v2255 = vpop.f32.mrb[0].mxu0
  %2256 = vmatprep.mubr.bf16.mxu0 0
  %2257 = vmatmul.mubr.bf16.gmra.mrb[0].mxu0 %v759
  %v2258 = vpop.f32.mrb[0].mxu0
  %v2259 = vadd.f32 0.0, %v2258
  %v2260 = vpop.f32.mrb[0].mxu0
  %v2261 = vpop.f32.mrb[0].mxu0
  %v2262 = vadd.f32 0.0, %v2261
  %v2263 = vpop.f32.mrb[0].mxu0
  %2264 = vmatprep.mubr.bf16.mxu0 0
  %2265 = vmatmul.mubr.bf16.gmra.mrb[0].mxu0 %v762
  %v2266 = vpop.f32.mrb[0].mxu0
  %v2267 = vadd.f32 0.0, %v2266
  %v2268 = vpop.f32.mrb[0].mxu0
  %v2269 = vpop.f32.mrb[0].mxu0
  %v2270 = vadd.f32 0.0, %v2269
  %v2271 = vpop.f32.mrb[0].mxu0
  %2272 = vmatprep.mubr.bf16.mxu0 0
  %2273 = vmatmul.mubr.bf16.gmra.mrb[0].mxu0 %v765
  %v2274 = vpop.f32.mrb[0].mxu0
  %v2275 = vadd.f32 0.0, %v2274
  %v2276 = vpop.f32.mrb[0].mxu0
  %v2277 = vpop.f32.mrb[0].mxu0
  %v2278 = vadd.f32 0.0, %v2277
  %v2279 = vpop.f32.mrb[0].mxu0
  %2280 = vmatprep.mubr.bf16.mxu0 0
  %2281 = vmatmul.mubr.bf16.gmra.mrb[0].mxu0 %v768
  %v2282 = vpop.f32.mrb[0].mxu0
  %v2283 = vadd.f32 0.0, %v2282
  %v2284 = vpop.f32.mrb[0].mxu0
  %v2285 = vpop.f32.mrb[0].mxu0
  %v2286 = vadd.f32 0.0, %v2285
  %v2287 = vpop.f32.mrb[0].mxu0
  %2288 = vmatprep.mubr.bf16.mxu0 0
  %2289 = vmatmul.mubr.bf16.gmra.mrb[0].mxu0 %v1533
  %v2290 = vpop.f32.mrb[0].mxu0
  %v2291 = vadd.f32 0.0, %v2290
  %v2292 = vpop.f32.mrb[0].mxu0
  %v2293 = vpop.f32.mrb[0].mxu0
  %v2294 = vadd.f32 0.0, %v2293
  %v2295 = vpop.f32.mrb[0].mxu0
  %2296 = vmatprep.mubr.bf16.mxu0 0
  %2297 = vmatmul.mubr.bf16.gmra.mrb[0].mxu0 %v774
  %v2298 = vpop.f32.mrb[0].mxu0
  %v2299 = vadd.f32 0.0, %v2298
  %v2300 = vpop.f32.mrb[0].mxu0
  %v2301 = vpop.f32.mrb[0].mxu0
  %v2302 = vadd.f32 0.0, %v2301
  %v2303 = vpop.f32.mrb[0].mxu0
  %2304 = vmatprep.mubr.bf16.mxu0 0
  %2305 = vmatmul.mubr.bf16.gmra.mrb[0].mxu0 %v777
  %v2306 = vpop.f32.mrb[0].mxu0
  %v2307 = vadd.f32 0.0, %v2306
  %v2308 = vpop.f32.mrb[0].mxu0
  %v2309 = vpop.f32.mrb[0].mxu0
  %v2310 = vadd.f32 0.0, %v2309
  %v2311 = vpop.f32.mrb[0].mxu0
  %2312 = vmatprep.mubr.bf16.mxu0 0
  %2313 = vmatmul.mubr.bf16.gmra.mrb[0].mxu0 %v780
  %v2314 = vpop.f32.mrb[0].mxu0
  %v2315 = vadd.f32 0.0, %v2314
  %v2316 = vpop.f32.mrb[0].mxu0
  %v2317 = vpop.f32.mrb[0].mxu0
  %v2318 = vadd.f32 0.0, %v2317
  %v2319 = vpop.f32.mrb[0].mxu0
  %2320 = vmatprep.mubr.bf16.mxu0 0
  %2321 = vmatmul.mubr.bf16.gmra.mrb[0].mxu0 %v783
  %v2322 = vpop.f32.mrb[0].mxu0
  %v2323 = vadd.f32 0.0, %v2322
  %v2324 = vpop.f32.mrb[0].mxu0
  %v2325 = vpop.f32.mrb[0].mxu0
  %v2326 = vadd.f32 0.0, %v2325
  %v2327 = vpop.f32.mrb[0].mxu0
  %2328 = vmatprep.mubr.bf16.mxu0 0
  %2329 = vmatmul.mubr.bf16.gmra.mrb[0].mxu0 %v786
  %v2330 = vpop.f32.mrb[0].mxu0
  %v2331 = vadd.f32 0.0, %v2330
  %v2332 = vpop.f32.mrb[0].mxu0
  %v2333 = vpop.f32.mrb[0].mxu0
  %v2334 = vadd.f32 0.0, %v2333
  %v2335 = vpop.f32.mrb[0].mxu0
  %2336 = vmatprep.mubr.bf16.mxu0 0
  %2337 = vmatmul.mubr.bf16.gmra.mrb[0].mxu0 %v789
  %v2338 = vpop.f32.mrb[0].mxu0
  %v2339 = vadd.f32 0.0, %v2338
  %v2340 = vpop.f32.mrb[0].mxu0
  %v2341 = vpop.f32.mrb[0].mxu0
  %v2342 = vadd.f32 0.0, %v2341
  %v2343 = vpop.f32.mrb[0].mxu0
  %2344 = vmatprep.mubr.bf16.mxu0 0
  %2345 = vmatmul.mubr.bf16.gmra.mrb[0].mxu0 %v792
  %v2346 = vpop.f32.mrb[0].mxu0
  %v2347 = vadd.f32 0.0, %v2346
  %v2348 = vpop.f32.mrb[0].mxu0
  %v2349 = vpop.f32.mrb[0].mxu0
  %v2350 = vadd.f32 0.0, %v2349
  %v2351 = vpop.f32.mrb[0].mxu0
  %2352 = vmatprep.mubr.bf16.mxu0 0
  %2353 = vmatmul.mubr.bf16.gmra.mrb[0].mxu0 %v1536
  %v2354 = vpop.f32.mrb[0].mxu0
  %v2355 = vadd.f32 0.0, %v2354
  %v2356 = vpop.f32.mrb[0].mxu0
  %v2357 = vpop.f32.mrb[0].mxu0
  %v2358 = vadd.f32 0.0, %v2357
  %v2359 = vpop.f32.mrb[0].mxu0
  %2360 = vmatprep.mubr.bf16.mxu0 0
  %2361 = vmatmul.mubr.bf16.gmra.mrb[0].mxu0 %v798
  %v2362 = vpop.f32.mrb[0].mxu0
  %v2363 = vadd.f32 0.0, %v2362
  %v2364 = vpop.f32.mrb[0].mxu0
  %v2365 = vpop.f32.mrb[0].mxu0
  %v2366 = vadd.f32 0.0, %v2365
  %v2367 = vpop.f32.mrb[0].mxu0
  %2368 = vmatprep.mubr.bf16.mxu0 0
  %2369 = vmatmul.mubr.bf16.gmra.mrb[0].mxu0 %v801
  %v2370 = vpop.f32.mrb[0].mxu0
  %v2371 = vadd.f32 0.0, %v2370
  %v2372 = vpop.f32.mrb[0].mxu0
  %v2373 = vpop.f32.mrb[0].mxu0
  %v2374 = vadd.f32 0.0, %v2373
  %v2375 = vpop.f32.mrb[0].mxu0
  %2376 = vmatprep.mubr.bf16.mxu0 0
  %2377 = vmatmul.mubr.bf16.gmra.mrb[0].mxu0 %v804
  %v2378 = vpop.f32.mrb[0].mxu0
  %v2379 = vadd.f32 0.0, %v2378
  %v2380 = vpop.f32.mrb[0].mxu0
  %v2381 = vpop.f32.mrb[0].mxu0
  %v2382 = vadd.f32 0.0, %v2381
  %v2383 = vpop.f32.mrb[0].mxu0
  %2384 = vmatprep.mubr.bf16.mxu0 0
  %2385 = vmatmul.mubr.bf16.gmra.mrb[0].mxu0 %v807
  %v2386 = vpop.f32.mrb[0].mxu0
  %v2387 = vadd.f32 0.0, %v2386
  %v2388 = vpop.f32.mrb[0].mxu0
  %v2389 = vpop.f32.mrb[0].mxu0
  %v2390 = vadd.f32 0.0, %v2389
  %v2391 = vpop.f32.mrb[0].mxu0
  %2392 = vmatprep.mubr.bf16.mxu0 0
  %2393 = vmatmul.mubr.bf16.gmra.mrb[0].mxu0 %v810
  %v2394 = vpop.f32.mrb[0].mxu0
  %v2395 = vadd.f32 0.0, %v2394
  %v2396 = vpop.f32.mrb[0].mxu0
  %v2397 = vpop.f32.mrb[0].mxu0
  %v2398 = vadd.f32 0.0, %v2397
  %v2399 = vpop.f32.mrb[0].mxu0
  %2400 = vmatprep.mubr.bf16.mxu0 0
  %2401 = vmatmul.mubr.bf16.gmra.mrb[0].mxu0 %v813
  %v2402 = vpop.f32.mrb[0].mxu0
  %v2403 = vadd.f32 0.0, %v2402
  %v2404 = vpop.f32.mrb[0].mxu0
  %v2405 = vpop.f32.mrb[0].mxu0
  %v2406 = vadd.f32 0.0, %v2405
  %v2407 = vpop.f32.mrb[0].mxu0
  %2408 = vmatprep.mubr.bf16.mxu0 0
  %2409 = vmatmul.mubr.bf16.gmra.mrb[0].mxu0 %v816
  %v2410 = vpop.f32.mrb[0].mxu0
  %v2411 = vadd.f32 0.0, %v2410
  %v2412 = vpop.f32.mrb[0].mxu0
  %v2413 = vpop.f32.mrb[0].mxu0
  %v2414 = vadd.f32 0.0, %v2413
  %v2415 = vpop.f32.mrb[0].mxu0
  %2416 = vmatprep.mubr.bf16.mxu0 0
  %2417 = vmatmul.mubr.bf16.gmra.mrb[0].mxu0 %v1539
  %v2418 = vpop.f32.mrb[0].mxu0
  %v2419 = vadd.f32 0.0, %v2418
  %v2420 = vpop.f32.mrb[0].mxu0
  %v2421 = vpop.f32.mrb[0].mxu0
  %v2422 = vadd.f32 0.0, %v2421
  %v2423 = vpop.f32.mrb[0].mxu0
  %2424 = vmatprep.mubr.bf16.mxu0 0
  %2425 = vmatmul.mubr.bf16.gmra.mrb[0].mxu0 %v822
  %v2426 = vpop.f32.mrb[0].mxu0
  %v2427 = vadd.f32 0.0, %v2426
  %v2428 = vpop.f32.mrb[0].mxu0
  %v2429 = vpop.f32.mrb[0].mxu0
  %v2430 = vadd.f32 0.0, %v2429
  %v2431 = vpop.f32.mrb[0].mxu0
  %2432 = vmatprep.mubr.bf16.mxu0 0
  %2433 = vmatmul.mubr.bf16.gmra.mrb[0].mxu0 %v825
  %v2434 = vpop.f32.mrb[0].mxu0
  %v2435 = vadd.f32 0.0, %v2434
  %v2436 = vpop.f32.mrb[0].mxu0
  %v2437 = vpop.f32.mrb[0].mxu0
  %v2438 = vadd.f32 0.0, %v2437
  %v2439 = vpop.f32.mrb[0].mxu0
  %2440 = vmatprep.mubr.bf16.mxu0 0
  %2441 = vmatmul.mubr.bf16.gmra.mrb[0].mxu0 %v828
  %v2442 = vpop.f32.mrb[0].mxu0
  %v2443 = vadd.f32 0.0, %v2442
  %v2444 = vpop.f32.mrb[0].mxu0
  %v2445 = vpop.f32.mrb[0].mxu0
  %v2446 = vadd.f32 0.0, %v2445
  %v2447 = vpop.f32.mrb[0].mxu0
  %2448 = vmatprep.mubr.bf16.mxu0 0
  %2449 = vmatmul.mubr.bf16.gmra.mrb[0].mxu0 %v831
  %v2450 = vpop.f32.mrb[0].mxu0
  %v2451 = vadd.f32 0.0, %v2450
  %v2452 = vpop.f32.mrb[0].mxu0
  %v2453 = vpop.f32.mrb[0].mxu0
  %v2454 = vadd.f32 0.0, %v2453
  %v2455 = vpop.f32.mrb[0].mxu0
  %2456 = vmatprep.mubr.bf16.mxu0 0
  %2457 = vmatmul.mubr.bf16.gmra.mrb[0].mxu0 %v834
  %v2458 = vpop.f32.mrb[0].mxu0
  %v2459 = vadd.f32 0.0, %v2458
  %v2460 = vpop.f32.mrb[0].mxu0
  %v2461 = vpop.f32.mrb[0].mxu0
  %v2462 = vadd.f32 0.0, %v2461
  %v2463 = vpop.f32.mrb[0].mxu0
  %2464 = vmatprep.mubr.bf16.mxu0 0
  %2465 = vmatmul.mubr.bf16.gmra.mrb[0].mxu0 %v837
  %v2466 = vpop.f32.mrb[0].mxu0
  %v2467 = vadd.f32 0.0, %v2466
  %v2468 = vpop.f32.mrb[0].mxu0
  %v2469 = vpop.f32.mrb[0].mxu0
  %v2470 = vadd.f32 0.0, %v2469
  %v2471 = vpop.f32.mrb[0].mxu0
  %2472 = vmatprep.mubr.bf16.mxu0 0
  %2473 = vmatmul.mubr.bf16.gmra.mrb[0].mxu0 %v840
  %v2474 = vpop.f32.mrb[0].mxu0
  %v2475 = vadd.f32 0.0, %v2474
  %v2476 = vpop.f32.mrb[0].mxu0
  %v2477 = vpop.f32.mrb[0].mxu0
  %v2478 = vadd.f32 0.0, %v2477
  %v2479 = vpop.f32.mrb[0].mxu0
  %2480 = vmatprep.mubr.bf16.mxu0 0
  %2481 = vmatmul.mubr.bf16.gmra.mrb[0].mxu0 %v1542
  %v2482 = vpop.f32.mrb[0].mxu0
  %v2483 = vadd.f32 0.0, %v2482
  %v2484 = vpop.f32.mrb[0].mxu0
  %v2485 = vpop.f32.mrb[0].mxu0
  %v2486 = vadd.f32 0.0, %v2485
  %v2487 = vpop.f32.mrb[0].mxu0
  %2488 = vmatprep.mubr.bf16.mxu0 0
  %2489 = vmatmul.mubr.bf16.gmra.mrb[0].mxu0 %v846
  %v2490 = vpop.f32.mrb[0].mxu0
  %v2491 = vadd.f32 0.0, %v2490
  %v2492 = vpop.f32.mrb[0].mxu0
  %v2493 = vpop.f32.mrb[0].mxu0
  %v2494 = vadd.f32 0.0, %v2493
  %v2495 = vpop.f32.mrb[0].mxu0
  %2496 = vmatprep.mubr.bf16.mxu0 0
  %2497 = vmatmul.mubr.bf16.gmra.mrb[0].mxu0 %v849
  %v2498 = vpop.f32.mrb[0].mxu0
  %v2499 = vadd.f32 0.0, %v2498
  %v2500 = vpop.f32.mrb[0].mxu0
  %v2501 = vpop.f32.mrb[0].mxu0
  %v2502 = vadd.f32 0.0, %v2501
  %v2503 = vpop.f32.mrb[0].mxu0
  %2504 = vmatprep.mubr.bf16.mxu0 0
  %2505 = vmatmul.mubr.bf16.gmra.mrb[0].mxu0 %v852
  %v2506 = vpop.f32.mrb[0].mxu0
  %v2507 = vadd.f32 0.0, %v2506
  %v2508 = vpop.f32.mrb[0].mxu0
  %v2509 = vpop.f32.mrb[0].mxu0
  %v2510 = vadd.f32 0.0, %v2509
  %v2511 = vpop.f32.mrb[0].mxu0
  %2512 = vmatprep.mubr.bf16.mxu0 0
  %2513 = vmatmul.mubr.bf16.gmra.mrb[0].mxu0 %v855
  %v2514 = vpop.f32.mrb[0].mxu0
  %v2515 = vadd.f32 0.0, %v2514
  %v2516 = vpop.f32.mrb[0].mxu0
  %v2517 = vpop.f32.mrb[0].mxu0
  %v2518 = vadd.f32 0.0, %v2517
  %v2519 = vpop.f32.mrb[0].mxu0
  %2520 = vmatprep.mubr.bf16.mxu0 0
  %2521 = vmatmul.mubr.bf16.gmra.mrb[0].mxu0 %v858
  %v2522 = vpop.f32.mrb[0].mxu0
  %v2523 = vadd.f32 0.0, %v2522
  %v2524 = vpop.f32.mrb[0].mxu0
  %v2525 = vpop.f32.mrb[0].mxu0
  %v2526 = vadd.f32 0.0, %v2525
  %v2527 = vpop.f32.mrb[0].mxu0
  %2528 = vmatprep.mubr.bf16.mxu0 0
  %2529 = vmatmul.mubr.bf16.gmra.mrb[0].mxu0 %v861
  %v2530 = vpop.f32.mrb[0].mxu0
  %v2531 = vadd.f32 0.0, %v2530
  %v2532 = vpop.f32.mrb[0].mxu0
  %v2533 = vpop.f32.mrb[0].mxu0
  %v2534 = vadd.f32 0.0, %v2533
  %v2535 = vpop.f32.mrb[0].mxu0
  %2536 = vmatprep.mubr.bf16.mxu0 0
  %2537 = vmatmul.mubr.bf16.gmra.mrb[0].mxu0 %v864
  %v2538 = vpop.f32.mrb[0].mxu0
  %v2539 = vadd.f32 0.0, %v2538
  %v2540 = vpop.f32.mrb[0].mxu0
  %v2541 = vpop.f32.mrb[0].mxu0
  %v2542 = vadd.f32 0.0, %v2541
  %v2543 = vpop.f32.mrb[0].mxu0
  %2544 = vmatprep.mubr.bf16.mxu0 0
  %2545 = vmatmul.mubr.bf16.gmra.mrb[0].mxu0 %v1545
  %v2546 = vpop.f32.mrb[0].mxu0
  %v2547 = vadd.f32 0.0, %v2546
  %v2548 = vpop.f32.mrb[0].mxu0
  %v2549 = vpop.f32.mrb[0].mxu0
  %v2550 = vadd.f32 0.0, %v2549
  %v2551 = vpop.f32.mrb[0].mxu0
  %2552 = vmatprep.mubr.bf16.mxu0 0
  %2553 = vmatmul.mubr.bf16.gmra.mrb[0].mxu0 %v870
  %v2554 = vpop.f32.mrb[0].mxu0
  %v2555 = vadd.f32 0.0, %v2554
  %v2556 = vpop.f32.mrb[0].mxu0
  %v2557 = vpop.f32.mrb[0].mxu0
  %v2558 = vadd.f32 0.0, %v2557
  %v2559 = vpop.f32.mrb[0].mxu0
  %2560 = vmatprep.mubr.bf16.mxu0 0
  %2561 = vmatmul.mubr.bf16.gmra.mrb[0].mxu0 %v873
  %v2562 = vpop.f32.mrb[0].mxu0
  %v2563 = vadd.f32 0.0, %v2562
  %v2564 = vpop.f32.mrb[0].mxu0
  %v2565 = vpop.f32.mrb[0].mxu0
  %v2566 = vadd.f32 0.0, %v2565
  %v2567 = vpop.f32.mrb[0].mxu0
  %2568 = vmatprep.mubr.bf16.mxu0 0
  %2569 = vmatmul.mubr.bf16.gmra.mrb[0].mxu0 %v876
  %v2570 = vpop.f32.mrb[0].mxu0
  %v2571 = vadd.f32 0.0, %v2570
  %v2572 = vpop.f32.mrb[0].mxu0
  %v2573 = vpop.f32.mrb[0].mxu0
  %v2574 = vadd.f32 0.0, %v2573
  %v2575 = vpop.f32.mrb[0].mxu0
  %2576 = vmatprep.mubr.bf16.mxu0 0
  %2577 = vmatmul.mubr.bf16.gmra.mrb[0].mxu0 %v879
  %v2578 = vpop.f32.mrb[0].mxu0
  %v2579 = vadd.f32 0.0, %v2578
  %v2580 = vpop.f32.mrb[0].mxu0
  %v2581 = vpop.f32.mrb[0].mxu0
  %v2582 = vadd.f32 0.0, %v2581
  %v2583 = vpop.f32.mrb[0].mxu0
  %2584 = vmatprep.mubr.bf16.mxu0 0
  %2585 = vmatmul.mubr.bf16.gmra.mrb[0].mxu0 %v882
  %v2586 = vpop.f32.mrb[0].mxu0
  %v2587 = vadd.f32 0.0, %v2586
  %v2588 = vpop.f32.mrb[0].mxu0
  %v2589 = vpop.f32.mrb[0].mxu0
  %v2590 = vadd.f32 0.0, %v2589
  %v2591 = vpop.f32.mrb[0].mxu0
  %2592 = vmatprep.mubr.bf16.mxu0 0
  %2593 = vmatmul.mubr.bf16.gmra.mrb[0].mxu0 %v885
  %v2594 = vpop.f32.mrb[0].mxu0
  %v2595 = vadd.f32 0.0, %v2594
  %v2596 = vpop.f32.mrb[0].mxu0
  %v2597 = vpop.f32.mrb[0].mxu0
  %v2598 = vadd.f32 0.0, %v2597
  %v2599 = vpop.f32.mrb[0].mxu0
  %2600 = vmatprep.mubr.bf16.mxu0 0
  %2601 = vmatmul.mubr.bf16.gmra.mrb[0].mxu0 %v888
  %v2602 = vpop.f32.mrb[0].mxu0
  %v2603 = vadd.f32 0.0, %v2602
  %v2604 = vpop.f32.mrb[0].mxu0
  %v2605 = vpop.f32.mrb[0].mxu0
  %v2606 = vadd.f32 0.0, %v2605
  %v2607 = vpop.f32.mrb[0].mxu0
  %2608 = vmatprep.mubr.bf16.mxu0 0
  %2609 = vmatmul.mubr.bf16.gmra.mrb[0].mxu0 %v1548
  %v2610 = vpop.f32.mrb[0].mxu0
  %v2611 = vadd.f32 0.0, %v2610
  %v2612 = vpop.f32.mrb[0].mxu0
  %v2613 = vpop.f32.mrb[0].mxu0
  %v2614 = vadd.f32 0.0, %v2613
  %v2615 = vpop.f32.mrb[0].mxu0
  %2616 = vmatprep.mubr.bf16.mxu0 0
  %2617 = vmatmul.mubr.bf16.gmra.mrb[0].mxu0 %v894
  %v2618 = vpop.f32.mrb[0].mxu0
  %v2619 = vadd.f32 0.0, %v2618
  %v2620 = vpop.f32.mrb[0].mxu0
  %v2621 = vpop.f32.mrb[0].mxu0
  %v2622 = vadd.f32 0.0, %v2621
  %v2623 = vpop.f32.mrb[0].mxu0
  %2624 = vmatprep.mubr.bf16.mxu0 0
  %2625 = vmatmul.mubr.bf16.gmra.mrb[0].mxu0 %v897
  %v2626 = vpop.f32.mrb[0].mxu0
  %v2627 = vadd.f32 0.0, %v2626
  %v2628 = vpop.f32.mrb[0].mxu0
  %v2629 = vpop.f32.mrb[0].mxu0
  %v2630 = vadd.f32 0.0, %v2629
  %v2631 = vpop.f32.mrb[0].mxu0
  %2632 = vmatprep.mubr.bf16.mxu0 0
  %2633 = vmatmul.mubr.bf16.gmra.mrb[0].mxu0 %v900
  %v2634 = vpop.f32.mrb[0].mxu0
  %v2635 = vadd.f32 0.0, %v2634
  %v2636 = vpop.f32.mrb[0].mxu0
  %v2637 = vpop.f32.mrb[0].mxu0
  %v2638 = vadd.f32 0.0, %v2637
  %v2639 = vpop.f32.mrb[0].mxu0
  %2640 = vmatprep.mubr.bf16.mxu0 0
  %2641 = vmatmul.mubr.bf16.gmra.mrb[0].mxu0 %v903
  %v2642 = vpop.f32.mrb[0].mxu0
  %v2643 = vadd.f32 0.0, %v2642
  %v2644 = vpop.f32.mrb[0].mxu0
  %v2645 = vpop.f32.mrb[0].mxu0
  %v2646 = vadd.f32 0.0, %v2645
  %v2647 = vpop.f32.mrb[0].mxu0
  %2648 = vmatprep.mubr.bf16.mxu0 0
  %2649 = vmatmul.mubr.bf16.gmra.mrb[0].mxu0 %v906
  %v2650 = vpop.f32.mrb[0].mxu0
  %v2651 = vadd.f32 0.0, %v2650
  %v2652 = vpop.f32.mrb[0].mxu0
  %v2653 = vpop.f32.mrb[0].mxu0
  %v2654 = vadd.f32 0.0, %v2653
  %v2655 = vpop.f32.mrb[0].mxu0
  %2656 = vmatprep.mubr.bf16.mxu0 0
  %2657 = vmatmul.mubr.bf16.gmra.mrb[0].mxu0 %v909
  %v2658 = vpop.f32.mrb[0].mxu0
  %v2659 = vadd.f32 0.0, %v2658
  %v2660 = vpop.f32.mrb[0].mxu0
  %v2661 = vpop.f32.mrb[0].mxu0
  %v2662 = vadd.f32 0.0, %v2661
  %v2663 = vpop.f32.mrb[0].mxu0
  %2664 = vmatprep.mubr.bf16.mxu0 0
  %2665 = vmatmul.mubr.bf16.gmra.mrb[0].mxu0 %v912
  %v2666 = vpop.f32.mrb[0].mxu0
  %v2667 = vadd.f32 0.0, %v2666
  %v2668 = vpop.f32.mrb[0].mxu0
  %v2669 = vpop.f32.mrb[0].mxu0
  %v2670 = vadd.f32 0.0, %v2669
  %v2671 = vpop.f32.mrb[0].mxu0
  %2672 = vmatprep.mubr.bf16.mxu0 0
  %2673 = vmatmul.mubr.bf16.gmra.mrb[0].mxu0 %v2169
  %v2674 = vpop.f32.mrb[0].mxu0
  %v2675 = vadd.f32 0.0, %v2674
  %v2676 = vpop.f32.mrb[0].mxu0
  %v2677 = vpop.f32.mrb[0].mxu0
  %v2678 = vadd.f32 0.0, %v2677
  %v2679 = vpop.f32.mrb[0].mxu0
  %2680 = vmatprep.mubr.bf16.mxu0 0
  %2681 = vmatmul.mubr.bf16.gmra.mrb[0].mxu0 %v2172
  %v2682 = vpop.f32.mrb[0].mxu0
  %v2683 = vadd.f32 0.0, %v2682
  %v2684 = vpop.f32.mrb[0].mxu0
  %v2685 = vpop.f32.mrb[0].mxu0
  %v2686 = vadd.f32 0.0, %v2685
  %v2687 = vpop.f32.mrb[0].mxu0
  %2688 = vmatprep.mubr.bf16.mxu0 0
  %2689 = vmatmul.mubr.bf16.gmra.mrb[0].mxu0 %v2175
  %v2690 = vpop.f32.mrb[0].mxu0
  %v2691 = vadd.f32 0.0, %v2690
  %v2692 = vpop.f32.mrb[0].mxu0
  %v2693 = vpop.f32.mrb[0].mxu0
  %v2694 = vadd.f32 0.0, %v2693
  %v2695 = vpop.f32.mrb[0].mxu0
  %2696 = vmatprep.mubr.bf16.mxu0 0
  %2697 = vmatmul.mubr.bf16.gmra.mrb[0].mxu0 %v2178
  %v2698 = vpop.f32.mrb[0].mxu0
  %v2699 = vadd.f32 0.0, %v2698
  %v2700 = vpop.f32.mrb[0].mxu0
  %v2701 = vpop.f32.mrb[0].mxu0
  %v2702 = vadd.f32 0.0, %v2701
  %v2703 = vpop.f32.mrb[0].mxu0
  %2704 = vmatprep.mubr.bf16.mxu0 0
  %2705 = vmatmul.mubr.bf16.gmra.mrb[0].mxu0 %v2181
  %v2706 = vpop.f32.mrb[0].mxu0
  %v2707 = vadd.f32 0.0, %v2706
  %v2708 = vpop.f32.mrb[0].mxu0
  %v2709 = vpop.f32.mrb[0].mxu0
  %v2710 = vadd.f32 0.0, %v2709
  %v2711 = vpop.f32.mrb[0].mxu0
  %2712 = vmatprep.mubr.bf16.mxu0 0
  %2713 = vmatmul.mubr.bf16.gmra.mrb[0].mxu0 %v2184
  %v2714 = vpop.f32.mrb[0].mxu0
  %v2715 = vadd.f32 0.0, %v2714
  %v2716 = vpop.f32.mrb[0].mxu0
  %v2717 = vpop.f32.mrb[0].mxu0
  %v2718 = vadd.f32 0.0, %v2717
  %v2719 = vpop.f32.mrb[0].mxu0
  %2720 = vmatprep.mubr.bf16.mxu0 0
  %2721 = vmatmul.mubr.bf16.gmra.mrb[0].mxu0 %v2187
  %v2722 = vpop.f32.mrb[0].mxu0
  %v2723 = vadd.f32 0.0, %v2722
  %v2724 = vpop.f32.mrb[0].mxu0
  %v2725 = vpop.f32.mrb[0].mxu0
  %v2726 = vadd.f32 0.0, %v2725
  %v2727 = vpop.f32.mrb[0].mxu0
  %2728 = vmatprep.mubr.bf16.mxu0 0
  %2729 = vmatmul.mubr.bf16.gmra.mrb[0].mxu0 %v2190
  %v2730 = vpop.f32.mrb[0].mxu0
  %v2731 = vadd.f32 0.0, %v2730
  %v2732 = vpop.f32.mrb[0].mxu0
  %v2733 = vpop.f32.mrb[0].mxu0
  %v2734 = vadd.f32 0.0, %v2733
  %v2735 = vpop.f32.mrb[0].mxu0
  %2736 = vdwg.mxu0
  %v2737 = vadd.f32 %v1585, %v2227
  %v2738 = vadd.f32 %v1588, %v2230
  %v2739 = vadd.f32 %v1593, %v2235
  %v2740 = vadd.f32 %v1596, %v2238
  %v2741 = vadd.f32 %v1601, %v2243
  %v2742 = vadd.f32 %v1604, %v2246
  %v2743 = vadd.f32 %v1609, %v2251
  %v2744 = vadd.f32 %v1612, %v2254
  %v2745 = vadd.f32 %v1617, %v2259
  %v2746 = vadd.f32 %v1620, %v2262
  %v2747 = vadd.f32 %v1625, %v2267
  %v2748 = vadd.f32 %v1628, %v2270
  %v2749 = vadd.f32 %v1633, %v2275
  %v2750 = vadd.f32 %v1636, %v2278
  %v2751 = vadd.f32 %v1641, %v2283
  %v2752 = vadd.f32 %v1644, %v2286
  %v2753 = vadd.f32 %v1649, %v2291
  %v2754 = vadd.f32 %v1652, %v2294
  %v2755 = vadd.f32 %v1657, %v2299
  %v2756 = vadd.f32 %v1660, %v2302
  %v2757 = vadd.f32 %v1665, %v2307
  %v2758 = vadd.f32 %v1668, %v2310
  %v2759 = vadd.f32 %v1673, %v2315
  %v2760 = vadd.f32 %v1676, %v2318
  %v2761 = vadd.f32 %v1681, %v2323
  %v2762 = vadd.f32 %v1684, %v2326
  %v2763 = vadd.f32 %v1689, %v2331
  %v2764 = vadd.f32 %v1692, %v2334
  %v2765 = vadd.f32 %v1697, %v2339
  %v2766 = vadd.f32 %v1700, %v2342
  %v2767 = vadd.f32 %v1705, %v2347
  %v2768 = vadd.f32 %v1708, %v2350
  %v2769 = vadd.f32 %v1713, %v2355
  %v2770 = vadd.f32 %v1716, %v2358
  %v2771 = vadd.f32 %v1721, %v2363
  %v2772 = vadd.f32 %v1724, %v2366
  %v2773 = vadd.f32 %v1729, %v2371
  %v2774 = vadd.f32 %v1732, %v2374
  %v2775 = vadd.f32 %v1737, %v2379
  %v2776 = vadd.f32 %v1740, %v2382
  %v2777 = vadd.f32 %v1745, %v2387
  %v2778 = vadd.f32 %v1748, %v2390
  %v2779 = vadd.f32 %v1753, %v2395
  %v2780 = vadd.f32 %v1756, %v2398
  %v2781 = vadd.f32 %v1761, %v2403
  %v2782 = vadd.f32 %v1764, %v2406
  %v2783 = vadd.f32 %v1769, %v2411
  %v2784 = vadd.f32 %v1772, %v2414
  %v2785 = vadd.f32 %v1777, %v2419
  %v2786 = vadd.f32 %v1780, %v2422
  %v2787 = vadd.f32 %v1785, %v2427
  %v2788 = vadd.f32 %v1788, %v2430
  %v2789 = vadd.f32 %v1793, %v2435
  %v2790 = vadd.f32 %v1796, %v2438
  %v2791 = vadd.f32 %v1801, %v2443
  %v2792 = vadd.f32 %v1804, %v2446
  %v2793 = vadd.f32 %v1809, %v2451
  %v2794 = vadd.f32 %v1812, %v2454
  %v2795 = vadd.f32 %v1817, %v2459
  %v2796 = vadd.f32 %v1820, %v2462
  %v2797 = vadd.f32 %v1825, %v2467
  %v2798 = vadd.f32 %v1828, %v2470
  %v2799 = vadd.f32 %v1833, %v2475
  %v2800 = vadd.f32 %v1836, %v2478
  %v2801 = vadd.f32 %v1841, %v2483
  %v2802 = vadd.f32 %v1844, %v2486
  %v2803 = vadd.f32 %v1849, %v2491
  %v2804 = vadd.f32 %v1852, %v2494
  %v2805 = vadd.f32 %v1857, %v2499
  %v2806 = vadd.f32 %v1860, %v2502
  %v2807 = vadd.f32 %v1865, %v2507
  %v2808 = vadd.f32 %v1868, %v2510
  %v2809 = vadd.f32 %v1873, %v2515
  %v2810 = vadd.f32 %v1876, %v2518
  %v2811 = vadd.f32 %v1881, %v2523
  %v2812 = vadd.f32 %v1884, %v2526
  %v2813 = vadd.f32 %v1889, %v2531
  %v2814 = vadd.f32 %v1892, %v2534
  %v2815 = vadd.f32 %v1897, %v2539
  %v2816 = vadd.f32 %v1900, %v2542
  %v2817 = vadd.f32 %v1905, %v2547
  %v2818 = vadd.f32 %v1908, %v2550
  %v2819 = vadd.f32 %v1913, %v2555
  %v2820 = vadd.f32 %v1916, %v2558
  %v2821 = vadd.f32 %v1921, %v2563
  %v2822 = vadd.f32 %v1924, %v2566
  %v2823 = vadd.f32 %v1929, %v2571
  %v2824 = vadd.f32 %v1932, %v2574
  %v2825 = vadd.f32 %v1937, %v2579
  %v2826 = vadd.f32 %v1940, %v2582
  %v2827 = vadd.f32 %v1945, %v2587
  %v2828 = vadd.f32 %v1948, %v2590
  %v2829 = vadd.f32 %v1953, %v2595
  %v2830 = vadd.f32 %v1956, %v2598
  %v2831 = vadd.f32 %v1961, %v2603
  %v2832 = vadd.f32 %v1964, %v2606
  %v2833 = vadd.f32 %v1969, %v2611
  %v2834 = vadd.f32 %v1972, %v2614
  %v2835 = vadd.f32 %v1977, %v2619
  %v2836 = vadd.f32 %v1980, %v2622
  %v2837 = vadd.f32 %v1985, %v2627
  %v2838 = vadd.f32 %v1988, %v2630
  %v2839 = vadd.f32 %v1993, %v2635
  %v2840 = vadd.f32 %v1996, %v2638
  %v2841 = vadd.f32 %v2001, %v2643
  %v2842 = vadd.f32 %v2004, %v2646
  %v2843 = vadd.f32 %v2009, %v2651
  %v2844 = vadd.f32 %v2012, %v2654
  %v2845 = vadd.f32 %v2017, %v2659
  %v2846 = vadd.f32 %v2020, %v2662
  %v2847 = vadd.f32 %v2025, %v2667
  %v2848 = vadd.f32 %v2028, %v2670
  %v2849 = vadd.f32 %v2033, %v2675
  %v2850 = vadd.f32 %v2036, %v2678
  %v2851 = vadd.f32 %v2041, %v2683
  %v2852 = vadd.f32 %v2044, %v2686
  %v2853 = vadd.f32 %v2049, %v2691
  %v2854 = vadd.f32 %v2052, %v2694
  %v2855 = vadd.f32 %v2057, %v2699
  %v2856 = vadd.f32 %v2060, %v2702
  %v2857 = vadd.f32 %v2065, %v2707
  %v2858 = vadd.f32 %v2068, %v2710
  %v2859 = vadd.f32 %v2073, %v2715
  %v2860 = vadd.f32 %v2076, %v2718
  %v2861 = vadd.f32 %v2081, %v2723
  %v2862 = vadd.f32 %v2084, %v2726
  %v2863 = vadd.f32 %v2089, %v2731
  %v2864 = vadd.f32 %v2092, %v2734
  %s2865 = scalar_lea.vmem %s1, 96
  %v2866 = vld [vmem:[%s2865] sm:$0xf]
  %v2867 = vld [vmem:[%s2865 + $0x4] sm:$0xf]
  %v2868 = vld [vmem:[%s2865 + $0x8] sm:$0xf]
  %v2869 = vld [vmem:[%s2865 + $0xc] sm:$0xf]
  %v2870 = vld [vmem:[%s2865 + $0x10] sm:$0xf]
  %v2871 = vld [vmem:[%s2865 + $0x14] sm:$0xf]
  %v2872 = vld [vmem:[%s2865 + $0x18] sm:$0xf]
  %v2873 = vld [vmem:[%s2865 + $0x1c] sm:$0xf]
  %v2876 = vunpack.c.l.b16 %v361
  %v2877 = vunpack.c.l.b16 %v362
  %v2878 = vpack.c.b16 %v2877, %v2876
  %v2887 = vunpack.c.l.b16 %v2866
  %v2888 = vunpack.c.l.b16 %v2867
  %v2889 = vunpack.c.l.b16 %v2868
  %v2890 = vunpack.c.l.b16 %v2869
  %v2891 = vunpack.c.l.b16 %v2870
  %v2892 = vunpack.c.l.b16 %v2871
  %v2893 = vunpack.c.l.b16 %v2872
  %v2894 = vunpack.c.l.b16 %v2873
  %v2895 = vpack.c.b16 %v2888, %v2887
  %v2896 = vpack.c.b16 %v2890, %v2889
  %v2897 = vpack.c.b16 %v2892, %v2891
  %v2898 = vpack.c.b16 %v2894, %v2893
  %v2904 = vsel %vm724, %v2878, 0
  %2906 = vmatprep.subr.bf16.mxu0 0
  %2907 = vmatpush1.bf16.msra.mxu0 %v2895
  %2908 = vmatprep.subr.bf16.mxu0 0
  %2909 = vmatpush1.bf16.msra.mxu0 %v2896
  %2910 = vmatprep.subr.bf16.mxu0 0
  %2911 = vmatpush1.bf16.msra.mxu0 %v2897
  %2912 = vmatprep.subr.bf16.mxu0 0
  %2913 = vmatpush1.bf16.msra.mxu0 %v2898
  %2914 = vmatprep.subr.bf16.mxu0 0
  %2915 = vmatpush1.bf16.msra.mxu0 0
  %2916 = vmatprep.subr.bf16.mxu0 0
  %2917 = vmatpush1.bf16.msra.mxu0 0
  %2918 = vmatprep.subr.bf16.mxu0 0
  %2919 = vmatpush1.bf16.msra.mxu0 0
  %2920 = vmatprep.subr.bf16.mxu0 0
  %2921 = vmatpush1.bf16.msra.mxu0 0
  %2922 = vmatprep.subr.bf16.mxu0 0
  %2923 = vmatpush1.bf16.msra.mxu0 0
  %2924 = vmatprep.subr.bf16.mxu0 0
  %2925 = vmatpush1.bf16.msra.mxu0 0
  %2926 = vmatprep.subr.bf16.mxu0 0
  %2927 = vmatpush1.bf16.msra.mxu0 0
  %2928 = vmatprep.subr.bf16.mxu0 0
  %2929 = vmatpush1.bf16.msra.mxu0 0
  %2930 = vmatprep.subr.bf16.mxu0 0
  %2931 = vmatpush1.bf16.msra.mxu0 0
  %2932 = vmatprep.subr.bf16.mxu0 0
  %2933 = vmatpush1.bf16.msra.mxu0 0
  %2934 = vmatprep.subr.bf16.mxu0 0
  %2935 = vmatpush1.bf16.msra.mxu0 0
  %2936 = vmatprep.subr.bf16.mxu0 0
  %2937 = vmatpush1.bf16.msra.mxu0 0
  %2938 = vmatprep.mubr.bf16.mxu0 0
  %2939 = vmatmul.mubr.bf16.gmra.mrb[0].mxu0 %v750
  %v2940 = vpop.f32.mrb[0].mxu0
  %v2941 = vadd.f32 0.0, %v2940
  %v2942 = vpop.f32.mrb[0].mxu0
  %v2943 = vpop.f32.mrb[0].mxu0
  %v2944 = vadd.f32 0.0, %v2943
  %v2945 = vpop.f32.mrb[0].mxu0
  %2946 = vmatprep.mubr.bf16.mxu0 0
  %2947 = vmatmul.mubr.bf16.gmra.mrb[0].mxu0 %v753
  %v2948 = vpop.f32.mrb[0].mxu0
  %v2949 = vadd.f32 0.0, %v2948
  %v2950 = vpop.f32.mrb[0].mxu0
  %v2951 = vpop.f32.mrb[0].mxu0
  %v2952 = vadd.f32 0.0, %v2951
  %v2953 = vpop.f32.mrb[0].mxu0
  %2954 = vmatprep.mubr.bf16.mxu0 0
  %2955 = vmatmul.mubr.bf16.gmra.mrb[0].mxu0 %v756
  %v2956 = vpop.f32.mrb[0].mxu0
  %v2957 = vadd.f32 0.0, %v2956
  %v2958 = vpop.f32.mrb[0].mxu0
  %v2959 = vpop.f32.mrb[0].mxu0
  %v2960 = vadd.f32 0.0, %v2959
  %v2961 = vpop.f32.mrb[0].mxu0
  %2962 = vmatprep.mubr.bf16.mxu0 0
  %2963 = vmatmul.mubr.bf16.gmra.mrb[0].mxu0 %v759
  %v2964 = vpop.f32.mrb[0].mxu0
  %v2965 = vadd.f32 0.0, %v2964
  %v2966 = vpop.f32.mrb[0].mxu0
  %v2967 = vpop.f32.mrb[0].mxu0
  %v2968 = vadd.f32 0.0, %v2967
  %v2969 = vpop.f32.mrb[0].mxu0
  %2970 = vmatprep.mubr.bf16.mxu0 0
  %2971 = vmatmul.mubr.bf16.gmra.mrb[0].mxu0 %v762
  %v2972 = vpop.f32.mrb[0].mxu0
  %v2973 = vadd.f32 0.0, %v2972
  %v2974 = vpop.f32.mrb[0].mxu0
  %v2975 = vpop.f32.mrb[0].mxu0
  %v2976 = vadd.f32 0.0, %v2975
  %v2977 = vpop.f32.mrb[0].mxu0
  %2978 = vmatprep.mubr.bf16.mxu0 0
  %2979 = vmatmul.mubr.bf16.gmra.mrb[0].mxu0 %v765
  %v2980 = vpop.f32.mrb[0].mxu0
  %v2981 = vadd.f32 0.0, %v2980
  %v2982 = vpop.f32.mrb[0].mxu0
  %v2983 = vpop.f32.mrb[0].mxu0
  %v2984 = vadd.f32 0.0, %v2983
  %v2985 = vpop.f32.mrb[0].mxu0
  %2986 = vmatprep.mubr.bf16.mxu0 0
  %2987 = vmatmul.mubr.bf16.gmra.mrb[0].mxu0 %v768
  %v2988 = vpop.f32.mrb[0].mxu0
  %v2989 = vadd.f32 0.0, %v2988
  %v2990 = vpop.f32.mrb[0].mxu0
  %v2991 = vpop.f32.mrb[0].mxu0
  %v2992 = vadd.f32 0.0, %v2991
  %v2993 = vpop.f32.mrb[0].mxu0
  %2994 = vmatprep.mubr.bf16.mxu0 0
  %2995 = vmatmul.mubr.bf16.gmra.mrb[0].mxu0 %v771
  %v2996 = vpop.f32.mrb[0].mxu0
  %v2997 = vadd.f32 0.0, %v2996
  %v2998 = vpop.f32.mrb[0].mxu0
  %v2999 = vpop.f32.mrb[0].mxu0
  %v3000 = vadd.f32 0.0, %v2999
  %v3001 = vpop.f32.mrb[0].mxu0
  %3002 = vmatprep.mubr.bf16.mxu0 0
  %3003 = vmatmul.mubr.bf16.gmra.mrb[0].mxu0 %v774
  %v3004 = vpop.f32.mrb[0].mxu0
  %v3005 = vadd.f32 0.0, %v3004
  %v3006 = vpop.f32.mrb[0].mxu0
  %v3007 = vpop.f32.mrb[0].mxu0
  %v3008 = vadd.f32 0.0, %v3007
  %v3009 = vpop.f32.mrb[0].mxu0
  %3010 = vmatprep.mubr.bf16.mxu0 0
  %3011 = vmatmul.mubr.bf16.gmra.mrb[0].mxu0 %v777
  %v3012 = vpop.f32.mrb[0].mxu0
  %v3013 = vadd.f32 0.0, %v3012
  %v3014 = vpop.f32.mrb[0].mxu0
  %v3015 = vpop.f32.mrb[0].mxu0
  %v3016 = vadd.f32 0.0, %v3015
  %v3017 = vpop.f32.mrb[0].mxu0
  %3018 = vmatprep.mubr.bf16.mxu0 0
  %3019 = vmatmul.mubr.bf16.gmra.mrb[0].mxu0 %v780
  %v3020 = vpop.f32.mrb[0].mxu0
  %v3021 = vadd.f32 0.0, %v3020
  %v3022 = vpop.f32.mrb[0].mxu0
  %v3023 = vpop.f32.mrb[0].mxu0
  %v3024 = vadd.f32 0.0, %v3023
  %v3025 = vpop.f32.mrb[0].mxu0
  %3026 = vmatprep.mubr.bf16.mxu0 0
  %3027 = vmatmul.mubr.bf16.gmra.mrb[0].mxu0 %v783
  %v3028 = vpop.f32.mrb[0].mxu0
  %v3029 = vadd.f32 0.0, %v3028
  %v3030 = vpop.f32.mrb[0].mxu0
  %v3031 = vpop.f32.mrb[0].mxu0
  %v3032 = vadd.f32 0.0, %v3031
  %v3033 = vpop.f32.mrb[0].mxu0
  %3034 = vmatprep.mubr.bf16.mxu0 0
  %3035 = vmatmul.mubr.bf16.gmra.mrb[0].mxu0 %v786
  %v3036 = vpop.f32.mrb[0].mxu0
  %v3037 = vadd.f32 0.0, %v3036
  %v3038 = vpop.f32.mrb[0].mxu0
  %v3039 = vpop.f32.mrb[0].mxu0
  %v3040 = vadd.f32 0.0, %v3039
  %v3041 = vpop.f32.mrb[0].mxu0
  %3042 = vmatprep.mubr.bf16.mxu0 0
  %3043 = vmatmul.mubr.bf16.gmra.mrb[0].mxu0 %v789
  %v3044 = vpop.f32.mrb[0].mxu0
  %v3045 = vadd.f32 0.0, %v3044
  %v3046 = vpop.f32.mrb[0].mxu0
  %v3047 = vpop.f32.mrb[0].mxu0
  %v3048 = vadd.f32 0.0, %v3047
  %v3049 = vpop.f32.mrb[0].mxu0
  %3050 = vmatprep.mubr.bf16.mxu0 0
  %3051 = vmatmul.mubr.bf16.gmra.mrb[0].mxu0 %v792
  %v3052 = vpop.f32.mrb[0].mxu0
  %v3053 = vadd.f32 0.0, %v3052
  %v3054 = vpop.f32.mrb[0].mxu0
  %v3055 = vpop.f32.mrb[0].mxu0
  %v3056 = vadd.f32 0.0, %v3055
  %v3057 = vpop.f32.mrb[0].mxu0
  %3058 = vmatprep.mubr.bf16.mxu0 0
  %3059 = vmatmul.mubr.bf16.gmra.mrb[0].mxu0 %v795
  %v3060 = vpop.f32.mrb[0].mxu0
  %v3061 = vadd.f32 0.0, %v3060
  %v3062 = vpop.f32.mrb[0].mxu0
  %v3063 = vpop.f32.mrb[0].mxu0
  %v3064 = vadd.f32 0.0, %v3063
  %v3065 = vpop.f32.mrb[0].mxu0
  %3066 = vmatprep.mubr.bf16.mxu0 0
  %3067 = vmatmul.mubr.bf16.gmra.mrb[0].mxu0 %v798
  %v3068 = vpop.f32.mrb[0].mxu0
  %v3069 = vadd.f32 0.0, %v3068
  %v3070 = vpop.f32.mrb[0].mxu0
  %v3071 = vpop.f32.mrb[0].mxu0
  %v3072 = vadd.f32 0.0, %v3071
  %v3073 = vpop.f32.mrb[0].mxu0
  %3074 = vmatprep.mubr.bf16.mxu0 0
  %3075 = vmatmul.mubr.bf16.gmra.mrb[0].mxu0 %v801
  %v3076 = vpop.f32.mrb[0].mxu0
  %v3077 = vadd.f32 0.0, %v3076
  %v3078 = vpop.f32.mrb[0].mxu0
  %v3079 = vpop.f32.mrb[0].mxu0
  %v3080 = vadd.f32 0.0, %v3079
  %v3081 = vpop.f32.mrb[0].mxu0
  %3082 = vmatprep.mubr.bf16.mxu0 0
  %3083 = vmatmul.mubr.bf16.gmra.mrb[0].mxu0 %v804
  %v3084 = vpop.f32.mrb[0].mxu0
  %v3085 = vadd.f32 0.0, %v3084
  %v3086 = vpop.f32.mrb[0].mxu0
  %v3087 = vpop.f32.mrb[0].mxu0
  %v3088 = vadd.f32 0.0, %v3087
  %v3089 = vpop.f32.mrb[0].mxu0
  %3090 = vmatprep.mubr.bf16.mxu0 0
  %3091 = vmatmul.mubr.bf16.gmra.mrb[0].mxu0 %v807
  %v3092 = vpop.f32.mrb[0].mxu0
  %v3093 = vadd.f32 0.0, %v3092
  %v3094 = vpop.f32.mrb[0].mxu0
  %v3095 = vpop.f32.mrb[0].mxu0
  %v3096 = vadd.f32 0.0, %v3095
  %v3097 = vpop.f32.mrb[0].mxu0
  %3098 = vmatprep.mubr.bf16.mxu0 0
  %3099 = vmatmul.mubr.bf16.gmra.mrb[0].mxu0 %v810
  %v3100 = vpop.f32.mrb[0].mxu0
  %v3101 = vadd.f32 0.0, %v3100
  %v3102 = vpop.f32.mrb[0].mxu0
  %v3103 = vpop.f32.mrb[0].mxu0
  %v3104 = vadd.f32 0.0, %v3103
  %v3105 = vpop.f32.mrb[0].mxu0
  %3106 = vmatprep.mubr.bf16.mxu0 0
  %3107 = vmatmul.mubr.bf16.gmra.mrb[0].mxu0 %v813
  %v3108 = vpop.f32.mrb[0].mxu0
  %v3109 = vadd.f32 0.0, %v3108
  %v3110 = vpop.f32.mrb[0].mxu0
  %v3111 = vpop.f32.mrb[0].mxu0
  %v3112 = vadd.f32 0.0, %v3111
  %v3113 = vpop.f32.mrb[0].mxu0
  %3114 = vmatprep.mubr.bf16.mxu0 0
  %3115 = vmatmul.mubr.bf16.gmra.mrb[0].mxu0 %v816
  %v3116 = vpop.f32.mrb[0].mxu0
  %v3117 = vadd.f32 0.0, %v3116
  %v3118 = vpop.f32.mrb[0].mxu0
  %v3119 = vpop.f32.mrb[0].mxu0
  %v3120 = vadd.f32 0.0, %v3119
  %v3121 = vpop.f32.mrb[0].mxu0
  %3122 = vmatprep.mubr.bf16.mxu0 0
  %3123 = vmatmul.mubr.bf16.gmra.mrb[0].mxu0 %v819
  %v3124 = vpop.f32.mrb[0].mxu0
  %v3125 = vadd.f32 0.0, %v3124
  %v3126 = vpop.f32.mrb[0].mxu0
  %v3127 = vpop.f32.mrb[0].mxu0
  %v3128 = vadd.f32 0.0, %v3127
  %v3129 = vpop.f32.mrb[0].mxu0
  %3130 = vmatprep.mubr.bf16.mxu0 0
  %3131 = vmatmul.mubr.bf16.gmra.mrb[0].mxu0 %v822
  %v3132 = vpop.f32.mrb[0].mxu0
  %v3133 = vadd.f32 0.0, %v3132
  %v3134 = vpop.f32.mrb[0].mxu0
  %v3135 = vpop.f32.mrb[0].mxu0
  %v3136 = vadd.f32 0.0, %v3135
  %v3137 = vpop.f32.mrb[0].mxu0
  %3138 = vmatprep.mubr.bf16.mxu0 0
  %3139 = vmatmul.mubr.bf16.gmra.mrb[0].mxu0 %v825
  %v3140 = vpop.f32.mrb[0].mxu0
  %v3141 = vadd.f32 0.0, %v3140
  %v3142 = vpop.f32.mrb[0].mxu0
  %v3143 = vpop.f32.mrb[0].mxu0
  %v3144 = vadd.f32 0.0, %v3143
  %v3145 = vpop.f32.mrb[0].mxu0
  %3146 = vmatprep.mubr.bf16.mxu0 0
  %3147 = vmatmul.mubr.bf16.gmra.mrb[0].mxu0 %v828
  %v3148 = vpop.f32.mrb[0].mxu0
  %v3149 = vadd.f32 0.0, %v3148
  %v3150 = vpop.f32.mrb[0].mxu0
  %v3151 = vpop.f32.mrb[0].mxu0
  %v3152 = vadd.f32 0.0, %v3151
  %v3153 = vpop.f32.mrb[0].mxu0
  %3154 = vmatprep.mubr.bf16.mxu0 0
  %3155 = vmatmul.mubr.bf16.gmra.mrb[0].mxu0 %v831
  %v3156 = vpop.f32.mrb[0].mxu0
  %v3157 = vadd.f32 0.0, %v3156
  %v3158 = vpop.f32.mrb[0].mxu0
  %v3159 = vpop.f32.mrb[0].mxu0
  %v3160 = vadd.f32 0.0, %v3159
  %v3161 = vpop.f32.mrb[0].mxu0
  %3162 = vmatprep.mubr.bf16.mxu0 0
  %3163 = vmatmul.mubr.bf16.gmra.mrb[0].mxu0 %v834
  %v3164 = vpop.f32.mrb[0].mxu0
  %v3165 = vadd.f32 0.0, %v3164
  %v3166 = vpop.f32.mrb[0].mxu0
  %v3167 = vpop.f32.mrb[0].mxu0
  %v3168 = vadd.f32 0.0, %v3167
  %v3169 = vpop.f32.mrb[0].mxu0
  %3170 = vmatprep.mubr.bf16.mxu0 0
  %3171 = vmatmul.mubr.bf16.gmra.mrb[0].mxu0 %v837
  %v3172 = vpop.f32.mrb[0].mxu0
  %v3173 = vadd.f32 0.0, %v3172
  %v3174 = vpop.f32.mrb[0].mxu0
  %v3175 = vpop.f32.mrb[0].mxu0
  %v3176 = vadd.f32 0.0, %v3175
  %v3177 = vpop.f32.mrb[0].mxu0
  %3178 = vmatprep.mubr.bf16.mxu0 0
  %3179 = vmatmul.mubr.bf16.gmra.mrb[0].mxu0 %v840
  %v3180 = vpop.f32.mrb[0].mxu0
  %v3181 = vadd.f32 0.0, %v3180
  %v3182 = vpop.f32.mrb[0].mxu0
  %v3183 = vpop.f32.mrb[0].mxu0
  %v3184 = vadd.f32 0.0, %v3183
  %v3185 = vpop.f32.mrb[0].mxu0
  %3186 = vmatprep.mubr.bf16.mxu0 0
  %3187 = vmatmul.mubr.bf16.gmra.mrb[0].mxu0 %v843
  %v3188 = vpop.f32.mrb[0].mxu0
  %v3189 = vadd.f32 0.0, %v3188
  %v3190 = vpop.f32.mrb[0].mxu0
  %v3191 = vpop.f32.mrb[0].mxu0
  %v3192 = vadd.f32 0.0, %v3191
  %v3193 = vpop.f32.mrb[0].mxu0
  %3194 = vmatprep.mubr.bf16.mxu0 0
  %3195 = vmatmul.mubr.bf16.gmra.mrb[0].mxu0 %v846
  %v3196 = vpop.f32.mrb[0].mxu0
  %v3197 = vadd.f32 0.0, %v3196
  %v3198 = vpop.f32.mrb[0].mxu0
  %v3199 = vpop.f32.mrb[0].mxu0
  %v3200 = vadd.f32 0.0, %v3199
  %v3201 = vpop.f32.mrb[0].mxu0
  %3202 = vmatprep.mubr.bf16.mxu0 0
  %3203 = vmatmul.mubr.bf16.gmra.mrb[0].mxu0 %v849
  %v3204 = vpop.f32.mrb[0].mxu0
  %v3205 = vadd.f32 0.0, %v3204
  %v3206 = vpop.f32.mrb[0].mxu0
  %v3207 = vpop.f32.mrb[0].mxu0
  %v3208 = vadd.f32 0.0, %v3207
  %v3209 = vpop.f32.mrb[0].mxu0
  %3210 = vmatprep.mubr.bf16.mxu0 0
  %3211 = vmatmul.mubr.bf16.gmra.mrb[0].mxu0 %v852
  %v3212 = vpop.f32.mrb[0].mxu0
  %v3213 = vadd.f32 0.0, %v3212
  %v3214 = vpop.f32.mrb[0].mxu0
  %v3215 = vpop.f32.mrb[0].mxu0
  %v3216 = vadd.f32 0.0, %v3215
  %v3217 = vpop.f32.mrb[0].mxu0
  %3218 = vmatprep.mubr.bf16.mxu0 0
  %3219 = vmatmul.mubr.bf16.gmra.mrb[0].mxu0 %v855
  %v3220 = vpop.f32.mrb[0].mxu0
  %v3221 = vadd.f32 0.0, %v3220
  %v3222 = vpop.f32.mrb[0].mxu0
  %v3223 = vpop.f32.mrb[0].mxu0
  %v3224 = vadd.f32 0.0, %v3223
  %v3225 = vpop.f32.mrb[0].mxu0
  %3226 = vmatprep.mubr.bf16.mxu0 0
  %3227 = vmatmul.mubr.bf16.gmra.mrb[0].mxu0 %v858
  %v3228 = vpop.f32.mrb[0].mxu0
  %v3229 = vadd.f32 0.0, %v3228
  %v3230 = vpop.f32.mrb[0].mxu0
  %v3231 = vpop.f32.mrb[0].mxu0
  %v3232 = vadd.f32 0.0, %v3231
  %v3233 = vpop.f32.mrb[0].mxu0
  %3234 = vmatprep.mubr.bf16.mxu0 0
  %3235 = vmatmul.mubr.bf16.gmra.mrb[0].mxu0 %v861
  %v3236 = vpop.f32.mrb[0].mxu0
  %v3237 = vadd.f32 0.0, %v3236
  %v3238 = vpop.f32.mrb[0].mxu0
  %v3239 = vpop.f32.mrb[0].mxu0
  %v3240 = vadd.f32 0.0, %v3239
  %v3241 = vpop.f32.mrb[0].mxu0
  %3242 = vmatprep.mubr.bf16.mxu0 0
  %3243 = vmatmul.mubr.bf16.gmra.mrb[0].mxu0 %v864
  %v3244 = vpop.f32.mrb[0].mxu0
  %v3245 = vadd.f32 0.0, %v3244
  %v3246 = vpop.f32.mrb[0].mxu0
  %v3247 = vpop.f32.mrb[0].mxu0
  %v3248 = vadd.f32 0.0, %v3247
  %v3249 = vpop.f32.mrb[0].mxu0
  %3250 = vmatprep.mubr.bf16.mxu0 0
  %3251 = vmatmul.mubr.bf16.gmra.mrb[0].mxu0 %v867
  %v3252 = vpop.f32.mrb[0].mxu0
  %v3253 = vadd.f32 0.0, %v3252
  %v3254 = vpop.f32.mrb[0].mxu0
  %v3255 = vpop.f32.mrb[0].mxu0
  %v3256 = vadd.f32 0.0, %v3255
  %v3257 = vpop.f32.mrb[0].mxu0
  %3258 = vmatprep.mubr.bf16.mxu0 0
  %3259 = vmatmul.mubr.bf16.gmra.mrb[0].mxu0 %v870
  %v3260 = vpop.f32.mrb[0].mxu0
  %v3261 = vadd.f32 0.0, %v3260
  %v3262 = vpop.f32.mrb[0].mxu0
  %v3263 = vpop.f32.mrb[0].mxu0
  %v3264 = vadd.f32 0.0, %v3263
  %v3265 = vpop.f32.mrb[0].mxu0
  %3266 = vmatprep.mubr.bf16.mxu0 0
  %3267 = vmatmul.mubr.bf16.gmra.mrb[0].mxu0 %v873
  %v3268 = vpop.f32.mrb[0].mxu0
  %v3269 = vadd.f32 0.0, %v3268
  %v3270 = vpop.f32.mrb[0].mxu0
  %v3271 = vpop.f32.mrb[0].mxu0
  %v3272 = vadd.f32 0.0, %v3271
  %v3273 = vpop.f32.mrb[0].mxu0
  %3274 = vmatprep.mubr.bf16.mxu0 0
  %3275 = vmatmul.mubr.bf16.gmra.mrb[0].mxu0 %v876
  %v3276 = vpop.f32.mrb[0].mxu0
  %v3277 = vadd.f32 0.0, %v3276
  %v3278 = vpop.f32.mrb[0].mxu0
  %v3279 = vpop.f32.mrb[0].mxu0
  %v3280 = vadd.f32 0.0, %v3279
  %v3281 = vpop.f32.mrb[0].mxu0
  %3282 = vmatprep.mubr.bf16.mxu0 0
  %3283 = vmatmul.mubr.bf16.gmra.mrb[0].mxu0 %v879
  %v3284 = vpop.f32.mrb[0].mxu0
  %v3285 = vadd.f32 0.0, %v3284
  %v3286 = vpop.f32.mrb[0].mxu0
  %v3287 = vpop.f32.mrb[0].mxu0
  %v3288 = vadd.f32 0.0, %v3287
  %v3289 = vpop.f32.mrb[0].mxu0
  %3290 = vmatprep.mubr.bf16.mxu0 0
  %3291 = vmatmul.mubr.bf16.gmra.mrb[0].mxu0 %v882
  %v3292 = vpop.f32.mrb[0].mxu0
  %v3293 = vadd.f32 0.0, %v3292
  %v3294 = vpop.f32.mrb[0].mxu0
  %v3295 = vpop.f32.mrb[0].mxu0
  %v3296 = vadd.f32 0.0, %v3295
  %v3297 = vpop.f32.mrb[0].mxu0
  %3298 = vmatprep.mubr.bf16.mxu0 0
  %3299 = vmatmul.mubr.bf16.gmra.mrb[0].mxu0 %v885
  %v3300 = vpop.f32.mrb[0].mxu0
  %v3301 = vadd.f32 0.0, %v3300
  %v3302 = vpop.f32.mrb[0].mxu0
  %v3303 = vpop.f32.mrb[0].mxu0
  %v3304 = vadd.f32 0.0, %v3303
  %v3305 = vpop.f32.mrb[0].mxu0
  %3306 = vmatprep.mubr.bf16.mxu0 0
  %3307 = vmatmul.mubr.bf16.gmra.mrb[0].mxu0 %v888
  %v3308 = vpop.f32.mrb[0].mxu0
  %v3309 = vadd.f32 0.0, %v3308
  %v3310 = vpop.f32.mrb[0].mxu0
  %v3311 = vpop.f32.mrb[0].mxu0
  %v3312 = vadd.f32 0.0, %v3311
  %v3313 = vpop.f32.mrb[0].mxu0
  %3314 = vmatprep.mubr.bf16.mxu0 0
  %3315 = vmatmul.mubr.bf16.gmra.mrb[0].mxu0 %v891
  %v3316 = vpop.f32.mrb[0].mxu0
  %v3317 = vadd.f32 0.0, %v3316
  %v3318 = vpop.f32.mrb[0].mxu0
  %v3319 = vpop.f32.mrb[0].mxu0
  %v3320 = vadd.f32 0.0, %v3319
  %v3321 = vpop.f32.mrb[0].mxu0
  %3322 = vmatprep.mubr.bf16.mxu0 0
  %3323 = vmatmul.mubr.bf16.gmra.mrb[0].mxu0 %v894
  %v3324 = vpop.f32.mrb[0].mxu0
  %v3325 = vadd.f32 0.0, %v3324
  %v3326 = vpop.f32.mrb[0].mxu0
  %v3327 = vpop.f32.mrb[0].mxu0
  %v3328 = vadd.f32 0.0, %v3327
  %v3329 = vpop.f32.mrb[0].mxu0
  %3330 = vmatprep.mubr.bf16.mxu0 0
  %3331 = vmatmul.mubr.bf16.gmra.mrb[0].mxu0 %v897
  %v3332 = vpop.f32.mrb[0].mxu0
  %v3333 = vadd.f32 0.0, %v3332
  %v3334 = vpop.f32.mrb[0].mxu0
  %v3335 = vpop.f32.mrb[0].mxu0
  %v3336 = vadd.f32 0.0, %v3335
  %v3337 = vpop.f32.mrb[0].mxu0
  %3338 = vmatprep.mubr.bf16.mxu0 0
  %3339 = vmatmul.mubr.bf16.gmra.mrb[0].mxu0 %v900
  %v3340 = vpop.f32.mrb[0].mxu0
  %v3341 = vadd.f32 0.0, %v3340
  %v3342 = vpop.f32.mrb[0].mxu0
  %v3343 = vpop.f32.mrb[0].mxu0
  %v3344 = vadd.f32 0.0, %v3343
  %v3345 = vpop.f32.mrb[0].mxu0
  %3346 = vmatprep.mubr.bf16.mxu0 0
  %3347 = vmatmul.mubr.bf16.gmra.mrb[0].mxu0 %v903
  %v3348 = vpop.f32.mrb[0].mxu0
  %v3349 = vadd.f32 0.0, %v3348
  %v3350 = vpop.f32.mrb[0].mxu0
  %v3351 = vpop.f32.mrb[0].mxu0
  %v3352 = vadd.f32 0.0, %v3351
  %v3353 = vpop.f32.mrb[0].mxu0
  %3354 = vmatprep.mubr.bf16.mxu0 0
  %3355 = vmatmul.mubr.bf16.gmra.mrb[0].mxu0 %v906
  %v3356 = vpop.f32.mrb[0].mxu0
  %v3357 = vadd.f32 0.0, %v3356
  %v3358 = vpop.f32.mrb[0].mxu0
  %v3359 = vpop.f32.mrb[0].mxu0
  %v3360 = vadd.f32 0.0, %v3359
  %v3361 = vpop.f32.mrb[0].mxu0
  %3362 = vmatprep.mubr.bf16.mxu0 0
  %3363 = vmatmul.mubr.bf16.gmra.mrb[0].mxu0 %v909
  %v3364 = vpop.f32.mrb[0].mxu0
  %v3365 = vadd.f32 0.0, %v3364
  %v3366 = vpop.f32.mrb[0].mxu0
  %v3367 = vpop.f32.mrb[0].mxu0
  %v3368 = vadd.f32 0.0, %v3367
  %v3369 = vpop.f32.mrb[0].mxu0
  %3370 = vmatprep.mubr.bf16.mxu0 0
  %3371 = vmatmul.mubr.bf16.gmra.mrb[0].mxu0 %v912
  %v3372 = vpop.f32.mrb[0].mxu0
  %v3373 = vadd.f32 0.0, %v3372
  %v3374 = vpop.f32.mrb[0].mxu0
  %v3375 = vpop.f32.mrb[0].mxu0
  %v3376 = vadd.f32 0.0, %v3375
  %v3377 = vpop.f32.mrb[0].mxu0
  %3378 = vmatprep.mubr.bf16.mxu0 0
  %3379 = vmatmul.mubr.bf16.gmra.mrb[0].mxu0 %v915
  %v3380 = vpop.f32.mrb[0].mxu0
  %v3381 = vadd.f32 0.0, %v3380
  %v3382 = vpop.f32.mrb[0].mxu0
  %v3383 = vpop.f32.mrb[0].mxu0
  %v3384 = vadd.f32 0.0, %v3383
  %v3385 = vpop.f32.mrb[0].mxu0
  %3386 = vmatprep.mubr.bf16.mxu0 0
  %3387 = vmatmul.mubr.bf16.gmra.mrb[0].mxu0 %v2172
  %v3388 = vpop.f32.mrb[0].mxu0
  %v3389 = vadd.f32 0.0, %v3388
  %v3390 = vpop.f32.mrb[0].mxu0
  %v3391 = vpop.f32.mrb[0].mxu0
  %v3392 = vadd.f32 0.0, %v3391
  %v3393 = vpop.f32.mrb[0].mxu0
  %3394 = vmatprep.mubr.bf16.mxu0 0
  %3395 = vmatmul.mubr.bf16.gmra.mrb[0].mxu0 %v2175
  %v3396 = vpop.f32.mrb[0].mxu0
  %v3397 = vadd.f32 0.0, %v3396
  %v3398 = vpop.f32.mrb[0].mxu0
  %v3399 = vpop.f32.mrb[0].mxu0
  %v3400 = vadd.f32 0.0, %v3399
  %v3401 = vpop.f32.mrb[0].mxu0
  %3402 = vmatprep.mubr.bf16.mxu0 0
  %3403 = vmatmul.mubr.bf16.gmra.mrb[0].mxu0 %v2178
  %v3404 = vpop.f32.mrb[0].mxu0
  %v3405 = vadd.f32 0.0, %v3404
  %v3406 = vpop.f32.mrb[0].mxu0
  %v3407 = vpop.f32.mrb[0].mxu0
  %v3408 = vadd.f32 0.0, %v3407
  %v3409 = vpop.f32.mrb[0].mxu0
  %3410 = vmatprep.mubr.bf16.mxu0 0
  %3411 = vmatmul.mubr.bf16.gmra.mrb[0].mxu0 %v2181
  %v3412 = vpop.f32.mrb[0].mxu0
  %v3413 = vadd.f32 0.0, %v3412
  %v3414 = vpop.f32.mrb[0].mxu0
  %v3415 = vpop.f32.mrb[0].mxu0
  %v3416 = vadd.f32 0.0, %v3415
  %v3417 = vpop.f32.mrb[0].mxu0
  %3418 = vmatprep.mubr.bf16.mxu0 0
  %3419 = vmatmul.mubr.bf16.gmra.mrb[0].mxu0 %v2184
  %v3420 = vpop.f32.mrb[0].mxu0
  %v3421 = vadd.f32 0.0, %v3420
  %v3422 = vpop.f32.mrb[0].mxu0
  %v3423 = vpop.f32.mrb[0].mxu0
  %v3424 = vadd.f32 0.0, %v3423
  %v3425 = vpop.f32.mrb[0].mxu0
  %3426 = vmatprep.mubr.bf16.mxu0 0
  %3427 = vmatmul.mubr.bf16.gmra.mrb[0].mxu0 %v2187
  %v3428 = vpop.f32.mrb[0].mxu0
  %v3429 = vadd.f32 0.0, %v3428
  %v3430 = vpop.f32.mrb[0].mxu0
  %v3431 = vpop.f32.mrb[0].mxu0
  %v3432 = vadd.f32 0.0, %v3431
  %v3433 = vpop.f32.mrb[0].mxu0
  %3434 = vmatprep.mubr.bf16.mxu0 0
  %3435 = vmatmul.mubr.bf16.gmra.mrb[0].mxu0 %v2190
  %v3436 = vpop.f32.mrb[0].mxu0
  %v3437 = vadd.f32 0.0, %v3436
  %v3438 = vpop.f32.mrb[0].mxu0
  %v3439 = vpop.f32.mrb[0].mxu0
  %v3440 = vadd.f32 0.0, %v3439
  %v3441 = vpop.f32.mrb[0].mxu0
  %3442 = vmatprep.mubr.bf16.mxu0 0
  %3443 = vmatmul.mubr.bf16.gmra.mrb[0].mxu0 %v2904
  %v3444 = vpop.f32.mrb[0].mxu0
  %v3445 = vadd.f32 0.0, %v3444
  %v3446 = vpop.f32.mrb[0].mxu0
  %v3447 = vpop.f32.mrb[0].mxu0
  %v3448 = vadd.f32 0.0, %v3447
  %v3449 = vpop.f32.mrb[0].mxu0
  %3450 = vdwg.mxu0
  %v3451 = vadd.f32 %v2737, %v2941
  %v3452 = vadd.f32 %v2738, %v2944
  %v3453 = vadd.f32 %v2739, %v2949
  %v3454 = vadd.f32 %v2740, %v2952
  %v3455 = vadd.f32 %v2741, %v2957
  %v3456 = vadd.f32 %v2742, %v2960
  %v3457 = vadd.f32 %v2743, %v2965
  %v3458 = vadd.f32 %v2744, %v2968
  %v3459 = vadd.f32 %v2745, %v2973
  %v3460 = vadd.f32 %v2746, %v2976
  %v3461 = vadd.f32 %v2747, %v2981
  %v3462 = vadd.f32 %v2748, %v2984
  %v3463 = vadd.f32 %v2749, %v2989
  %v3464 = vadd.f32 %v2750, %v2992
  %v3465 = vadd.f32 %v2751, %v2997
  %v3466 = vadd.f32 %v2752, %v3000
  %v3467 = vadd.f32 %v2753, %v3005
  %v3468 = vadd.f32 %v2754, %v3008
  %v3469 = vadd.f32 %v2755, %v3013
  %v3470 = vadd.f32 %v2756, %v3016
  %v3471 = vadd.f32 %v2757, %v3021
  %v3472 = vadd.f32 %v2758, %v3024
  %v3473 = vadd.f32 %v2759, %v3029
  %v3474 = vadd.f32 %v2760, %v3032
  %v3475 = vadd.f32 %v2761, %v3037
  %v3476 = vadd.f32 %v2762, %v3040
  %v3477 = vadd.f32 %v2763, %v3045
  %v3478 = vadd.f32 %v2764, %v3048
  %v3479 = vadd.f32 %v2765, %v3053
  %v3480 = vadd.f32 %v2766, %v3056
  %v3481 = vadd.f32 %v2767, %v3061
  %v3482 = vadd.f32 %v2768, %v3064
  %v3483 = vadd.f32 %v2769, %v3069
  %v3484 = vadd.f32 %v2770, %v3072
  %v3485 = vadd.f32 %v2771, %v3077
  %v3486 = vadd.f32 %v2772, %v3080
  %v3487 = vadd.f32 %v2773, %v3085
  %v3488 = vadd.f32 %v2774, %v3088
  %v3489 = vadd.f32 %v2775, %v3093
  %v3490 = vadd.f32 %v2776, %v3096
  %v3491 = vadd.f32 %v2777, %v3101
  %v3492 = vadd.f32 %v2778, %v3104
  %v3493 = vadd.f32 %v2779, %v3109
  %v3494 = vadd.f32 %v2780, %v3112
  %v3495 = vadd.f32 %v2781, %v3117
  %v3496 = vadd.f32 %v2782, %v3120
  %v3497 = vadd.f32 %v2783, %v3125
  %v3498 = vadd.f32 %v2784, %v3128
  %v3499 = vadd.f32 %v2785, %v3133
  %v3500 = vadd.f32 %v2786, %v3136
  %v3501 = vadd.f32 %v2787, %v3141
  %v3502 = vadd.f32 %v2788, %v3144
  %v3503 = vadd.f32 %v2789, %v3149
  %v3504 = vadd.f32 %v2790, %v3152
  %v3505 = vadd.f32 %v2791, %v3157
  %v3506 = vadd.f32 %v2792, %v3160
  %v3507 = vadd.f32 %v2793, %v3165
  %v3508 = vadd.f32 %v2794, %v3168
  %v3509 = vadd.f32 %v2795, %v3173
  %v3510 = vadd.f32 %v2796, %v3176
  %v3511 = vadd.f32 %v2797, %v3181
  %v3512 = vadd.f32 %v2798, %v3184
  %v3513 = vadd.f32 %v2799, %v3189
  %v3514 = vadd.f32 %v2800, %v3192
  %v3515 = vadd.f32 %v2801, %v3197
  %v3516 = vadd.f32 %v2802, %v3200
  %v3517 = vadd.f32 %v2803, %v3205
  %v3518 = vadd.f32 %v2804, %v3208
  %v3519 = vadd.f32 %v2805, %v3213
  %v3520 = vadd.f32 %v2806, %v3216
  %v3521 = vadd.f32 %v2807, %v3221
  %v3522 = vadd.f32 %v2808, %v3224
  %v3523 = vadd.f32 %v2809, %v3229
  %v3524 = vadd.f32 %v2810, %v3232
  %v3525 = vadd.f32 %v2811, %v3237
  %v3526 = vadd.f32 %v2812, %v3240
  %v3527 = vadd.f32 %v2813, %v3245
  %v3528 = vadd.f32 %v2814, %v3248
  %v3529 = vadd.f32 %v2815, %v3253
  %v3530 = vadd.f32 %v2816, %v3256
  %v3531 = vadd.f32 %v2817, %v3261
  %v3532 = vadd.f32 %v2818, %v3264
  %v3533 = vadd.f32 %v2819, %v3269
  %v3534 = vadd.f32 %v2820, %v3272
  %v3535 = vadd.f32 %v2821, %v3277
  %v3536 = vadd.f32 %v2822, %v3280
  %v3537 = vadd.f32 %v2823, %v3285
  %v3538 = vadd.f32 %v2824, %v3288
  %v3539 = vadd.f32 %v2825, %v3293
  %v3540 = vadd.f32 %v2826, %v3296
  %v3541 = vadd.f32 %v2827, %v3301
  %v3542 = vadd.f32 %v2828, %v3304
  %v3543 = vadd.f32 %v2829, %v3309
  %v3544 = vadd.f32 %v2830, %v3312
  %v3545 = vadd.f32 %v2831, %v3317
  %v3546 = vadd.f32 %v2832, %v3320
  %v3547 = vadd.f32 %v2833, %v3325
  %v3548 = vadd.f32 %v2834, %v3328
  %v3549 = vadd.f32 %v2835, %v3333
  %v3550 = vadd.f32 %v2836, %v3336
  %v3551 = vadd.f32 %v2837, %v3341
  %v3552 = vadd.f32 %v2838, %v3344
  %v3553 = vadd.f32 %v2839, %v3349
  %v3554 = vadd.f32 %v2840, %v3352
  %v3555 = vadd.f32 %v2841, %v3357
  %v3556 = vadd.f32 %v2842, %v3360
  %v3557 = vadd.f32 %v2843, %v3365
  %v3558 = vadd.f32 %v2844, %v3368
  %v3559 = vadd.f32 %v2845, %v3373
  %v3560 = vadd.f32 %v2846, %v3376
  %v3561 = vadd.f32 %v2847, %v3381
  %v3562 = vadd.f32 %v2848, %v3384
  %v3563 = vadd.f32 %v2849, %v3389
  %v3564 = vadd.f32 %v2850, %v3392
  %v3565 = vadd.f32 %v2851, %v3397
  %v3566 = vadd.f32 %v2852, %v3400
  %v3567 = vadd.f32 %v2853, %v3405
  %v3568 = vadd.f32 %v2854, %v3408
  %v3569 = vadd.f32 %v2855, %v3413
  %v3570 = vadd.f32 %v2856, %v3416
  %v3571 = vadd.f32 %v2857, %v3421
  %v3572 = vadd.f32 %v2858, %v3424
  %v3573 = vadd.f32 %v2859, %v3429
  %v3574 = vadd.f32 %v2860, %v3432
  %v3575 = vadd.f32 %v2861, %v3437
  %v3576 = vadd.f32 %v2862, %v3440
  %v3577 = vadd.f32 %v2863, %v3445
  %v3578 = vadd.f32 %v2864, %v3448
  %v3579 = vld [vmem:[%s2] sm:$0x1]
  %v3581 = vlaneseq
  %v3582 = vshrl.u32 %v3581, 7
  %v3583 = vsub.s32 0, %v3582
  %v3584 = vrot.slane %v3579, %v3583
  %v3586 = vadd.f32 %v3451, %v3584
  %v3587 = vadd.f32 %v3452, %v3584
  %v3588 = vadd.f32 %v3453, %v3584
  %v3589 = vadd.f32 %v3454, %v3584
  %v3590 = vadd.f32 %v3455, %v3584
  %v3591 = vadd.f32 %v3456, %v3584
  %v3592 = vadd.f32 %v3457, %v3584
  %v3593 = vadd.f32 %v3458, %v3584
  %v3594 = vadd.f32 %v3459, %v3584
  %v3595 = vadd.f32 %v3460, %v3584
  %v3596 = vadd.f32 %v3461, %v3584
  %v3597 = vadd.f32 %v3462, %v3584
  %v3598 = vadd.f32 %v3463, %v3584
  %v3599 = vadd.f32 %v3464, %v3584
  %v3600 = vadd.f32 %v3465, %v3584
  %v3601 = vadd.f32 %v3466, %v3584
  %v3602 = vadd.f32 %v3467, %v3584
  %v3603 = vadd.f32 %v3468, %v3584
  %v3604 = vadd.f32 %v3469, %v3584
  %v3605 = vadd.f32 %v3470, %v3584
  %v3606 = vadd.f32 %v3471, %v3584
  %v3607 = vadd.f32 %v3472, %v3584
  %v3608 = vadd.f32 %v3473, %v3584
  %v3609 = vadd.f32 %v3474, %v3584
  %v3610 = vadd.f32 %v3475, %v3584
  %v3611 = vadd.f32 %v3476, %v3584
  %v3612 = vadd.f32 %v3477, %v3584
  %v3613 = vadd.f32 %v3478, %v3584
  %v3614 = vadd.f32 %v3479, %v3584
  %v3615 = vadd.f32 %v3480, %v3584
  %v3616 = vadd.f32 %v3481, %v3584
  %v3617 = vadd.f32 %v3482, %v3584
  %v3618 = vadd.f32 %v3483, %v3584
  %v3619 = vadd.f32 %v3484, %v3584
  %v3620 = vadd.f32 %v3485, %v3584
  %v3621 = vadd.f32 %v3486, %v3584
  %v3622 = vadd.f32 %v3487, %v3584
  %v3623 = vadd.f32 %v3488, %v3584
  %v3624 = vadd.f32 %v3489, %v3584
  %v3625 = vadd.f32 %v3490, %v3584
  %v3626 = vadd.f32 %v3491, %v3584
  %v3627 = vadd.f32 %v3492, %v3584
  %v3628 = vadd.f32 %v3493, %v3584
  %v3629 = vadd.f32 %v3494, %v3584
  %v3630 = vadd.f32 %v3495, %v3584
  %v3631 = vadd.f32 %v3496, %v3584
  %v3632 = vadd.f32 %v3497, %v3584
  %v3633 = vadd.f32 %v3498, %v3584
  %v3634 = vadd.f32 %v3499, %v3584
  %v3635 = vadd.f32 %v3500, %v3584
  %v3636 = vadd.f32 %v3501, %v3584
  %v3637 = vadd.f32 %v3502, %v3584
  %v3638 = vadd.f32 %v3503, %v3584
  %v3639 = vadd.f32 %v3504, %v3584
  %v3640 = vadd.f32 %v3505, %v3584
  %v3641 = vadd.f32 %v3506, %v3584
  %v3642 = vadd.f32 %v3507, %v3584
  %v3643 = vadd.f32 %v3508, %v3584
  %v3644 = vadd.f32 %v3509, %v3584
  %v3645 = vadd.f32 %v3510, %v3584
  %v3646 = vadd.f32 %v3511, %v3584
  %v3647 = vadd.f32 %v3512, %v3584
  %v3648 = vadd.f32 %v3513, %v3584
  %v3649 = vadd.f32 %v3514, %v3584
  %v3650 = vadd.f32 %v3515, %v3584
  %v3651 = vadd.f32 %v3516, %v3584
  %v3652 = vadd.f32 %v3517, %v3584
  %v3653 = vadd.f32 %v3518, %v3584
  %v3654 = vadd.f32 %v3519, %v3584
  %v3655 = vadd.f32 %v3520, %v3584
  %v3656 = vadd.f32 %v3521, %v3584
  %v3657 = vadd.f32 %v3522, %v3584
  %v3658 = vadd.f32 %v3523, %v3584
  %v3659 = vadd.f32 %v3524, %v3584
  %v3660 = vadd.f32 %v3525, %v3584
  %v3661 = vadd.f32 %v3526, %v3584
  %v3662 = vadd.f32 %v3527, %v3584
  %v3663 = vadd.f32 %v3528, %v3584
  %v3664 = vadd.f32 %v3529, %v3584
  %v3665 = vadd.f32 %v3530, %v3584
  %v3666 = vadd.f32 %v3531, %v3584
  %v3667 = vadd.f32 %v3532, %v3584
  %v3668 = vadd.f32 %v3533, %v3584
  %v3669 = vadd.f32 %v3534, %v3584
  %v3670 = vadd.f32 %v3535, %v3584
  %v3671 = vadd.f32 %v3536, %v3584
  %v3672 = vadd.f32 %v3537, %v3584
  %v3673 = vadd.f32 %v3538, %v3584
  %v3674 = vadd.f32 %v3539, %v3584
  %v3675 = vadd.f32 %v3540, %v3584
  %v3676 = vadd.f32 %v3541, %v3584
  %v3677 = vadd.f32 %v3542, %v3584
  %v3678 = vadd.f32 %v3543, %v3584
  %v3679 = vadd.f32 %v3544, %v3584
  %v3680 = vadd.f32 %v3545, %v3584
  %v3681 = vadd.f32 %v3546, %v3584
  %v3682 = vadd.f32 %v3547, %v3584
  %v3683 = vadd.f32 %v3548, %v3584
  %v3684 = vadd.f32 %v3549, %v3584
  %v3685 = vadd.f32 %v3550, %v3584
  %v3686 = vadd.f32 %v3551, %v3584
  %v3687 = vadd.f32 %v3552, %v3584
  %v3688 = vadd.f32 %v3553, %v3584
  %v3689 = vadd.f32 %v3554, %v3584
  %v3690 = vadd.f32 %v3555, %v3584
  %v3691 = vadd.f32 %v3556, %v3584
  %v3692 = vadd.f32 %v3557, %v3584
  %v3693 = vadd.f32 %v3558, %v3584
  %v3694 = vadd.f32 %v3559, %v3584
  %v3695 = vadd.f32 %v3560, %v3584
  %v3696 = vadd.f32 %v3561, %v3584
  %v3697 = vadd.f32 %v3562, %v3584
  %v3698 = vadd.f32 %v3563, %v3584
  %v3699 = vadd.f32 %v3564, %v3584
  %v3700 = vadd.f32 %v3565, %v3584
  %v3701 = vadd.f32 %v3566, %v3584
  %v3702 = vadd.f32 %v3567, %v3584
  %v3703 = vadd.f32 %v3568, %v3584
  %v3704 = vadd.f32 %v3569, %v3584
  %v3705 = vadd.f32 %v3570, %v3584
  %v3706 = vadd.f32 %v3571, %v3584
  %v3707 = vadd.f32 %v3572, %v3584
  %v3708 = vadd.f32 %v3573, %v3584
  %v3709 = vadd.f32 %v3574, %v3584
  %v3710 = vadd.f32 %v3575, %v3584
  %v3711 = vadd.f32 %v3576, %v3584
  %v3712 = vadd.f32 %v3577, %v3584
  %v3713 = vadd.f32 %v3578, %v3584
  %v3714 = vmax.f32 %v3586, 0.0
  %v3715 = vmax.f32 %v3587, 0.0
  %v3716 = vmax.f32 %v3588, 0.0
  %v3717 = vmax.f32 %v3589, 0.0
  %v3718 = vmax.f32 %v3590, 0.0
  %v3719 = vmax.f32 %v3591, 0.0
  %v3720 = vmax.f32 %v3592, 0.0
  %v3721 = vmax.f32 %v3593, 0.0
  %v3722 = vmax.f32 %v3594, 0.0
  %v3723 = vmax.f32 %v3595, 0.0
  %v3724 = vmax.f32 %v3596, 0.0
  %v3725 = vmax.f32 %v3597, 0.0
  %v3726 = vmax.f32 %v3598, 0.0
  %v3727 = vmax.f32 %v3599, 0.0
  %v3728 = vmax.f32 %v3600, 0.0
  %v3729 = vmax.f32 %v3601, 0.0
  %v3730 = vmax.f32 %v3602, 0.0
  %v3731 = vmax.f32 %v3603, 0.0
  %v3732 = vmax.f32 %v3604, 0.0
  %v3733 = vmax.f32 %v3605, 0.0
  %v3734 = vmax.f32 %v3606, 0.0
  %v3735 = vmax.f32 %v3607, 0.0
  %v3736 = vmax.f32 %v3608, 0.0
  %v3737 = vmax.f32 %v3609, 0.0
  %v3738 = vmax.f32 %v3610, 0.0
  %v3739 = vmax.f32 %v3611, 0.0
  %v3740 = vmax.f32 %v3612, 0.0
  %v3741 = vmax.f32 %v3613, 0.0
  %v3742 = vmax.f32 %v3614, 0.0
  %v3743 = vmax.f32 %v3615, 0.0
  %v3744 = vmax.f32 %v3616, 0.0
  %v3745 = vmax.f32 %v3617, 0.0
  %v3746 = vmax.f32 %v3618, 0.0
  %v3747 = vmax.f32 %v3619, 0.0
  %v3748 = vmax.f32 %v3620, 0.0
  %v3749 = vmax.f32 %v3621, 0.0
  %v3750 = vmax.f32 %v3622, 0.0
  %v3751 = vmax.f32 %v3623, 0.0
  %v3752 = vmax.f32 %v3624, 0.0
  %v3753 = vmax.f32 %v3625, 0.0
  %v3754 = vmax.f32 %v3626, 0.0
  %v3755 = vmax.f32 %v3627, 0.0
  %v3756 = vmax.f32 %v3628, 0.0
  %v3757 = vmax.f32 %v3629, 0.0
  %v3758 = vmax.f32 %v3630, 0.0
  %v3759 = vmax.f32 %v3631, 0.0
  %v3760 = vmax.f32 %v3632, 0.0
  %v3761 = vmax.f32 %v3633, 0.0
  %v3762 = vmax.f32 %v3634, 0.0
  %v3763 = vmax.f32 %v3635, 0.0
  %v3764 = vmax.f32 %v3636, 0.0
  %v3765 = vmax.f32 %v3637, 0.0
  %v3766 = vmax.f32 %v3638, 0.0
  %v3767 = vmax.f32 %v3639, 0.0
  %v3768 = vmax.f32 %v3640, 0.0
  %v3769 = vmax.f32 %v3641, 0.0
  %v3770 = vmax.f32 %v3642, 0.0
  %v3771 = vmax.f32 %v3643, 0.0
  %v3772 = vmax.f32 %v3644, 0.0
  %v3773 = vmax.f32 %v3645, 0.0
  %v3774 = vmax.f32 %v3646, 0.0
  %v3775 = vmax.f32 %v3647, 0.0
  %v3776 = vmax.f32 %v3648, 0.0
  %v3777 = vmax.f32 %v3649, 0.0
  %v3778 = vmax.f32 %v3650, 0.0
  %v3779 = vmax.f32 %v3651, 0.0
  %v3780 = vmax.f32 %v3652, 0.0
  %v3781 = vmax.f32 %v3653, 0.0
  %v3782 = vmax.f32 %v3654, 0.0
  %v3783 = vmax.f32 %v3655, 0.0
  %v3784 = vmax.f32 %v3656, 0.0
  %v3785 = vmax.f32 %v3657, 0.0
  %v3786 = vmax.f32 %v3658, 0.0
  %v3787 = vmax.f32 %v3659, 0.0
  %v3788 = vmax.f32 %v3660, 0.0
  %v3789 = vmax.f32 %v3661, 0.0
  %v3790 = vmax.f32 %v3662, 0.0
  %v3791 = vmax.f32 %v3663, 0.0
  %v3792 = vmax.f32 %v3664, 0.0
  %v3793 = vmax.f32 %v3665, 0.0
  %v3794 = vmax.f32 %v3666, 0.0
  %v3795 = vmax.f32 %v3667, 0.0
  %v3796 = vmax.f32 %v3668, 0.0
  %v3797 = vmax.f32 %v3669, 0.0
  %v3798 = vmax.f32 %v3670, 0.0
  %v3799 = vmax.f32 %v3671, 0.0
  %v3800 = vmax.f32 %v3672, 0.0
  %v3801 = vmax.f32 %v3673, 0.0
  %v3802 = vmax.f32 %v3674, 0.0
  %v3803 = vmax.f32 %v3675, 0.0
  %v3804 = vmax.f32 %v3676, 0.0
  %v3805 = vmax.f32 %v3677, 0.0
  %v3806 = vmax.f32 %v3678, 0.0
  %v3807 = vmax.f32 %v3679, 0.0
  %v3808 = vmax.f32 %v3680, 0.0
  %v3809 = vmax.f32 %v3681, 0.0
  %v3810 = vmax.f32 %v3682, 0.0
  %v3811 = vmax.f32 %v3683, 0.0
  %v3812 = vmax.f32 %v3684, 0.0
  %v3813 = vmax.f32 %v3685, 0.0
  %v3814 = vmax.f32 %v3686, 0.0
  %v3815 = vmax.f32 %v3687, 0.0
  %v3816 = vmax.f32 %v3688, 0.0
  %v3817 = vmax.f32 %v3689, 0.0
  %v3818 = vmax.f32 %v3690, 0.0
  %v3819 = vmax.f32 %v3691, 0.0
  %v3820 = vmax.f32 %v3692, 0.0
  %v3821 = vmax.f32 %v3693, 0.0
  %v3822 = vmax.f32 %v3694, 0.0
  %v3823 = vmax.f32 %v3695, 0.0
  %v3824 = vmax.f32 %v3696, 0.0
  %v3825 = vmax.f32 %v3697, 0.0
  %v3826 = vmax.f32 %v3698, 0.0
  %v3827 = vmax.f32 %v3699, 0.0
  %v3828 = vmax.f32 %v3700, 0.0
  %v3829 = vmax.f32 %v3701, 0.0
  %v3830 = vmax.f32 %v3702, 0.0
  %v3831 = vmax.f32 %v3703, 0.0
  %v3832 = vmax.f32 %v3704, 0.0
  %v3833 = vmax.f32 %v3705, 0.0
  %v3834 = vmax.f32 %v3706, 0.0
  %v3835 = vmax.f32 %v3707, 0.0
  %v3836 = vmax.f32 %v3708, 0.0
  %v3837 = vmax.f32 %v3709, 0.0
  %v3838 = vmax.f32 %v3710, 0.0
  %v3839 = vmax.f32 %v3711, 0.0
  %v3840 = vmax.f32 %v3712, 0.0
  %v3841 = vmax.f32 %v3713, 0.0
  %v3842 = vpack.c.bf16 %v3715, %v3714
  %v3843 = vpack.c.bf16 %v3717, %v3716
  %v3844 = vpack.c.bf16 %v3719, %v3718
  %v3845 = vpack.c.bf16 %v3721, %v3720
  %v3846 = vpack.c.bf16 %v3723, %v3722
  %v3847 = vpack.c.bf16 %v3725, %v3724
  %v3848 = vpack.c.bf16 %v3727, %v3726
  %v3849 = vpack.c.bf16 %v3729, %v3728
  %v3850 = vpack.c.bf16 %v3731, %v3730
  %v3851 = vpack.c.bf16 %v3733, %v3732
  %v3852 = vpack.c.bf16 %v3735, %v3734
  %v3853 = vpack.c.bf16 %v3737, %v3736
  %v3854 = vpack.c.bf16 %v3739, %v3738
  %v3855 = vpack.c.bf16 %v3741, %v3740
  %v3856 = vpack.c.bf16 %v3743, %v3742
  %v3857 = vpack.c.bf16 %v3745, %v3744
  %v3858 = vpack.c.bf16 %v3747, %v3746
  %v3859 = vpack.c.bf16 %v3749, %v3748
  %v3860 = vpack.c.bf16 %v3751, %v3750
  %v3861 = vpack.c.bf16 %v3753, %v3752
  %v3862 = vpack.c.bf16 %v3755, %v3754
  %v3863 = vpack.c.bf16 %v3757, %v3756
  %v3864 = vpack.c.bf16 %v3759, %v3758
  %v3865 = vpack.c.bf16 %v3761, %v3760
  %v3866 = vpack.c.bf16 %v3763, %v3762
  %v3867 = vpack.c.bf16 %v3765, %v3764
  %v3868 = vpack.c.bf16 %v3767, %v3766
  %v3869 = vpack.c.bf16 %v3769, %v3768
  %v3870 = vpack.c.bf16 %v3771, %v3770
  %v3871 = vpack.c.bf16 %v3773, %v3772
  %v3872 = vpack.c.bf16 %v3775, %v3774
  %v3873 = vpack.c.bf16 %v3777, %v3776
  %v3874 = vpack.c.bf16 %v3779, %v3778
  %v3875 = vpack.c.bf16 %v3781, %v3780
  %v3876 = vpack.c.bf16 %v3783, %v3782
  %v3877 = vpack.c.bf16 %v3785, %v3784
  %v3878 = vpack.c.bf16 %v3787, %v3786
  %v3879 = vpack.c.bf16 %v3789, %v3788
  %v3880 = vpack.c.bf16 %v3791, %v3790
  %v3881 = vpack.c.bf16 %v3793, %v3792
  %v3882 = vpack.c.bf16 %v3795, %v3794
  %v3883 = vpack.c.bf16 %v3797, %v3796
  %v3884 = vpack.c.bf16 %v3799, %v3798
  %v3885 = vpack.c.bf16 %v3801, %v3800
  %v3886 = vpack.c.bf16 %v3803, %v3802
  %v3887 = vpack.c.bf16 %v3805, %v3804
  %v3888 = vpack.c.bf16 %v3807, %v3806
  %v3889 = vpack.c.bf16 %v3809, %v3808
  %v3890 = vpack.c.bf16 %v3811, %v3810
  %v3891 = vpack.c.bf16 %v3813, %v3812
  %v3892 = vpack.c.bf16 %v3815, %v3814
  %v3893 = vpack.c.bf16 %v3817, %v3816
  %v3894 = vpack.c.bf16 %v3819, %v3818
  %v3895 = vpack.c.bf16 %v3821, %v3820
  %v3896 = vpack.c.bf16 %v3823, %v3822
  %v3897 = vpack.c.bf16 %v3825, %v3824
  %v3898 = vpack.c.bf16 %v3827, %v3826
  %v3899 = vpack.c.bf16 %v3829, %v3828
  %v3900 = vpack.c.bf16 %v3831, %v3830
  %v3901 = vpack.c.bf16 %v3833, %v3832
  %v3902 = vpack.c.bf16 %v3835, %v3834
  %v3903 = vpack.c.bf16 %v3837, %v3836
  %v3904 = vpack.c.bf16 %v3839, %v3838
  %v3905 = vpack.c.bf16 %v3841, %v3840
  %v3906 = vld [vmem:[%s3] sm:$0xf]
  %v3907 = vld [vmem:[%s3 + $0x4] sm:$0xf]
  %v3908 = vld [vmem:[%s3 + $0x8] sm:$0xf]
  %v3909 = vld [vmem:[%s3 + $0xc] sm:$0xf]
  %s3910 = scalar_lea.vmem %s3, 16
  %v3911 = vld [vmem:[%s3910] sm:$0xf]
  %v3912 = vld [vmem:[%s3910 + $0x4] sm:$0xf]
  %v3913 = vld [vmem:[%s3910 + $0x8] sm:$0xf]
  %v3914 = vld [vmem:[%s3910 + $0xc] sm:$0xf]
  %v3919 = vunpack.c.l.b16 %v3911
  %v3920 = vunpack.c.l.b16 %v3912
  %v3921 = vunpack.c.l.b16 %v3913
  %v3922 = vunpack.c.l.b16 %v3914
  %v3923 = vpack.c.b16 %v3920, %v3919
  %v3924 = vpack.c.b16 %v3922, %v3921
  %vm3927 = vcmask 261120
  %v3929 = vsel %vm3927, %v3843, 0
  %v3932 = vsel %vm3927, %v3845, 0
  %v3935 = vsel %vm3927, %v3847, 0
  %v3938 = vsel %vm3927, %v3859, 0
  %v3941 = vsel %vm3927, %v3861, 0
  %v3944 = vsel %vm3927, %v3863, 0
  %v3947 = vsel %vm3927, %v3875, 0
  %v3950 = vsel %vm3927, %v3877, 0
  %v3953 = vsel %vm3927, %v3879, 0
  %3955 = vmatprep.subr.bf16.mxu0 0
  %3956 = vmatpush1.bf16.msra.mxu0 %v3923
  %3957 = vmatprep.subr.bf16.mxu0 0
  %3958 = vmatpush1.bf16.msra.mxu0 %v3924
  %3959 = vmatprep.subr.bf16.mxu0 0
  %3960 = vmatpush1.bf16.msra.mxu0 0
  %3961 = vmatprep.subr.bf16.mxu0 0
  %3962 = vmatpush1.bf16.msra.mxu0 0
  %3963 = vmatprep.subr.bf16.mxu0 0
  %3964 = vmatpush1.bf16.msra.mxu0 0
  %3965 = vmatprep.subr.bf16.mxu0 0
  %3966 = vmatpush1.bf16.msra.mxu0 0
  %3967 = vmatprep.subr.bf16.mxu0 0
  %3968 = vmatpush1.bf16.msra.mxu0 0
  %3969 = vmatprep.subr.bf16.mxu0 0
  %3970 = vmatpush1.bf16.msra.mxu0 0
  %3971 = vmatprep.subr.bf16.mxu0 0
  %3972 = vmatpush1.bf16.msra.mxu0 0
  %3973 = vmatprep.subr.bf16.mxu0 0
  %3974 = vmatpush1.bf16.msra.mxu0 0
  %3975 = vmatprep.subr.bf16.mxu0 0
  %3976 = vmatpush1.bf16.msra.mxu0 0
  %3977 = vmatprep.subr.bf16.mxu0 0
  %3978 = vmatpush1.bf16.msra.mxu0 0
  %3979 = vmatprep.subr.bf16.mxu0 0
  %3980 = vmatpush1.bf16.msra.mxu0 0
  %3981 = vmatprep.subr.bf16.mxu0 0
  %3982 = vmatpush1.bf16.msra.mxu0 0
  %3983 = vmatprep.subr.bf16.mxu0 0
  %3984 = vmatpush1.bf16.msra.mxu0 0
  %3985 = vmatprep.subr.bf16.mxu0 0
  %3986 = vmatpush1.bf16.msra.mxu0 0
  %3987 = vmatprep.mubr.bf16.mxu0 0
  %3988 = vmatmul.mubr.bf16.gmra.mrb[0].mxu0 %v3929
  %v3989 = vpop.f32.mrb[0].mxu0
  %v3990 = vadd.f32 0.0, %v3989
  %v3991 = vpop.f32.mrb[0].mxu0
  %v3992 = vpop.f32.mrb[0].mxu0
  %v3993 = vadd.f32 0.0, %v3992
  %v3994 = vpop.f32.mrb[0].mxu0
  %3995 = vmatprep.mubr.bf16.mxu0 0
  %3996 = vmatmul.mubr.bf16.gmra.mrb[0].mxu0 %v3932
  %v3997 = vpop.f32.mrb[0].mxu0
  %v3998 = vadd.f32 0.0, %v3997
  %v3999 = vpop.f32.mrb[0].mxu0
  %v4000 = vpop.f32.mrb[0].mxu0
  %v4001 = vadd.f32 0.0, %v4000
  %v4002 = vpop.f32.mrb[0].mxu0
  %4003 = vmatprep.mubr.bf16.mxu0 0
  %4004 = vmatmul.mubr.bf16.gmra.mrb[0].mxu0 %v3935
  %v4005 = vpop.f32.mrb[0].mxu0
  %v4006 = vadd.f32 0.0, %v4005
  %v4007 = vpop.f32.mrb[0].mxu0
  %v4008 = vpop.f32.mrb[0].mxu0
  %v4009 = vadd.f32 0.0, %v4008
  %v4010 = vpop.f32.mrb[0].mxu0
  %4011 = vmatprep.mubr.bf16.mxu0 0
  %4012 = vmatmul.mubr.bf16.gmra.mrb[0].mxu0 %v3938
  %v4013 = vpop.f32.mrb[0].mxu0
  %v4014 = vadd.f32 0.0, %v4013
  %v4015 = vpop.f32.mrb[0].mxu0
  %v4016 = vpop.f32.mrb[0].mxu0
  %v4017 = vadd.f32 0.0, %v4016
  %v4018 = vpop.f32.mrb[0].mxu0
  %4019 = vmatprep.mubr.bf16.mxu0 0
  %4020 = vmatmul.mubr.bf16.gmra.mrb[0].mxu0 %v3941
  %v4021 = vpop.f32.mrb[0].mxu0
  %v4022 = vadd.f32 0.0, %v4021
  %v4023 = vpop.f32.mrb[0].mxu0
  %v4024 = vpop.f32.mrb[0].mxu0
  %v4025 = vadd.f32 0.0, %v4024
  %v4026 = vpop.f32.mrb[0].mxu0
  %4027 = vmatprep.mubr.bf16.mxu0 0
  %4028 = vmatmul.mubr.bf16.gmra.mrb[0].mxu0 %v3944
  %v4029 = vpop.f32.mrb[0].mxu0
  %v4030 = vadd.f32 0.0, %v4029
  %v4031 = vpop.f32.mrb[0].mxu0
  %v4032 = vpop.f32.mrb[0].mxu0
  %v4033 = vadd.f32 0.0, %v4032
  %v4034 = vpop.f32.mrb[0].mxu0
  %4035 = vmatprep.mubr.bf16.mxu0 0
  %4036 = vmatmul.mubr.bf16.gmra.mrb[0].mxu0 %v3947
  %v4037 = vpop.f32.mrb[0].mxu0
  %v4038 = vadd.f32 0.0, %v4037
  %v4039 = vpop.f32.mrb[0].mxu0
  %v4040 = vpop.f32.mrb[0].mxu0
  %v4041 = vadd.f32 0.0, %v4040
  %v4042 = vpop.f32.mrb[0].mxu0
  %4043 = vmatprep.mubr.bf16.mxu0 0
  %4044 = vmatmul.mubr.bf16.gmra.mrb[0].mxu0 %v3950
  %v4045 = vpop.f32.mrb[0].mxu0
  %v4046 = vadd.f32 0.0, %v4045
  %v4047 = vpop.f32.mrb[0].mxu0
  %v4048 = vpop.f32.mrb[0].mxu0
  %v4049 = vadd.f32 0.0, %v4048
  %v4050 = vpop.f32.mrb[0].mxu0
  %4051 = vmatprep.mubr.bf16.mxu0 0
  %4052 = vmatmul.mubr.bf16.gmra.mrb[0].mxu0 %v3953
  %v4053 = vpop.f32.mrb[0].mxu0
  %v4054 = vadd.f32 0.0, %v4053
  %v4055 = vpop.f32.mrb[0].mxu0
  %v4056 = vpop.f32.mrb[0].mxu0
  %v4057 = vadd.f32 0.0, %v4056
  %v4058 = vpop.f32.mrb[0].mxu0
  %4059 = vdwg.mxu0
  %v4064 = vunpack.c.l.b16 %v3906
  %v4065 = vunpack.c.l.b16 %v3907
  %v4066 = vunpack.c.l.b16 %v3908
  %v4067 = vunpack.c.l.b16 %v3909
  %v4068 = vpack.c.b16 %v4065, %v4064
  %v4069 = vpack.c.b16 %v4067, %v4066
  %v4073 = vsel %vm3927, %v3842, 0
  %v4076 = vsel %vm3927, %v3844, 0
  %v4079 = vsel %vm3927, %v3846, 0
  %v4082 = vsel %vm3927, %v3858, 0
  %v4085 = vsel %vm3927, %v3860, 0
  %v4088 = vsel %vm3927, %v3862, 0
  %v4091 = vsel %vm3927, %v3874, 0
  %v4094 = vsel %vm3927, %v3876, 0
  %v4097 = vsel %vm3927, %v3878, 0
  %4099 = vmatprep.subr.bf16.mxu0 0
  %4100 = vmatpush1.bf16.msra.mxu0 %v4068
  %4101 = vmatprep.subr.bf16.mxu0 0
  %4102 = vmatpush1.bf16.msra.mxu0 %v4069
  %4103 = vmatprep.subr.bf16.mxu0 0
  %4104 = vmatpush1.bf16.msra.mxu0 0
  %4105 = vmatprep.subr.bf16.mxu0 0
  %4106 = vmatpush1.bf16.msra.mxu0 0
  %4107 = vmatprep.subr.bf16.mxu0 0
  %4108 = vmatpush1.bf16.msra.mxu0 0
  %4109 = vmatprep.subr.bf16.mxu0 0
  %4110 = vmatpush1.bf16.msra.mxu0 0
  %4111 = vmatprep.subr.bf16.mxu0 0
  %4112 = vmatpush1.bf16.msra.mxu0 0
  %4113 = vmatprep.subr.bf16.mxu0 0
  %4114 = vmatpush1.bf16.msra.mxu0 0
  %4115 = vmatprep.subr.bf16.mxu0 0
  %4116 = vmatpush1.bf16.msra.mxu0 0
  %4117 = vmatprep.subr.bf16.mxu0 0
  %4118 = vmatpush1.bf16.msra.mxu0 0
  %4119 = vmatprep.subr.bf16.mxu0 0
  %4120 = vmatpush1.bf16.msra.mxu0 0
  %4121 = vmatprep.subr.bf16.mxu0 0
  %4122 = vmatpush1.bf16.msra.mxu0 0
  %4123 = vmatprep.subr.bf16.mxu0 0
  %4124 = vmatpush1.bf16.msra.mxu0 0
  %4125 = vmatprep.subr.bf16.mxu0 0
  %4126 = vmatpush1.bf16.msra.mxu0 0
  %4127 = vmatprep.subr.bf16.mxu0 0
  %4128 = vmatpush1.bf16.msra.mxu0 0
  %4129 = vmatprep.subr.bf16.mxu0 0
  %4130 = vmatpush1.bf16.msra.mxu0 0
  %4131 = vmatprep.mubr.bf16.mxu0 0
  %4132 = vmatmul.mubr.bf16.gmra.mrb[0].mxu0 %v4073
  %v4133 = vpop.f32.mrb[0].mxu0
  %v4134 = vadd.f32 %v3990, %v4133
  %v4135 = vpop.f32.mrb[0].mxu0
  %v4136 = vpop.f32.mrb[0].mxu0
  %v4137 = vadd.f32 %v3993, %v4136
  %v4138 = vpop.f32.mrb[0].mxu0
  %4139 = vmatprep.mubr.bf16.mxu0 0
  %4140 = vmatmul.mubr.bf16.gmra.mrb[0].mxu0 %v4076
  %v4141 = vpop.f32.mrb[0].mxu0
  %v4142 = vadd.f32 %v3998, %v4141
  %v4143 = vpop.f32.mrb[0].mxu0
  %v4144 = vpop.f32.mrb[0].mxu0
  %v4145 = vadd.f32 %v4001, %v4144
  %v4146 = vpop.f32.mrb[0].mxu0
  %4147 = vmatprep.mubr.bf16.mxu0 0
  %4148 = vmatmul.mubr.bf16.gmra.mrb[0].mxu0 %v4079
  %v4149 = vpop.f32.mrb[0].mxu0
  %v4150 = vadd.f32 %v4006, %v4149
  %v4151 = vpop.f32.mrb[0].mxu0
  %v4152 = vpop.f32.mrb[0].mxu0
  %v4153 = vadd.f32 %v4009, %v4152
  %v4154 = vpop.f32.mrb[0].mxu0
  %4155 = vmatprep.mubr.bf16.mxu0 0
  %4156 = vmatmul.mubr.bf16.gmra.mrb[0].mxu0 %v4082
  %v4157 = vpop.f32.mrb[0].mxu0
  %v4158 = vadd.f32 %v4014, %v4157
  %v4159 = vpop.f32.mrb[0].mxu0
  %v4160 = vpop.f32.mrb[0].mxu0
  %v4161 = vadd.f32 %v4017, %v4160
  %v4162 = vpop.f32.mrb[0].mxu0
  %4163 = vmatprep.mubr.bf16.mxu0 0
  %4164 = vmatmul.mubr.bf16.gmra.mrb[0].mxu0 %v4085
  %v4165 = vpop.f32.mrb[0].mxu0
  %v4166 = vadd.f32 %v4022, %v4165
  %v4167 = vpop.f32.mrb[0].mxu0
  %v4168 = vpop.f32.mrb[0].mxu0
  %v4169 = vadd.f32 %v4025, %v4168
  %v4170 = vpop.f32.mrb[0].mxu0
  %4171 = vmatprep.mubr.bf16.mxu0 0
  %4172 = vmatmul.mubr.bf16.gmra.mrb[0].mxu0 %v4088
  %v4173 = vpop.f32.mrb[0].mxu0
  %v4174 = vadd.f32 %v4030, %v4173
  %v4175 = vpop.f32.mrb[0].mxu0
  %v4176 = vpop.f32.mrb[0].mxu0
  %v4177 = vadd.f32 %v4033, %v4176
  %v4178 = vpop.f32.mrb[0].mxu0
  %4179 = vmatprep.mubr.bf16.mxu0 0
  %4180 = vmatmul.mubr.bf16.gmra.mrb[0].mxu0 %v4091
  %v4181 = vpop.f32.mrb[0].mxu0
  %v4182 = vadd.f32 %v4038, %v4181
  %v4183 = vpop.f32.mrb[0].mxu0
  %v4184 = vpop.f32.mrb[0].mxu0
  %v4185 = vadd.f32 %v4041, %v4184
  %v4186 = vpop.f32.mrb[0].mxu0
  %4187 = vmatprep.mubr.bf16.mxu0 0
  %4188 = vmatmul.mubr.bf16.gmra.mrb[0].mxu0 %v4094
  %v4189 = vpop.f32.mrb[0].mxu0
  %v4190 = vadd.f32 %v4046, %v4189
  %v4191 = vpop.f32.mrb[0].mxu0
  %v4192 = vpop.f32.mrb[0].mxu0
  %v4193 = vadd.f32 %v4049, %v4192
  %v4194 = vpop.f32.mrb[0].mxu0
  %4195 = vmatprep.mubr.bf16.mxu0 0
  %4196 = vmatmul.mubr.bf16.gmra.mrb[0].mxu0 %v4097
  %v4197 = vpop.f32.mrb[0].mxu0
  %v4198 = vadd.f32 %v4054, %v4197
  %v4199 = vpop.f32.mrb[0].mxu0
  %v4200 = vpop.f32.mrb[0].mxu0
  %v4201 = vadd.f32 %v4057, %v4200
  %v4202 = vpop.f32.mrb[0].mxu0
  %4203 = vdwg.mxu0
  %s4204 = scalar_lea.vmem %s3, 32
  %v4205 = vld [vmem:[%s4204] sm:$0xf]
  %v4206 = vld [vmem:[%s4204 + $0x4] sm:$0xf]
  %v4207 = vld [vmem:[%s4204 + $0x8] sm:$0xf]
  %v4208 = vld [vmem:[%s4204 + $0xc] sm:$0xf]
  %v4213 = vunpack.c.l.b16 %v4205
  %v4214 = vunpack.c.l.b16 %v4206
  %v4215 = vunpack.c.l.b16 %v4207
  %v4216 = vunpack.c.l.b16 %v4208
  %v4217 = vpack.c.b16 %v4214, %v4213
  %v4218 = vpack.c.b16 %v4216, %v4215
  %v4222 = vsel %vm3927, %v3848, 0
  %v4225 = vsel %vm3927, %v3864, 0
  %v4228 = vsel %vm3927, %v3880, 0
  %4230 = vmatprep.subr.bf16.mxu0 0
  %4231 = vmatpush1.bf16.msra.mxu0 %v4217
  %4232 = vmatprep.subr.bf16.mxu0 0
  %4233 = vmatpush1.bf16.msra.mxu0 %v4218
  %4234 = vmatprep.subr.bf16.mxu0 0
  %4235 = vmatpush1.bf16.msra.mxu0 0
  %4236 = vmatprep.subr.bf16.mxu0 0
  %4237 = vmatpush1.bf16.msra.mxu0 0
  %4238 = vmatprep.subr.bf16.mxu0 0
  %4239 = vmatpush1.bf16.msra.mxu0 0
  %4240 = vmatprep.subr.bf16.mxu0 0
  %4241 = vmatpush1.bf16.msra.mxu0 0
  %4242 = vmatprep.subr.bf16.mxu0 0
  %4243 = vmatpush1.bf16.msra.mxu0 0
  %4244 = vmatprep.subr.bf16.mxu0 0
  %4245 = vmatpush1.bf16.msra.mxu0 0
  %4246 = vmatprep.subr.bf16.mxu0 0
  %4247 = vmatpush1.bf16.msra.mxu0 0
  %4248 = vmatprep.subr.bf16.mxu0 0
  %4249 = vmatpush1.bf16.msra.mxu0 0
  %4250 = vmatprep.subr.bf16.mxu0 0
  %4251 = vmatpush1.bf16.msra.mxu0 0
  %4252 = vmatprep.subr.bf16.mxu0 0
  %4253 = vmatpush1.bf16.msra.mxu0 0
  %4254 = vmatprep.subr.bf16.mxu0 0
  %4255 = vmatpush1.bf16.msra.mxu0 0
  %4256 = vmatprep.subr.bf16.mxu0 0
  %4257 = vmatpush1.bf16.msra.mxu0 0
  %4258 = vmatprep.subr.bf16.mxu0 0
  %4259 = vmatpush1.bf16.msra.mxu0 0
  %4260 = vmatprep.subr.bf16.mxu0 0
  %4261 = vmatpush1.bf16.msra.mxu0 0
  %4262 = vmatprep.mubr.bf16.mxu0 0
  %4263 = vmatmul.mubr.bf16.gmra.mrb[0].mxu0 %v4076
  %v4264 = vpop.f32.mrb[0].mxu0
  %v4265 = vadd.f32 0.0, %v4264
  %v4266 = vpop.f32.mrb[0].mxu0
  %v4267 = vpop.f32.mrb[0].mxu0
  %v4268 = vadd.f32 0.0, %v4267
  %v4269 = vpop.f32.mrb[0].mxu0
  %4270 = vmatprep.mubr.bf16.mxu0 0
  %4271 = vmatmul.mubr.bf16.gmra.mrb[0].mxu0 %v4079
  %v4272 = vpop.f32.mrb[0].mxu0
  %v4273 = vadd.f32 0.0, %v4272
  %v4274 = vpop.f32.mrb[0].mxu0
  %v4275 = vpop.f32.mrb[0].mxu0
  %v4276 = vadd.f32 0.0, %v4275
  %v4277 = vpop.f32.mrb[0].mxu0
  %4278 = vmatprep.mubr.bf16.mxu0 0
  %4279 = vmatmul.mubr.bf16.gmra.mrb[0].mxu0 %v4222
  %v4280 = vpop.f32.mrb[0].mxu0
  %v4281 = vadd.f32 0.0, %v4280
  %v4282 = vpop.f32.mrb[0].mxu0
  %v4283 = vpop.f32.mrb[0].mxu0
  %v4284 = vadd.f32 0.0, %v4283
  %v4285 = vpop.f32.mrb[0].mxu0
  %4286 = vmatprep.mubr.bf16.mxu0 0
  %4287 = vmatmul.mubr.bf16.gmra.mrb[0].mxu0 %v4085
  %v4288 = vpop.f32.mrb[0].mxu0
  %v4289 = vadd.f32 0.0, %v4288
  %v4290 = vpop.f32.mrb[0].mxu0
  %v4291 = vpop.f32.mrb[0].mxu0
  %v4292 = vadd.f32 0.0, %v4291
  %v4293 = vpop.f32.mrb[0].mxu0
  %4294 = vmatprep.mubr.bf16.mxu0 0
  %4295 = vmatmul.mubr.bf16.gmra.mrb[0].mxu0 %v4088
  %v4296 = vpop.f32.mrb[0].mxu0
  %v4297 = vadd.f32 0.0, %v4296
  %v4298 = vpop.f32.mrb[0].mxu0
  %v4299 = vpop.f32.mrb[0].mxu0
  %v4300 = vadd.f32 0.0, %v4299
  %v4301 = vpop.f32.mrb[0].mxu0
  %4302 = vmatprep.mubr.bf16.mxu0 0
  %4303 = vmatmul.mubr.bf16.gmra.mrb[0].mxu0 %v4225
  %v4304 = vpop.f32.mrb[0].mxu0
  %v4305 = vadd.f32 0.0, %v4304
  %v4306 = vpop.f32.mrb[0].mxu0
  %v4307 = vpop.f32.mrb[0].mxu0
  %v4308 = vadd.f32 0.0, %v4307
  %v4309 = vpop.f32.mrb[0].mxu0
  %4310 = vmatprep.mubr.bf16.mxu0 0
  %4311 = vmatmul.mubr.bf16.gmra.mrb[0].mxu0 %v4094
  %v4312 = vpop.f32.mrb[0].mxu0
  %v4313 = vadd.f32 0.0, %v4312
  %v4314 = vpop.f32.mrb[0].mxu0
  %v4315 = vpop.f32.mrb[0].mxu0
  %v4316 = vadd.f32 0.0, %v4315
  %v4317 = vpop.f32.mrb[0].mxu0
  %4318 = vmatprep.mubr.bf16.mxu0 0
  %4319 = vmatmul.mubr.bf16.gmra.mrb[0].mxu0 %v4097
  %v4320 = vpop.f32.mrb[0].mxu0
  %v4321 = vadd.f32 0.0, %v4320
  %v4322 = vpop.f32.mrb[0].mxu0
  %v4323 = vpop.f32.mrb[0].mxu0
  %v4324 = vadd.f32 0.0, %v4323
  %v4325 = vpop.f32.mrb[0].mxu0
  %4326 = vmatprep.mubr.bf16.mxu0 0
  %4327 = vmatmul.mubr.bf16.gmra.mrb[0].mxu0 %v4228
  %v4328 = vpop.f32.mrb[0].mxu0
  %v4329 = vadd.f32 0.0, %v4328
  %v4330 = vpop.f32.mrb[0].mxu0
  %v4331 = vpop.f32.mrb[0].mxu0
  %v4332 = vadd.f32 0.0, %v4331
  %v4333 = vpop.f32.mrb[0].mxu0
  %4334 = vdwg.mxu0
  %v4335 = vadd.f32 %v4134, %v4265
  %v4336 = vadd.f32 %v4137, %v4268
  %v4337 = vadd.f32 %v4142, %v4273
  %v4338 = vadd.f32 %v4145, %v4276
  %v4339 = vadd.f32 %v4150, %v4281
  %v4340 = vadd.f32 %v4153, %v4284
  %v4341 = vadd.f32 %v4158, %v4289
  %v4342 = vadd.f32 %v4161, %v4292
  %v4343 = vadd.f32 %v4166, %v4297
  %v4344 = vadd.f32 %v4169, %v4300
  %v4345 = vadd.f32 %v4174, %v4305
  %v4346 = vadd.f32 %v4177, %v4308
  %v4347 = vadd.f32 %v4182, %v4313
  %v4348 = vadd.f32 %v4185, %v4316
  %v4349 = vadd.f32 %v4190, %v4321
  %v4350 = vadd.f32 %v4193, %v4324
  %v4351 = vadd.f32 %v4198, %v4329
  %v4352 = vadd.f32 %v4201, %v4332
  %s4353 = scalar_lea.vmem %s3, 48
  %v4354 = vld [vmem:[%s4353] sm:$0xf]
  %v4355 = vld [vmem:[%s4353 + $0x4] sm:$0xf]
  %v4356 = vld [vmem:[%s4353 + $0x8] sm:$0xf]
  %v4357 = vld [vmem:[%s4353 + $0xc] sm:$0xf]
  %v4362 = vunpack.c.l.b16 %v4354
  %v4363 = vunpack.c.l.b16 %v4355
  %v4364 = vunpack.c.l.b16 %v4356
  %v4365 = vunpack.c.l.b16 %v4357
  %v4366 = vpack.c.b16 %v4363, %v4362
  %v4367 = vpack.c.b16 %v4365, %v4364
  %v4371 = vsel %vm3927, %v3849, 0
  %v4374 = vsel %vm3927, %v3865, 0
  %v4377 = vsel %vm3927, %v3881, 0
  %4379 = vmatprep.subr.bf16.mxu0 0
  %4380 = vmatpush1.bf16.msra.mxu0 %v4366
  %4381 = vmatprep.subr.bf16.mxu0 0
  %4382 = vmatpush1.bf16.msra.mxu0 %v4367
  %4383 = vmatprep.subr.bf16.mxu0 0
  %4384 = vmatpush1.bf16.msra.mxu0 0
  %4385 = vmatprep.subr.bf16.mxu0 0
  %4386 = vmatpush1.bf16.msra.mxu0 0
  %4387 = vmatprep.subr.bf16.mxu0 0
  %4388 = vmatpush1.bf16.msra.mxu0 0
  %4389 = vmatprep.subr.bf16.mxu0 0
  %4390 = vmatpush1.bf16.msra.mxu0 0
  %4391 = vmatprep.subr.bf16.mxu0 0
  %4392 = vmatpush1.bf16.msra.mxu0 0
  %4393 = vmatprep.subr.bf16.mxu0 0
  %4394 = vmatpush1.bf16.msra.mxu0 0
  %4395 = vmatprep.subr.bf16.mxu0 0
  %4396 = vmatpush1.bf16.msra.mxu0 0
  %4397 = vmatprep.subr.bf16.mxu0 0
  %4398 = vmatpush1.bf16.msra.mxu0 0
  %4399 = vmatprep.subr.bf16.mxu0 0
  %4400 = vmatpush1.bf16.msra.mxu0 0
  %4401 = vmatprep.subr.bf16.mxu0 0
  %4402 = vmatpush1.bf16.msra.mxu0 0
  %4403 = vmatprep.subr.bf16.mxu0 0
  %4404 = vmatpush1.bf16.msra.mxu0 0
  %4405 = vmatprep.subr.bf16.mxu0 0
  %4406 = vmatpush1.bf16.msra.mxu0 0
  %4407 = vmatprep.subr.bf16.mxu0 0
  %4408 = vmatpush1.bf16.msra.mxu0 0
  %4409 = vmatprep.subr.bf16.mxu0 0
  %4410 = vmatpush1.bf16.msra.mxu0 0
  %4411 = vmatprep.mubr.bf16.mxu0 0
  %4412 = vmatmul.mubr.bf16.gmra.mrb[0].mxu0 %v3932
  %v4413 = vpop.f32.mrb[0].mxu0
  %v4414 = vadd.f32 0.0, %v4413
  %v4415 = vpop.f32.mrb[0].mxu0
  %v4416 = vpop.f32.mrb[0].mxu0
  %v4417 = vadd.f32 0.0, %v4416
  %v4418 = vpop.f32.mrb[0].mxu0
  %4419 = vmatprep.mubr.bf16.mxu0 0
  %4420 = vmatmul.mubr.bf16.gmra.mrb[0].mxu0 %v3935
  %v4421 = vpop.f32.mrb[0].mxu0
  %v4422 = vadd.f32 0.0, %v4421
  %v4423 = vpop.f32.mrb[0].mxu0
  %v4424 = vpop.f32.mrb[0].mxu0
  %v4425 = vadd.f32 0.0, %v4424
  %v4426 = vpop.f32.mrb[0].mxu0
  %4427 = vmatprep.mubr.bf16.mxu0 0
  %4428 = vmatmul.mubr.bf16.gmra.mrb[0].mxu0 %v4371
  %v4429 = vpop.f32.mrb[0].mxu0
  %v4430 = vadd.f32 0.0, %v4429
  %v4431 = vpop.f32.mrb[0].mxu0
  %v4432 = vpop.f32.mrb[0].mxu0
  %v4433 = vadd.f32 0.0, %v4432
  %v4434 = vpop.f32.mrb[0].mxu0
  %4435 = vmatprep.mubr.bf16.mxu0 0
  %4436 = vmatmul.mubr.bf16.gmra.mrb[0].mxu0 %v3941
  %v4437 = vpop.f32.mrb[0].mxu0
  %v4438 = vadd.f32 0.0, %v4437
  %v4439 = vpop.f32.mrb[0].mxu0
  %v4440 = vpop.f32.mrb[0].mxu0
  %v4441 = vadd.f32 0.0, %v4440
  %v4442 = vpop.f32.mrb[0].mxu0
  %4443 = vmatprep.mubr.bf16.mxu0 0
  %4444 = vmatmul.mubr.bf16.gmra.mrb[0].mxu0 %v3944
  %v4445 = vpop.f32.mrb[0].mxu0
  %v4446 = vadd.f32 0.0, %v4445
  %v4447 = vpop.f32.mrb[0].mxu0
  %v4448 = vpop.f32.mrb[0].mxu0
  %v4449 = vadd.f32 0.0, %v4448
  %v4450 = vpop.f32.mrb[0].mxu0
  %4451 = vmatprep.mubr.bf16.mxu0 0
  %4452 = vmatmul.mubr.bf16.gmra.mrb[0].mxu0 %v4374
  %v4453 = vpop.f32.mrb[0].mxu0
  %v4454 = vadd.f32 0.0, %v4453
  %v4455 = vpop.f32.mrb[0].mxu0
  %v4456 = vpop.f32.mrb[0].mxu0
  %v4457 = vadd.f32 0.0, %v4456
  %v4458 = vpop.f32.mrb[0].mxu0
  %4459 = vmatprep.mubr.bf16.mxu0 0
  %4460 = vmatmul.mubr.bf16.gmra.mrb[0].mxu0 %v3950
  %v4461 = vpop.f32.mrb[0].mxu0
  %v4462 = vadd.f32 0.0, %v4461
  %v4463 = vpop.f32.mrb[0].mxu0
  %v4464 = vpop.f32.mrb[0].mxu0
  %v4465 = vadd.f32 0.0, %v4464
  %v4466 = vpop.f32.mrb[0].mxu0
  %4467 = vmatprep.mubr.bf16.mxu0 0
  %4468 = vmatmul.mubr.bf16.gmra.mrb[0].mxu0 %v3953
  %v4469 = vpop.f32.mrb[0].mxu0
  %v4470 = vadd.f32 0.0, %v4469
  %v4471 = vpop.f32.mrb[0].mxu0
  %v4472 = vpop.f32.mrb[0].mxu0
  %v4473 = vadd.f32 0.0, %v4472
  %v4474 = vpop.f32.mrb[0].mxu0
  %4475 = vmatprep.mubr.bf16.mxu0 0
  %4476 = vmatmul.mubr.bf16.gmra.mrb[0].mxu0 %v4377
  %v4477 = vpop.f32.mrb[0].mxu0
  %v4478 = vadd.f32 0.0, %v4477
  %v4479 = vpop.f32.mrb[0].mxu0
  %v4480 = vpop.f32.mrb[0].mxu0
  %v4481 = vadd.f32 0.0, %v4480
  %v4482 = vpop.f32.mrb[0].mxu0
  %4483 = vdwg.mxu0
  %v4484 = vadd.f32 %v4335, %v4414
  %v4485 = vadd.f32 %v4336, %v4417
  %v4486 = vadd.f32 %v4337, %v4422
  %v4487 = vadd.f32 %v4338, %v4425
  %v4488 = vadd.f32 %v4339, %v4430
  %v4489 = vadd.f32 %v4340, %v4433
  %v4490 = vadd.f32 %v4341, %v4438
  %v4491 = vadd.f32 %v4342, %v4441
  %v4492 = vadd.f32 %v4343, %v4446
  %v4493 = vadd.f32 %v4344, %v4449
  %v4494 = vadd.f32 %v4345, %v4454
  %v4495 = vadd.f32 %v4346, %v4457
  %v4496 = vadd.f32 %v4347, %v4462
  %v4497 = vadd.f32 %v4348, %v4465
  %v4498 = vadd.f32 %v4349, %v4470
  %v4499 = vadd.f32 %v4350, %v4473
  %v4500 = vadd.f32 %v4351, %v4478
  %v4501 = vadd.f32 %v4352, %v4481
  %s4502 = scalar_lea.vmem %s3, 64
  %v4503 = vld [vmem:[%s4502] sm:$0xf]
  %v4504 = vld [vmem:[%s4502 + $0x4] sm:$0xf]
  %v4505 = vld [vmem:[%s4502 + $0x8] sm:$0xf]
  %v4506 = vld [vmem:[%s4502 + $0xc] sm:$0xf]
  %v4511 = vunpack.c.l.b16 %v4503
  %v4512 = vunpack.c.l.b16 %v4504
  %v4513 = vunpack.c.l.b16 %v4505
  %v4514 = vunpack.c.l.b16 %v4506
  %v4515 = vpack.c.b16 %v4512, %v4511
  %v4516 = vpack.c.b16 %v4514, %v4513
  %v4520 = vsel %vm3927, %v3850, 0
  %v4523 = vsel %vm3927, %v3852, 0
  %v4526 = vsel %vm3927, %v3854, 0
  %v4529 = vsel %vm3927, %v3866, 0
  %v4532 = vsel %vm3927, %v3868, 0
  %v4535 = vsel %vm3927, %v3870, 0
  %v4538 = vsel %vm3927, %v3882, 0
  %v4541 = vsel %vm3927, %v3884, 0
  %v4544 = vsel %vm3927, %v3886, 0
  %4546 = vmatprep.subr.bf16.mxu0 0
  %4547 = vmatpush1.bf16.msra.mxu0 %v4515
  %4548 = vmatprep.subr.bf16.mxu0 0
  %4549 = vmatpush1.bf16.msra.mxu0 %v4516
  %4550 = vmatprep.subr.bf16.mxu0 0
  %4551 = vmatpush1.bf16.msra.mxu0 0
  %4552 = vmatprep.subr.bf16.mxu0 0
  %4553 = vmatpush1.bf16.msra.mxu0 0
  %4554 = vmatprep.subr.bf16.mxu0 0
  %4555 = vmatpush1.bf16.msra.mxu0 0
  %4556 = vmatprep.subr.bf16.mxu0 0
  %4557 = vmatpush1.bf16.msra.mxu0 0
  %4558 = vmatprep.subr.bf16.mxu0 0
  %4559 = vmatpush1.bf16.msra.mxu0 0
  %4560 = vmatprep.subr.bf16.mxu0 0
  %4561 = vmatpush1.bf16.msra.mxu0 0
  %4562 = vmatprep.subr.bf16.mxu0 0
  %4563 = vmatpush1.bf16.msra.mxu0 0
  %4564 = vmatprep.subr.bf16.mxu0 0
  %4565 = vmatpush1.bf16.msra.mxu0 0
  %4566 = vmatprep.subr.bf16.mxu0 0
  %4567 = vmatpush1.bf16.msra.mxu0 0
  %4568 = vmatprep.subr.bf16.mxu0 0
  %4569 = vmatpush1.bf16.msra.mxu0 0
  %4570 = vmatprep.subr.bf16.mxu0 0
  %4571 = vmatpush1.bf16.msra.mxu0 0
  %4572 = vmatprep.subr.bf16.mxu0 0
  %4573 = vmatpush1.bf16.msra.mxu0 0
  %4574 = vmatprep.subr.bf16.mxu0 0
  %4575 = vmatpush1.bf16.msra.mxu0 0
  %4576 = vmatprep.subr.bf16.mxu0 0
  %4577 = vmatpush1.bf16.msra.mxu0 0
  %4578 = vmatprep.mubr.bf16.mxu0 0
  %4579 = vmatmul.mubr.bf16.gmra.mrb[0].mxu0 %v4520
  %v4580 = vpop.f32.mrb[0].mxu0
  %v4581 = vadd.f32 0.0, %v4580
  %v4582 = vpop.f32.mrb[0].mxu0
  %v4583 = vpop.f32.mrb[0].mxu0
  %v4584 = vadd.f32 0.0, %v4583
  %v4585 = vpop.f32.mrb[0].mxu0
  %4586 = vmatprep.mubr.bf16.mxu0 0
  %4587 = vmatmul.mubr.bf16.gmra.mrb[0].mxu0 %v4523
  %v4588 = vpop.f32.mrb[0].mxu0
  %v4589 = vadd.f32 0.0, %v4588
  %v4590 = vpop.f32.mrb[0].mxu0
  %v4591 = vpop.f32.mrb[0].mxu0
  %v4592 = vadd.f32 0.0, %v4591
  %v4593 = vpop.f32.mrb[0].mxu0
  %4594 = vmatprep.mubr.bf16.mxu0 0
  %4595 = vmatmul.mubr.bf16.gmra.mrb[0].mxu0 %v4526
  %v4596 = vpop.f32.mrb[0].mxu0
  %v4597 = vadd.f32 0.0, %v4596
  %v4598 = vpop.f32.mrb[0].mxu0
  %v4599 = vpop.f32.mrb[0].mxu0
  %v4600 = vadd.f32 0.0, %v4599
  %v4601 = vpop.f32.mrb[0].mxu0
  %4602 = vmatprep.mubr.bf16.mxu0 0
  %4603 = vmatmul.mubr.bf16.gmra.mrb[0].mxu0 %v4529
  %v4604 = vpop.f32.mrb[0].mxu0
  %v4605 = vadd.f32 0.0, %v4604
  %v4606 = vpop.f32.mrb[0].mxu0
  %v4607 = vpop.f32.mrb[0].mxu0
  %v4608 = vadd.f32 0.0, %v4607
  %v4609 = vpop.f32.mrb[0].mxu0
  %4610 = vmatprep.mubr.bf16.mxu0 0
  %4611 = vmatmul.mubr.bf16.gmra.mrb[0].mxu0 %v4532
  %v4612 = vpop.f32.mrb[0].mxu0
  %v4613 = vadd.f32 0.0, %v4612
  %v4614 = vpop.f32.mrb[0].mxu0
  %v4615 = vpop.f32.mrb[0].mxu0
  %v4616 = vadd.f32 0.0, %v4615
  %v4617 = vpop.f32.mrb[0].mxu0
  %4618 = vmatprep.mubr.bf16.mxu0 0
  %4619 = vmatmul.mubr.bf16.gmra.mrb[0].mxu0 %v4535
  %v4620 = vpop.f32.mrb[0].mxu0
  %v4621 = vadd.f32 0.0, %v4620
  %v4622 = vpop.f32.mrb[0].mxu0
  %v4623 = vpop.f32.mrb[0].mxu0
  %v4624 = vadd.f32 0.0, %v4623
  %v4625 = vpop.f32.mrb[0].mxu0
  %4626 = vmatprep.mubr.bf16.mxu0 0
  %4627 = vmatmul.mubr.bf16.gmra.mrb[0].mxu0 %v4538
  %v4628 = vpop.f32.mrb[0].mxu0
  %v4629 = vadd.f32 0.0, %v4628
  %v4630 = vpop.f32.mrb[0].mxu0
  %v4631 = vpop.f32.mrb[0].mxu0
  %v4632 = vadd.f32 0.0, %v4631
  %v4633 = vpop.f32.mrb[0].mxu0
  %4634 = vmatprep.mubr.bf16.mxu0 0
  %4635 = vmatmul.mubr.bf16.gmra.mrb[0].mxu0 %v4541
  %v4636 = vpop.f32.mrb[0].mxu0
  %v4637 = vadd.f32 0.0, %v4636
  %v4638 = vpop.f32.mrb[0].mxu0
  %v4639 = vpop.f32.mrb[0].mxu0
  %v4640 = vadd.f32 0.0, %v4639
  %v4641 = vpop.f32.mrb[0].mxu0
  %4642 = vmatprep.mubr.bf16.mxu0 0
  %4643 = vmatmul.mubr.bf16.gmra.mrb[0].mxu0 %v4544
  %v4644 = vpop.f32.mrb[0].mxu0
  %v4645 = vadd.f32 0.0, %v4644
  %v4646 = vpop.f32.mrb[0].mxu0
  %v4647 = vpop.f32.mrb[0].mxu0
  %v4648 = vadd.f32 0.0, %v4647
  %v4649 = vpop.f32.mrb[0].mxu0
  %4650 = vdwg.mxu0
  %v4651 = vadd.f32 %v4484, %v4581
  %v4652 = vadd.f32 %v4485, %v4584
  %v4653 = vadd.f32 %v4486, %v4589
  %v4654 = vadd.f32 %v4487, %v4592
  %v4655 = vadd.f32 %v4488, %v4597
  %v4656 = vadd.f32 %v4489, %v4600
  %v4657 = vadd.f32 %v4490, %v4605
  %v4658 = vadd.f32 %v4491, %v4608
  %v4659 = vadd.f32 %v4492, %v4613
  %v4660 = vadd.f32 %v4493, %v4616
  %v4661 = vadd.f32 %v4494, %v4621
  %v4662 = vadd.f32 %v4495, %v4624
  %v4663 = vadd.f32 %v4496, %v4629
  %v4664 = vadd.f32 %v4497, %v4632
  %v4665 = vadd.f32 %v4498, %v4637
  %v4666 = vadd.f32 %v4499, %v4640
  %v4667 = vadd.f32 %v4500, %v4645
  %v4668 = vadd.f32 %v4501, %v4648
  %s4669 = scalar_lea.vmem %s3, 80
  %v4670 = vld [vmem:[%s4669] sm:$0xf]
  %v4671 = vld [vmem:[%s4669 + $0x4] sm:$0xf]
  %v4672 = vld [vmem:[%s4669 + $0x8] sm:$0xf]
  %v4673 = vld [vmem:[%s4669 + $0xc] sm:$0xf]
  %v4678 = vunpack.c.l.b16 %v4670
  %v4679 = vunpack.c.l.b16 %v4671
  %v4680 = vunpack.c.l.b16 %v4672
  %v4681 = vunpack.c.l.b16 %v4673
  %v4682 = vpack.c.b16 %v4679, %v4678
  %v4683 = vpack.c.b16 %v4681, %v4680
  %v4687 = vsel %vm3927, %v3851, 0
  %v4690 = vsel %vm3927, %v3853, 0
  %v4693 = vsel %vm3927, %v3855, 0
  %v4696 = vsel %vm3927, %v3867, 0
  %v4699 = vsel %vm3927, %v3869, 0
  %v4702 = vsel %vm3927, %v3871, 0
  %v4705 = vsel %vm3927, %v3883, 0
  %v4708 = vsel %vm3927, %v3885, 0
  %v4711 = vsel %vm3927, %v3887, 0
  %4713 = vmatprep.subr.bf16.mxu0 0
  %4714 = vmatpush1.bf16.msra.mxu0 %v4682
  %4715 = vmatprep.subr.bf16.mxu0 0
  %4716 = vmatpush1.bf16.msra.mxu0 %v4683
  %4717 = vmatprep.subr.bf16.mxu0 0
  %4718 = vmatpush1.bf16.msra.mxu0 0
  %4719 = vmatprep.subr.bf16.mxu0 0
  %4720 = vmatpush1.bf16.msra.mxu0 0
  %4721 = vmatprep.subr.bf16.mxu0 0
  %4722 = vmatpush1.bf16.msra.mxu0 0
  %4723 = vmatprep.subr.bf16.mxu0 0
  %4724 = vmatpush1.bf16.msra.mxu0 0
  %4725 = vmatprep.subr.bf16.mxu0 0
  %4726 = vmatpush1.bf16.msra.mxu0 0
  %4727 = vmatprep.subr.bf16.mxu0 0
  %4728 = vmatpush1.bf16.msra.mxu0 0
  %4729 = vmatprep.subr.bf16.mxu0 0
  %4730 = vmatpush1.bf16.msra.mxu0 0
  %4731 = vmatprep.subr.bf16.mxu0 0
  %4732 = vmatpush1.bf16.msra.mxu0 0
  %4733 = vmatprep.subr.bf16.mxu0 0
  %4734 = vmatpush1.bf16.msra.mxu0 0
  %4735 = vmatprep.subr.bf16.mxu0 0
  %4736 = vmatpush1.bf16.msra.mxu0 0
  %4737 = vmatprep.subr.bf16.mxu0 0
  %4738 = vmatpush1.bf16.msra.mxu0 0
  %4739 = vmatprep.subr.bf16.mxu0 0
  %4740 = vmatpush1.bf16.msra.mxu0 0
  %4741 = vmatprep.subr.bf16.mxu0 0
  %4742 = vmatpush1.bf16.msra.mxu0 0
  %4743 = vmatprep.subr.bf16.mxu0 0
  %4744 = vmatpush1.bf16.msra.mxu0 0
  %4745 = vmatprep.mubr.bf16.mxu0 0
  %4746 = vmatmul.mubr.bf16.gmra.mrb[0].mxu0 %v4687
  %v4747 = vpop.f32.mrb[0].mxu0
  %v4748 = vadd.f32 0.0, %v4747
  %v4749 = vpop.f32.mrb[0].mxu0
  %v4750 = vpop.f32.mrb[0].mxu0
  %v4751 = vadd.f32 0.0, %v4750
  %v4752 = vpop.f32.mrb[0].mxu0
  %4753 = vmatprep.mubr.bf16.mxu0 0
  %4754 = vmatmul.mubr.bf16.gmra.mrb[0].mxu0 %v4690
  %v4755 = vpop.f32.mrb[0].mxu0
  %v4756 = vadd.f32 0.0, %v4755
  %v4757 = vpop.f32.mrb[0].mxu0
  %v4758 = vpop.f32.mrb[0].mxu0
  %v4759 = vadd.f32 0.0, %v4758
  %v4760 = vpop.f32.mrb[0].mxu0
  %4761 = vmatprep.mubr.bf16.mxu0 0
  %4762 = vmatmul.mubr.bf16.gmra.mrb[0].mxu0 %v4693
  %v4763 = vpop.f32.mrb[0].mxu0
  %v4764 = vadd.f32 0.0, %v4763
  %v4765 = vpop.f32.mrb[0].mxu0
  %v4766 = vpop.f32.mrb[0].mxu0
  %v4767 = vadd.f32 0.0, %v4766
  %v4768 = vpop.f32.mrb[0].mxu0
  %4769 = vmatprep.mubr.bf16.mxu0 0
  %4770 = vmatmul.mubr.bf16.gmra.mrb[0].mxu0 %v4696
  %v4771 = vpop.f32.mrb[0].mxu0
  %v4772 = vadd.f32 0.0, %v4771
  %v4773 = vpop.f32.mrb[0].mxu0
  %v4774 = vpop.f32.mrb[0].mxu0
  %v4775 = vadd.f32 0.0, %v4774
  %v4776 = vpop.f32.mrb[0].mxu0
  %4777 = vmatprep.mubr.bf16.mxu0 0
  %4778 = vmatmul.mubr.bf16.gmra.mrb[0].mxu0 %v4699
  %v4779 = vpop.f32.mrb[0].mxu0
  %v4780 = vadd.f32 0.0, %v4779
  %v4781 = vpop.f32.mrb[0].mxu0
  %v4782 = vpop.f32.mrb[0].mxu0
  %v4783 = vadd.f32 0.0, %v4782
  %v4784 = vpop.f32.mrb[0].mxu0
  %4785 = vmatprep.mubr.bf16.mxu0 0
  %4786 = vmatmul.mubr.bf16.gmra.mrb[0].mxu0 %v4702
  %v4787 = vpop.f32.mrb[0].mxu0
  %v4788 = vadd.f32 0.0, %v4787
  %v4789 = vpop.f32.mrb[0].mxu0
  %v4790 = vpop.f32.mrb[0].mxu0
  %v4791 = vadd.f32 0.0, %v4790
  %v4792 = vpop.f32.mrb[0].mxu0
  %4793 = vmatprep.mubr.bf16.mxu0 0
  %4794 = vmatmul.mubr.bf16.gmra.mrb[0].mxu0 %v4705
  %v4795 = vpop.f32.mrb[0].mxu0
  %v4796 = vadd.f32 0.0, %v4795
  %v4797 = vpop.f32.mrb[0].mxu0
  %v4798 = vpop.f32.mrb[0].mxu0
  %v4799 = vadd.f32 0.0, %v4798
  %v4800 = vpop.f32.mrb[0].mxu0
  %4801 = vmatprep.mubr.bf16.mxu0 0
  %4802 = vmatmul.mubr.bf16.gmra.mrb[0].mxu0 %v4708
  %v4803 = vpop.f32.mrb[0].mxu0
  %v4804 = vadd.f32 0.0, %v4803
  %v4805 = vpop.f32.mrb[0].mxu0
  %v4806 = vpop.f32.mrb[0].mxu0
  %v4807 = vadd.f32 0.0, %v4806
  %v4808 = vpop.f32.mrb[0].mxu0
  %4809 = vmatprep.mubr.bf16.mxu0 0
  %4810 = vmatmul.mubr.bf16.gmra.mrb[0].mxu0 %v4711
  %v4811 = vpop.f32.mrb[0].mxu0
  %v4812 = vadd.f32 0.0, %v4811
  %v4813 = vpop.f32.mrb[0].mxu0
  %v4814 = vpop.f32.mrb[0].mxu0
  %v4815 = vadd.f32 0.0, %v4814
  %v4816 = vpop.f32.mrb[0].mxu0
  %4817 = vdwg.mxu0
  %v4818 = vadd.f32 %v4651, %v4748
  %v4819 = vadd.f32 %v4652, %v4751
  %v4820 = vadd.f32 %v4653, %v4756
  %v4821 = vadd.f32 %v4654, %v4759
  %v4822 = vadd.f32 %v4655, %v4764
  %v4823 = vadd.f32 %v4656, %v4767
  %v4824 = vadd.f32 %v4657, %v4772
  %v4825 = vadd.f32 %v4658, %v4775
  %v4826 = vadd.f32 %v4659, %v4780
  %v4827 = vadd.f32 %v4660, %v4783
  %v4828 = vadd.f32 %v4661, %v4788
  %v4829 = vadd.f32 %v4662, %v4791
  %v4830 = vadd.f32 %v4663, %v4796
  %v4831 = vadd.f32 %v4664, %v4799
  %v4832 = vadd.f32 %v4665, %v4804
  %v4833 = vadd.f32 %v4666, %v4807
  %v4834 = vadd.f32 %v4667, %v4812
  %v4835 = vadd.f32 %v4668, %v4815
  %s4836 = scalar_lea.vmem %s3, 96
  %v4837 = vld [vmem:[%s4836] sm:$0xf]
  %v4838 = vld [vmem:[%s4836 + $0x4] sm:$0xf]
  %v4839 = vld [vmem:[%s4836 + $0x8] sm:$0xf]
  %v4840 = vld [vmem:[%s4836 + $0xc] sm:$0xf]
  %v4845 = vunpack.c.l.b16 %v4837
  %v4846 = vunpack.c.l.b16 %v4838
  %v4847 = vunpack.c.l.b16 %v4839
  %v4848 = vunpack.c.l.b16 %v4840
  %v4849 = vpack.c.b16 %v4846, %v4845
  %v4850 = vpack.c.b16 %v4848, %v4847
  %v4854 = vsel %vm3927, %v3856, 0
  %v4857 = vsel %vm3927, %v3872, 0
  %v4860 = vsel %vm3927, %v3888, 0
  %4862 = vmatprep.subr.bf16.mxu0 0
  %4863 = vmatpush1.bf16.msra.mxu0 %v4849
  %4864 = vmatprep.subr.bf16.mxu0 0
  %4865 = vmatpush1.bf16.msra.mxu0 %v4850
  %4866 = vmatprep.subr.bf16.mxu0 0
  %4867 = vmatpush1.bf16.msra.mxu0 0
  %4868 = vmatprep.subr.bf16.mxu0 0
  %4869 = vmatpush1.bf16.msra.mxu0 0
  %4870 = vmatprep.subr.bf16.mxu0 0
  %4871 = vmatpush1.bf16.msra.mxu0 0
  %4872 = vmatprep.subr.bf16.mxu0 0
  %4873 = vmatpush1.bf16.msra.mxu0 0
  %4874 = vmatprep.subr.bf16.mxu0 0
  %4875 = vmatpush1.bf16.msra.mxu0 0
  %4876 = vmatprep.subr.bf16.mxu0 0
  %4877 = vmatpush1.bf16.msra.mxu0 0
  %4878 = vmatprep.subr.bf16.mxu0 0
  %4879 = vmatpush1.bf16.msra.mxu0 0
  %4880 = vmatprep.subr.bf16.mxu0 0
  %4881 = vmatpush1.bf16.msra.mxu0 0
  %4882 = vmatprep.subr.bf16.mxu0 0
  %4883 = vmatpush1.bf16.msra.mxu0 0
  %4884 = vmatprep.subr.bf16.mxu0 0
  %4885 = vmatpush1.bf16.msra.mxu0 0
  %4886 = vmatprep.subr.bf16.mxu0 0
  %4887 = vmatpush1.bf16.msra.mxu0 0
  %4888 = vmatprep.subr.bf16.mxu0 0
  %4889 = vmatpush1.bf16.msra.mxu0 0
  %4890 = vmatprep.subr.bf16.mxu0 0
  %4891 = vmatpush1.bf16.msra.mxu0 0
  %4892 = vmatprep.subr.bf16.mxu0 0
  %4893 = vmatpush1.bf16.msra.mxu0 0
  %4894 = vmatprep.mubr.bf16.mxu0 0
  %4895 = vmatmul.mubr.bf16.gmra.mrb[0].mxu0 %v4523
  %v4896 = vpop.f32.mrb[0].mxu0
  %v4897 = vadd.f32 0.0, %v4896
  %v4898 = vpop.f32.mrb[0].mxu0
  %v4899 = vpop.f32.mrb[0].mxu0
  %v4900 = vadd.f32 0.0, %v4899
  %v4901 = vpop.f32.mrb[0].mxu0
  %4902 = vmatprep.mubr.bf16.mxu0 0
  %4903 = vmatmul.mubr.bf16.gmra.mrb[0].mxu0 %v4526
  %v4904 = vpop.f32.mrb[0].mxu0
  %v4905 = vadd.f32 0.0, %v4904
  %v4906 = vpop.f32.mrb[0].mxu0
  %v4907 = vpop.f32.mrb[0].mxu0
  %v4908 = vadd.f32 0.0, %v4907
  %v4909 = vpop.f32.mrb[0].mxu0
  %4910 = vmatprep.mubr.bf16.mxu0 0
  %4911 = vmatmul.mubr.bf16.gmra.mrb[0].mxu0 %v4854
  %v4912 = vpop.f32.mrb[0].mxu0
  %v4913 = vadd.f32 0.0, %v4912
  %v4914 = vpop.f32.mrb[0].mxu0
  %v4915 = vpop.f32.mrb[0].mxu0
  %v4916 = vadd.f32 0.0, %v4915
  %v4917 = vpop.f32.mrb[0].mxu0
  %4918 = vmatprep.mubr.bf16.mxu0 0
  %4919 = vmatmul.mubr.bf16.gmra.mrb[0].mxu0 %v4532
  %v4920 = vpop.f32.mrb[0].mxu0
  %v4921 = vadd.f32 0.0, %v4920
  %v4922 = vpop.f32.mrb[0].mxu0
  %v4923 = vpop.f32.mrb[0].mxu0
  %v4924 = vadd.f32 0.0, %v4923
  %v4925 = vpop.f32.mrb[0].mxu0
  %4926 = vmatprep.mubr.bf16.mxu0 0
  %4927 = vmatmul.mubr.bf16.gmra.mrb[0].mxu0 %v4535
  %v4928 = vpop.f32.mrb[0].mxu0
  %v4929 = vadd.f32 0.0, %v4928
  %v4930 = vpop.f32.mrb[0].mxu0
  %v4931 = vpop.f32.mrb[0].mxu0
  %v4932 = vadd.f32 0.0, %v4931
  %v4933 = vpop.f32.mrb[0].mxu0
  %4934 = vmatprep.mubr.bf16.mxu0 0
  %4935 = vmatmul.mubr.bf16.gmra.mrb[0].mxu0 %v4857
  %v4936 = vpop.f32.mrb[0].mxu0
  %v4937 = vadd.f32 0.0, %v4936
  %v4938 = vpop.f32.mrb[0].mxu0
  %v4939 = vpop.f32.mrb[0].mxu0
  %v4940 = vadd.f32 0.0, %v4939
  %v4941 = vpop.f32.mrb[0].mxu0
  %4942 = vmatprep.mubr.bf16.mxu0 0
  %4943 = vmatmul.mubr.bf16.gmra.mrb[0].mxu0 %v4541
  %v4944 = vpop.f32.mrb[0].mxu0
  %v4945 = vadd.f32 0.0, %v4944
  %v4946 = vpop.f32.mrb[0].mxu0
  %v4947 = vpop.f32.mrb[0].mxu0
  %v4948 = vadd.f32 0.0, %v4947
  %v4949 = vpop.f32.mrb[0].mxu0
  %4950 = vmatprep.mubr.bf16.mxu0 0
  %4951 = vmatmul.mubr.bf16.gmra.mrb[0].mxu0 %v4544
  %v4952 = vpop.f32.mrb[0].mxu0
  %v4953 = vadd.f32 0.0, %v4952
  %v4954 = vpop.f32.mrb[0].mxu0
  %v4955 = vpop.f32.mrb[0].mxu0
  %v4956 = vadd.f32 0.0, %v4955
  %v4957 = vpop.f32.mrb[0].mxu0
  %4958 = vmatprep.mubr.bf16.mxu0 0
  %4959 = vmatmul.mubr.bf16.gmra.mrb[0].mxu0 %v4860
  %v4960 = vpop.f32.mrb[0].mxu0
  %v4961 = vadd.f32 0.0, %v4960
  %v4962 = vpop.f32.mrb[0].mxu0
  %v4963 = vpop.f32.mrb[0].mxu0
  %v4964 = vadd.f32 0.0, %v4963
  %v4965 = vpop.f32.mrb[0].mxu0
  %4966 = vdwg.mxu0
  %v4967 = vadd.f32 %v4818, %v4897
  %v4968 = vadd.f32 %v4819, %v4900
  %v4969 = vadd.f32 %v4820, %v4905
  %v4970 = vadd.f32 %v4821, %v4908
  %v4971 = vadd.f32 %v4822, %v4913
  %v4972 = vadd.f32 %v4823, %v4916
  %v4973 = vadd.f32 %v4824, %v4921
  %v4974 = vadd.f32 %v4825, %v4924
  %v4975 = vadd.f32 %v4826, %v4929
  %v4976 = vadd.f32 %v4827, %v4932
  %v4977 = vadd.f32 %v4828, %v4937
  %v4978 = vadd.f32 %v4829, %v4940
  %v4979 = vadd.f32 %v4830, %v4945
  %v4980 = vadd.f32 %v4831, %v4948
  %v4981 = vadd.f32 %v4832, %v4953
  %v4982 = vadd.f32 %v4833, %v4956
  %v4983 = vadd.f32 %v4834, %v4961
  %v4984 = vadd.f32 %v4835, %v4964
  %s4985 = scalar_lea.vmem %s3, 112
  %v4986 = vld [vmem:[%s4985] sm:$0xf]
  %v4987 = vld [vmem:[%s4985 + $0x4] sm:$0xf]
  %v4988 = vld [vmem:[%s4985 + $0x8] sm:$0xf]
  %v4989 = vld [vmem:[%s4985 + $0xc] sm:$0xf]
  %v4994 = vunpack.c.l.b16 %v4986
  %v4995 = vunpack.c.l.b16 %v4987
  %v4996 = vunpack.c.l.b16 %v4988
  %v4997 = vunpack.c.l.b16 %v4989
  %v4998 = vpack.c.b16 %v4995, %v4994
  %v4999 = vpack.c.b16 %v4997, %v4996
  %v5003 = vsel %vm3927, %v3857, 0
  %v5006 = vsel %vm3927, %v3873, 0
  %v5009 = vsel %vm3927, %v3889, 0
  %5011 = vmatprep.subr.bf16.mxu0 0
  %5012 = vmatpush1.bf16.msra.mxu0 %v4998
  %5013 = vmatprep.subr.bf16.mxu0 0
  %5014 = vmatpush1.bf16.msra.mxu0 %v4999
  %5015 = vmatprep.subr.bf16.mxu0 0
  %5016 = vmatpush1.bf16.msra.mxu0 0
  %5017 = vmatprep.subr.bf16.mxu0 0
  %5018 = vmatpush1.bf16.msra.mxu0 0
  %5019 = vmatprep.subr.bf16.mxu0 0
  %5020 = vmatpush1.bf16.msra.mxu0 0
  %5021 = vmatprep.subr.bf16.mxu0 0
  %5022 = vmatpush1.bf16.msra.mxu0 0
  %5023 = vmatprep.subr.bf16.mxu0 0
  %5024 = vmatpush1.bf16.msra.mxu0 0
  %5025 = vmatprep.subr.bf16.mxu0 0
  %5026 = vmatpush1.bf16.msra.mxu0 0
  %5027 = vmatprep.subr.bf16.mxu0 0
  %5028 = vmatpush1.bf16.msra.mxu0 0
  %5029 = vmatprep.subr.bf16.mxu0 0
  %5030 = vmatpush1.bf16.msra.mxu0 0
  %5031 = vmatprep.subr.bf16.mxu0 0
  %5032 = vmatpush1.bf16.msra.mxu0 0
  %5033 = vmatprep.subr.bf16.mxu0 0
  %5034 = vmatpush1.bf16.msra.mxu0 0
  %5035 = vmatprep.subr.bf16.mxu0 0
  %5036 = vmatpush1.bf16.msra.mxu0 0
  %5037 = vmatprep.subr.bf16.mxu0 0
  %5038 = vmatpush1.bf16.msra.mxu0 0
  %5039 = vmatprep.subr.bf16.mxu0 0
  %5040 = vmatpush1.bf16.msra.mxu0 0
  %5041 = vmatprep.subr.bf16.mxu0 0
  %5042 = vmatpush1.bf16.msra.mxu0 0
  %5043 = vmatprep.mubr.bf16.mxu0 0
  %5044 = vmatmul.mubr.bf16.gmra.mrb[0].mxu0 %v4690
  %v5045 = vpop.f32.mrb[0].mxu0
  %v5046 = vadd.f32 0.0, %v5045
  %v5047 = vpop.f32.mrb[0].mxu0
  %v5048 = vpop.f32.mrb[0].mxu0
  %v5049 = vadd.f32 0.0, %v5048
  %v5050 = vpop.f32.mrb[0].mxu0
  %5051 = vmatprep.mubr.bf16.mxu0 0
  %5052 = vmatmul.mubr.bf16.gmra.mrb[0].mxu0 %v4693
  %v5053 = vpop.f32.mrb[0].mxu0
  %v5054 = vadd.f32 0.0, %v5053
  %v5055 = vpop.f32.mrb[0].mxu0
  %v5056 = vpop.f32.mrb[0].mxu0
  %v5057 = vadd.f32 0.0, %v5056
  %v5058 = vpop.f32.mrb[0].mxu0
  %5059 = vmatprep.mubr.bf16.mxu0 0
  %5060 = vmatmul.mubr.bf16.gmra.mrb[0].mxu0 %v5003
  %v5061 = vpop.f32.mrb[0].mxu0
  %v5062 = vadd.f32 0.0, %v5061
  %v5063 = vpop.f32.mrb[0].mxu0
  %v5064 = vpop.f32.mrb[0].mxu0
  %v5065 = vadd.f32 0.0, %v5064
  %v5066 = vpop.f32.mrb[0].mxu0
  %5067 = vmatprep.mubr.bf16.mxu0 0
  %5068 = vmatmul.mubr.bf16.gmra.mrb[0].mxu0 %v4699
  %v5069 = vpop.f32.mrb[0].mxu0
  %v5070 = vadd.f32 0.0, %v5069
  %v5071 = vpop.f32.mrb[0].mxu0
  %v5072 = vpop.f32.mrb[0].mxu0
  %v5073 = vadd.f32 0.0, %v5072
  %v5074 = vpop.f32.mrb[0].mxu0
  %5075 = vmatprep.mubr.bf16.mxu0 0
  %5076 = vmatmul.mubr.bf16.gmra.mrb[0].mxu0 %v4702
  %v5077 = vpop.f32.mrb[0].mxu0
  %v5078 = vadd.f32 0.0, %v5077
  %v5079 = vpop.f32.mrb[0].mxu0
  %v5080 = vpop.f32.mrb[0].mxu0
  %v5081 = vadd.f32 0.0, %v5080
  %v5082 = vpop.f32.mrb[0].mxu0
  %5083 = vmatprep.mubr.bf16.mxu0 0
  %5084 = vmatmul.mubr.bf16.gmra.mrb[0].mxu0 %v5006
  %v5085 = vpop.f32.mrb[0].mxu0
  %v5086 = vadd.f32 0.0, %v5085
  %v5087 = vpop.f32.mrb[0].mxu0
  %v5088 = vpop.f32.mrb[0].mxu0
  %v5089 = vadd.f32 0.0, %v5088
  %v5090 = vpop.f32.mrb[0].mxu0
  %5091 = vmatprep.mubr.bf16.mxu0 0
  %5092 = vmatmul.mubr.bf16.gmra.mrb[0].mxu0 %v4708
  %v5093 = vpop.f32.mrb[0].mxu0
  %v5094 = vadd.f32 0.0, %v5093
  %v5095 = vpop.f32.mrb[0].mxu0
  %v5096 = vpop.f32.mrb[0].mxu0
  %v5097 = vadd.f32 0.0, %v5096
  %v5098 = vpop.f32.mrb[0].mxu0
  %5099 = vmatprep.mubr.bf16.mxu0 0
  %5100 = vmatmul.mubr.bf16.gmra.mrb[0].mxu0 %v4711
  %v5101 = vpop.f32.mrb[0].mxu0
  %v5102 = vadd.f32 0.0, %v5101
  %v5103 = vpop.f32.mrb[0].mxu0
  %v5104 = vpop.f32.mrb[0].mxu0
  %v5105 = vadd.f32 0.0, %v5104
  %v5106 = vpop.f32.mrb[0].mxu0
  %5107 = vmatprep.mubr.bf16.mxu0 0
  %5108 = vmatmul.mubr.bf16.gmra.mrb[0].mxu0 %v5009
  %v5109 = vpop.f32.mrb[0].mxu0
  %v5110 = vadd.f32 0.0, %v5109
  %v5111 = vpop.f32.mrb[0].mxu0
  %v5112 = vpop.f32.mrb[0].mxu0
  %v5113 = vadd.f32 0.0, %v5112
  %v5114 = vpop.f32.mrb[0].mxu0
  %5115 = vdwg.mxu0
  %v5116 = vadd.f32 %v4967, %v5046
  %v5117 = vadd.f32 %v4968, %v5049
  %v5118 = vadd.f32 %v4969, %v5054
  %v5119 = vadd.f32 %v4970, %v5057
  %v5120 = vadd.f32 %v4971, %v5062
  %v5121 = vadd.f32 %v4972, %v5065
  %v5122 = vadd.f32 %v4973, %v5070
  %v5123 = vadd.f32 %v4974, %v5073
  %v5124 = vadd.f32 %v4975, %v5078
  %v5125 = vadd.f32 %v4976, %v5081
  %v5126 = vadd.f32 %v4977, %v5086
  %v5127 = vadd.f32 %v4978, %v5089
  %v5128 = vadd.f32 %v4979, %v5094
  %v5129 = vadd.f32 %v4980, %v5097
  %v5130 = vadd.f32 %v4981, %v5102
  %v5131 = vadd.f32 %v4982, %v5105
  %v5132 = vadd.f32 %v4983, %v5110
  %v5133 = vadd.f32 %v4984, %v5113
  %s5134 = scalar_lea.vmem %s3, 128
  %v5135 = vld [vmem:[%s5134] sm:$0xf]
  %v5136 = vld [vmem:[%s5134 + $0x4] sm:$0xf]
  %v5137 = vld [vmem:[%s5134 + $0x8] sm:$0xf]
  %v5138 = vld [vmem:[%s5134 + $0xc] sm:$0xf]
  %v5143 = vunpack.c.l.b16 %v5135
  %v5144 = vunpack.c.l.b16 %v5136
  %v5145 = vunpack.c.l.b16 %v5137
  %v5146 = vunpack.c.l.b16 %v5138
  %v5147 = vpack.c.b16 %v5144, %v5143
  %v5148 = vpack.c.b16 %v5146, %v5145
  %v5152 = vsel %vm3927, %v3890, 0
  %v5155 = vsel %vm3927, %v3892, 0
  %v5158 = vsel %vm3927, %v3894, 0
  %5160 = vmatprep.subr.bf16.mxu0 0
  %5161 = vmatpush1.bf16.msra.mxu0 %v5147
  %5162 = vmatprep.subr.bf16.mxu0 0
  %5163 = vmatpush1.bf16.msra.mxu0 %v5148
  %5164 = vmatprep.subr.bf16.mxu0 0
  %5165 = vmatpush1.bf16.msra.mxu0 0
  %5166 = vmatprep.subr.bf16.mxu0 0
  %5167 = vmatpush1.bf16.msra.mxu0 0
  %5168 = vmatprep.subr.bf16.mxu0 0
  %5169 = vmatpush1.bf16.msra.mxu0 0
  %5170 = vmatprep.subr.bf16.mxu0 0
  %5171 = vmatpush1.bf16.msra.mxu0 0
  %5172 = vmatprep.subr.bf16.mxu0 0
  %5173 = vmatpush1.bf16.msra.mxu0 0
  %5174 = vmatprep.subr.bf16.mxu0 0
  %5175 = vmatpush1.bf16.msra.mxu0 0
  %5176 = vmatprep.subr.bf16.mxu0 0
  %5177 = vmatpush1.bf16.msra.mxu0 0
  %5178 = vmatprep.subr.bf16.mxu0 0
  %5179 = vmatpush1.bf16.msra.mxu0 0
  %5180 = vmatprep.subr.bf16.mxu0 0
  %5181 = vmatpush1.bf16.msra.mxu0 0
  %5182 = vmatprep.subr.bf16.mxu0 0
  %5183 = vmatpush1.bf16.msra.mxu0 0
  %5184 = vmatprep.subr.bf16.mxu0 0
  %5185 = vmatpush1.bf16.msra.mxu0 0
  %5186 = vmatprep.subr.bf16.mxu0 0
  %5187 = vmatpush1.bf16.msra.mxu0 0
  %5188 = vmatprep.subr.bf16.mxu0 0
  %5189 = vmatpush1.bf16.msra.mxu0 0
  %5190 = vmatprep.subr.bf16.mxu0 0
  %5191 = vmatpush1.bf16.msra.mxu0 0
  %5192 = vmatprep.mubr.bf16.mxu0 0
  %5193 = vmatmul.mubr.bf16.gmra.mrb[0].mxu0 %v4082
  %v5194 = vpop.f32.mrb[0].mxu0
  %v5195 = vadd.f32 0.0, %v5194
  %v5196 = vpop.f32.mrb[0].mxu0
  %v5197 = vpop.f32.mrb[0].mxu0
  %v5198 = vadd.f32 0.0, %v5197
  %v5199 = vpop.f32.mrb[0].mxu0
  %5200 = vmatprep.mubr.bf16.mxu0 0
  %5201 = vmatmul.mubr.bf16.gmra.mrb[0].mxu0 %v4085
  %v5202 = vpop.f32.mrb[0].mxu0
  %v5203 = vadd.f32 0.0, %v5202
  %v5204 = vpop.f32.mrb[0].mxu0
  %v5205 = vpop.f32.mrb[0].mxu0
  %v5206 = vadd.f32 0.0, %v5205
  %v5207 = vpop.f32.mrb[0].mxu0
  %5208 = vmatprep.mubr.bf16.mxu0 0
  %5209 = vmatmul.mubr.bf16.gmra.mrb[0].mxu0 %v4088
  %v5210 = vpop.f32.mrb[0].mxu0
  %v5211 = vadd.f32 0.0, %v5210
  %v5212 = vpop.f32.mrb[0].mxu0
  %v5213 = vpop.f32.mrb[0].mxu0
  %v5214 = vadd.f32 0.0, %v5213
  %v5215 = vpop.f32.mrb[0].mxu0
  %5216 = vmatprep.mubr.bf16.mxu0 0
  %5217 = vmatmul.mubr.bf16.gmra.mrb[0].mxu0 %v4091
  %v5218 = vpop.f32.mrb[0].mxu0
  %v5219 = vadd.f32 0.0, %v5218
  %v5220 = vpop.f32.mrb[0].mxu0
  %v5221 = vpop.f32.mrb[0].mxu0
  %v5222 = vadd.f32 0.0, %v5221
  %v5223 = vpop.f32.mrb[0].mxu0
  %5224 = vmatprep.mubr.bf16.mxu0 0
  %5225 = vmatmul.mubr.bf16.gmra.mrb[0].mxu0 %v4094
  %v5226 = vpop.f32.mrb[0].mxu0
  %v5227 = vadd.f32 0.0, %v5226
  %v5228 = vpop.f32.mrb[0].mxu0
  %v5229 = vpop.f32.mrb[0].mxu0
  %v5230 = vadd.f32 0.0, %v5229
  %v5231 = vpop.f32.mrb[0].mxu0
  %5232 = vmatprep.mubr.bf16.mxu0 0
  %5233 = vmatmul.mubr.bf16.gmra.mrb[0].mxu0 %v4097
  %v5234 = vpop.f32.mrb[0].mxu0
  %v5235 = vadd.f32 0.0, %v5234
  %v5236 = vpop.f32.mrb[0].mxu0
  %v5237 = vpop.f32.mrb[0].mxu0
  %v5238 = vadd.f32 0.0, %v5237
  %v5239 = vpop.f32.mrb[0].mxu0
  %5240 = vmatprep.mubr.bf16.mxu0 0
  %5241 = vmatmul.mubr.bf16.gmra.mrb[0].mxu0 %v5152
  %v5242 = vpop.f32.mrb[0].mxu0
  %v5243 = vadd.f32 0.0, %v5242
  %v5244 = vpop.f32.mrb[0].mxu0
  %v5245 = vpop.f32.mrb[0].mxu0
  %v5246 = vadd.f32 0.0, %v5245
  %v5247 = vpop.f32.mrb[0].mxu0
  %5248 = vmatprep.mubr.bf16.mxu0 0
  %5249 = vmatmul.mubr.bf16.gmra.mrb[0].mxu0 %v5155
  %v5250 = vpop.f32.mrb[0].mxu0
  %v5251 = vadd.f32 0.0, %v5250
  %v5252 = vpop.f32.mrb[0].mxu0
  %v5253 = vpop.f32.mrb[0].mxu0
  %v5254 = vadd.f32 0.0, %v5253
  %v5255 = vpop.f32.mrb[0].mxu0
  %5256 = vmatprep.mubr.bf16.mxu0 0
  %5257 = vmatmul.mubr.bf16.gmra.mrb[0].mxu0 %v5158
  %v5258 = vpop.f32.mrb[0].mxu0
  %v5259 = vadd.f32 0.0, %v5258
  %v5260 = vpop.f32.mrb[0].mxu0
  %v5261 = vpop.f32.mrb[0].mxu0
  %v5262 = vadd.f32 0.0, %v5261
  %v5263 = vpop.f32.mrb[0].mxu0
  %5264 = vdwg.mxu0
  %v5265 = vadd.f32 %v5116, %v5195
  %v5266 = vadd.f32 %v5117, %v5198
  %v5267 = vadd.f32 %v5118, %v5203
  %v5268 = vadd.f32 %v5119, %v5206
  %v5269 = vadd.f32 %v5120, %v5211
  %v5270 = vadd.f32 %v5121, %v5214
  %v5271 = vadd.f32 %v5122, %v5219
  %v5272 = vadd.f32 %v5123, %v5222
  %v5273 = vadd.f32 %v5124, %v5227
  %v5274 = vadd.f32 %v5125, %v5230
  %v5275 = vadd.f32 %v5126, %v5235
  %v5276 = vadd.f32 %v5127, %v5238
  %v5277 = vadd.f32 %v5128, %v5243
  %v5278 = vadd.f32 %v5129, %v5246
  %v5279 = vadd.f32 %v5130, %v5251
  %v5280 = vadd.f32 %v5131, %v5254
  %v5281 = vadd.f32 %v5132, %v5259
  %v5282 = vadd.f32 %v5133, %v5262
  %s5283 = scalar_lea.vmem %s3, 144
  %v5284 = vld [vmem:[%s5283] sm:$0xf]
  %v5285 = vld [vmem:[%s5283 + $0x4] sm:$0xf]
  %v5286 = vld [vmem:[%s5283 + $0x8] sm:$0xf]
  %v5287 = vld [vmem:[%s5283 + $0xc] sm:$0xf]
  %v5292 = vunpack.c.l.b16 %v5284
  %v5293 = vunpack.c.l.b16 %v5285
  %v5294 = vunpack.c.l.b16 %v5286
  %v5295 = vunpack.c.l.b16 %v5287
  %v5296 = vpack.c.b16 %v5293, %v5292
  %v5297 = vpack.c.b16 %v5295, %v5294
  %v5301 = vsel %vm3927, %v3891, 0
  %v5304 = vsel %vm3927, %v3893, 0
  %v5307 = vsel %vm3927, %v3895, 0
  %5309 = vmatprep.subr.bf16.mxu0 0
  %5310 = vmatpush1.bf16.msra.mxu0 %v5296
  %5311 = vmatprep.subr.bf16.mxu0 0
  %5312 = vmatpush1.bf16.msra.mxu0 %v5297
  %5313 = vmatprep.subr.bf16.mxu0 0
  %5314 = vmatpush1.bf16.msra.mxu0 0
  %5315 = vmatprep.subr.bf16.mxu0 0
  %5316 = vmatpush1.bf16.msra.mxu0 0
  %5317 = vmatprep.subr.bf16.mxu0 0
  %5318 = vmatpush1.bf16.msra.mxu0 0
  %5319 = vmatprep.subr.bf16.mxu0 0
  %5320 = vmatpush1.bf16.msra.mxu0 0
  %5321 = vmatprep.subr.bf16.mxu0 0
  %5322 = vmatpush1.bf16.msra.mxu0 0
  %5323 = vmatprep.subr.bf16.mxu0 0
  %5324 = vmatpush1.bf16.msra.mxu0 0
  %5325 = vmatprep.subr.bf16.mxu0 0
  %5326 = vmatpush1.bf16.msra.mxu0 0
  %5327 = vmatprep.subr.bf16.mxu0 0
  %5328 = vmatpush1.bf16.msra.mxu0 0
  %5329 = vmatprep.subr.bf16.mxu0 0
  %5330 = vmatpush1.bf16.msra.mxu0 0
  %5331 = vmatprep.subr.bf16.mxu0 0
  %5332 = vmatpush1.bf16.msra.mxu0 0
  %5333 = vmatprep.subr.bf16.mxu0 0
  %5334 = vmatpush1.bf16.msra.mxu0 0
  %5335 = vmatprep.subr.bf16.mxu0 0
  %5336 = vmatpush1.bf16.msra.mxu0 0
  %5337 = vmatprep.subr.bf16.mxu0 0
  %5338 = vmatpush1.bf16.msra.mxu0 0
  %5339 = vmatprep.subr.bf16.mxu0 0
  %5340 = vmatpush1.bf16.msra.mxu0 0
  %5341 = vmatprep.mubr.bf16.mxu0 0
  %5342 = vmatmul.mubr.bf16.gmra.mrb[0].mxu0 %v3938
  %v5343 = vpop.f32.mrb[0].mxu0
  %v5344 = vadd.f32 0.0, %v5343
  %v5345 = vpop.f32.mrb[0].mxu0
  %v5346 = vpop.f32.mrb[0].mxu0
  %v5347 = vadd.f32 0.0, %v5346
  %v5348 = vpop.f32.mrb[0].mxu0
  %5349 = vmatprep.mubr.bf16.mxu0 0
  %5350 = vmatmul.mubr.bf16.gmra.mrb[0].mxu0 %v3941
  %v5351 = vpop.f32.mrb[0].mxu0
  %v5352 = vadd.f32 0.0, %v5351
  %v5353 = vpop.f32.mrb[0].mxu0
  %v5354 = vpop.f32.mrb[0].mxu0
  %v5355 = vadd.f32 0.0, %v5354
  %v5356 = vpop.f32.mrb[0].mxu0
  %5357 = vmatprep.mubr.bf16.mxu0 0
  %5358 = vmatmul.mubr.bf16.gmra.mrb[0].mxu0 %v3944
  %v5359 = vpop.f32.mrb[0].mxu0
  %v5360 = vadd.f32 0.0, %v5359
  %v5361 = vpop.f32.mrb[0].mxu0
  %v5362 = vpop.f32.mrb[0].mxu0
  %v5363 = vadd.f32 0.0, %v5362
  %v5364 = vpop.f32.mrb[0].mxu0
  %5365 = vmatprep.mubr.bf16.mxu0 0
  %5366 = vmatmul.mubr.bf16.gmra.mrb[0].mxu0 %v3947
  %v5367 = vpop.f32.mrb[0].mxu0
  %v5368 = vadd.f32 0.0, %v5367
  %v5369 = vpop.f32.mrb[0].mxu0
  %v5370 = vpop.f32.mrb[0].mxu0
  %v5371 = vadd.f32 0.0, %v5370
  %v5372 = vpop.f32.mrb[0].mxu0
  %5373 = vmatprep.mubr.bf16.mxu0 0
  %5374 = vmatmul.mubr.bf16.gmra.mrb[0].mxu0 %v3950
  %v5375 = vpop.f32.mrb[0].mxu0
  %v5376 = vadd.f32 0.0, %v5375
  %v5377 = vpop.f32.mrb[0].mxu0
  %v5378 = vpop.f32.mrb[0].mxu0
  %v5379 = vadd.f32 0.0, %v5378
  %v5380 = vpop.f32.mrb[0].mxu0
  %5381 = vmatprep.mubr.bf16.mxu0 0
  %5382 = vmatmul.mubr.bf16.gmra.mrb[0].mxu0 %v3953
  %v5383 = vpop.f32.mrb[0].mxu0
  %v5384 = vadd.f32 0.0, %v5383
  %v5385 = vpop.f32.mrb[0].mxu0
  %v5386 = vpop.f32.mrb[0].mxu0
  %v5387 = vadd.f32 0.0, %v5386
  %v5388 = vpop.f32.mrb[0].mxu0
  %5389 = vmatprep.mubr.bf16.mxu0 0
  %5390 = vmatmul.mubr.bf16.gmra.mrb[0].mxu0 %v5301
  %v5391 = vpop.f32.mrb[0].mxu0
  %v5392 = vadd.f32 0.0, %v5391
  %v5393 = vpop.f32.mrb[0].mxu0
  %v5394 = vpop.f32.mrb[0].mxu0
  %v5395 = vadd.f32 0.0, %v5394
  %v5396 = vpop.f32.mrb[0].mxu0
  %5397 = vmatprep.mubr.bf16.mxu0 0
  %5398 = vmatmul.mubr.bf16.gmra.mrb[0].mxu0 %v5304
  %v5399 = vpop.f32.mrb[0].mxu0
  %v5400 = vadd.f32 0.0, %v5399
  %v5401 = vpop.f32.mrb[0].mxu0
  %v5402 = vpop.f32.mrb[0].mxu0
  %v5403 = vadd.f32 0.0, %v5402
  %v5404 = vpop.f32.mrb[0].mxu0
  %5405 = vmatprep.mubr.bf16.mxu0 0
  %5406 = vmatmul.mubr.bf16.gmra.mrb[0].mxu0 %v5307
  %v5407 = vpop.f32.mrb[0].mxu0
  %v5408 = vadd.f32 0.0, %v5407
  %v5409 = vpop.f32.mrb[0].mxu0
  %v5410 = vpop.f32.mrb[0].mxu0
  %v5411 = vadd.f32 0.0, %v5410
  %v5412 = vpop.f32.mrb[0].mxu0
  %5413 = vdwg.mxu0
  %v5414 = vadd.f32 %v5265, %v5344
  %v5415 = vadd.f32 %v5266, %v5347
  %v5416 = vadd.f32 %v5267, %v5352
  %v5417 = vadd.f32 %v5268, %v5355
  %v5418 = vadd.f32 %v5269, %v5360
  %v5419 = vadd.f32 %v5270, %v5363
  %v5420 = vadd.f32 %v5271, %v5368
  %v5421 = vadd.f32 %v5272, %v5371
  %v5422 = vadd.f32 %v5273, %v5376
  %v5423 = vadd.f32 %v5274, %v5379
  %v5424 = vadd.f32 %v5275, %v5384
  %v5425 = vadd.f32 %v5276, %v5387
  %v5426 = vadd.f32 %v5277, %v5392
  %v5427 = vadd.f32 %v5278, %v5395
  %v5428 = vadd.f32 %v5279, %v5400
  %v5429 = vadd.f32 %v5280, %v5403
  %v5430 = vadd.f32 %v5281, %v5408
  %v5431 = vadd.f32 %v5282, %v5411
  %s5432 = scalar_lea.vmem %s3, 160
  %v5433 = vld [vmem:[%s5432] sm:$0xf]
  %v5434 = vld [vmem:[%s5432 + $0x4] sm:$0xf]
  %v5435 = vld [vmem:[%s5432 + $0x8] sm:$0xf]
  %v5436 = vld [vmem:[%s5432 + $0xc] sm:$0xf]
  %v5441 = vunpack.c.l.b16 %v5433
  %v5442 = vunpack.c.l.b16 %v5434
  %v5443 = vunpack.c.l.b16 %v5435
  %v5444 = vunpack.c.l.b16 %v5436
  %v5445 = vpack.c.b16 %v5442, %v5441
  %v5446 = vpack.c.b16 %v5444, %v5443
  %v5450 = vsel %vm3927, %v3896, 0
  %5452 = vmatprep.subr.bf16.mxu0 0
  %5453 = vmatpush1.bf16.msra.mxu0 %v5445
  %5454 = vmatprep.subr.bf16.mxu0 0
  %5455 = vmatpush1.bf16.msra.mxu0 %v5446
  %5456 = vmatprep.subr.bf16.mxu0 0
  %5457 = vmatpush1.bf16.msra.mxu0 0
  %5458 = vmatprep.subr.bf16.mxu0 0
  %5459 = vmatpush1.bf16.msra.mxu0 0
  %5460 = vmatprep.subr.bf16.mxu0 0
  %5461 = vmatpush1.bf16.msra.mxu0 0
  %5462 = vmatprep.subr.bf16.mxu0 0
  %5463 = vmatpush1.bf16.msra.mxu0 0
  %5464 = vmatprep.subr.bf16.mxu0 0
  %5465 = vmatpush1.bf16.msra.mxu0 0
  %5466 = vmatprep.subr.bf16.mxu0 0
  %5467 = vmatpush1.bf16.msra.mxu0 0
  %5468 = vmatprep.subr.bf16.mxu0 0
  %5469 = vmatpush1.bf16.msra.mxu0 0
  %5470 = vmatprep.subr.bf16.mxu0 0
  %5471 = vmatpush1.bf16.msra.mxu0 0
  %5472 = vmatprep.subr.bf16.mxu0 0
  %5473 = vmatpush1.bf16.msra.mxu0 0
  %5474 = vmatprep.subr.bf16.mxu0 0
  %5475 = vmatpush1.bf16.msra.mxu0 0
  %5476 = vmatprep.subr.bf16.mxu0 0
  %5477 = vmatpush1.bf16.msra.mxu0 0
  %5478 = vmatprep.subr.bf16.mxu0 0
  %5479 = vmatpush1.bf16.msra.mxu0 0
  %5480 = vmatprep.subr.bf16.mxu0 0
  %5481 = vmatpush1.bf16.msra.mxu0 0
  %5482 = vmatprep.subr.bf16.mxu0 0
  %5483 = vmatpush1.bf16.msra.mxu0 0
  %5484 = vmatprep.mubr.bf16.mxu0 0
  %5485 = vmatmul.mubr.bf16.gmra.mrb[0].mxu0 %v4085
  %v5486 = vpop.f32.mrb[0].mxu0
  %v5487 = vadd.f32 0.0, %v5486
  %v5488 = vpop.f32.mrb[0].mxu0
  %v5489 = vpop.f32.mrb[0].mxu0
  %v5490 = vadd.f32 0.0, %v5489
  %v5491 = vpop.f32.mrb[0].mxu0
  %5492 = vmatprep.mubr.bf16.mxu0 0
  %5493 = vmatmul.mubr.bf16.gmra.mrb[0].mxu0 %v4088
  %v5494 = vpop.f32.mrb[0].mxu0
  %v5495 = vadd.f32 0.0, %v5494
  %v5496 = vpop.f32.mrb[0].mxu0
  %v5497 = vpop.f32.mrb[0].mxu0
  %v5498 = vadd.f32 0.0, %v5497
  %v5499 = vpop.f32.mrb[0].mxu0
  %5500 = vmatprep.mubr.bf16.mxu0 0
  %5501 = vmatmul.mubr.bf16.gmra.mrb[0].mxu0 %v4225
  %v5502 = vpop.f32.mrb[0].mxu0
  %v5503 = vadd.f32 0.0, %v5502
  %v5504 = vpop.f32.mrb[0].mxu0
  %v5505 = vpop.f32.mrb[0].mxu0
  %v5506 = vadd.f32 0.0, %v5505
  %v5507 = vpop.f32.mrb[0].mxu0
  %5508 = vmatprep.mubr.bf16.mxu0 0
  %5509 = vmatmul.mubr.bf16.gmra.mrb[0].mxu0 %v4094
  %v5510 = vpop.f32.mrb[0].mxu0
  %v5511 = vadd.f32 0.0, %v5510
  %v5512 = vpop.f32.mrb[0].mxu0
  %v5513 = vpop.f32.mrb[0].mxu0
  %v5514 = vadd.f32 0.0, %v5513
  %v5515 = vpop.f32.mrb[0].mxu0
  %5516 = vmatprep.mubr.bf16.mxu0 0
  %5517 = vmatmul.mubr.bf16.gmra.mrb[0].mxu0 %v4097
  %v5518 = vpop.f32.mrb[0].mxu0
  %v5519 = vadd.f32 0.0, %v5518
  %v5520 = vpop.f32.mrb[0].mxu0
  %v5521 = vpop.f32.mrb[0].mxu0
  %v5522 = vadd.f32 0.0, %v5521
  %v5523 = vpop.f32.mrb[0].mxu0
  %5524 = vmatprep.mubr.bf16.mxu0 0
  %5525 = vmatmul.mubr.bf16.gmra.mrb[0].mxu0 %v4228
  %v5526 = vpop.f32.mrb[0].mxu0
  %v5527 = vadd.f32 0.0, %v5526
  %v5528 = vpop.f32.mrb[0].mxu0
  %v5529 = vpop.f32.mrb[0].mxu0
  %v5530 = vadd.f32 0.0, %v5529
  %v5531 = vpop.f32.mrb[0].mxu0
  %5532 = vmatprep.mubr.bf16.mxu0 0
  %5533 = vmatmul.mubr.bf16.gmra.mrb[0].mxu0 %v5155
  %v5534 = vpop.f32.mrb[0].mxu0
  %v5535 = vadd.f32 0.0, %v5534
  %v5536 = vpop.f32.mrb[0].mxu0
  %v5537 = vpop.f32.mrb[0].mxu0
  %v5538 = vadd.f32 0.0, %v5537
  %v5539 = vpop.f32.mrb[0].mxu0
  %5540 = vmatprep.mubr.bf16.mxu0 0
  %5541 = vmatmul.mubr.bf16.gmra.mrb[0].mxu0 %v5158
  %v5542 = vpop.f32.mrb[0].mxu0
  %v5543 = vadd.f32 0.0, %v5542
  %v5544 = vpop.f32.mrb[0].mxu0
  %v5545 = vpop.f32.mrb[0].mxu0
  %v5546 = vadd.f32 0.0, %v5545
  %v5547 = vpop.f32.mrb[0].mxu0
  %5548 = vmatprep.mubr.bf16.mxu0 0
  %5549 = vmatmul.mubr.bf16.gmra.mrb[0].mxu0 %v5450
  %v5550 = vpop.f32.mrb[0].mxu0
  %v5551 = vadd.f32 0.0, %v5550
  %v5552 = vpop.f32.mrb[0].mxu0
  %v5553 = vpop.f32.mrb[0].mxu0
  %v5554 = vadd.f32 0.0, %v5553
  %v5555 = vpop.f32.mrb[0].mxu0
  %5556 = vdwg.mxu0
  %v5557 = vadd.f32 %v5414, %v5487
  %v5558 = vadd.f32 %v5415, %v5490
  %v5559 = vadd.f32 %v5416, %v5495
  %v5560 = vadd.f32 %v5417, %v5498
  %v5561 = vadd.f32 %v5418, %v5503
  %v5562 = vadd.f32 %v5419, %v5506
  %v5563 = vadd.f32 %v5420, %v5511
  %v5564 = vadd.f32 %v5421, %v5514
  %v5565 = vadd.f32 %v5422, %v5519
  %v5566 = vadd.f32 %v5423, %v5522
  %v5567 = vadd.f32 %v5424, %v5527
  %v5568 = vadd.f32 %v5425, %v5530
  %v5569 = vadd.f32 %v5426, %v5535
  %v5570 = vadd.f32 %v5427, %v5538
  %v5571 = vadd.f32 %v5428, %v5543
  %v5572 = vadd.f32 %v5429, %v5546
  %v5573 = vadd.f32 %v5430, %v5551
  %v5574 = vadd.f32 %v5431, %v5554
  %s5575 = scalar_lea.vmem %s3, 176
  %v5576 = vld [vmem:[%s5575] sm:$0xf]
  %v5577 = vld [vmem:[%s5575 + $0x4] sm:$0xf]
  %v5578 = vld [vmem:[%s5575 + $0x8] sm:$0xf]
  %v5579 = vld [vmem:[%s5575 + $0xc] sm:$0xf]
  %v5584 = vunpack.c.l.b16 %v5576
  %v5585 = vunpack.c.l.b16 %v5577
  %v5586 = vunpack.c.l.b16 %v5578
  %v5587 = vunpack.c.l.b16 %v5579
  %v5588 = vpack.c.b16 %v5585, %v5584
  %v5589 = vpack.c.b16 %v5587, %v5586
  %v5593 = vsel %vm3927, %v3897, 0
  %5595 = vmatprep.subr.bf16.mxu0 0
  %5596 = vmatpush1.bf16.msra.mxu0 %v5588
  %5597 = vmatprep.subr.bf16.mxu0 0
  %5598 = vmatpush1.bf16.msra.mxu0 %v5589
  %5599 = vmatprep.subr.bf16.mxu0 0
  %5600 = vmatpush1.bf16.msra.mxu0 0
  %5601 = vmatprep.subr.bf16.mxu0 0
  %5602 = vmatpush1.bf16.msra.mxu0 0
  %5603 = vmatprep.subr.bf16.mxu0 0
  %5604 = vmatpush1.bf16.msra.mxu0 0
  %5605 = vmatprep.subr.bf16.mxu0 0
  %5606 = vmatpush1.bf16.msra.mxu0 0
  %5607 = vmatprep.subr.bf16.mxu0 0
  %5608 = vmatpush1.bf16.msra.mxu0 0
  %5609 = vmatprep.subr.bf16.mxu0 0
  %5610 = vmatpush1.bf16.msra.mxu0 0
  %5611 = vmatprep.subr.bf16.mxu0 0
  %5612 = vmatpush1.bf16.msra.mxu0 0
  %5613 = vmatprep.subr.bf16.mxu0 0
  %5614 = vmatpush1.bf16.msra.mxu0 0
  %5615 = vmatprep.subr.bf16.mxu0 0
  %5616 = vmatpush1.bf16.msra.mxu0 0
  %5617 = vmatprep.subr.bf16.mxu0 0
  %5618 = vmatpush1.bf16.msra.mxu0 0
  %5619 = vmatprep.subr.bf16.mxu0 0
  %5620 = vmatpush1.bf16.msra.mxu0 0
  %5621 = vmatprep.subr.bf16.mxu0 0
  %5622 = vmatpush1.bf16.msra.mxu0 0
  %5623 = vmatprep.subr.bf16.mxu0 0
  %5624 = vmatpush1.bf16.msra.mxu0 0
  %5625 = vmatprep.subr.bf16.mxu0 0
  %5626 = vmatpush1.bf16.msra.mxu0 0
  %5627 = vmatprep.mubr.bf16.mxu0 0
  %5628 = vmatmul.mubr.bf16.gmra.mrb[0].mxu0 %v3941
  %v5629 = vpop.f32.mrb[0].mxu0
  %v5630 = vadd.f32 0.0, %v5629
  %v5631 = vpop.f32.mrb[0].mxu0
  %v5632 = vpop.f32.mrb[0].mxu0
  %v5633 = vadd.f32 0.0, %v5632
  %v5634 = vpop.f32.mrb[0].mxu0
  %5635 = vmatprep.mubr.bf16.mxu0 0
  %5636 = vmatmul.mubr.bf16.gmra.mrb[0].mxu0 %v3944
  %v5637 = vpop.f32.mrb[0].mxu0
  %v5638 = vadd.f32 0.0, %v5637
  %v5639 = vpop.f32.mrb[0].mxu0
  %v5640 = vpop.f32.mrb[0].mxu0
  %v5641 = vadd.f32 0.0, %v5640
  %v5642 = vpop.f32.mrb[0].mxu0
  %5643 = vmatprep.mubr.bf16.mxu0 0
  %5644 = vmatmul.mubr.bf16.gmra.mrb[0].mxu0 %v4374
  %v5645 = vpop.f32.mrb[0].mxu0
  %v5646 = vadd.f32 0.0, %v5645
  %v5647 = vpop.f32.mrb[0].mxu0
  %v5648 = vpop.f32.mrb[0].mxu0
  %v5649 = vadd.f32 0.0, %v5648
  %v5650 = vpop.f32.mrb[0].mxu0
  %5651 = vmatprep.mubr.bf16.mxu0 0
  %5652 = vmatmul.mubr.bf16.gmra.mrb[0].mxu0 %v3950
  %v5653 = vpop.f32.mrb[0].mxu0
  %v5654 = vadd.f32 0.0, %v5653
  %v5655 = vpop.f32.mrb[0].mxu0
  %v5656 = vpop.f32.mrb[0].mxu0
  %v5657 = vadd.f32 0.0, %v5656
  %v5658 = vpop.f32.mrb[0].mxu0
  %5659 = vmatprep.mubr.bf16.mxu0 0
  %5660 = vmatmul.mubr.bf16.gmra.mrb[0].mxu0 %v3953
  %v5661 = vpop.f32.mrb[0].mxu0
  %v5662 = vadd.f32 0.0, %v5661
  %v5663 = vpop.f32.mrb[0].mxu0
  %v5664 = vpop.f32.mrb[0].mxu0
  %v5665 = vadd.f32 0.0, %v5664
  %v5666 = vpop.f32.mrb[0].mxu0
  %5667 = vmatprep.mubr.bf16.mxu0 0
  %5668 = vmatmul.mubr.bf16.gmra.mrb[0].mxu0 %v4377
  %v5669 = vpop.f32.mrb[0].mxu0
  %v5670 = vadd.f32 0.0, %v5669
  %v5671 = vpop.f32.mrb[0].mxu0
  %v5672 = vpop.f32.mrb[0].mxu0
  %v5673 = vadd.f32 0.0, %v5672
  %v5674 = vpop.f32.mrb[0].mxu0
  %5675 = vmatprep.mubr.bf16.mxu0 0
  %5676 = vmatmul.mubr.bf16.gmra.mrb[0].mxu0 %v5304
  %v5677 = vpop.f32.mrb[0].mxu0
  %v5678 = vadd.f32 0.0, %v5677
  %v5679 = vpop.f32.mrb[0].mxu0
  %v5680 = vpop.f32.mrb[0].mxu0
  %v5681 = vadd.f32 0.0, %v5680
  %v5682 = vpop.f32.mrb[0].mxu0
  %5683 = vmatprep.mubr.bf16.mxu0 0
  %5684 = vmatmul.mubr.bf16.gmra.mrb[0].mxu0 %v5307
  %v5685 = vpop.f32.mrb[0].mxu0
  %v5686 = vadd.f32 0.0, %v5685
  %v5687 = vpop.f32.mrb[0].mxu0
  %v5688 = vpop.f32.mrb[0].mxu0
  %v5689 = vadd.f32 0.0, %v5688
  %v5690 = vpop.f32.mrb[0].mxu0
  %5691 = vmatprep.mubr.bf16.mxu0 0
  %5692 = vmatmul.mubr.bf16.gmra.mrb[0].mxu0 %v5593
  %v5693 = vpop.f32.mrb[0].mxu0
  %v5694 = vadd.f32 0.0, %v5693
  %v5695 = vpop.f32.mrb[0].mxu0
  %v5696 = vpop.f32.mrb[0].mxu0
  %v5697 = vadd.f32 0.0, %v5696
  %v5698 = vpop.f32.mrb[0].mxu0
  %5699 = vdwg.mxu0
  %v5700 = vadd.f32 %v5557, %v5630
  %v5701 = vadd.f32 %v5558, %v5633
  %v5702 = vadd.f32 %v5559, %v5638
  %v5703 = vadd.f32 %v5560, %v5641
  %v5704 = vadd.f32 %v5561, %v5646
  %v5705 = vadd.f32 %v5562, %v5649
  %v5706 = vadd.f32 %v5563, %v5654
  %v5707 = vadd.f32 %v5564, %v5657
  %v5708 = vadd.f32 %v5565, %v5662
  %v5709 = vadd.f32 %v5566, %v5665
  %v5710 = vadd.f32 %v5567, %v5670
  %v5711 = vadd.f32 %v5568, %v5673
  %v5712 = vadd.f32 %v5569, %v5678
  %v5713 = vadd.f32 %v5570, %v5681
  %v5714 = vadd.f32 %v5571, %v5686
  %v5715 = vadd.f32 %v5572, %v5689
  %v5716 = vadd.f32 %v5573, %v5694
  %v5717 = vadd.f32 %v5574, %v5697
  %s5718 = scalar_lea.vmem %s3, 192
  %v5719 = vld [vmem:[%s5718] sm:$0xf]
  %v5720 = vld [vmem:[%s5718 + $0x4] sm:$0xf]
  %v5721 = vld [vmem:[%s5718 + $0x8] sm:$0xf]
  %v5722 = vld [vmem:[%s5718 + $0xc] sm:$0xf]
  %v5727 = vunpack.c.l.b16 %v5719
  %v5728 = vunpack.c.l.b16 %v5720
  %v5729 = vunpack.c.l.b16 %v5721
  %v5730 = vunpack.c.l.b16 %v5722
  %v5731 = vpack.c.b16 %v5728, %v5727
  %v5732 = vpack.c.b16 %v5730, %v5729
  %v5736 = vsel %vm3927, %v3898, 0
  %v5739 = vsel %vm3927, %v3900, 0
  %v5742 = vsel %vm3927, %v3902, 0
  %5744 = vmatprep.subr.bf16.mxu0 0
  %5745 = vmatpush1.bf16.msra.mxu0 %v5731
  %5746 = vmatprep.subr.bf16.mxu0 0
  %5747 = vmatpush1.bf16.msra.mxu0 %v5732
  %5748 = vmatprep.subr.bf16.mxu0 0
  %5749 = vmatpush1.bf16.msra.mxu0 0
  %5750 = vmatprep.subr.bf16.mxu0 0
  %5751 = vmatpush1.bf16.msra.mxu0 0
  %5752 = vmatprep.subr.bf16.mxu0 0
  %5753 = vmatpush1.bf16.msra.mxu0 0
  %5754 = vmatprep.subr.bf16.mxu0 0
  %5755 = vmatpush1.bf16.msra.mxu0 0
  %5756 = vmatprep.subr.bf16.mxu0 0
  %5757 = vmatpush1.bf16.msra.mxu0 0
  %5758 = vmatprep.subr.bf16.mxu0 0
  %5759 = vmatpush1.bf16.msra.mxu0 0
  %5760 = vmatprep.subr.bf16.mxu0 0
  %5761 = vmatpush1.bf16.msra.mxu0 0
  %5762 = vmatprep.subr.bf16.mxu0 0
  %5763 = vmatpush1.bf16.msra.mxu0 0
  %5764 = vmatprep.subr.bf16.mxu0 0
  %5765 = vmatpush1.bf16.msra.mxu0 0
  %5766 = vmatprep.subr.bf16.mxu0 0
  %5767 = vmatpush1.bf16.msra.mxu0 0
  %5768 = vmatprep.subr.bf16.mxu0 0
  %5769 = vmatpush1.bf16.msra.mxu0 0
  %5770 = vmatprep.subr.bf16.mxu0 0
  %5771 = vmatpush1.bf16.msra.mxu0 0
  %5772 = vmatprep.subr.bf16.mxu0 0
  %5773 = vmatpush1.bf16.msra.mxu0 0
  %5774 = vmatprep.subr.bf16.mxu0 0
  %5775 = vmatpush1.bf16.msra.mxu0 0
  %5776 = vmatprep.mubr.bf16.mxu0 0
  %5777 = vmatmul.mubr.bf16.gmra.mrb[0].mxu0 %v4529
  %v5778 = vpop.f32.mrb[0].mxu0
  %v5779 = vadd.f32 0.0, %v5778
  %v5780 = vpop.f32.mrb[0].mxu0
  %v5781 = vpop.f32.mrb[0].mxu0
  %v5782 = vadd.f32 0.0, %v5781
  %v5783 = vpop.f32.mrb[0].mxu0
  %5784 = vmatprep.mubr.bf16.mxu0 0
  %5785 = vmatmul.mubr.bf16.gmra.mrb[0].mxu0 %v4532
  %v5786 = vpop.f32.mrb[0].mxu0
  %v5787 = vadd.f32 0.0, %v5786
  %v5788 = vpop.f32.mrb[0].mxu0
  %v5789 = vpop.f32.mrb[0].mxu0
  %v5790 = vadd.f32 0.0, %v5789
  %v5791 = vpop.f32.mrb[0].mxu0
  %5792 = vmatprep.mubr.bf16.mxu0 0
  %5793 = vmatmul.mubr.bf16.gmra.mrb[0].mxu0 %v4535
  %v5794 = vpop.f32.mrb[0].mxu0
  %v5795 = vadd.f32 0.0, %v5794
  %v5796 = vpop.f32.mrb[0].mxu0
  %v5797 = vpop.f32.mrb[0].mxu0
  %v5798 = vadd.f32 0.0, %v5797
  %v5799 = vpop.f32.mrb[0].mxu0
  %5800 = vmatprep.mubr.bf16.mxu0 0
  %5801 = vmatmul.mubr.bf16.gmra.mrb[0].mxu0 %v4538
  %v5802 = vpop.f32.mrb[0].mxu0
  %v5803 = vadd.f32 0.0, %v5802
  %v5804 = vpop.f32.mrb[0].mxu0
  %v5805 = vpop.f32.mrb[0].mxu0
  %v5806 = vadd.f32 0.0, %v5805
  %v5807 = vpop.f32.mrb[0].mxu0
  %5808 = vmatprep.mubr.bf16.mxu0 0
  %5809 = vmatmul.mubr.bf16.gmra.mrb[0].mxu0 %v4541
  %v5810 = vpop.f32.mrb[0].mxu0
  %v5811 = vadd.f32 0.0, %v5810
  %v5812 = vpop.f32.mrb[0].mxu0
  %v5813 = vpop.f32.mrb[0].mxu0
  %v5814 = vadd.f32 0.0, %v5813
  %v5815 = vpop.f32.mrb[0].mxu0
  %5816 = vmatprep.mubr.bf16.mxu0 0
  %5817 = vmatmul.mubr.bf16.gmra.mrb[0].mxu0 %v4544
  %v5818 = vpop.f32.mrb[0].mxu0
  %v5819 = vadd.f32 0.0, %v5818
  %v5820 = vpop.f32.mrb[0].mxu0
  %v5821 = vpop.f32.mrb[0].mxu0
  %v5822 = vadd.f32 0.0, %v5821
  %v5823 = vpop.f32.mrb[0].mxu0
  %5824 = vmatprep.mubr.bf16.mxu0 0
  %5825 = vmatmul.mubr.bf16.gmra.mrb[0].mxu0 %v5736
  %v5826 = vpop.f32.mrb[0].mxu0
  %v5827 = vadd.f32 0.0, %v5826
  %v5828 = vpop.f32.mrb[0].mxu0
  %v5829 = vpop.f32.mrb[0].mxu0
  %v5830 = vadd.f32 0.0, %v5829
  %v5831 = vpop.f32.mrb[0].mxu0
  %5832 = vmatprep.mubr.bf16.mxu0 0
  %5833 = vmatmul.mubr.bf16.gmra.mrb[0].mxu0 %v5739
  %v5834 = vpop.f32.mrb[0].mxu0
  %v5835 = vadd.f32 0.0, %v5834
  %v5836 = vpop.f32.mrb[0].mxu0
  %v5837 = vpop.f32.mrb[0].mxu0
  %v5838 = vadd.f32 0.0, %v5837
  %v5839 = vpop.f32.mrb[0].mxu0
  %5840 = vmatprep.mubr.bf16.mxu0 0
  %5841 = vmatmul.mubr.bf16.gmra.mrb[0].mxu0 %v5742
  %v5842 = vpop.f32.mrb[0].mxu0
  %v5843 = vadd.f32 0.0, %v5842
  %v5844 = vpop.f32.mrb[0].mxu0
  %v5845 = vpop.f32.mrb[0].mxu0
  %v5846 = vadd.f32 0.0, %v5845
  %v5847 = vpop.f32.mrb[0].mxu0
  %5848 = vdwg.mxu0
  %v5849 = vadd.f32 %v5700, %v5779
  %v5850 = vadd.f32 %v5701, %v5782
  %v5851 = vadd.f32 %v5702, %v5787
  %v5852 = vadd.f32 %v5703, %v5790
  %v5853 = vadd.f32 %v5704, %v5795
  %v5854 = vadd.f32 %v5705, %v5798
  %v5855 = vadd.f32 %v5706, %v5803
  %v5856 = vadd.f32 %v5707, %v5806
  %v5857 = vadd.f32 %v5708, %v5811
  %v5858 = vadd.f32 %v5709, %v5814
  %v5859 = vadd.f32 %v5710, %v5819
  %v5860 = vadd.f32 %v5711, %v5822
  %v5861 = vadd.f32 %v5712, %v5827
  %v5862 = vadd.f32 %v5713, %v5830
  %v5863 = vadd.f32 %v5714, %v5835
  %v5864 = vadd.f32 %v5715, %v5838
  %v5865 = vadd.f32 %v5716, %v5843
  %v5866 = vadd.f32 %v5717, %v5846
  %s5867 = scalar_lea.vmem %s3, 208
  %v5868 = vld [vmem:[%s5867] sm:$0xf]
  %v5869 = vld [vmem:[%s5867 + $0x4] sm:$0xf]
  %v5870 = vld [vmem:[%s5867 + $0x8] sm:$0xf]
  %v5871 = vld [vmem:[%s5867 + $0xc] sm:$0xf]
  %v5876 = vunpack.c.l.b16 %v5868
  %v5877 = vunpack.c.l.b16 %v5869
  %v5878 = vunpack.c.l.b16 %v5870
  %v5879 = vunpack.c.l.b16 %v5871
  %v5880 = vpack.c.b16 %v5877, %v5876
  %v5881 = vpack.c.b16 %v5879, %v5878
  %v5885 = vsel %vm3927, %v3899, 0
  %v5888 = vsel %vm3927, %v3901, 0
  %v5891 = vsel %vm3927, %v3903, 0
  %5893 = vmatprep.subr.bf16.mxu0 0
  %5894 = vmatpush1.bf16.msra.mxu0 %v5880
  %5895 = vmatprep.subr.bf16.mxu0 0
  %5896 = vmatpush1.bf16.msra.mxu0 %v5881
  %5897 = vmatprep.subr.bf16.mxu0 0
  %5898 = vmatpush1.bf16.msra.mxu0 0
  %5899 = vmatprep.subr.bf16.mxu0 0
  %5900 = vmatpush1.bf16.msra.mxu0 0
  %5901 = vmatprep.subr.bf16.mxu0 0
  %5902 = vmatpush1.bf16.msra.mxu0 0
  %5903 = vmatprep.subr.bf16.mxu0 0
  %5904 = vmatpush1.bf16.msra.mxu0 0
  %5905 = vmatprep.subr.bf16.mxu0 0
  %5906 = vmatpush1.bf16.msra.mxu0 0
  %5907 = vmatprep.subr.bf16.mxu0 0
  %5908 = vmatpush1.bf16.msra.mxu0 0
  %5909 = vmatprep.subr.bf16.mxu0 0
  %5910 = vmatpush1.bf16.msra.mxu0 0
  %5911 = vmatprep.subr.bf16.mxu0 0
  %5912 = vmatpush1.bf16.msra.mxu0 0
  %5913 = vmatprep.subr.bf16.mxu0 0
  %5914 = vmatpush1.bf16.msra.mxu0 0
  %5915 = vmatprep.subr.bf16.mxu0 0
  %5916 = vmatpush1.bf16.msra.mxu0 0
  %5917 = vmatprep.subr.bf16.mxu0 0
  %5918 = vmatpush1.bf16.msra.mxu0 0
  %5919 = vmatprep.subr.bf16.mxu0 0
  %5920 = vmatpush1.bf16.msra.mxu0 0
  %5921 = vmatprep.subr.bf16.mxu0 0
  %5922 = vmatpush1.bf16.msra.mxu0 0
  %5923 = vmatprep.subr.bf16.mxu0 0
  %5924 = vmatpush1.bf16.msra.mxu0 0
  %5925 = vmatprep.mubr.bf16.mxu0 0
  %5926 = vmatmul.mubr.bf16.gmra.mrb[0].mxu0 %v4696
  %v5927 = vpop.f32.mrb[0].mxu0
  %v5928 = vadd.f32 0.0, %v5927
  %v5929 = vpop.f32.mrb[0].mxu0
  %v5930 = vpop.f32.mrb[0].mxu0
  %v5931 = vadd.f32 0.0, %v5930
  %v5932 = vpop.f32.mrb[0].mxu0
  %5933 = vmatprep.mubr.bf16.mxu0 0
  %5934 = vmatmul.mubr.bf16.gmra.mrb[0].mxu0 %v4699
  %v5935 = vpop.f32.mrb[0].mxu0
  %v5936 = vadd.f32 0.0, %v5935
  %v5937 = vpop.f32.mrb[0].mxu0
  %v5938 = vpop.f32.mrb[0].mxu0
  %v5939 = vadd.f32 0.0, %v5938
  %v5940 = vpop.f32.mrb[0].mxu0
  %5941 = vmatprep.mubr.bf16.mxu0 0
  %5942 = vmatmul.mubr.bf16.gmra.mrb[0].mxu0 %v4702
  %v5943 = vpop.f32.mrb[0].mxu0
  %v5944 = vadd.f32 0.0, %v5943
  %v5945 = vpop.f32.mrb[0].mxu0
  %v5946 = vpop.f32.mrb[0].mxu0
  %v5947 = vadd.f32 0.0, %v5946
  %v5948 = vpop.f32.mrb[0].mxu0
  %5949 = vmatprep.mubr.bf16.mxu0 0
  %5950 = vmatmul.mubr.bf16.gmra.mrb[0].mxu0 %v4705
  %v5951 = vpop.f32.mrb[0].mxu0
  %v5952 = vadd.f32 0.0, %v5951
  %v5953 = vpop.f32.mrb[0].mxu0
  %v5954 = vpop.f32.mrb[0].mxu0
  %v5955 = vadd.f32 0.0, %v5954
  %v5956 = vpop.f32.mrb[0].mxu0
  %5957 = vmatprep.mubr.bf16.mxu0 0
  %5958 = vmatmul.mubr.bf16.gmra.mrb[0].mxu0 %v4708
  %v5959 = vpop.f32.mrb[0].mxu0
  %v5960 = vadd.f32 0.0, %v5959
  %v5961 = vpop.f32.mrb[0].mxu0
  %v5962 = vpop.f32.mrb[0].mxu0
  %v5963 = vadd.f32 0.0, %v5962
  %v5964 = vpop.f32.mrb[0].mxu0
  %5965 = vmatprep.mubr.bf16.mxu0 0
  %5966 = vmatmul.mubr.bf16.gmra.mrb[0].mxu0 %v4711
  %v5967 = vpop.f32.mrb[0].mxu0
  %v5968 = vadd.f32 0.0, %v5967
  %v5969 = vpop.f32.mrb[0].mxu0
  %v5970 = vpop.f32.mrb[0].mxu0
  %v5971 = vadd.f32 0.0, %v5970
  %v5972 = vpop.f32.mrb[0].mxu0
  %5973 = vmatprep.mubr.bf16.mxu0 0
  %5974 = vmatmul.mubr.bf16.gmra.mrb[0].mxu0 %v5885
  %v5975 = vpop.f32.mrb[0].mxu0
  %v5976 = vadd.f32 0.0, %v5975
  %v5977 = vpop.f32.mrb[0].mxu0
  %v5978 = vpop.f32.mrb[0].mxu0
  %v5979 = vadd.f32 0.0, %v5978
  %v5980 = vpop.f32.mrb[0].mxu0
  %5981 = vmatprep.mubr.bf16.mxu0 0
  %5982 = vmatmul.mubr.bf16.gmra.mrb[0].mxu0 %v5888
  %v5983 = vpop.f32.mrb[0].mxu0
  %v5984 = vadd.f32 0.0, %v5983
  %v5985 = vpop.f32.mrb[0].mxu0
  %v5986 = vpop.f32.mrb[0].mxu0
  %v5987 = vadd.f32 0.0, %v5986
  %v5988 = vpop.f32.mrb[0].mxu0
  %5989 = vmatprep.mubr.bf16.mxu0 0
  %5990 = vmatmul.mubr.bf16.gmra.mrb[0].mxu0 %v5891
  %v5991 = vpop.f32.mrb[0].mxu0
  %v5992 = vadd.f32 0.0, %v5991
  %v5993 = vpop.f32.mrb[0].mxu0
  %v5994 = vpop.f32.mrb[0].mxu0
  %v5995 = vadd.f32 0.0, %v5994
  %v5996 = vpop.f32.mrb[0].mxu0
  %5997 = vdwg.mxu0
  %v5998 = vadd.f32 %v5849, %v5928
  %v5999 = vadd.f32 %v5850, %v5931
  %v6000 = vadd.f32 %v5851, %v5936
  %v6001 = vadd.f32 %v5852, %v5939
  %v6002 = vadd.f32 %v5853, %v5944
  %v6003 = vadd.f32 %v5854, %v5947
  %v6004 = vadd.f32 %v5855, %v5952
  %v6005 = vadd.f32 %v5856, %v5955
  %v6006 = vadd.f32 %v5857, %v5960
  %v6007 = vadd.f32 %v5858, %v5963
  %v6008 = vadd.f32 %v5859, %v5968
  %v6009 = vadd.f32 %v5860, %v5971
  %v6010 = vadd.f32 %v5861, %v5976
  %v6011 = vadd.f32 %v5862, %v5979
  %v6012 = vadd.f32 %v5863, %v5984
  %v6013 = vadd.f32 %v5864, %v5987
  %v6014 = vadd.f32 %v5865, %v5992
  %v6015 = vadd.f32 %v5866, %v5995
  %s6016 = scalar_lea.vmem %s3, 224
  %v6017 = vld [vmem:[%s6016] sm:$0xf]
  %v6018 = vld [vmem:[%s6016 + $0x4] sm:$0xf]
  %v6019 = vld [vmem:[%s6016 + $0x8] sm:$0xf]
  %v6020 = vld [vmem:[%s6016 + $0xc] sm:$0xf]
  %v6025 = vunpack.c.l.b16 %v6017
  %v6026 = vunpack.c.l.b16 %v6018
  %v6027 = vunpack.c.l.b16 %v6019
  %v6028 = vunpack.c.l.b16 %v6020
  %v6029 = vpack.c.b16 %v6026, %v6025
  %v6030 = vpack.c.b16 %v6028, %v6027
  %v6034 = vsel %vm3927, %v3904, 0
  %6036 = vmatprep.subr.bf16.mxu0 0
  %6037 = vmatpush1.bf16.msra.mxu0 %v6029
  %6038 = vmatprep.subr.bf16.mxu0 0
  %6039 = vmatpush1.bf16.msra.mxu0 %v6030
  %6040 = vmatprep.subr.bf16.mxu0 0
  %6041 = vmatpush1.bf16.msra.mxu0 0
  %6042 = vmatprep.subr.bf16.mxu0 0
  %6043 = vmatpush1.bf16.msra.mxu0 0
  %6044 = vmatprep.subr.bf16.mxu0 0
  %6045 = vmatpush1.bf16.msra.mxu0 0
  %6046 = vmatprep.subr.bf16.mxu0 0
  %6047 = vmatpush1.bf16.msra.mxu0 0
  %6048 = vmatprep.subr.bf16.mxu0 0
  %6049 = vmatpush1.bf16.msra.mxu0 0
  %6050 = vmatprep.subr.bf16.mxu0 0
  %6051 = vmatpush1.bf16.msra.mxu0 0
  %6052 = vmatprep.subr.bf16.mxu0 0
  %6053 = vmatpush1.bf16.msra.mxu0 0
  %6054 = vmatprep.subr.bf16.mxu0 0
  %6055 = vmatpush1.bf16.msra.mxu0 0
  %6056 = vmatprep.subr.bf16.mxu0 0
  %6057 = vmatpush1.bf16.msra.mxu0 0
  %6058 = vmatprep.subr.bf16.mxu0 0
  %6059 = vmatpush1.bf16.msra.mxu0 0
  %6060 = vmatprep.subr.bf16.mxu0 0
  %6061 = vmatpush1.bf16.msra.mxu0 0
  %6062 = vmatprep.subr.bf16.mxu0 0
  %6063 = vmatpush1.bf16.msra.mxu0 0
  %6064 = vmatprep.subr.bf16.mxu0 0
  %6065 = vmatpush1.bf16.msra.mxu0 0
  %6066 = vmatprep.subr.bf16.mxu0 0
  %6067 = vmatpush1.bf16.msra.mxu0 0
  %6068 = vmatprep.mubr.bf16.mxu0 0
  %6069 = vmatmul.mubr.bf16.gmra.mrb[0].mxu0 %v4532
  %v6070 = vpop.f32.mrb[0].mxu0
  %v6071 = vadd.f32 0.0, %v6070
  %v6072 = vpop.f32.mrb[0].mxu0
  %v6073 = vpop.f32.mrb[0].mxu0
  %v6074 = vadd.f32 0.0, %v6073
  %v6075 = vpop.f32.mrb[0].mxu0
  %6076 = vmatprep.mubr.bf16.mxu0 0
  %6077 = vmatmul.mubr.bf16.gmra.mrb[0].mxu0 %v4535
  %v6078 = vpop.f32.mrb[0].mxu0
  %v6079 = vadd.f32 0.0, %v6078
  %v6080 = vpop.f32.mrb[0].mxu0
  %v6081 = vpop.f32.mrb[0].mxu0
  %v6082 = vadd.f32 0.0, %v6081
  %v6083 = vpop.f32.mrb[0].mxu0
  %6084 = vmatprep.mubr.bf16.mxu0 0
  %6085 = vmatmul.mubr.bf16.gmra.mrb[0].mxu0 %v4857
  %v6086 = vpop.f32.mrb[0].mxu0
  %v6087 = vadd.f32 0.0, %v6086
  %v6088 = vpop.f32.mrb[0].mxu0
  %v6089 = vpop.f32.mrb[0].mxu0
  %v6090 = vadd.f32 0.0, %v6089
  %v6091 = vpop.f32.mrb[0].mxu0
  %6092 = vmatprep.mubr.bf16.mxu0 0
  %6093 = vmatmul.mubr.bf16.gmra.mrb[0].mxu0 %v4541
  %v6094 = vpop.f32.mrb[0].mxu0
  %v6095 = vadd.f32 0.0, %v6094
  %v6096 = vpop.f32.mrb[0].mxu0
  %v6097 = vpop.f32.mrb[0].mxu0
  %v6098 = vadd.f32 0.0, %v6097
  %v6099 = vpop.f32.mrb[0].mxu0
  %6100 = vmatprep.mubr.bf16.mxu0 0
  %6101 = vmatmul.mubr.bf16.gmra.mrb[0].mxu0 %v4544
  %v6102 = vpop.f32.mrb[0].mxu0
  %v6103 = vadd.f32 0.0, %v6102
  %v6104 = vpop.f32.mrb[0].mxu0
  %v6105 = vpop.f32.mrb[0].mxu0
  %v6106 = vadd.f32 0.0, %v6105
  %v6107 = vpop.f32.mrb[0].mxu0
  %6108 = vmatprep.mubr.bf16.mxu0 0
  %6109 = vmatmul.mubr.bf16.gmra.mrb[0].mxu0 %v4860
  %v6110 = vpop.f32.mrb[0].mxu0
  %v6111 = vadd.f32 0.0, %v6110
  %v6112 = vpop.f32.mrb[0].mxu0
  %v6113 = vpop.f32.mrb[0].mxu0
  %v6114 = vadd.f32 0.0, %v6113
  %v6115 = vpop.f32.mrb[0].mxu0
  %6116 = vmatprep.mubr.bf16.mxu0 0
  %6117 = vmatmul.mubr.bf16.gmra.mrb[0].mxu0 %v5739
  %v6118 = vpop.f32.mrb[0].mxu0
  %v6119 = vadd.f32 0.0, %v6118
  %v6120 = vpop.f32.mrb[0].mxu0
  %v6121 = vpop.f32.mrb[0].mxu0
  %v6122 = vadd.f32 0.0, %v6121
  %v6123 = vpop.f32.mrb[0].mxu0
  %6124 = vmatprep.mubr.bf16.mxu0 0
  %6125 = vmatmul.mubr.bf16.gmra.mrb[0].mxu0 %v5742
  %v6126 = vpop.f32.mrb[0].mxu0
  %v6127 = vadd.f32 0.0, %v6126
  %v6128 = vpop.f32.mrb[0].mxu0
  %v6129 = vpop.f32.mrb[0].mxu0
  %v6130 = vadd.f32 0.0, %v6129
  %v6131 = vpop.f32.mrb[0].mxu0
  %6132 = vmatprep.mubr.bf16.mxu0 0
  %6133 = vmatmul.mubr.bf16.gmra.mrb[0].mxu0 %v6034
  %v6134 = vpop.f32.mrb[0].mxu0
  %v6135 = vadd.f32 0.0, %v6134
  %v6136 = vpop.f32.mrb[0].mxu0
  %v6137 = vpop.f32.mrb[0].mxu0
  %v6138 = vadd.f32 0.0, %v6137
  %v6139 = vpop.f32.mrb[0].mxu0
  %6140 = vdwg.mxu0
  %v6141 = vadd.f32 %v5998, %v6071
  %v6142 = vadd.f32 %v5999, %v6074
  %v6143 = vadd.f32 %v6000, %v6079
  %v6144 = vadd.f32 %v6001, %v6082
  %v6145 = vadd.f32 %v6002, %v6087
  %v6146 = vadd.f32 %v6003, %v6090
  %v6147 = vadd.f32 %v6004, %v6095
  %v6148 = vadd.f32 %v6005, %v6098
  %v6149 = vadd.f32 %v6006, %v6103
  %v6150 = vadd.f32 %v6007, %v6106
  %v6151 = vadd.f32 %v6008, %v6111
  %v6152 = vadd.f32 %v6009, %v6114
  %v6153 = vadd.f32 %v6010, %v6119
  %v6154 = vadd.f32 %v6011, %v6122
  %v6155 = vadd.f32 %v6012, %v6127
  %v6156 = vadd.f32 %v6013, %v6130
  %v6157 = vadd.f32 %v6014, %v6135
  %v6158 = vadd.f32 %v6015, %v6138
  %s6159 = scalar_lea.vmem %s3, 240
  %v6160 = vld [vmem:[%s6159] sm:$0xf]
  %v6161 = vld [vmem:[%s6159 + $0x4] sm:$0xf]
  %v6162 = vld [vmem:[%s6159 + $0x8] sm:$0xf]
  %v6163 = vld [vmem:[%s6159 + $0xc] sm:$0xf]
  %v6168 = vunpack.c.l.b16 %v6160
  %v6169 = vunpack.c.l.b16 %v6161
  %v6170 = vunpack.c.l.b16 %v6162
  %v6171 = vunpack.c.l.b16 %v6163
  %v6172 = vpack.c.b16 %v6169, %v6168
  %v6173 = vpack.c.b16 %v6171, %v6170
  %v6177 = vsel %vm3927, %v3905, 0
  %6179 = vmatprep.subr.bf16.mxu0 0
  %6180 = vmatpush1.bf16.msra.mxu0 %v6172
  %6181 = vmatprep.subr.bf16.mxu0 0
  %6182 = vmatpush1.bf16.msra.mxu0 %v6173
  %6183 = vmatprep.subr.bf16.mxu0 0
  %6184 = vmatpush1.bf16.msra.mxu0 0
  %6185 = vmatprep.subr.bf16.mxu0 0
  %6186 = vmatpush1.bf16.msra.mxu0 0
  %6187 = vmatprep.subr.bf16.mxu0 0
  %6188 = vmatpush1.bf16.msra.mxu0 0
  %6189 = vmatprep.subr.bf16.mxu0 0
  %6190 = vmatpush1.bf16.msra.mxu0 0
  %6191 = vmatprep.subr.bf16.mxu0 0
  %6192 = vmatpush1.bf16.msra.mxu0 0
  %6193 = vmatprep.subr.bf16.mxu0 0
  %6194 = vmatpush1.bf16.msra.mxu0 0
  %6195 = vmatprep.subr.bf16.mxu0 0
  %6196 = vmatpush1.bf16.msra.mxu0 0
  %6197 = vmatprep.subr.bf16.mxu0 0
  %6198 = vmatpush1.bf16.msra.mxu0 0
  %6199 = vmatprep.subr.bf16.mxu0 0
  %6200 = vmatpush1.bf16.msra.mxu0 0
  %6201 = vmatprep.subr.bf16.mxu0 0
  %6202 = vmatpush1.bf16.msra.mxu0 0
  %6203 = vmatprep.subr.bf16.mxu0 0
  %6204 = vmatpush1.bf16.msra.mxu0 0
  %6205 = vmatprep.subr.bf16.mxu0 0
  %6206 = vmatpush1.bf16.msra.mxu0 0
  %6207 = vmatprep.subr.bf16.mxu0 0
  %6208 = vmatpush1.bf16.msra.mxu0 0
  %6209 = vmatprep.subr.bf16.mxu0 0
  %6210 = vmatpush1.bf16.msra.mxu0 0
  %6211 = vmatprep.mubr.bf16.mxu0 0
  %6212 = vmatmul.mubr.bf16.gmra.mrb[0].mxu0 %v4699
  %v6213 = vpop.f32.mrb[0].mxu0
  %v6214 = vadd.f32 0.0, %v6213
  %v6215 = vpop.f32.mrb[0].mxu0
  %v6216 = vpop.f32.mrb[0].mxu0
  %v6217 = vadd.f32 0.0, %v6216
  %v6218 = vpop.f32.mrb[0].mxu0
  %6219 = vmatprep.mubr.bf16.mxu0 0
  %6220 = vmatmul.mubr.bf16.gmra.mrb[0].mxu0 %v4702
  %v6221 = vpop.f32.mrb[0].mxu0
  %v6222 = vadd.f32 0.0, %v6221
  %v6223 = vpop.f32.mrb[0].mxu0
  %v6224 = vpop.f32.mrb[0].mxu0
  %v6225 = vadd.f32 0.0, %v6224
  %v6226 = vpop.f32.mrb[0].mxu0
  %6227 = vmatprep.mubr.bf16.mxu0 0
  %6228 = vmatmul.mubr.bf16.gmra.mrb[0].mxu0 %v5006
  %v6229 = vpop.f32.mrb[0].mxu0
  %v6230 = vadd.f32 0.0, %v6229
  %v6231 = vpop.f32.mrb[0].mxu0
  %v6232 = vpop.f32.mrb[0].mxu0
  %v6233 = vadd.f32 0.0, %v6232
  %v6234 = vpop.f32.mrb[0].mxu0
  %6235 = vmatprep.mubr.bf16.mxu0 0
  %6236 = vmatmul.mubr.bf16.gmra.mrb[0].mxu0 %v4708
  %v6237 = vpop.f32.mrb[0].mxu0
  %v6238 = vadd.f32 0.0, %v6237
  %v6239 = vpop.f32.mrb[0].mxu0
  %v6240 = vpop.f32.mrb[0].mxu0
  %v6241 = vadd.f32 0.0, %v6240
  %v6242 = vpop.f32.mrb[0].mxu0
  %6243 = vmatprep.mubr.bf16.mxu0 0
  %6244 = vmatmul.mubr.bf16.gmra.mrb[0].mxu0 %v4711
  %v6245 = vpop.f32.mrb[0].mxu0
  %v6246 = vadd.f32 0.0, %v6245
  %v6247 = vpop.f32.mrb[0].mxu0
  %v6248 = vpop.f32.mrb[0].mxu0
  %v6249 = vadd.f32 0.0, %v6248
  %v6250 = vpop.f32.mrb[0].mxu0
  %6251 = vmatprep.mubr.bf16.mxu0 0
  %6252 = vmatmul.mubr.bf16.gmra.mrb[0].mxu0 %v5009
  %v6253 = vpop.f32.mrb[0].mxu0
  %v6254 = vadd.f32 0.0, %v6253
  %v6255 = vpop.f32.mrb[0].mxu0
  %v6256 = vpop.f32.mrb[0].mxu0
  %v6257 = vadd.f32 0.0, %v6256
  %v6258 = vpop.f32.mrb[0].mxu0
  %6259 = vmatprep.mubr.bf16.mxu0 0
  %6260 = vmatmul.mubr.bf16.gmra.mrb[0].mxu0 %v5888
  %v6261 = vpop.f32.mrb[0].mxu0
  %v6262 = vadd.f32 0.0, %v6261
  %v6263 = vpop.f32.mrb[0].mxu0
  %v6264 = vpop.f32.mrb[0].mxu0
  %v6265 = vadd.f32 0.0, %v6264
  %v6266 = vpop.f32.mrb[0].mxu0
  %6267 = vmatprep.mubr.bf16.mxu0 0
  %6268 = vmatmul.mubr.bf16.gmra.mrb[0].mxu0 %v5891
  %v6269 = vpop.f32.mrb[0].mxu0
  %v6270 = vadd.f32 0.0, %v6269
  %v6271 = vpop.f32.mrb[0].mxu0
  %v6272 = vpop.f32.mrb[0].mxu0
  %v6273 = vadd.f32 0.0, %v6272
  %v6274 = vpop.f32.mrb[0].mxu0
  %6275 = vmatprep.mubr.bf16.mxu0 0
  %6276 = vmatmul.mubr.bf16.gmra.mrb[0].mxu0 %v6177
  %v6277 = vpop.f32.mrb[0].mxu0
  %v6278 = vadd.f32 0.0, %v6277
  %v6279 = vpop.f32.mrb[0].mxu0
  %v6280 = vpop.f32.mrb[0].mxu0
  %v6281 = vadd.f32 0.0, %v6280
  %v6282 = vpop.f32.mrb[0].mxu0
  %6283 = vdwg.mxu0
  %v6284 = vadd.f32 %v6141, %v6214
  %v6285 = vadd.f32 %v6142, %v6217
  %v6286 = vadd.f32 %v6143, %v6222
  %v6287 = vadd.f32 %v6144, %v6225
  %v6288 = vadd.f32 %v6145, %v6230
  %v6289 = vadd.f32 %v6146, %v6233
  %v6290 = vadd.f32 %v6147, %v6238
  %v6291 = vadd.f32 %v6148, %v6241
  %v6292 = vadd.f32 %v6149, %v6246
  %v6293 = vadd.f32 %v6150, %v6249
  %v6294 = vadd.f32 %v6151, %v6254
  %v6295 = vadd.f32 %v6152, %v6257
  %v6296 = vadd.f32 %v6153, %v6262
  %v6297 = vadd.f32 %v6154, %v6265
  %v6298 = vadd.f32 %v6155, %v6270
  %v6299 = vadd.f32 %v6156, %v6273
  %v6300 = vadd.f32 %v6157, %v6278
  %v6301 = vadd.f32 %v6158, %v6281
  %v6302 = vld [vmem:[%s4] sm:$0x1]
  %v6304 = vlaneseq
  %v6305 = vshrl.u32 %v6304, 7
  %v6306 = vsub.s32 0, %v6305
  %v6307 = vrot.slane %v6302, %v6306
  %v6309 = vadd.f32 %v6284, %v6307
  %v6310 = vadd.f32 %v6285, %v6307
  %v6311 = vadd.f32 %v6286, %v6307
  %v6312 = vadd.f32 %v6287, %v6307
  %v6313 = vadd.f32 %v6288, %v6307
  %v6314 = vadd.f32 %v6289, %v6307
  %v6315 = vadd.f32 %v6290, %v6307
  %v6316 = vadd.f32 %v6291, %v6307
  %v6317 = vadd.f32 %v6292, %v6307
  %v6318 = vadd.f32 %v6293, %v6307
  %v6319 = vadd.f32 %v6294, %v6307
  %v6320 = vadd.f32 %v6295, %v6307
  %v6321 = vadd.f32 %v6296, %v6307
  %v6322 = vadd.f32 %v6297, %v6307
  %v6323 = vadd.f32 %v6298, %v6307
  %v6324 = vadd.f32 %v6299, %v6307
  %v6325 = vadd.f32 %v6300, %v6307
  %v6326 = vadd.f32 %v6301, %v6307
  %v6327 = vmax.f32 %v6309, 0.0
  %v6328 = vmax.f32 %v6310, 0.0
  %v6329 = vmax.f32 %v6311, 0.0
  %v6330 = vmax.f32 %v6312, 0.0
  %v6331 = vmax.f32 %v6313, 0.0
  %v6332 = vmax.f32 %v6314, 0.0
  %v6333 = vmax.f32 %v6315, 0.0
  %v6334 = vmax.f32 %v6316, 0.0
  %v6335 = vmax.f32 %v6317, 0.0
  %v6336 = vmax.f32 %v6318, 0.0
  %v6337 = vmax.f32 %v6319, 0.0
  %v6338 = vmax.f32 %v6320, 0.0
  %v6339 = vmax.f32 %v6321, 0.0
  %v6340 = vmax.f32 %v6322, 0.0
  %v6341 = vmax.f32 %v6323, 0.0
  %v6342 = vmax.f32 %v6324, 0.0
  %v6343 = vmax.f32 %v6325, 0.0
  %v6344 = vmax.f32 %v6326, 0.0
  %v6345 = vpack.c.bf16 %v6328, %v6327
  %v6346 = vpack.c.bf16 %v6330, %v6329
  %v6347 = vpack.c.bf16 %v6332, %v6331
  %v6348 = vpack.c.bf16 %v6334, %v6333
  %v6349 = vpack.c.bf16 %v6336, %v6335
  %v6350 = vpack.c.bf16 %v6338, %v6337
  %v6351 = vpack.c.bf16 %v6340, %v6339
  %v6352 = vpack.c.bf16 %v6342, %v6341
  %v6353 = vpack.c.bf16 %v6344, %v6343
  %v6354 = vld [vmem:[%s5] sm:$0xf]
  %v6355 = vld [vmem:[%s5 + $0x4] sm:$0xf]
  %v6356 = vld [vmem:[%s5 + $0x8] sm:$0xf]
  %v6357 = vld [vmem:[%s5 + $0xc] sm:$0xf]
  %v6358 = vld [vmem:[%s5 + $0x10] sm:$0xf]
  %v6359 = vld [vmem:[%s5 + $0x14] sm:$0xf]
  %v6360 = vld [vmem:[%s5 + $0x18] sm:$0xf]
  %v6361 = vld [vmem:[%s5 + $0x1c] sm:$0xf]
  %s6362 = scalar_lea.vmem %s5, 32
  %v6363 = vld [vmem:[%s6362] sm:$0xf]
  %v6364 = vld [vmem:[%s6362 + $0x4] sm:$0xf]
  %v6365 = vld [vmem:[%s6362 + $0x8] sm:$0xf]
  %v6366 = vld [vmem:[%s6362 + $0xc] sm:$0xf]
  %v6367 = vld [vmem:[%s6362 + $0x10] sm:$0xf]
  %v6368 = vld [vmem:[%s6362 + $0x14] sm:$0xf]
  %v6369 = vld [vmem:[%s6362 + $0x18] sm:$0xf]
  %v6370 = vld [vmem:[%s6362 + $0x1c] sm:$0xf]
  %v6379 = vunpack.c.l.b16 %v6363
  %v6380 = vunpack.c.l.b16 %v6364
  %v6381 = vunpack.c.l.b16 %v6365
  %v6382 = vunpack.c.l.b16 %v6366
  %v6383 = vunpack.c.l.b16 %v6367
  %v6384 = vunpack.c.l.b16 %v6368
  %v6385 = vunpack.c.l.b16 %v6369
  %v6386 = vunpack.c.l.b16 %v6370
  %v6387 = vpack.c.b16 %v6380, %v6379
  %v6388 = vpack.c.b16 %v6382, %v6381
  %v6389 = vpack.c.b16 %v6384, %v6383
  %v6390 = vpack.c.b16 %v6386, %v6385
  %v6396 = vsel %vm724, %v6346, 0
  %6398 = vmatprep.subr.bf16.mxu0 0
  %6399 = vmatpush1.bf16.msra.mxu0 %v6387
  %6400 = vmatprep.subr.bf16.mxu0 0
  %6401 = vmatpush1.bf16.msra.mxu0 %v6388
  %6402 = vmatprep.subr.bf16.mxu0 0
  %6403 = vmatpush1.bf16.msra.mxu0 %v6389
  %6404 = vmatprep.subr.bf16.mxu0 0
  %6405 = vmatpush1.bf16.msra.mxu0 %v6390
  %6406 = vmatprep.subr.bf16.mxu0 0
  %6407 = vmatpush1.bf16.msra.mxu0 0
  %6408 = vmatprep.subr.bf16.mxu0 0
  %6409 = vmatpush1.bf16.msra.mxu0 0
  %6410 = vmatprep.subr.bf16.mxu0 0
  %6411 = vmatpush1.bf16.msra.mxu0 0
  %6412 = vmatprep.subr.bf16.mxu0 0
  %6413 = vmatpush1.bf16.msra.mxu0 0
  %6414 = vmatprep.subr.bf16.mxu0 0
  %6415 = vmatpush1.bf16.msra.mxu0 0
  %6416 = vmatprep.subr.bf16.mxu0 0
  %6417 = vmatpush1.bf16.msra.mxu0 0
  %6418 = vmatprep.subr.bf16.mxu0 0
  %6419 = vmatpush1.bf16.msra.mxu0 0
  %6420 = vmatprep.subr.bf16.mxu0 0
  %6421 = vmatpush1.bf16.msra.mxu0 0
  %6422 = vmatprep.subr.bf16.mxu0 0
  %6423 = vmatpush1.bf16.msra.mxu0 0
  %6424 = vmatprep.subr.bf16.mxu0 0
  %6425 = vmatpush1.bf16.msra.mxu0 0
  %6426 = vmatprep.subr.bf16.mxu0 0
  %6427 = vmatpush1.bf16.msra.mxu0 0
  %6428 = vmatprep.subr.bf16.mxu0 0
  %6429 = vmatpush1.bf16.msra.mxu0 0
  %6430 = vmatprep.mubr.bf16.mxu0 0
  %6431 = vmatmul.mubr.bf16.gmra.mrb[0].mxu0 %v6396
  %v6432 = vpop.f32.mrb[0].mxu0
  %v6433 = vadd.f32 0.0, %v6432
  %v6434 = vpop.f32.mrb[0].mxu0
  %v6435 = vpop.f32.mrb[0].mxu0
  %v6436 = vadd.f32 0.0, %v6435
  %v6437 = vpop.f32.mrb[0].mxu0
  %6438 = vdwg.mxu0
  %v6447 = vunpack.c.l.b16 %v6354
  %v6448 = vunpack.c.l.b16 %v6355
  %v6449 = vunpack.c.l.b16 %v6356
  %v6450 = vunpack.c.l.b16 %v6357
  %v6451 = vunpack.c.l.b16 %v6358
  %v6452 = vunpack.c.l.b16 %v6359
  %v6453 = vunpack.c.l.b16 %v6360
  %v6454 = vunpack.c.l.b16 %v6361
  %v6455 = vpack.c.b16 %v6448, %v6447
  %v6456 = vpack.c.b16 %v6450, %v6449
  %v6457 = vpack.c.b16 %v6452, %v6451
  %v6458 = vpack.c.b16 %v6454, %v6453
  %v6464 = vsel %vm724, %v6345, 0
  %6466 = vmatprep.subr.bf16.mxu0 0
  %6467 = vmatpush1.bf16.msra.mxu0 %v6455
  %6468 = vmatprep.subr.bf16.mxu0 0
  %6469 = vmatpush1.bf16.msra.mxu0 %v6456
  %6470 = vmatprep.subr.bf16.mxu0 0
  %6471 = vmatpush1.bf16.msra.mxu0 %v6457
  %6472 = vmatprep.subr.bf16.mxu0 0
  %6473 = vmatpush1.bf16.msra.mxu0 %v6458
  %6474 = vmatprep.subr.bf16.mxu0 0
  %6475 = vmatpush1.bf16.msra.mxu0 0
  %6476 = vmatprep.subr.bf16.mxu0 0
  %6477 = vmatpush1.bf16.msra.mxu0 0
  %6478 = vmatprep.subr.bf16.mxu0 0
  %6479 = vmatpush1.bf16.msra.mxu0 0
  %6480 = vmatprep.subr.bf16.mxu0 0
  %6481 = vmatpush1.bf16.msra.mxu0 0
  %6482 = vmatprep.subr.bf16.mxu0 0
  %6483 = vmatpush1.bf16.msra.mxu0 0
  %6484 = vmatprep.subr.bf16.mxu0 0
  %6485 = vmatpush1.bf16.msra.mxu0 0
  %6486 = vmatprep.subr.bf16.mxu0 0
  %6487 = vmatpush1.bf16.msra.mxu0 0
  %6488 = vmatprep.subr.bf16.mxu0 0
  %6489 = vmatpush1.bf16.msra.mxu0 0
  %6490 = vmatprep.subr.bf16.mxu0 0
  %6491 = vmatpush1.bf16.msra.mxu0 0
  %6492 = vmatprep.subr.bf16.mxu0 0
  %6493 = vmatpush1.bf16.msra.mxu0 0
  %6494 = vmatprep.subr.bf16.mxu0 0
  %6495 = vmatpush1.bf16.msra.mxu0 0
  %6496 = vmatprep.subr.bf16.mxu0 0
  %6497 = vmatpush1.bf16.msra.mxu0 0
  %6498 = vmatprep.mubr.bf16.mxu0 0
  %6499 = vmatmul.mubr.bf16.gmra.mrb[0].mxu0 %v6464
  %v6500 = vpop.f32.mrb[0].mxu0
  %v6501 = vadd.f32 %v6433, %v6500
  %v6502 = vpop.f32.mrb[0].mxu0
  %v6503 = vpop.f32.mrb[0].mxu0
  %v6504 = vadd.f32 %v6436, %v6503
  %v6505 = vpop.f32.mrb[0].mxu0
  %6506 = vdwg.mxu0
  %s6507 = scalar_lea.vmem %s5, 64
  %v6508 = vld [vmem:[%s6507] sm:$0xf]
  %v6509 = vld [vmem:[%s6507 + $0x4] sm:$0xf]
  %v6510 = vld [vmem:[%s6507 + $0x8] sm:$0xf]
  %v6511 = vld [vmem:[%s6507 + $0xc] sm:$0xf]
  %v6512 = vld [vmem:[%s6507 + $0x10] sm:$0xf]
  %v6513 = vld [vmem:[%s6507 + $0x14] sm:$0xf]
  %v6514 = vld [vmem:[%s6507 + $0x18] sm:$0xf]
  %v6515 = vld [vmem:[%s6507 + $0x1c] sm:$0xf]
  %v6524 = vunpack.c.l.b16 %v6508
  %v6525 = vunpack.c.l.b16 %v6509
  %v6526 = vunpack.c.l.b16 %v6510
  %v6527 = vunpack.c.l.b16 %v6511
  %v6528 = vunpack.c.l.b16 %v6512
  %v6529 = vunpack.c.l.b16 %v6513
  %v6530 = vunpack.c.l.b16 %v6514
  %v6531 = vunpack.c.l.b16 %v6515
  %v6532 = vpack.c.b16 %v6525, %v6524
  %v6533 = vpack.c.b16 %v6527, %v6526
  %v6534 = vpack.c.b16 %v6529, %v6528
  %v6535 = vpack.c.b16 %v6531, %v6530
  %v6541 = vsel %vm724, %v6347, 0
  %6543 = vmatprep.subr.bf16.mxu0 0
  %6544 = vmatpush1.bf16.msra.mxu0 %v6532
  %6545 = vmatprep.subr.bf16.mxu0 0
  %6546 = vmatpush1.bf16.msra.mxu0 %v6533
  %6547 = vmatprep.subr.bf16.mxu0 0
  %6548 = vmatpush1.bf16.msra.mxu0 %v6534
  %6549 = vmatprep.subr.bf16.mxu0 0
  %6550 = vmatpush1.bf16.msra.mxu0 %v6535
  %6551 = vmatprep.subr.bf16.mxu0 0
  %6552 = vmatpush1.bf16.msra.mxu0 0
  %6553 = vmatprep.subr.bf16.mxu0 0
  %6554 = vmatpush1.bf16.msra.mxu0 0
  %6555 = vmatprep.subr.bf16.mxu0 0
  %6556 = vmatpush1.bf16.msra.mxu0 0
  %6557 = vmatprep.subr.bf16.mxu0 0
  %6558 = vmatpush1.bf16.msra.mxu0 0
  %6559 = vmatprep.subr.bf16.mxu0 0
  %6560 = vmatpush1.bf16.msra.mxu0 0
  %6561 = vmatprep.subr.bf16.mxu0 0
  %6562 = vmatpush1.bf16.msra.mxu0 0
  %6563 = vmatprep.subr.bf16.mxu0 0
  %6564 = vmatpush1.bf16.msra.mxu0 0
  %6565 = vmatprep.subr.bf16.mxu0 0
  %6566 = vmatpush1.bf16.msra.mxu0 0
  %6567 = vmatprep.subr.bf16.mxu0 0
  %6568 = vmatpush1.bf16.msra.mxu0 0
  %6569 = vmatprep.subr.bf16.mxu0 0
  %6570 = vmatpush1.bf16.msra.mxu0 0
  %6571 = vmatprep.subr.bf16.mxu0 0
  %6572 = vmatpush1.bf16.msra.mxu0 0
  %6573 = vmatprep.subr.bf16.mxu0 0
  %6574 = vmatpush1.bf16.msra.mxu0 0
  %6575 = vmatprep.mubr.bf16.mxu0 0
  %6576 = vmatmul.mubr.bf16.gmra.mrb[0].mxu0 %v6541
  %v6577 = vpop.f32.mrb[0].mxu0
  %v6578 = vadd.f32 0.0, %v6577
  %v6579 = vpop.f32.mrb[0].mxu0
  %v6580 = vpop.f32.mrb[0].mxu0
  %v6581 = vadd.f32 0.0, %v6580
  %v6582 = vpop.f32.mrb[0].mxu0
  %6583 = vdwg.mxu0
  %v6584 = vadd.f32 %v6501, %v6578
  %v6585 = vadd.f32 %v6504, %v6581
  %s6586 = scalar_lea.vmem %s5, 96
  %v6587 = vld [vmem:[%s6586] sm:$0xf]
  %v6588 = vld [vmem:[%s6586 + $0x4] sm:$0xf]
  %v6589 = vld [vmem:[%s6586 + $0x8] sm:$0xf]
  %v6590 = vld [vmem:[%s6586 + $0xc] sm:$0xf]
  %v6591 = vld [vmem:[%s6586 + $0x10] sm:$0xf]
  %v6592 = vld [vmem:[%s6586 + $0x14] sm:$0xf]
  %v6593 = vld [vmem:[%s6586 + $0x18] sm:$0xf]
  %v6594 = vld [vmem:[%s6586 + $0x1c] sm:$0xf]
  %v6603 = vunpack.c.l.b16 %v6587
  %v6604 = vunpack.c.l.b16 %v6588
  %v6605 = vunpack.c.l.b16 %v6589
  %v6606 = vunpack.c.l.b16 %v6590
  %v6607 = vunpack.c.l.b16 %v6591
  %v6608 = vunpack.c.l.b16 %v6592
  %v6609 = vunpack.c.l.b16 %v6593
  %v6610 = vunpack.c.l.b16 %v6594
  %v6611 = vpack.c.b16 %v6604, %v6603
  %v6612 = vpack.c.b16 %v6606, %v6605
  %v6613 = vpack.c.b16 %v6608, %v6607
  %v6614 = vpack.c.b16 %v6610, %v6609
  %v6620 = vsel %vm724, %v6348, 0
  %6622 = vmatprep.subr.bf16.mxu0 0
  %6623 = vmatpush1.bf16.msra.mxu0 %v6611
  %6624 = vmatprep.subr.bf16.mxu0 0
  %6625 = vmatpush1.bf16.msra.mxu0 %v6612
  %6626 = vmatprep.subr.bf16.mxu0 0
  %6627 = vmatpush1.bf16.msra.mxu0 %v6613
  %6628 = vmatprep.subr.bf16.mxu0 0
  %6629 = vmatpush1.bf16.msra.mxu0 %v6614
  %6630 = vmatprep.subr.bf16.mxu0 0
  %6631 = vmatpush1.bf16.msra.mxu0 0
  %6632 = vmatprep.subr.bf16.mxu0 0
  %6633 = vmatpush1.bf16.msra.mxu0 0
  %6634 = vmatprep.subr.bf16.mxu0 0
  %6635 = vmatpush1.bf16.msra.mxu0 0
  %6636 = vmatprep.subr.bf16.mxu0 0
  %6637 = vmatpush1.bf16.msra.mxu0 0
  %6638 = vmatprep.subr.bf16.mxu0 0
  %6639 = vmatpush1.bf16.msra.mxu0 0
  %6640 = vmatprep.subr.bf16.mxu0 0
  %6641 = vmatpush1.bf16.msra.mxu0 0
  %6642 = vmatprep.subr.bf16.mxu0 0
  %6643 = vmatpush1.bf16.msra.mxu0 0
  %6644 = vmatprep.subr.bf16.mxu0 0
  %6645 = vmatpush1.bf16.msra.mxu0 0
  %6646 = vmatprep.subr.bf16.mxu0 0
  %6647 = vmatpush1.bf16.msra.mxu0 0
  %6648 = vmatprep.subr.bf16.mxu0 0
  %6649 = vmatpush1.bf16.msra.mxu0 0
  %6650 = vmatprep.subr.bf16.mxu0 0
  %6651 = vmatpush1.bf16.msra.mxu0 0
  %6652 = vmatprep.subr.bf16.mxu0 0
  %6653 = vmatpush1.bf16.msra.mxu0 0
  %6654 = vmatprep.mubr.bf16.mxu0 0
  %6655 = vmatmul.mubr.bf16.gmra.mrb[0].mxu0 %v6620
  %v6656 = vpop.f32.mrb[0].mxu0
  %v6657 = vadd.f32 0.0, %v6656
  %v6658 = vpop.f32.mrb[0].mxu0
  %v6659 = vpop.f32.mrb[0].mxu0
  %v6660 = vadd.f32 0.0, %v6659
  %v6661 = vpop.f32.mrb[0].mxu0
  %6662 = vdwg.mxu0
  %v6663 = vadd.f32 %v6584, %v6657
  %v6664 = vadd.f32 %v6585, %v6660
  %s6665 = scalar_lea.vmem %s5, 128
  %v6666 = vld [vmem:[%s6665] sm:$0xf]
  %v6667 = vld [vmem:[%s6665 + $0x4] sm:$0xf]
  %v6668 = vld [vmem:[%s6665 + $0x8] sm:$0xf]
  %v6669 = vld [vmem:[%s6665 + $0xc] sm:$0xf]
  %v6670 = vld [vmem:[%s6665 + $0x10] sm:$0xf]
  %v6671 = vld [vmem:[%s6665 + $0x14] sm:$0xf]
  %v6672 = vld [vmem:[%s6665 + $0x18] sm:$0xf]
  %v6673 = vld [vmem:[%s6665 + $0x1c] sm:$0xf]
  %v6682 = vunpack.c.l.b16 %v6666
  %v6683 = vunpack.c.l.b16 %v6667
  %v6684 = vunpack.c.l.b16 %v6668
  %v6685 = vunpack.c.l.b16 %v6669
  %v6686 = vunpack.c.l.b16 %v6670
  %v6687 = vunpack.c.l.b16 %v6671
  %v6688 = vunpack.c.l.b16 %v6672
  %v6689 = vunpack.c.l.b16 %v6673
  %v6690 = vpack.c.b16 %v6683, %v6682
  %v6691 = vpack.c.b16 %v6685, %v6684
  %v6692 = vpack.c.b16 %v6687, %v6686
  %v6693 = vpack.c.b16 %v6689, %v6688
  %v6699 = vsel %vm724, %v6349, 0
  %6701 = vmatprep.subr.bf16.mxu0 0
  %6702 = vmatpush1.bf16.msra.mxu0 %v6690
  %6703 = vmatprep.subr.bf16.mxu0 0
  %6704 = vmatpush1.bf16.msra.mxu0 %v6691
  %6705 = vmatprep.subr.bf16.mxu0 0
  %6706 = vmatpush1.bf16.msra.mxu0 %v6692
  %6707 = vmatprep.subr.bf16.mxu0 0
  %6708 = vmatpush1.bf16.msra.mxu0 %v6693
  %6709 = vmatprep.subr.bf16.mxu0 0
  %6710 = vmatpush1.bf16.msra.mxu0 0
  %6711 = vmatprep.subr.bf16.mxu0 0
  %6712 = vmatpush1.bf16.msra.mxu0 0
  %6713 = vmatprep.subr.bf16.mxu0 0
  %6714 = vmatpush1.bf16.msra.mxu0 0
  %6715 = vmatprep.subr.bf16.mxu0 0
  %6716 = vmatpush1.bf16.msra.mxu0 0
  %6717 = vmatprep.subr.bf16.mxu0 0
  %6718 = vmatpush1.bf16.msra.mxu0 0
  %6719 = vmatprep.subr.bf16.mxu0 0
  %6720 = vmatpush1.bf16.msra.mxu0 0
  %6721 = vmatprep.subr.bf16.mxu0 0
  %6722 = vmatpush1.bf16.msra.mxu0 0
  %6723 = vmatprep.subr.bf16.mxu0 0
  %6724 = vmatpush1.bf16.msra.mxu0 0
  %6725 = vmatprep.subr.bf16.mxu0 0
  %6726 = vmatpush1.bf16.msra.mxu0 0
  %6727 = vmatprep.subr.bf16.mxu0 0
  %6728 = vmatpush1.bf16.msra.mxu0 0
  %6729 = vmatprep.subr.bf16.mxu0 0
  %6730 = vmatpush1.bf16.msra.mxu0 0
  %6731 = vmatprep.subr.bf16.mxu0 0
  %6732 = vmatpush1.bf16.msra.mxu0 0
  %6733 = vmatprep.mubr.bf16.mxu0 0
  %6734 = vmatmul.mubr.bf16.gmra.mrb[0].mxu0 %v6699
  %v6735 = vpop.f32.mrb[0].mxu0
  %v6736 = vadd.f32 0.0, %v6735
  %v6737 = vpop.f32.mrb[0].mxu0
  %v6738 = vpop.f32.mrb[0].mxu0
  %v6739 = vadd.f32 0.0, %v6738
  %v6740 = vpop.f32.mrb[0].mxu0
  %6741 = vdwg.mxu0
  %v6742 = vadd.f32 %v6663, %v6736
  %v6743 = vadd.f32 %v6664, %v6739
  %s6744 = scalar_lea.vmem %s5, 160
  %v6745 = vld [vmem:[%s6744] sm:$0xf]
  %v6746 = vld [vmem:[%s6744 + $0x4] sm:$0xf]
  %v6747 = vld [vmem:[%s6744 + $0x8] sm:$0xf]
  %v6748 = vld [vmem:[%s6744 + $0xc] sm:$0xf]
  %v6749 = vld [vmem:[%s6744 + $0x10] sm:$0xf]
  %v6750 = vld [vmem:[%s6744 + $0x14] sm:$0xf]
  %v6751 = vld [vmem:[%s6744 + $0x18] sm:$0xf]
  %v6752 = vld [vmem:[%s6744 + $0x1c] sm:$0xf]
  %v6761 = vunpack.c.l.b16 %v6745
  %v6762 = vunpack.c.l.b16 %v6746
  %v6763 = vunpack.c.l.b16 %v6747
  %v6764 = vunpack.c.l.b16 %v6748
  %v6765 = vunpack.c.l.b16 %v6749
  %v6766 = vunpack.c.l.b16 %v6750
  %v6767 = vunpack.c.l.b16 %v6751
  %v6768 = vunpack.c.l.b16 %v6752
  %v6769 = vpack.c.b16 %v6762, %v6761
  %v6770 = vpack.c.b16 %v6764, %v6763
  %v6771 = vpack.c.b16 %v6766, %v6765
  %v6772 = vpack.c.b16 %v6768, %v6767
  %v6778 = vsel %vm724, %v6350, 0
  %6780 = vmatprep.subr.bf16.mxu0 0
  %6781 = vmatpush1.bf16.msra.mxu0 %v6769
  %6782 = vmatprep.subr.bf16.mxu0 0
  %6783 = vmatpush1.bf16.msra.mxu0 %v6770
  %6784 = vmatprep.subr.bf16.mxu0 0
  %6785 = vmatpush1.bf16.msra.mxu0 %v6771
  %6786 = vmatprep.subr.bf16.mxu0 0
  %6787 = vmatpush1.bf16.msra.mxu0 %v6772
  %6788 = vmatprep.subr.bf16.mxu0 0
  %6789 = vmatpush1.bf16.msra.mxu0 0
  %6790 = vmatprep.subr.bf16.mxu0 0
  %6791 = vmatpush1.bf16.msra.mxu0 0
  %6792 = vmatprep.subr.bf16.mxu0 0
  %6793 = vmatpush1.bf16.msra.mxu0 0
  %6794 = vmatprep.subr.bf16.mxu0 0
  %6795 = vmatpush1.bf16.msra.mxu0 0
  %6796 = vmatprep.subr.bf16.mxu0 0
  %6797 = vmatpush1.bf16.msra.mxu0 0
  %6798 = vmatprep.subr.bf16.mxu0 0
  %6799 = vmatpush1.bf16.msra.mxu0 0
  %6800 = vmatprep.subr.bf16.mxu0 0
  %6801 = vmatpush1.bf16.msra.mxu0 0
  %6802 = vmatprep.subr.bf16.mxu0 0
  %6803 = vmatpush1.bf16.msra.mxu0 0
  %6804 = vmatprep.subr.bf16.mxu0 0
  %6805 = vmatpush1.bf16.msra.mxu0 0
  %6806 = vmatprep.subr.bf16.mxu0 0
  %6807 = vmatpush1.bf16.msra.mxu0 0
  %6808 = vmatprep.subr.bf16.mxu0 0
  %6809 = vmatpush1.bf16.msra.mxu0 0
  %6810 = vmatprep.subr.bf16.mxu0 0
  %6811 = vmatpush1.bf16.msra.mxu0 0
  %6812 = vmatprep.mubr.bf16.mxu0 0
  %6813 = vmatmul.mubr.bf16.gmra.mrb[0].mxu0 %v6778
  %v6814 = vpop.f32.mrb[0].mxu0
  %v6815 = vadd.f32 0.0, %v6814
  %v6816 = vpop.f32.mrb[0].mxu0
  %v6817 = vpop.f32.mrb[0].mxu0
  %v6818 = vadd.f32 0.0, %v6817
  %v6819 = vpop.f32.mrb[0].mxu0
  %6820 = vdwg.mxu0
  %v6821 = vadd.f32 %v6742, %v6815
  %v6822 = vadd.f32 %v6743, %v6818
  %s6823 = scalar_lea.vmem %s5, 192
  %v6824 = vld [vmem:[%s6823] sm:$0xf]
  %v6825 = vld [vmem:[%s6823 + $0x4] sm:$0xf]
  %v6826 = vld [vmem:[%s6823 + $0x8] sm:$0xf]
  %v6827 = vld [vmem:[%s6823 + $0xc] sm:$0xf]
  %v6828 = vld [vmem:[%s6823 + $0x10] sm:$0xf]
  %v6829 = vld [vmem:[%s6823 + $0x14] sm:$0xf]
  %v6830 = vld [vmem:[%s6823 + $0x18] sm:$0xf]
  %v6831 = vld [vmem:[%s6823 + $0x1c] sm:$0xf]
  %v6840 = vunpack.c.l.b16 %v6824
  %v6841 = vunpack.c.l.b16 %v6825
  %v6842 = vunpack.c.l.b16 %v6826
  %v6843 = vunpack.c.l.b16 %v6827
  %v6844 = vunpack.c.l.b16 %v6828
  %v6845 = vunpack.c.l.b16 %v6829
  %v6846 = vunpack.c.l.b16 %v6830
  %v6847 = vunpack.c.l.b16 %v6831
  %v6848 = vpack.c.b16 %v6841, %v6840
  %v6849 = vpack.c.b16 %v6843, %v6842
  %v6850 = vpack.c.b16 %v6845, %v6844
  %v6851 = vpack.c.b16 %v6847, %v6846
  %v6857 = vsel %vm724, %v6351, 0
  %6859 = vmatprep.subr.bf16.mxu0 0
  %6860 = vmatpush1.bf16.msra.mxu0 %v6848
  %6861 = vmatprep.subr.bf16.mxu0 0
  %6862 = vmatpush1.bf16.msra.mxu0 %v6849
  %6863 = vmatprep.subr.bf16.mxu0 0
  %6864 = vmatpush1.bf16.msra.mxu0 %v6850
  %6865 = vmatprep.subr.bf16.mxu0 0
  %6866 = vmatpush1.bf16.msra.mxu0 %v6851
  %6867 = vmatprep.subr.bf16.mxu0 0
  %6868 = vmatpush1.bf16.msra.mxu0 0
  %6869 = vmatprep.subr.bf16.mxu0 0
  %6870 = vmatpush1.bf16.msra.mxu0 0
  %6871 = vmatprep.subr.bf16.mxu0 0
  %6872 = vmatpush1.bf16.msra.mxu0 0
  %6873 = vmatprep.subr.bf16.mxu0 0
  %6874 = vmatpush1.bf16.msra.mxu0 0
  %6875 = vmatprep.subr.bf16.mxu0 0
  %6876 = vmatpush1.bf16.msra.mxu0 0
  %6877 = vmatprep.subr.bf16.mxu0 0
  %6878 = vmatpush1.bf16.msra.mxu0 0
  %6879 = vmatprep.subr.bf16.mxu0 0
  %6880 = vmatpush1.bf16.msra.mxu0 0
  %6881 = vmatprep.subr.bf16.mxu0 0
  %6882 = vmatpush1.bf16.msra.mxu0 0
  %6883 = vmatprep.subr.bf16.mxu0 0
  %6884 = vmatpush1.bf16.msra.mxu0 0
  %6885 = vmatprep.subr.bf16.mxu0 0
  %6886 = vmatpush1.bf16.msra.mxu0 0
  %6887 = vmatprep.subr.bf16.mxu0 0
  %6888 = vmatpush1.bf16.msra.mxu0 0
  %6889 = vmatprep.subr.bf16.mxu0 0
  %6890 = vmatpush1.bf16.msra.mxu0 0
  %6891 = vmatprep.mubr.bf16.mxu0 0
  %6892 = vmatmul.mubr.bf16.gmra.mrb[0].mxu0 %v6857
  %v6893 = vpop.f32.mrb[0].mxu0
  %v6894 = vadd.f32 0.0, %v6893
  %v6895 = vpop.f32.mrb[0].mxu0
  %v6896 = vpop.f32.mrb[0].mxu0
  %v6897 = vadd.f32 0.0, %v6896
  %v6898 = vpop.f32.mrb[0].mxu0
  %6899 = vdwg.mxu0
  %v6900 = vadd.f32 %v6821, %v6894
  %v6901 = vadd.f32 %v6822, %v6897
  %s6902 = scalar_lea.vmem %s5, 224
  %v6903 = vld [vmem:[%s6902] sm:$0xf]
  %v6904 = vld [vmem:[%s6902 + $0x4] sm:$0xf]
  %v6905 = vld [vmem:[%s6902 + $0x8] sm:$0xf]
  %v6906 = vld [vmem:[%s6902 + $0xc] sm:$0xf]
  %v6907 = vld [vmem:[%s6902 + $0x10] sm:$0xf]
  %v6908 = vld [vmem:[%s6902 + $0x14] sm:$0xf]
  %v6909 = vld [vmem:[%s6902 + $0x18] sm:$0xf]
  %v6910 = vld [vmem:[%s6902 + $0x1c] sm:$0xf]
  %v6919 = vunpack.c.l.b16 %v6903
  %v6920 = vunpack.c.l.b16 %v6904
  %v6921 = vunpack.c.l.b16 %v6905
  %v6922 = vunpack.c.l.b16 %v6906
  %v6923 = vunpack.c.l.b16 %v6907
  %v6924 = vunpack.c.l.b16 %v6908
  %v6925 = vunpack.c.l.b16 %v6909
  %v6926 = vunpack.c.l.b16 %v6910
  %v6927 = vpack.c.b16 %v6920, %v6919
  %v6928 = vpack.c.b16 %v6922, %v6921
  %v6929 = vpack.c.b16 %v6924, %v6923
  %v6930 = vpack.c.b16 %v6926, %v6925
  %v6936 = vsel %vm724, %v6352, 0
  %6938 = vmatprep.subr.bf16.mxu0 0
  %6939 = vmatpush1.bf16.msra.mxu0 %v6927
  %6940 = vmatprep.subr.bf16.mxu0 0
  %6941 = vmatpush1.bf16.msra.mxu0 %v6928
  %6942 = vmatprep.subr.bf16.mxu0 0
  %6943 = vmatpush1.bf16.msra.mxu0 %v6929
  %6944 = vmatprep.subr.bf16.mxu0 0
  %6945 = vmatpush1.bf16.msra.mxu0 %v6930
  %6946 = vmatprep.subr.bf16.mxu0 0
  %6947 = vmatpush1.bf16.msra.mxu0 0
  %6948 = vmatprep.subr.bf16.mxu0 0
  %6949 = vmatpush1.bf16.msra.mxu0 0
  %6950 = vmatprep.subr.bf16.mxu0 0
  %6951 = vmatpush1.bf16.msra.mxu0 0
  %6952 = vmatprep.subr.bf16.mxu0 0
  %6953 = vmatpush1.bf16.msra.mxu0 0
  %6954 = vmatprep.subr.bf16.mxu0 0
  %6955 = vmatpush1.bf16.msra.mxu0 0
  %6956 = vmatprep.subr.bf16.mxu0 0
  %6957 = vmatpush1.bf16.msra.mxu0 0
  %6958 = vmatprep.subr.bf16.mxu0 0
  %6959 = vmatpush1.bf16.msra.mxu0 0
  %6960 = vmatprep.subr.bf16.mxu0 0
  %6961 = vmatpush1.bf16.msra.mxu0 0
  %6962 = vmatprep.subr.bf16.mxu0 0
  %6963 = vmatpush1.bf16.msra.mxu0 0
  %6964 = vmatprep.subr.bf16.mxu0 0
  %6965 = vmatpush1.bf16.msra.mxu0 0
  %6966 = vmatprep.subr.bf16.mxu0 0
  %6967 = vmatpush1.bf16.msra.mxu0 0
  %6968 = vmatprep.subr.bf16.mxu0 0
  %6969 = vmatpush1.bf16.msra.mxu0 0
  %6970 = vmatprep.mubr.bf16.mxu0 0
  %6971 = vmatmul.mubr.bf16.gmra.mrb[0].mxu0 %v6936
  %v6972 = vpop.f32.mrb[0].mxu0
  %v6973 = vadd.f32 0.0, %v6972
  %v6974 = vpop.f32.mrb[0].mxu0
  %v6975 = vpop.f32.mrb[0].mxu0
  %v6976 = vadd.f32 0.0, %v6975
  %v6977 = vpop.f32.mrb[0].mxu0
  %6978 = vdwg.mxu0
  %v6979 = vadd.f32 %v6900, %v6973
  %v6980 = vadd.f32 %v6901, %v6976
  %s6981 = scalar_lea.vmem %s5, 256
  %v6982 = vld [vmem:[%s6981] sm:$0xf]
  %v6983 = vld [vmem:[%s6981 + $0x4] sm:$0xf]
  %v6984 = vld [vmem:[%s6981 + $0x8] sm:$0xf]
  %v6985 = vld [vmem:[%s6981 + $0xc] sm:$0xf]
  %v6986 = vld [vmem:[%s6981 + $0x10] sm:$0xf]
  %v6987 = vld [vmem:[%s6981 + $0x14] sm:$0xf]
  %v6988 = vld [vmem:[%s6981 + $0x18] sm:$0xf]
  %v6989 = vld [vmem:[%s6981 + $0x1c] sm:$0xf]
  %v6998 = vunpack.c.l.b16 %v6982
  %v6999 = vunpack.c.l.b16 %v6983
  %v7000 = vunpack.c.l.b16 %v6984
  %v7001 = vunpack.c.l.b16 %v6985
  %v7002 = vunpack.c.l.b16 %v6986
  %v7003 = vunpack.c.l.b16 %v6987
  %v7004 = vunpack.c.l.b16 %v6988
  %v7005 = vunpack.c.l.b16 %v6989
  %v7006 = vpack.c.b16 %v6999, %v6998
  %v7007 = vpack.c.b16 %v7001, %v7000
  %v7008 = vpack.c.b16 %v7003, %v7002
  %v7009 = vpack.c.b16 %v7005, %v7004
  %v7015 = vsel %vm724, %v6353, 0
  %7017 = vmatprep.subr.bf16.mxu0 0
  %7018 = vmatpush1.bf16.msra.mxu0 %v7006
  %7019 = vmatprep.subr.bf16.mxu0 0
  %7020 = vmatpush1.bf16.msra.mxu0 %v7007
  %7021 = vmatprep.subr.bf16.mxu0 0
  %7022 = vmatpush1.bf16.msra.mxu0 %v7008
  %7023 = vmatprep.subr.bf16.mxu0 0
  %7024 = vmatpush1.bf16.msra.mxu0 %v7009
  %7025 = vmatprep.subr.bf16.mxu0 0
  %7026 = vmatpush1.bf16.msra.mxu0 0
  %7027 = vmatprep.subr.bf16.mxu0 0
  %7028 = vmatpush1.bf16.msra.mxu0 0
  %7029 = vmatprep.subr.bf16.mxu0 0
  %7030 = vmatpush1.bf16.msra.mxu0 0
  %7031 = vmatprep.subr.bf16.mxu0 0
  %7032 = vmatpush1.bf16.msra.mxu0 0
  %7033 = vmatprep.subr.bf16.mxu0 0
  %7034 = vmatpush1.bf16.msra.mxu0 0
  %7035 = vmatprep.subr.bf16.mxu0 0
  %7036 = vmatpush1.bf16.msra.mxu0 0
  %7037 = vmatprep.subr.bf16.mxu0 0
  %7038 = vmatpush1.bf16.msra.mxu0 0
  %7039 = vmatprep.subr.bf16.mxu0 0
  %7040 = vmatpush1.bf16.msra.mxu0 0
  %7041 = vmatprep.subr.bf16.mxu0 0
  %7042 = vmatpush1.bf16.msra.mxu0 0
  %7043 = vmatprep.subr.bf16.mxu0 0
  %7044 = vmatpush1.bf16.msra.mxu0 0
  %7045 = vmatprep.subr.bf16.mxu0 0
  %7046 = vmatpush1.bf16.msra.mxu0 0
  %7047 = vmatprep.subr.bf16.mxu0 0
  %7048 = vmatpush1.bf16.msra.mxu0 0
  %7049 = vmatprep.mubr.bf16.mxu0 0
  %7050 = vmatmul.mubr.bf16.gmra.mrb[0].mxu0 %v7015
  %v7051 = vpop.f32.mrb[0].mxu0
  %v7052 = vadd.f32 0.0, %v7051
  %v7053 = vpop.f32.mrb[0].mxu0
  %v7054 = vpop.f32.mrb[0].mxu0
  %v7055 = vadd.f32 0.0, %v7054
  %v7056 = vpop.f32.mrb[0].mxu0
  %7057 = vdwg.mxu0
  %v7058 = vadd.f32 %v6979, %v7052
  %v7059 = vadd.f32 %v6980, %v7055
  %v7060 = vld [vmem:[%s6] sm:$0x1]
  %v7062 = vlaneseq
  %v7063 = vshrl.u32 %v7062, 7
  %v7064 = vsub.s32 0, %v7063
  %v7065 = vrot.slane %v7060, %v7064
  %v7067 = vadd.f32 %v7058, %v7065
  %v7068 = vadd.f32 %v7059, %v7065
  %v7069 = vmax.f32 %v7067, 0.0
  %v7070 = vmax.f32 %v7068, 0.0
  %v7071 = vpack.c.bf16 %v7070, %v7069
  %v7072 = vld [vmem:[%s7] sm:$0xff]
  %v7073 = vld [vmem:[%s7 + $0x8] sm:$0xff]
  %v7074 = vld [vmem:[%s7 + $0x10] sm:$0xff]
  %v7075 = vld [vmem:[%s7 + $0x18] sm:$0xff]
  %v7076 = vld [vmem:[%s7 + $0x20] sm:$0xff]
  %v7077 = vld [vmem:[%s7 + $0x28] sm:$0xff]
  %v7078 = vld [vmem:[%s7 + $0x30] sm:$0xff]
  %v7079 = vld [vmem:[%s7 + $0x38] sm:$0xff]
  %v7080 = vld [vmem:[%s7 + $0x40] sm:$0xff]
  %v7081 = vld [vmem:[%s7 + $0x48] sm:$0xff]
  %v7082 = vld [vmem:[%s7 + $0x50] sm:$0xff]
  %v7083 = vld [vmem:[%s7 + $0x58] sm:$0xff]
  %v7084 = vld [vmem:[%s7 + $0x60] sm:$0xff]
  %v7085 = vld [vmem:[%s7 + $0x68] sm:$0xff]
  %v7086 = vld [vmem:[%s7 + $0x70] sm:$0xff]
  %v7087 = vld [vmem:[%s7 + $0x78] sm:$0xff]
  %v7088 = vld [vmem:[%s8] sm:$0xf]
  %v7090 = vlaneseq
  %v7091 = vshrl.u32 %v7090, 7
  %v7092 = vsub.s32 0, %v7091
  %v7093 = vrot.slane %v7088, %v7092
  %v7094 = vlaneseq
  %v7095 = vshrl.u32 %v7094, 7
  %v7096 = vsub.s32 1, %v7095
  %v7097 = vrot.slane %v7088, %v7096
  %v7098 = vlaneseq
  %v7099 = vshrl.u32 %v7098, 7
  %v7100 = vsub.s32 2, %v7099
  %v7101 = vrot.slane %v7088, %v7100
  %v7102 = vlaneseq
  %v7103 = vshrl.u32 %v7102, 7
  %v7104 = vsub.s32 3, %v7103
  %v7105 = vrot.slane %v7088, %v7104
  %v7126 = vunpack.c.l.b16 %v7072
  %v7127 = vunpack.c.h.b16 %v7072
  %v7128 = vunpack.c.l.b16 %v7073
  %v7129 = vunpack.c.h.b16 %v7073
  %v7130 = vunpack.c.l.b16 %v7074
  %v7131 = vunpack.c.h.b16 %v7074
  %v7132 = vunpack.c.l.b16 %v7075
  %v7133 = vunpack.c.h.b16 %v7075
  %v7134 = vunpack.c.l.b16 %v7076
  %v7135 = vunpack.c.h.b16 %v7076
  %v7136 = vunpack.c.l.b16 %v7077
  %v7137 = vunpack.c.h.b16 %v7077
  %v7138 = vunpack.c.l.b16 %v7078
  %v7139 = vunpack.c.h.b16 %v7078
  %v7140 = vunpack.c.l.b16 %v7079
  %v7141 = vunpack.c.h.b16 %v7079
  %v7142 = vunpack.c.l.b16 %v7080
  %v7143 = vunpack.c.h.b16 %v7080
  %v7144 = vunpack.c.l.b16 %v7081
  %v7145 = vunpack.c.h.b16 %v7081
  %v7146 = vunpack.c.l.b16 %v7082
  %v7147 = vunpack.c.h.b16 %v7082
  %v7148 = vunpack.c.l.b16 %v7083
  %v7149 = vunpack.c.h.b16 %v7083
  %v7150 = vunpack.c.l.b16 %v7084
  %v7151 = vunpack.c.h.b16 %v7084
  %v7152 = vunpack.c.l.b16 %v7085
  %v7153 = vunpack.c.h.b16 %v7085
  %v7154 = vunpack.c.l.b16 %v7086
  %v7155 = vunpack.c.h.b16 %v7086
  %v7156 = vunpack.c.l.b16 %v7087
  %v7157 = vunpack.c.h.b16 %v7087
  %v7158 = vpack.c.b16 %v7130, %v7126
  %v7159 = vpack.c.b16 %v7131, %v7127
  %v7160 = vpack.c.b16 %v7132, %v7128
  %v7161 = vpack.c.b16 %v7133, %v7129
  %v7162 = vpack.c.b16 %v7138, %v7134
  %v7163 = vpack.c.b16 %v7139, %v7135
  %v7164 = vpack.c.b16 %v7140, %v7136
  %v7165 = vpack.c.b16 %v7141, %v7137
  %v7166 = vpack.c.b16 %v7146, %v7142
  %v7167 = vpack.c.b16 %v7147, %v7143
  %v7168 = vpack.c.b16 %v7148, %v7144
  %v7169 = vpack.c.b16 %v7149, %v7145
  %v7170 = vpack.c.b16 %v7154, %v7150
  %v7171 = vpack.c.b16 %v7155, %v7151
  %v7172 = vpack.c.b16 %v7156, %v7152
  %v7173 = vpack.c.b16 %v7157, %v7153
  %v7191 = vsel %vm724, %v7071, 0
  %7193 = vmatprep.subr.bf16.mxu0 %v7159
  %7194 = vmatpush1.bf16.msra.mxu0 %v7158
  %7195 = vmatprep.subr.bf16.mxu0 %v7163
  %7196 = vmatpush1.bf16.msra.mxu0 %v7162
  %7197 = vmatprep.subr.bf16.mxu0 %v7167
  %7198 = vmatpush1.bf16.msra.mxu0 %v7166
  %7199 = vmatprep.subr.bf16.mxu0 %v7171
  %7200 = vmatpush1.bf16.msra.mxu0 %v7170
  %7201 = vmatprep.subr.bf16.mxu0 0
  %7202 = vmatpush1.bf16.msra.mxu0 0
  %7203 = vmatprep.subr.bf16.mxu0 0
  %7204 = vmatpush1.bf16.msra.mxu0 0
  %7205 = vmatprep.subr.bf16.mxu0 0
  %7206 = vmatpush1.bf16.msra.mxu0 0
  %7207 = vmatprep.subr.bf16.mxu0 0
  %7208 = vmatpush1.bf16.msra.mxu0 0
  %7209 = vmatprep.subr.bf16.mxu0 0
  %7210 = vmatpush1.bf16.msra.mxu0 0
  %7211 = vmatprep.subr.bf16.mxu0 0
  %7212 = vmatpush1.bf16.msra.mxu0 0
  %7213 = vmatprep.subr.bf16.mxu0 0
  %7214 = vmatpush1.bf16.msra.mxu0 0
  %7215 = vmatprep.subr.bf16.mxu0 0
  %7216 = vmatpush1.bf16.msra.mxu0 0
  %7217 = vmatprep.subr.bf16.mxu0 0
  %7218 = vmatpush1.bf16.msra.mxu0 0
  %7219 = vmatprep.subr.bf16.mxu0 0
  %7220 = vmatpush1.bf16.msra.mxu0 0
  %7221 = vmatprep.subr.bf16.mxu0 0
  %7222 = vmatpush1.bf16.msra.mxu0 0
  %7223 = vmatprep.subr.bf16.mxu0 0
  %7224 = vmatpush1.bf16.msra.mxu0 0
  %7225 = vmatprep.mubr.bf16.mxu0 0
  %7226 = vmatmul.mubr.bf16.gmra.mrb[0].mxu0 %v7191
  %v7227 = vpop.f32.mrb[0].mxu0
  %v7228 = vadd.f32 %v7093, %v7227
  %v7229 = vpop.f32.mrb[0].mxu0
  %v7230 = vadd.f32 %v7097, %v7229
  %v7231 = vpop.f32.mrb[0].mxu0
  %v7232 = vadd.f32 %v7093, %v7231
  %v7233 = vpop.f32.mrb[0].mxu0
  %v7234 = vadd.f32 %v7097, %v7233
  %7235 = vdwg.mxu0
  %7236 = vmatprep.subr.bf16.mxu0 %v7161
  %7237 = vmatpush1.bf16.msra.mxu0 %v7160
  %7238 = vmatprep.subr.bf16.mxu0 %v7165
  %7239 = vmatpush1.bf16.msra.mxu0 %v7164
  %7240 = vmatprep.subr.bf16.mxu0 %v7169
  %7241 = vmatpush1.bf16.msra.mxu0 %v7168
  %7242 = vmatprep.subr.bf16.mxu0 %v7173
  %7243 = vmatpush1.bf16.msra.mxu0 %v7172
  %7244 = vmatprep.subr.bf16.mxu0 0
  %7245 = vmatpush1.bf16.msra.mxu0 0
  %7246 = vmatprep.subr.bf16.mxu0 0
  %7247 = vmatpush1.bf16.msra.mxu0 0
  %7248 = vmatprep.subr.bf16.mxu0 0
  %7249 = vmatpush1.bf16.msra.mxu0 0
  %7250 = vmatprep.subr.bf16.mxu0 0
  %7251 = vmatpush1.bf16.msra.mxu0 0
  %7252 = vmatprep.subr.bf16.mxu0 0
  %7253 = vmatpush1.bf16.msra.mxu0 0
  %7254 = vmatprep.subr.bf16.mxu0 0
  %7255 = vmatpush1.bf16.msra.mxu0 0
  %7256 = vmatprep.subr.bf16.mxu0 0
  %7257 = vmatpush1.bf16.msra.mxu0 0
  %7258 = vmatprep.subr.bf16.mxu0 0
  %7259 = vmatpush1.bf16.msra.mxu0 0
  %7260 = vmatprep.subr.bf16.mxu0 0
  %7261 = vmatpush1.bf16.msra.mxu0 0
  %7262 = vmatprep.subr.bf16.mxu0 0
  %7263 = vmatpush1.bf16.msra.mxu0 0
  %7264 = vmatprep.subr.bf16.mxu0 0
  %7265 = vmatpush1.bf16.msra.mxu0 0
  %7266 = vmatprep.subr.bf16.mxu0 0
  %7267 = vmatpush1.bf16.msra.mxu0 0
  %7268 = vmatprep.mubr.bf16.mxu0 0
  %7269 = vmatmul.mubr.bf16.gmra.mrb[0].mxu0 %v7191
  %v7270 = vpop.f32.mrb[0].mxu0
  %v7271 = vadd.f32 %v7101, %v7270
  %v7272 = vpop.f32.mrb[0].mxu0
  %v7273 = vadd.f32 %v7105, %v7272
  %v7274 = vpop.f32.mrb[0].mxu0
  %v7275 = vadd.f32 %v7101, %v7274
  %v7276 = vpop.f32.mrb[0].mxu0
  %v7277 = vadd.f32 %v7105, %v7276
  %7278 = vdwg.mxu0
  %v7279 = vmax.f32 %v7228, 0.0
  %v7280 = vmax.f32 %v7230, 0.0
  %v7281 = vmax.f32 %v7271, 0.0
  %v7282 = vmax.f32 %v7273, 0.0
  %v7283 = vmax.f32 %v7232, 0.0
  %v7284 = vmax.f32 %v7234, 0.0
  %v7285 = vmax.f32 %v7275, 0.0
  %v7286 = vmax.f32 %v7277, 0.0
  %v7287 = vpack.c.bf16 %v7283, %v7279
  %v7288 = vpack.c.bf16 %v7284, %v7280
  %v7289 = vpack.c.bf16 %v7285, %v7281
  %v7290 = vpack.c.bf16 %v7286, %v7282
  %v7291 = vld [vmem:[%s9] sm:$0xf]
  %v7292 = vld [vmem:[%s9 + $0x4] sm:$0xf]
  %v7293 = vld [vmem:[%s9 + $0x8] sm:$0xf]
  %v7294 = vld [vmem:[%s9 + $0xc] sm:$0xf]
  %v7295 = vld [vmem:[%s9 + $0x10] sm:$0xf]
  %v7296 = vld [vmem:[%s9 + $0x14] sm:$0xf]
  %v7297 = vld [vmem:[%s9 + $0x18] sm:$0xf]
  %v7298 = vld [vmem:[%s9 + $0x1c] sm:$0xf]
  %v7299 = vld [vmem:[%s9 + $0x20] sm:$0xf]
  %v7300 = vld [vmem:[%s9 + $0x24] sm:$0xf]
  %v7301 = vld [vmem:[%s9 + $0x28] sm:$0xf]
  %v7302 = vld [vmem:[%s9 + $0x2c] sm:$0xf]
  %v7303 = vld [vmem:[%s9 + $0x30] sm:$0xf]
  %v7304 = vld [vmem:[%s9 + $0x34] sm:$0xf]
  %v7305 = vld [vmem:[%s9 + $0x38] sm:$0xf]
  %v7306 = vld [vmem:[%s9 + $0x3c] sm:$0xf]
  %v7307 = vld [vmem:[%s9 + $0x40] sm:$0xf]
  %v7308 = vld [vmem:[%s9 + $0x44] sm:$0xf]
  %v7309 = vld [vmem:[%s9 + $0x48] sm:$0xf]
  %v7310 = vld [vmem:[%s9 + $0x4c] sm:$0xf]
  %v7311 = vld [vmem:[%s9 + $0x50] sm:$0xf]
  %v7312 = vld [vmem:[%s9 + $0x54] sm:$0xf]
  %v7313 = vld [vmem:[%s9 + $0x58] sm:$0xf]
  %v7314 = vld [vmem:[%s9 + $0x5c] sm:$0xf]
  %v7315 = vld [vmem:[%s9 + $0x60] sm:$0xf]
  %v7316 = vld [vmem:[%s9 + $0x64] sm:$0xf]
  %v7317 = vld [vmem:[%s9 + $0x68] sm:$0xf]
  %v7318 = vld [vmem:[%s9 + $0x6c] sm:$0xf]
  %v7319 = vld [vmem:[%s9 + $0x70] sm:$0xf]
  %v7320 = vld [vmem:[%s9 + $0x74] sm:$0xf]
  %v7321 = vld [vmem:[%s9 + $0x78] sm:$0xf]
  %v7322 = vld [vmem:[%s9 + $0x7c] sm:$0xf]
  %v7323 = vld [vmem:[%s9 + $0x80] sm:$0xf]
  %v7324 = vld [vmem:[%s9 + $0x84] sm:$0xf]
  %v7325 = vld [vmem:[%s9 + $0x88] sm:$0xf]
  %v7326 = vld [vmem:[%s9 + $0x8c] sm:$0xf]
  %v7327 = vld [vmem:[%s9 + $0x90] sm:$0xf]
  %v7328 = vld [vmem:[%s9 + $0x94] sm:$0xf]
  %v7329 = vld [vmem:[%s9 + $0x98] sm:$0xf]
  %v7330 = vld [vmem:[%s9 + $0x9c] sm:$0xf]
  %v7331 = vld [vmem:[%s9 + $0xa0] sm:$0xf]
  %v7332 = vld [vmem:[%s9 + $0xa4] sm:$0xf]
  %v7333 = vld [vmem:[%s9 + $0xa8] sm:$0xf]
  %v7334 = vld [vmem:[%s9 + $0xac] sm:$0xf]
  %v7335 = vld [vmem:[%s9 + $0xb0] sm:$0xf]
  %v7336 = vld [vmem:[%s9 + $0xb4] sm:$0xf]
  %v7337 = vld [vmem:[%s9 + $0xb8] sm:$0xf]
  %v7338 = vld [vmem:[%s9 + $0xbc] sm:$0xf]
  %v7339 = vld [vmem:[%s9 + $0xc0] sm:$0xf]
  %v7340 = vld [vmem:[%s9 + $0xc4] sm:$0xf]
  %v7341 = vld [vmem:[%s9 + $0xc8] sm:$0xf]
  %v7342 = vld [vmem:[%s9 + $0xcc] sm:$0xf]
  %v7343 = vld [vmem:[%s9 + $0xd0] sm:$0xf]
  %v7344 = vld [vmem:[%s9 + $0xd4] sm:$0xf]
  %v7345 = vld [vmem:[%s9 + $0xd8] sm:$0xf]
  %v7346 = vld [vmem:[%s9 + $0xdc] sm:$0xf]
  %v7347 = vld [vmem:[%s9 + $0xe0] sm:$0xf]
  %v7348 = vld [vmem:[%s9 + $0xe4] sm:$0xf]
  %v7349 = vld [vmem:[%s9 + $0xe8] sm:$0xf]
  %v7350 = vld [vmem:[%s9 + $0xec] sm:$0xf]
  %v7351 = vld [vmem:[%s9 + $0xf0] sm:$0xf]
  %v7352 = vld [vmem:[%s9 + $0xf4] sm:$0xf]
  %v7353 = vld [vmem:[%s9 + $0xf8] sm:$0xf]
  %v7354 = vld [vmem:[%s9 + $0xfc] sm:$0xf]
  %v7355 = vld [vmem:[%s10] sm:$0x1]
  %v7357 = vlaneseq
  %v7358 = vshrl.u32 %v7357, 7
  %v7359 = vsub.s32 0, %v7358
  %v7360 = vrot.slane %v7355, %v7359
  %v7426 = vunpack.c.l.b16 %v7291
  %v7427 = vunpack.c.l.b16 %v7292
  %v7428 = vunpack.c.l.b16 %v7293
  %v7429 = vunpack.c.l.b16 %v7294
  %v7430 = vunpack.c.l.b16 %v7295
  %v7431 = vunpack.c.l.b16 %v7296
  %v7432 = vunpack.c.l.b16 %v7297
  %v7433 = vunpack.c.l.b16 %v7298
  %v7434 = vunpack.c.l.b16 %v7299
  %v7435 = vunpack.c.l.b16 %v7300
  %v7436 = vunpack.c.l.b16 %v7301
  %v7437 = vunpack.c.l.b16 %v7302
  %v7438 = vunpack.c.l.b16 %v7303
  %v7439 = vunpack.c.l.b16 %v7304
  %v7440 = vunpack.c.l.b16 %v7305
  %v7441 = vunpack.c.l.b16 %v7306
  %v7442 = vunpack.c.l.b16 %v7307
  %v7443 = vunpack.c.l.b16 %v7308
  %v7444 = vunpack.c.l.b16 %v7309
  %v7445 = vunpack.c.l.b16 %v7310
  %v7446 = vunpack.c.l.b16 %v7311
  %v7447 = vunpack.c.l.b16 %v7312
  %v7448 = vunpack.c.l.b16 %v7313
  %v7449 = vunpack.c.l.b16 %v7314
  %v7450 = vunpack.c.l.b16 %v7315
  %v7451 = vunpack.c.l.b16 %v7316
  %v7452 = vunpack.c.l.b16 %v7317
  %v7453 = vunpack.c.l.b16 %v7318
  %v7454 = vunpack.c.l.b16 %v7319
  %v7455 = vunpack.c.l.b16 %v7320
  %v7456 = vunpack.c.l.b16 %v7321
  %v7457 = vunpack.c.l.b16 %v7322
  %v7458 = vunpack.c.l.b16 %v7323
  %v7459 = vunpack.c.l.b16 %v7324
  %v7460 = vunpack.c.l.b16 %v7325
  %v7461 = vunpack.c.l.b16 %v7326
  %v7462 = vunpack.c.l.b16 %v7327
  %v7463 = vunpack.c.l.b16 %v7328
  %v7464 = vunpack.c.l.b16 %v7329
  %v7465 = vunpack.c.l.b16 %v7330
  %v7466 = vunpack.c.l.b16 %v7331
  %v7467 = vunpack.c.l.b16 %v7332
  %v7468 = vunpack.c.l.b16 %v7333
  %v7469 = vunpack.c.l.b16 %v7334
  %v7470 = vunpack.c.l.b16 %v7335
  %v7471 = vunpack.c.l.b16 %v7336
  %v7472 = vunpack.c.l.b16 %v7337
  %v7473 = vunpack.c.l.b16 %v7338
  %v7474 = vunpack.c.l.b16 %v7339
  %v7475 = vunpack.c.l.b16 %v7340
  %v7476 = vunpack.c.l.b16 %v7341
  %v7477 = vunpack.c.l.b16 %v7342
  %v7478 = vunpack.c.l.b16 %v7343
  %v7479 = vunpack.c.l.b16 %v7344
  %v7480 = vunpack.c.l.b16 %v7345
  %v7481 = vunpack.c.l.b16 %v7346
  %v7482 = vunpack.c.l.b16 %v7347
  %v7483 = vunpack.c.l.b16 %v7348
  %v7484 = vunpack.c.l.b16 %v7349
  %v7485 = vunpack.c.l.b16 %v7350
  %v7486 = vunpack.c.l.b16 %v7351
  %v7487 = vunpack.c.l.b16 %v7352
  %v7488 = vunpack.c.l.b16 %v7353
  %v7489 = vunpack.c.l.b16 %v7354
  %v7490 = vpack.c.b16 %v7427, %v7426
  %v7491 = vpack.c.b16 %v7429, %v7428
  %v7492 = vpack.c.b16 %v7431, %v7430
  %v7493 = vpack.c.b16 %v7433, %v7432
  %v7494 = vpack.c.b16 %v7435, %v7434
  %v7495 = vpack.c.b16 %v7437, %v7436
  %v7496 = vpack.c.b16 %v7439, %v7438
  %v7497 = vpack.c.b16 %v7441, %v7440
  %v7498 = vpack.c.b16 %v7443, %v7442
  %v7499 = vpack.c.b16 %v7445, %v7444
  %v7500 = vpack.c.b16 %v7447, %v7446
  %v7501 = vpack.c.b16 %v7449, %v7448
  %v7502 = vpack.c.b16 %v7451, %v7450
  %v7503 = vpack.c.b16 %v7453, %v7452
  %v7504 = vpack.c.b16 %v7455, %v7454
  %v7505 = vpack.c.b16 %v7457, %v7456
  %v7506 = vpack.c.b16 %v7459, %v7458
  %v7507 = vpack.c.b16 %v7461, %v7460
  %v7508 = vpack.c.b16 %v7463, %v7462
  %v7509 = vpack.c.b16 %v7465, %v7464
  %v7510 = vpack.c.b16 %v7467, %v7466
  %v7511 = vpack.c.b16 %v7469, %v7468
  %v7512 = vpack.c.b16 %v7471, %v7470
  %v7513 = vpack.c.b16 %v7473, %v7472
  %v7514 = vpack.c.b16 %v7475, %v7474
  %v7515 = vpack.c.b16 %v7477, %v7476
  %v7516 = vpack.c.b16 %v7479, %v7478
  %v7517 = vpack.c.b16 %v7481, %v7480
  %v7518 = vpack.c.b16 %v7483, %v7482
  %v7519 = vpack.c.b16 %v7485, %v7484
  %v7520 = vpack.c.b16 %v7487, %v7486
  %v7521 = vpack.c.b16 %v7489, %v7488
  %7554 = vmatprep.subr.bf16.mxu0 0
  %7555 = vmatpush1.bf16.msra.mxu0 %v7490
  %7556 = vmatprep.subr.bf16.mxu0 0
  %7557 = vmatpush1.bf16.msra.mxu0 %v7491
  %7558 = vmatprep.subr.bf16.mxu0 0
  %7559 = vmatpush1.bf16.msra.mxu0 %v7492
  %7560 = vmatprep.subr.bf16.mxu0 0
  %7561 = vmatpush1.bf16.msra.mxu0 %v7493
  %7562 = vmatprep.subr.bf16.mxu0 0
  %7563 = vmatpush1.bf16.msra.mxu0 %v7494
  %7564 = vmatprep.subr.bf16.mxu0 0
  %7565 = vmatpush1.bf16.msra.mxu0 %v7495
  %7566 = vmatprep.subr.bf16.mxu0 0
  %7567 = vmatpush1.bf16.msra.mxu0 %v7496
  %7568 = vmatprep.subr.bf16.mxu0 0
  %7569 = vmatpush1.bf16.msra.mxu0 %v7497
  %7570 = vmatprep.subr.bf16.mxu0 0
  %7571 = vmatpush1.bf16.msra.mxu0 %v7498
  %7572 = vmatprep.subr.bf16.mxu0 0
  %7573 = vmatpush1.bf16.msra.mxu0 %v7499
  %7574 = vmatprep.subr.bf16.mxu0 0
  %7575 = vmatpush1.bf16.msra.mxu0 %v7500
  %7576 = vmatprep.subr.bf16.mxu0 0
  %7577 = vmatpush1.bf16.msra.mxu0 %v7501
  %7578 = vmatprep.subr.bf16.mxu0 0
  %7579 = vmatpush1.bf16.msra.mxu0 %v7502
  %7580 = vmatprep.subr.bf16.mxu0 0
  %7581 = vmatpush1.bf16.msra.mxu0 %v7503
  %7582 = vmatprep.subr.bf16.mxu0 0
  %7583 = vmatpush1.bf16.msra.mxu0 %v7504
  %7584 = vmatprep.subr.bf16.mxu0 0
  %7585 = vmatpush1.bf16.msra.mxu0 %v7505
  %7586 = vmatprep.mubr.bf16.mxu0 %v7288
  %7587 = vmatmul.mubr.bf16.gmra.mrb[0].mxu0 %v7287
  %v7588 = vpop.f32.mrb[0].mxu0
  %v7589 = vadd.f32 %v7360, %v7588
  %v7590 = vpop.f32.mrb[0].mxu0
  %v7591 = vpop.f32.mrb[0].mxu0
  %v7592 = vadd.f32 %v7360, %v7591
  %v7593 = vpop.f32.mrb[0].mxu0
  %7594 = vdwg.mxu0
  %7595 = vmatprep.subr.bf16.mxu0 0
  %7596 = vmatpush1.bf16.msra.mxu0 %v7506
  %7597 = vmatprep.subr.bf16.mxu0 0
  %7598 = vmatpush1.bf16.msra.mxu0 %v7507
  %7599 = vmatprep.subr.bf16.mxu0 0
  %7600 = vmatpush1.bf16.msra.mxu0 %v7508
  %7601 = vmatprep.subr.bf16.mxu0 0
  %7602 = vmatpush1.bf16.msra.mxu0 %v7509
  %7603 = vmatprep.subr.bf16.mxu0 0
  %7604 = vmatpush1.bf16.msra.mxu0 %v7510
  %7605 = vmatprep.subr.bf16.mxu0 0
  %7606 = vmatpush1.bf16.msra.mxu0 %v7511
  %7607 = vmatprep.subr.bf16.mxu0 0
  %7608 = vmatpush1.bf16.msra.mxu0 %v7512
  %7609 = vmatprep.subr.bf16.mxu0 0
  %7610 = vmatpush1.bf16.msra.mxu0 %v7513
  %7611 = vmatprep.subr.bf16.mxu0 0
  %7612 = vmatpush1.bf16.msra.mxu0 %v7514
  %7613 = vmatprep.subr.bf16.mxu0 0
  %7614 = vmatpush1.bf16.msra.mxu0 %v7515
  %7615 = vmatprep.subr.bf16.mxu0 0
  %7616 = vmatpush1.bf16.msra.mxu0 %v7516
  %7617 = vmatprep.subr.bf16.mxu0 0
  %7618 = vmatpush1.bf16.msra.mxu0 %v7517
  %7619 = vmatprep.subr.bf16.mxu0 0
  %7620 = vmatpush1.bf16.msra.mxu0 %v7518
  %7621 = vmatprep.subr.bf16.mxu0 0
  %7622 = vmatpush1.bf16.msra.mxu0 %v7519
  %7623 = vmatprep.subr.bf16.mxu0 0
  %7624 = vmatpush1.bf16.msra.mxu0 %v7520
  %7625 = vmatprep.subr.bf16.mxu0 0
  %7626 = vmatpush1.bf16.msra.mxu0 %v7521
  %7627 = vmatprep.mubr.bf16.mxu0 %v7290
  %7628 = vmatmul.mubr.bf16.gmra.mrb[0].mxu0 %v7289
  %v7629 = vpop.f32.mrb[0].mxu0
  %v7630 = vadd.f32 %v7589, %v7629
  %v7631 = vpop.f32.mrb[0].mxu0
  %v7632 = vpop.f32.mrb[0].mxu0
  %v7633 = vadd.f32 %v7592, %v7632
  %v7634 = vpop.f32.mrb[0].mxu0
  %7635 = vdwg.mxu0
  %vm7636 = vcmask 48128
  %7637 = vst.msk [vmem:[%s11] sm:$0xff] %vm7636, %v7630
  %7638 = vst.msk [vmem:[%s11 + $0x8] sm:$0xff] %vm7636, %v7633
  // Predicated region
  $region46: #{a_call__.1} parent=0 // pred_check
    _
  $region47: #{a_call__.1} parent=0 // pred_check_branch
    %7640 = sbr.rel (0) target = $region49
  $region48: #{a_call__.1} parent=0 // pred_region
    _
  $region49: #{a_call__.1} parent=0 // pred_fallthru
    _
  // Predicated region
  $region50: #{a_call__.1} parent=0 // pred_check
    _
  $region51: #{a_call__.1} parent=0 // pred_check_branch
    %7642 = sbr.rel (0) target = $region53
  $region52: #{a_call__.1} parent=0 // pred_region
    _
  $region53: #{a_call__.1} parent=0 // pred_fallthru
    _

</llo_original>
